<compile_context>
chip_gen: v6e
topology: v6e:2x2x1
jax: 0.10.0
libtpu: 0.0.40
codegen_flags: <defaults>
</compile_context>

<pallas_src>
import functools

import jax
import jax.numpy as jnp
from jax import lax
from jax.experimental import pallas as pl
from jax.experimental.pallas import tpu as pltpu


def _round_up(x, m):
    return ((x + m - 1) // m) * m


# ------------------------------ Pallas kernel ------------------------------ #

def _cnn2l_kernel(ilens_ref, x_ref, w1_ref, b1_ref, w2_ref, b2_ref, out_ref,
                  *, n_frames, tile_t):
    # ilens_ref : (B,)                     int32, SMEM (scalar prefetch)
    # x_ref     : (1, 1, TT+4, (F+2)*Cin)  bf16  time-haloed, freq-padded slab
    #                                            (column index = f_pad*Cin + ci)
    # w1_ref    : (3, (F+2)*Cin, (F+2)*C1) bf16  banded conv1 weights, one per ky
    # b1_ref    : (1, (F+2)*C1)            f32   (zero on the freq-pad columns)
    # w2_ref    : (3, (F+2)*C1, C2*F)      bf16  banded conv2 weights, one per ky
    # b2_ref    : (1, C2*F)                f32
    # out_ref   : (1, TT, C2*F)            f32   channel-major (col = c2*F + f)
    b = pl.program_id(0)
    j = pl.program_id(1)
    TT = tile_t
    T1 = TT + 2
    t0 = j * TT
    seq_len = ilens_ref[b]

    @pl.when(t0 >= seq_len)
    def _skip():
        # Whole tile lies past this utterance: pad_list -> zeros, no conv work.
        out_ref[...] = jnp.zeros_like(out_ref)

    @pl.when(t0 < seq_len)
    def _compute():
        x = x_ref[0, 0]                                      # (TT+4, (F+2)*Cin)

        # ---- conv1 (+ReLU): 3 time-tap banded matmuls, f32 accumulation -----
        a1 = (jnp.dot(x[0:T1], w1_ref[0], preferred_element_type=jnp.float32)
              + jnp.dot(x[1:T1 + 1], w1_ref[1],
                        preferred_element_type=jnp.float32)
              + jnp.dot(x[2:T1 + 2], w1_ref[2],
                        preferred_element_type=jnp.float32)
              + b1_ref[...])
        # Zero h1 rows whose absolute frame index is outside [0, T): this is
        # exactly conv2's zero "same" padding in time (h1[-1] == h1[T] == 0).
        t1_abs = lax.broadcasted_iota(jnp.int32, (T1, 1), 0) + (t0 - 1)
        valid1 = jnp.logical_and(t1_abs >= 0, t1_abs < n_frames)
        h1 = jnp.where(valid1, jnp.maximum(a1, 0.0), 0.0).astype(jnp.bfloat16)

        # ---- conv2 (+ReLU): output columns come out channel-major already ---
        a2 = (jnp.dot(h1[0:TT], w2_ref[0], preferred_element_type=jnp.float32)
              + jnp.dot(h1[1:TT + 1], w2_ref[1],
                        preferred_element_type=jnp.float32)
              + jnp.dot(h1[2:TT + 2], w2_ref[2],
                        preferred_element_type=jnp.float32)
              + b2_ref[...])
        h2 = jnp.maximum(a2, 0.0)

        # ---- pad_list semantics: zero frames at/after this utterance's length
        t2_abs = lax.broadcasted_iota(jnp.int32, (TT, 1), 0) + t0
        mask = (t2_abs < seq_len).astype(h2.dtype)
        out_ref[0] = h2 * mask


# --------------------------------- wrapper ---------------------------------- #

def cnn2l_forward(xs, ilens, params, in_channel=1, tile_t=None):
    """Fused CNN2L forward.

    xs    : (B, T, D) float array with D = in_channel * F.
    ilens : list of per-utterance lengths (each <= T).
    params: {"w1": (3,3,Cin,32) HWIO, "b1": (32,), "w2": (3,3,32,64), "b2": (64,)}

    Returns (feat, ilens) with feat: (B, max(ilens), 64 * F), channel-major
    features (index = c * F + f), frames t >= ilens[b] set to 0.0 — matching
    the PyTorch CNN2L.forward (whose ilens pass through unchanged).
    """
    B, T, D = xs.shape
    assert D % in_channel == 0
    F_ = D // in_channel
    C1 = params["w1"].shape[-1]
    C2 = params["w2"].shape[-1]
    cols_in = (F_ + 2) * in_channel
    cols_h1 = (F_ + 2) * C1
    cols_out = C2 * F_

    # ---- time tiling: TT output frames per grid step, 2-frame input halo ----
    if tile_t is None:
        tile_t = 128
    TT = max(8, _round_up(min(tile_t, _round_up(T, 8)), 8))
    NT = int(pl.cdiv(T, TT))
    T_pad = NT * TT

    # ---- input relayout: (B,T,D) -> freq-padded, channel-minor columns ------
    x = xs.reshape(B, T, in_channel, F_).astype(jnp.float32)
    x = jnp.transpose(x, (0, 1, 3, 2))                       # (B, T, F, Cin)
    x = jnp.pad(x, ((0, 0), (0, 0), (1, 1), (0, 0)))          # freq "same" pad
    x = x.reshape(B, T, cols_in)
    # 2-frame zero halo front/back (covers both convs' time "same" padding),
    # plus zero-fill up to T_pad so every tile is full-size.
    x = jnp.pad(x, ((0, 0), (2, 2 + T_pad - T), (0, 0)))      # (B, T_pad+4, .)
    # Overlapping time tiles (stride TT, width TT+4).  The input is ~64x
    # smaller than the output, so this one gather pass is cheap.
    tidx = jnp.arange(NT)[:, None] * TT + jnp.arange(TT + 4)[None, :]
    x_tiles = x[:, tidx].astype(jnp.bfloat16)                 # (B,NT,TT+4,cols_in)

    # ---- frequency-banded weights (built once; bf16 for the MXU) ------------
    w1 = params["w1"].astype(jnp.float32)                     # (3,3,Cin,C1) HWIO
    w2 = params["w2"].astype(jnp.float32)                     # (3,3,C1,C2)  HWIO
    dx = jnp.arange(3)
    p = jnp.arange(F_ + 2)
    q = jnp.arange(F_ + 2)
    f = jnp.arange(F_)
    # conv1 tap dx connects padded input col p to padded output col q
    # (border output cols q in {0, F+1} stay all-zero -> h1 freq zero-padding).
    ind1 = ((p[None, :, None] == q[None, None, :] - 1 + dx[:, None, None])
            & (q[None, None, :] >= 1) & (q[None, None, :] <= F_)
            ).astype(jnp.float32)                              # (3, F+2, F+2)
    # conv2 tap dx connects padded h1 col p to output frequency f.
    ind2 = (p[None, :, None] == f[None, None, :] + dx[:, None, None]
            ).astype(jnp.float32)                              # (3, F+2, F)
    w1big = jnp.einsum("xpq,yxio->ypiqo", ind1, w1).reshape(3, cols_in, cols_h1)
    w2big = jnp.einsum("xpf,yxio->ypiof", ind2, w2).reshape(3, cols_h1, cols_out)
    qmask = ((q >= 1) & (q <= F_)).astype(jnp.float32)
    b1big = (qmask[:, None] * params["b1"][None, :].astype(jnp.float32)
             ).reshape(1, cols_h1)
    b2big = jnp.repeat(params["b2"].astype(jnp.float32), F_).reshape(1, cols_out)

    ilens_arr = jnp.asarray(ilens, jnp.int32)

    # ---- VMEM budget: double-buffered I/O blocks + weights + intermediates --
    blocks = 2 * ((TT + 4) * cols_in * 2 + TT * cols_out * 4)
    weights = 2 * (3 * cols_in * cols_h1 * 2 + 3 * cols_h1 * cols_out * 2
                   + (cols_h1 + cols_out) * 4)
    interm = (TT + 2) * cols_h1 * 6 + 2 * TT * cols_out * 4
    vmem_limit = min(64 * 1024 * 1024,
                     max(32 * 1024 * 1024,
                         int(1.5 * (blocks + weights + interm)) + (4 << 20)))

    kernel = functools.partial(_cnn2l_kernel, n_frames=T, tile_t=TT)
    out = pl.pallas_call(
        kernel,
        out_shape=jax.ShapeDtypeStruct((B, T_pad, cols_out), jnp.float32),
        grid_spec=pltpu.PrefetchScalarGridSpec(
            num_scalar_prefetch=1,
            grid=(B, NT),
            in_specs=[
                pl.BlockSpec((1, 1, TT + 4, cols_in),
                             lambda b, j, il: (b, j, 0, 0)),
                pl.BlockSpec((3, cols_in, cols_h1), lambda b, j, il: (0, 0, 0)),
                pl.BlockSpec((1, cols_h1), lambda b, j, il: (0, 0)),
                pl.BlockSpec((3, cols_h1, cols_out), lambda b, j, il: (0, 0, 0)),
                pl.BlockSpec((1, cols_out), lambda b, j, il: (0, 0)),
            ],
            out_specs=pl.BlockSpec((1, TT, cols_out),
                                   lambda b, j, il: (b, j, 0)),
        ),
        compiler_params=pltpu.CompilerParams(
            dimension_semantics=("parallel", "parallel"),
            vmem_limit_bytes=vmem_limit),
    )(ilens_arr, x_tiles,
      w1big.astype(jnp.bfloat16), b1big,
      w2big.astype(jnp.bfloat16), b2big)

    t_max = int(max(int(l) for l in ilens))    # pad_list pads to max(ilens)
    return out[:, :t_max], ilens_arr


# ------------------------- pure-JAX reference (check) ----------------------- #

def cnn2l_ref(xs, ilens, params, in_channel=1):
    B, T, D = xs.shape
    F_ = D // in_channel
    C2 = params["w2"].shape[-1]
    x = jnp.transpose(xs.reshape(B, T, in_channel, F_), (0, 1, 3, 2))
    x = x.astype(jnp.float32)
    h = jax.nn.relu(lax.conv_general_dilated(
        x, params["w1"], (1, 1), "SAME",
        dimension_numbers=("NHWC", "HWIO", "NHWC")) + params["b1"])
    h = jax.nn.relu(lax.conv_general_dilated(
        h, params["w2"], (1, 1), "SAME",
        dimension_numbers=("NHWC", "HWIO", "NHWC")) + params["b2"])
    feat = jnp.transpose(h, (0, 1, 3, 2)).reshape(B, T, C2 * F_)
    t_max = int(max(int(l) for l in ilens))
    lens = jnp.asarray(ilens, jnp.int32)
    mask = (jnp.arange(t_max)[None, :, None] < lens[:, None, None]
            ).astype(feat.dtype)
    return feat[:, :t_max] * mask, lens


# ------------------------------ parameter init ------------------------------ #

def init_params(key, in_channel=1, c1=32, c2=64):
    k1, k2, k3, k4 = jax.random.split(key, 4)
    bound1 = 1.0 / float(9 * in_channel) ** 0.5   # PyTorch Conv2d default init
    bound2 = 1.0 / float(9 * c1) ** 0.5
    u = jax.random.uniform
    return {
        "w1": u(k1, (3, 3, in_channel, c1), jnp.float32, -bound1, bound1),
        "b1": u(k2, (c1,), jnp.float32, -bound1, bound1),
        "w2": u(k3, (3, 3, c1, c2), jnp.float32, -bound2, bound2),
        "b2": u(k4, (c2,), jnp.float32, -bound2, bound2),
    }


# ----------------------------------- main ----------------------------------- #

if __name__ == "__main__":
    B, T, D = 2, 24, 16          # D = in_channel * F ; F = 16 frequency bins
    in_channel = 1
    key = jax.random.PRNGKey(0)
    kx, kp = jax.random.split(key)
    xs = jax.random.normal(kx, (B, T, D), jnp.float32)
    ilens = [24, 10]
    params = init_params(kp, in_channel)

    # tile_t=8 -> 3 time tiles: exercises the 2-frame halo, the per-utterance
    # tile skip (utterance 1 is only 10 frames) and the partial-tile masking.
    out, olens = cnn2l_forward(xs, ilens, params, in_channel, tile_t=8)
    out = jax.block_until_ready(out)

    ref, rlens = cnn2l_ref(xs, ilens, params, in_channel)
    assert out.shape == ref.shape, (out.shape, ref.shape)
    assert bool(jnp.array_equal(olens, rlens)), (olens, rlens)
    max_err = float(jnp.max(jnp.abs(out - ref)))
    # bf16 operands on the MXU (f32 accumulation) -> looser-than-f32 tolerance.
    assert bool(jnp.allclose(out, ref, atol=2e-2, rtol=2e-2)), max_err

    print("KERNEL_OK")
</pallas_src>

<mosaic_0001>
module attributes {stable_mosaic.version = 11 : i64} {
  func.func @_cnn2l_kernel(%arg0: i32, %arg1: i32, %arg2: memref<2xi32, #tpu.memory_space<smem>>, %arg3: memref<1x1x12x18xbf16, #tpu.memory_space<vmem>>, %arg4: memref<3x18x576xbf16, #tpu.memory_space<vmem>>, %arg5: memref<1x576xf32, #tpu.memory_space<vmem>>, %arg6: memref<3x576x1024xbf16, #tpu.memory_space<vmem>>, %arg7: memref<1x1024xf32, #tpu.memory_space<vmem>>, %arg8: memref<1x8x1024xf32, #tpu.memory_space<vmem>>) attributes {dimension_semantics = [#tpu.dimension_semantics<parallel>, #tpu.dimension_semantics<parallel>], iteration_bounds = array<i64: 2, 3>, scalar_prefetch = 1 : i64, scratch_operands = 0 : i64, tpu.core_type = #tpu.core_type<tc>, window_params = [{transform_indices = @transform_0, window_bounds = array<i64: 1, 1, 12, 18>}, {pipeline_mode = #tpu.pipeline_mode<synchronous>, transform_indices = @transform_1, window_bounds = array<i64: 3, 18, 576>}, {pipeline_mode = #tpu.pipeline_mode<synchronous>, transform_indices = @transform_2, window_bounds = array<i64: 1, 576>}, {pipeline_mode = #tpu.pipeline_mode<synchronous>, transform_indices = @transform_3, window_bounds = array<i64: 3, 576, 1024>}, {pipeline_mode = #tpu.pipeline_mode<synchronous>, transform_indices = @transform_4, window_bounds = array<i64: 1, 1024>}, {transform_indices = @transform_5, window_bounds = array<i64: 1, 8, 1024>}]} {
    %c8_i32 = arith.constant 8 : i32
    %0 = arith.muli %arg1, %c8_i32 : i32
    %1 = arith.index_cast %arg0 : i32 to index
    %2 = memref.load %arg2[%1] : memref<2xi32, #tpu.memory_space<smem>>
    %3 = arith.cmpi sge, %0, %2 : i32
    %4 = arith.extui %3 : i1 to i32
    %c0_i32 = arith.constant 0 : i32
    %5 = arith.cmpi ne, %4, %c0_i32 : i32
    scf.if %5 {
      %cst = arith.constant 0.000000e+00 : f32
      %9 = vector.broadcast %cst : f32 to vector<1x8x1024xf32>
      %c0 = arith.constant 0 : index
      %c0_1 = arith.constant 0 : index
      %c0_2 = arith.constant 0 : index
      %10 = vector.load %arg8[%c0, %c0_1, %c0_2] : memref<1x8x1024xf32, #tpu.memory_space<vmem>>, vector<1x8x1024xf32>
      tpu.vector_store %arg8[%c0, %c0_1, %c0_2], %9 {strides = array<i32>} : memref<1x8x1024xf32, #tpu.memory_space<vmem>>, vector<1x8x1024xf32>,
    } else {
    }
    %6 = arith.cmpi slt, %0, %2 : i32
    %7 = arith.extui %6 : i1 to i32
    %c0_i32_0 = arith.constant 0 : i32
    %8 = arith.cmpi ne, %7, %c0_i32_0 : i32
    scf.if %8 {
      %c0 = arith.constant 0 : index
      %c0_1 = arith.constant 0 : index
      %c0_2 = arith.constant 0 : index
      %c0_3 = arith.constant 0 : index
      %9 = vector.load %arg3[%c0, %c0_1, %c0_2, %c0_3] : memref<1x1x12x18xbf16, #tpu.memory_space<vmem>>, vector<1x1x12x18xbf16>
      %10 = vector.shape_cast %9 : vector<1x1x12x18xbf16> to vector<12x18xbf16>
      %11 = vector.extract_strided_slice %10 {offsets = [0, 0], sizes = [10, 18], strides = [1, 1]} : vector<12x18xbf16> to vector<10x18xbf16>
      %c0_4 = arith.constant 0 : index
      %c0_5 = arith.constant 0 : index
      %c0_6 = arith.constant 0 : index
      %12 = vector.load %arg4[%c0_4, %c0_5, %c0_6] : memref<3x18x576xbf16, #tpu.memory_space<vmem>>, vector<1x18x576xbf16>
      %13 = vector.shape_cast %12 : vector<1x18x576xbf16> to vector<18x576xbf16>
      %cst = arith.constant dense<0.000000e+00> : vector<10x576xf32>
      %14 = tpu.matmul %11, %13, %cst {dimension_numbers = #tpu.dot_dimension_numbers<[1], [0], [0], [1], [0, 0, 1, 1], [], []>} : vector<10x18xbf16>, vector<18x576xbf16>, vector<10x576xf32> -> vector<10x576xf32>
      %15 = vector.extract_strided_slice %10 {offsets = [1, 0], sizes = [10, 18], strides = [1, 1]} : vector<12x18xbf16> to vector<10x18xbf16>
      %c1 = arith.constant 1 : index
      %c0_7 = arith.constant 0 : index
      %c0_8 = arith.constant 0 : index
      %16 = vector.load %arg4[%c1, %c0_7, %c0_8] : memref<3x18x576xbf16, #tpu.memory_space<vmem>>, vector<1x18x576xbf16>
      %17 = vector.shape_cast %16 : vector<1x18x576xbf16> to vector<18x576xbf16>
      %cst_9 = arith.constant dense<0.000000e+00> : vector<10x576xf32>
      %18 = tpu.matmul %15, %17, %cst_9 {dimension_numbers = #tpu.dot_dimension_numbers<[1], [0], [0], [1], [0, 0, 1, 1], [], []>} : vector<10x18xbf16>, vector<18x576xbf16>, vector<10x576xf32> -> vector<10x576xf32>
      %19 = arith.addf %14, %18 : vector<10x576xf32>
      %20 = vector.extract_strided_slice %10 {offsets = [2, 0], sizes = [10, 18], strides = [1, 1]} : vector<12x18xbf16> to vector<10x18xbf16>
      %c2 = arith.constant 2 : index
      %c0_10 = arith.constant 0 : index
      %c0_11 = arith.constant 0 : index
      %21 = vector.load %arg4[%c2, %c0_10, %c0_11] : memref<3x18x576xbf16, #tpu.memory_space<vmem>>, vector<1x18x576xbf16>
      %22 = vector.shape_cast %21 : vector<1x18x576xbf16> to vector<18x576xbf16>
      %cst_12 = arith.constant dense<0.000000e+00> : vector<10x576xf32>
      %23 = tpu.matmul %20, %22, %cst_12 {dimension_numbers = #tpu.dot_dimension_numbers<[1], [0], [0], [1], [0, 0, 1, 1], [], []>} : vector<10x18xbf16>, vector<18x576xbf16>, vector<10x576xf32> -> vector<10x576xf32>
      %24 = arith.addf %19, %23 : vector<10x576xf32>
      %c0_13 = arith.constant 0 : index
      %c0_14 = arith.constant 0 : index
      %25 = vector.load %arg5[%c0_13, %c0_14] : memref<1x576xf32, #tpu.memory_space<vmem>>, vector<1x576xf32>
      %26 = vector.broadcast %25 : vector<1x576xf32> to vector<10x576xf32>
      %27 = arith.addf %24, %26 : vector<10x576xf32>
      %28 = tpu.iota {dimensions = array<i32: 0>} : vector<10x1xi32>
      %c1_i32 = arith.constant 1 : i32
      %29 = arith.subi %0, %c1_i32 : i32
      %30 = vector.broadcast %29 : i32 to vector<10x1xi32>
      %31 = arith.addi %28, %30 : vector<10x1xi32>
      %c0_i32_15 = arith.constant 0 : i32
      %32 = vector.broadcast %c0_i32_15 : i32 to vector<10x1xi32>
      %33 = arith.cmpi sge, %31, %32 : vector<10x1xi32>
      %c24_i32 = arith.constant 24 : i32
      %34 = vector.broadcast %c24_i32 : i32 to vector<10x1xi32>
      %35 = arith.cmpi slt, %31, %34 : vector<10x1xi32>
      %36 = arith.andi %33, %35 : vector<10x1xi1>
      %cst_16 = arith.constant 0.000000e+00 : f32
      %37 = vector.broadcast %cst_16 : f32 to vector<10x576xf32>
      %38 = arith.maximumf %27, %37 : vector<10x576xf32>
      %cst_17 = arith.constant 0.000000e+00 : f32
      %39 = vector.shape_cast %36 : vector<10x1xi1> to vector<10x1xi1>
      %40 = vector.broadcast %39 : vector<10x1xi1> to vector<10x576xi1>
      %41 = vector.broadcast %cst_17 : f32 to vector<10x576xf32>
      %42 = arith.select %40, %38, %41 : vector<10x576xi1>, vector<10x576xf32>
      %43 = arith.truncf %42 : vector<10x576xf32> to vector<10x576xbf16>
      %44 = vector.extract_strided_slice %43 {offsets = [0, 0], sizes = [8, 576], strides = [1, 1]} : vector<10x576xbf16> to vector<8x576xbf16>
      %c0_18 = arith.constant 0 : index
      %c0_19 = arith.constant 0 : index
      %c0_20 = arith.constant 0 : index
      %45 = vector.load %arg6[%c0_18, %c0_19, %c0_20] : memref<3x576x1024xbf16, #tpu.memory_space<vmem>>, vector<1x576x1024xbf16>
      %46 = vector.shape_cast %45 : vector<1x576x1024xbf16> to vector<576x1024xbf16>
      %cst_21 = arith.constant dense<0.000000e+00> : vector<8x1024xf32>
      %47 = tpu.matmul %44, %46, %cst_21 {dimension_numbers = #tpu.dot_dimension_numbers<[1], [0], [0], [1], [0, 0, 1, 1], [], []>} : vector<8x576xbf16>, vector<576x1024xbf16>, vector<8x1024xf32> -> vector<8x1024xf32>
      %48 = vector.extract_strided_slice %43 {offsets = [1, 0], sizes = [8, 576], strides = [1, 1]} : vector<10x576xbf16> to vector<8x576xbf16>
      %c1_22 = arith.constant 1 : index
      %c0_23 = arith.constant 0 : index
      %c0_24 = arith.constant 0 : index
      %49 = vector.load %arg6[%c1_22, %c0_23, %c0_24] : memref<3x576x1024xbf16, #tpu.memory_space<vmem>>, vector<1x576x1024xbf16>
      %50 = vector.shape_cast %49 : vector<1x576x1024xbf16> to vector<576x1024xbf16>
      %cst_25 = arith.constant dense<0.000000e+00> : vector<8x1024xf32>
      %51 = tpu.matmul %48, %50, %cst_25 {dimension_numbers = #tpu.dot_dimension_numbers<[1], [0], [0], [1], [0, 0, 1, 1], [], []>} : vector<8x576xbf16>, vector<576x1024xbf16>, vector<8x1024xf32> -> vector<8x1024xf32>
      %52 = arith.addf %47, %51 : vector<8x1024xf32>
      %53 = vector.extract_strided_slice %43 {offsets = [2, 0], sizes = [8, 576], strides = [1, 1]} : vector<10x576xbf16> to vector<8x576xbf16>
      %c2_26 = arith.constant 2 : index
      %c0_27 = arith.constant 0 : index
      %c0_28 = arith.constant 0 : index
      %54 = vector.load %arg6[%c2_26, %c0_27, %c0_28] : memref<3x576x1024xbf16, #tpu.memory_space<vmem>>, vector<1x576x1024xbf16>
      %55 = vector.shape_cast %54 : vector<1x576x1024xbf16> to vector<576x1024xbf16>
      %cst_29 = arith.constant dense<0.000000e+00> : vector<8x1024xf32>
      %56 = tpu.matmul %53, %55, %cst_29 {dimension_numbers = #tpu.dot_dimension_numbers<[1], [0], [0], [1], [0, 0, 1, 1], [], []>} : vector<8x576xbf16>, vector<576x1024xbf16>, vector<8x1024xf32> -> vector<8x1024xf32>
      %57 = arith.addf %52, %56 : vector<8x1024xf32>
      %c0_30 = arith.constant 0 : index
      %c0_31 = arith.constant 0 : index
      %58 = vector.load %arg7[%c0_30, %c0_31] : memref<1x1024xf32, #tpu.memory_space<vmem>>, vector<1x1024xf32>
      %59 = vector.broadcast %58 : vector<1x1024xf32> to vector<8x1024xf32>
      %60 = arith.addf %57, %59 : vector<8x1024xf32>
      %cst_32 = arith.constant 0.000000e+00 : f32
      %61 = vector.broadcast %cst_32 : f32 to vector<8x1024xf32>
      %62 = arith.maximumf %60, %61 : vector<8x1024xf32>
      %63 = tpu.iota {dimensions = array<i32: 0>} : vector<8x1xi32>
      %64 = vector.broadcast %0 : i32 to vector<8x1xi32>
      %65 = arith.addi %63, %64 : vector<8x1xi32>
      %66 = vector.broadcast %2 : i32 to vector<8x1xi32>
      %67 = arith.cmpi slt, %65, %66 : vector<8x1xi32>
      %68 = arith.extui %67 : vector<8x1xi1> to vector<8x1xi32>
      %69 = arith.sitofp %68 : vector<8x1xi32> to vector<8x1xf32>
      %70 = vector.broadcast %69 : vector<8x1xf32> to vector<8x1024xf32>
      %71 = arith.mulf %62, %70 : vector<8x1024xf32>
      %c0_33 = arith.constant 0 : index
      %c0_34 = arith.constant 0 : index
      %c0_35 = arith.constant 0 : index
      %72 = vector.load %arg8[%c0_33, %c0_34, %c0_35] : memref<1x8x1024xf32, #tpu.memory_space<vmem>>, vector<1x8x1024xf32>
      %73 = vector.shape_cast %72 : vector<1x8x1024xf32> to vector<8x1024xf32>
      %74 = vector.shape_cast %71 : vector<8x1024xf32> to vector<1x8x1024xf32>
      tpu.vector_store %arg8[%c0_33, %c0_34, %c0_35], %74 {strides = array<i32>} : memref<1x8x1024xf32, #tpu.memory_space<vmem>>, vector<1x8x1024xf32>,
    } else {
    }
    return
  }
  func.func @transform_0(%arg0: i32, %arg1: i32, %arg2: memref<2xi32, #tpu.memory_space<smem>>) -> (i32, i32, i32, i32) {
    %c0_i32 = arith.constant 0 : i32
    %c0_i32_0 = arith.constant 0 : i32
    %c0_i32_1 = arith.constant 0 : i32
    return %arg0, %arg1, %c0_i32, %c0_i32_0 : i32, i32, i32, i32
  }
  func.func @transform_1(%arg0: i32, %arg1: i32, %arg2: memref<2xi32, #tpu.memory_space<smem>>) -> (i32, i32, i32) {
    %c0_i32 = arith.constant 0 : i32
    %c0_i32_0 = arith.constant 0 : i32
    %c0_i32_1 = arith.constant 0 : i32
    %c0_i32_2 = arith.constant 0 : i32
    return %c0_i32, %c0_i32_0, %c0_i32_1 : i32, i32, i32
  }
  func.func @transform_2(%arg0: i32, %arg1: i32, %arg2: memref<2xi32, #tpu.memory_space<smem>>) -> (i32, i32) {
    %c0_i32 = arith.constant 0 : i32
    %c0_i32_0 = arith.constant 0 : i32
    %c0_i32_1 = arith.constant 0 : i32
    return %c0_i32, %c0_i32_0 : i32, i32
  }
  func.func @transform_3(%arg0: i32, %arg1: i32, %arg2: memref<2xi32, #tpu.memory_space<smem>>) -> (i32, i32, i32) {
    %c0_i32 = arith.constant 0 : i32
    %c0_i32_0 = arith.constant 0 : i32
    %c0_i32_1 = arith.constant 0 : i32
    %c0_i32_2 = arith.constant 0 : i32
    return %c0_i32, %c0_i32_0, %c0_i32_1 : i32, i32, i32
  }
  func.func @transform_4(%arg0: i32, %arg1: i32, %arg2: memref<2xi32, #tpu.memory_space<smem>>) -> (i32, i32) {
    %c0_i32 = arith.constant 0 : i32
    %c0_i32_0 = arith.constant 0 : i32
    %c0_i32_1 = arith.constant 0 : i32
    return %c0_i32, %c0_i32_0 : i32, i32
  }
  func.func @transform_5(%arg0: i32, %arg1: i32, %arg2: memref<2xi32, #tpu.memory_space<smem>>) -> (i32, i32, i32) {
    %c0_i32 = arith.constant 0 : i32
    %c0_i32_0 = arith.constant 0 : i32
    return %arg0, %arg1, %c0_i32 : i32, i32, i32
  }
}

</mosaic_0001>

<llo_original>
// kernel: tpu_custom_call.1
$region0: #{tpu_custom_call.1}
  #allocation0 [shape = 'u32[]', space=smem, size = 0x4, offset = 0x4, fixed_abs, tag = 'smem constant byte address 0x4 - core index']
  #allocation1 [shape = 'u32[144,128]{1,0:T(1,128)}', space=vmem, size = 0x12000, scoped, tag = 'internal scratch']
  #allocation2 [shape = 's32[1]{0}', space=sflag, size = 0x4, scoped, tag = 'scoped memory for tpu_custom_call.1']
  #allocation3 [shape = 'u8[512]{0}', space=smem, size = 0x200, scoped, tag = 'prefetched SMEM operand 0']
  %s0 = inlined_call_operand.hbm [shape: s32[2], index: 0, kind: input, shape index: {}]
  %s1 = inlined_call_operand.vmem [shape: bf16[2,3,12,18], index: 1, kind: input, shape index: {}]
  %s2 = inlined_call_operand.hbm [shape: bf16[3,18,576], index: 2, kind: input, shape index: {}]
  %s3 = inlined_call_operand.hbm [shape: f32[1,576], index: 3, kind: input, shape index: {}]
  %s4 = inlined_call_operand.hbm [shape: bf16[3,576,1024], index: 4, kind: input, shape index: {}]
  %s5 = inlined_call_operand.hbm [shape: f32[1,1024], index: 5, kind: input, shape index: {}]
  %s6 = inlined_call_operand.hbm [shape: f32[2,24,1024], index: 6, kind: output, shape index: {}]
  %s7 = sld [smem:[#allocation0]]
  $region77: #{tpu_custom_call.1} parent=0
    _
  %s9 = ssub.s32 1, %s7
  %s10 = scalar_select 0, %s9, %s7
  %12 = dma.hbm_to_smem %s0, 16, [#allocation3], [#allocation2]
  %13 = dma.done [#allocation2], 16
  %14 = sfence
  $region1: #{tpu_custom_call.1} parent=0
    #allocation4 [shape = 'u8[92160]{0}', space=vmem, size = 0x16800, scoped, tag = 'input window, operand 2, single buffered']
    #allocation5 [shape = 's32[2]{0}', space=sflag, size = 0x8, scoped, tag = 'scoped memory for tpu_custom_call.1']
    #allocation6 [shape = 's32[2]{0}', space=sflag, size = 0x8, scoped, tag = 'scoped memory for tpu_custom_call.1']
    #allocation7 [shape = 'u8[2560]{0}', space=vmem, size = 0xc00, scoped, tag = 'input window, operand 3, single buffered']
    #allocation8 [shape = 's32[1]{0}', space=sflag, size = 0x4, scoped, tag = 'scoped memory for tpu_custom_call.1']
    #allocation9 [shape = 'u8[3538944]{0}', space=vmem, size = 0x360000, scoped, tag = 'input window, operand 4, single buffered']
    #allocation10 [shape = 'u8[4096]{0}', space=vmem, size = 0x1000, scoped, tag = 'input window, operand 5, single buffered']
    #allocation11 [shape = 's32[1]{0}', space=sflag, size = 0x4, scoped, tag = 'scoped memory for tpu_custom_call.1']
    #allocation12 [shape = 'u8[65536]{0}', space=vmem, size = 0x10000, scoped, tag = 'output window, operand 0']
    %15 = vsyncpa [#allocation5], 0
    %16 = vsyncpa [#allocation8], 0
    %17 = vsyncpa [#allocation11], 0
    %18 = vsyncpa [#allocation6], 0
    %s19 = scalar_lea.sflag [#allocation6], 1
    %20 = vsyncpa %s19, 0
    loop: start=0, step=1, limit=8
    $region2: #{tpu_custom_call.1} parent=1 // loop_pre_header
      _
    $region3: #{tpu_custom_call.1} parent=1 // loop_header
      %s22 = sphi 0, %s26
      %p23 = scmp.ge.s32.totalorder %s22, 8
      %s29 = sphi 0, %s41
      %s30 = sphi 0, %s37
      %s31 = sphi 0, %s29
      %s32 = sphi 0, %s30
      %s33 = sphi 0, %s31
      %s34 = sphi 0, %s32
      %s46 = sphi 0, %s48
      %s49 = sphi 0, %s46
      %s50 = sphi 0, %s49
      %s66 = sphi 0, %s50
      %s70 = sphi 0, %s70
      %s72 = sphi 0, %s70
      %s73 = sphi 0, %s72
      %s87 = sphi 0, %s73
      %s91 = sphi 0, %s91
      %s93 = sphi 0, %s91
      %s94 = sphi 0, %s93
      %s108 = sphi 0, %s94
      %s112 = sphi 0, %s112
      %s114 = sphi 0, %s112
      %s115 = sphi 0, %s114
      %s129 = sphi 0, %s115
      %s133 = sphi 0, %s133
      %s135 = sphi 0, %s133
      %s136 = sphi 0, %s135
      %s150 = sphi 0, %s136
      %s158 = sphi 0, %s160
      %s161 = sphi 0, %s158
      %s162 = sphi 0, %s161
      %s178 = sphi 0, %s162
    $region4: #{tpu_custom_call.1} parent=1 // loop_header_branch
      %25 = sbr.rel (%p23) target = $region8
    $region5: #{tpu_custom_call.1} parent=1 // loop_body
      %s27 = ssub.s32 %s22, 1
      %s28 = ssub.s32 %s22, 2
      %s35 = sadd.s32 1, %s30
      %p36 = scmp.ge.s32.totalorder %s35, 3
      %s37 = scalar_select %p36, 0, %s35
      %s38 = sadd.s32 1, %s29
      %s39 = scalar_select %p36, %s38, %s29
      %p40 = scmp.ge.s32.totalorder %s39, 2
      %s41 = scalar_select %p40, 0, %s39
      %s42 = ssub.s32 %s29, %s41
      %s43 = ssub.s32 %s30, %s37
      %s44 = sor.u32 %s42, %s43
      %p45 = scmp.eq.s32.totalorder %s44, 0
      %s47 = sadd.s32 %s46, 1
      %s48 = scalar_select %p45, %s46, %s47
      %p51 = pneg %p45
      %p52 = scmp.eq.s32.totalorder %s22, 5
      %p53 = por %p51, %p52
      %p54 = scmp.ne.s32.totalorder %s46, %s49
      %p55 = scmp.eq.s32.totalorder %s22, 0
      %p56 = por %p54, %p55
      %p57 = scmp.ne.s32.totalorder %s46, %s49
      %p58 = scmp.eq.s32.totalorder %s27, 5
      %p59 = por %p57, %p58
      %p60 = scmp.ne.s32.totalorder %s49, %s50
      %p61 = scmp.eq.s32.totalorder %s27, 0
      %p62 = por %p60, %p61
      %p63 = scmp.ne.s32.totalorder %s49, %s50
      %p64 = scmp.eq.s32.totalorder %s28, 5
      %p65 = por %p63, %p64
      %p67 = scmp.ne.s32.totalorder %s50, %s66
      %p68 = scmp.eq.s32.totalorder %s28, 0
      %p69 = por %p67, %p68
      %s71 = sadd.s32 %s70, 1
      %p74 = scmp.eq.s32.totalorder %s22, 5
      %p75 = scmp.ne.s32.totalorder %s70, %s72
      %p76 = scmp.eq.s32.totalorder %s22, 0
      %p77 = por %p75, %p76
      %p78 = scmp.ne.s32.totalorder %s70, %s72
      %p79 = scmp.eq.s32.totalorder %s27, 5
      %p80 = por %p78, %p79
      %p81 = scmp.ne.s32.totalorder %s72, %s73
      %p82 = scmp.eq.s32.totalorder %s27, 0
      %p83 = por %p81, %p82
      %p84 = scmp.ne.s32.totalorder %s72, %s73
      %p85 = scmp.eq.s32.totalorder %s28, 5
      %p86 = por %p84, %p85
      %p88 = scmp.ne.s32.totalorder %s73, %s87
      %p89 = scmp.eq.s32.totalorder %s28, 0
      %p90 = por %p88, %p89
      %s92 = sadd.s32 %s91, 1
      %p95 = scmp.eq.s32.totalorder %s22, 5
      %p96 = scmp.ne.s32.totalorder %s91, %s93
      %p97 = scmp.eq.s32.totalorder %s22, 0
      %p98 = por %p96, %p97
      %p99 = scmp.ne.s32.totalorder %s91, %s93
      %p100 = scmp.eq.s32.totalorder %s27, 5
      %p101 = por %p99, %p100
      %p102 = scmp.ne.s32.totalorder %s93, %s94
      %p103 = scmp.eq.s32.totalorder %s27, 0
      %p104 = por %p102, %p103
      %p105 = scmp.ne.s32.totalorder %s93, %s94
      %p106 = scmp.eq.s32.totalorder %s28, 5
      %p107 = por %p105, %p106
      %p109 = scmp.ne.s32.totalorder %s94, %s108
      %p110 = scmp.eq.s32.totalorder %s28, 0
      %p111 = por %p109, %p110
      %s113 = sadd.s32 %s112, 1
      %p116 = scmp.eq.s32.totalorder %s22, 5
      %p117 = scmp.ne.s32.totalorder %s112, %s114
      %p118 = scmp.eq.s32.totalorder %s22, 0
      %p119 = por %p117, %p118
      %p120 = scmp.ne.s32.totalorder %s112, %s114
      %p121 = scmp.eq.s32.totalorder %s27, 5
      %p122 = por %p120, %p121
      %p123 = scmp.ne.s32.totalorder %s114, %s115
      %p124 = scmp.eq.s32.totalorder %s27, 0
      %p125 = por %p123, %p124
      %p126 = scmp.ne.s32.totalorder %s114, %s115
      %p127 = scmp.eq.s32.totalorder %s28, 5
      %p128 = por %p126, %p127
      %p130 = scmp.ne.s32.totalorder %s115, %s129
      %p131 = scmp.eq.s32.totalorder %s28, 0
      %p132 = por %p130, %p131
      %s134 = sadd.s32 %s133, 1
      %p137 = scmp.eq.s32.totalorder %s22, 5
      %p138 = scmp.ne.s32.totalorder %s133, %s135
      %p139 = scmp.eq.s32.totalorder %s22, 0
      %p140 = por %p138, %p139
      %p141 = scmp.ne.s32.totalorder %s133, %s135
      %p142 = scmp.eq.s32.totalorder %s27, 5
      %p143 = por %p141, %p142
      %p144 = scmp.ne.s32.totalorder %s135, %s136
      %p145 = scmp.eq.s32.totalorder %s27, 0
      %p146 = por %p144, %p145
      %p147 = scmp.ne.s32.totalorder %s135, %s136
      %p148 = scmp.eq.s32.totalorder %s28, 5
      %p149 = por %p147, %p148
      %p151 = scmp.ne.s32.totalorder %s136, %s150
      %p152 = scmp.eq.s32.totalorder %s28, 0
      %p153 = por %p151, %p152
      %s154 = ssub.s32 %s29, %s41
      %s155 = ssub.s32 %s30, %s37
      %s156 = sor.u32 %s154, %s155
      %p157 = scmp.eq.s32.totalorder %s156, 0
      %s159 = sadd.s32 %s158, 1
      %s160 = scalar_select %p157, %s158, %s159
      %p163 = pneg %p157
      %p164 = scmp.eq.s32.totalorder %s22, 5
      %p165 = por %p163, %p164
      %p166 = scmp.ne.s32.totalorder %s158, %s161
      %p167 = scmp.eq.s32.totalorder %s22, 0
      %p168 = por %p166, %p167
      %p169 = scmp.ne.s32.totalorder %s158, %s161
      %p170 = scmp.eq.s32.totalorder %s27, 5
      %p171 = por %p169, %p170
      %p172 = scmp.ne.s32.totalorder %s161, %s162
      %p173 = scmp.eq.s32.totalorder %s27, 0
      %p174 = por %p172, %p173
      %p175 = scmp.ne.s32.totalorder %s161, %s162
      %p176 = scmp.eq.s32.totalorder %s28, 5
      %p177 = por %p175, %p176
      %p179 = scmp.ne.s32.totalorder %s162, %s178
      %p180 = scmp.eq.s32.totalorder %s28, 0
      %p181 = por %p179, %p180
      %p182 = scmp.le.s32.totalorder 1, %s22
      %p183 = scmp.lt.s32.totalorder %s22, 7
      %p184 = pnand %p182, %p183
      %p185 = pneg %p184
      // Predicated region
      $region9: #{tpu_custom_call.1} parent=5 // pred_check
        _
      $region10: #{tpu_custom_call.1} parent=5 // pred_check_branch
        %187 = sbr.rel (%p184) target = $region12
      $region11: #{tpu_custom_call.1} parent=5 // pred_region
        %s188 = ssub.s32 %s22, 1
        // Predicated region
        $region13: #{tpu_custom_call.1} parent=11 // pred_check
          %p189 = pneg %p83
        $region14: #{tpu_custom_call.1} parent=11 // pred_check_branch
          %191 = sbr.rel (%p189) target = $region16
        $region15: #{tpu_custom_call.1} parent=11 // pred_region
          %s193 = ssub.s32 2880, 2880
          %194 = vsyncadd [#allocation5], %s193
          %s195 = sshll.u32 [#allocation4], 4
          %s196 = int_to_ptr.vmem [resolvable:$true] %s195
          %201 = dma.hbm_to_vmem [thread:$0]  %s2, 2880, %s196, [#allocation5], 320, 320, 20
        $region16: #{tpu_custom_call.1} parent=11 // pred_fallthru
          _
        // Predicated region
        $region17: #{tpu_custom_call.1} parent=11 // pred_check
          %p202 = pneg %p104
        $region18: #{tpu_custom_call.1} parent=11 // pred_check_branch
          %204 = sbr.rel (%p202) target = $region20
        $region19: #{tpu_custom_call.1} parent=11 // pred_region
          %s206 = ssub.s32 80, 80
          %207 = vsyncadd [#allocation8], %s206
          %s209 = sshll.u32 [#allocation7], 4
          %s210 = int_to_ptr.vmem [resolvable:$true] %s209
          %212 = dma.hbm_to_vmem [thread:$0]  %s3, 80, %s210, [#allocation8]
        $region20: #{tpu_custom_call.1} parent=11 // pred_fallthru
          _
        // Predicated region
        $region21: #{tpu_custom_call.1} parent=11 // pred_check
          %p213 = pneg %p125
        $region22: #{tpu_custom_call.1} parent=11 // pred_check_branch
          %215 = sbr.rel (%p213) target = $region24
        $region23: #{tpu_custom_call.1} parent=11 // pred_region
          %s217 = ssub.s32 110592, 110592
          %218 = vsyncadd [#allocation8], %s217
          %s219 = sshll.u32 [#allocation9], 4
          %s220 = int_to_ptr.vmem [resolvable:$true] %s219
          %225 = dma.hbm_to_vmem [thread:$0]  %s4, 110592, %s220, [#allocation8], 512, 512, 32
        $region24: #{tpu_custom_call.1} parent=11 // pred_fallthru
          _
        // Predicated region
        $region25: #{tpu_custom_call.1} parent=11 // pred_check
          %p226 = pneg %p146
        $region26: #{tpu_custom_call.1} parent=11 // pred_check_branch
          %228 = sbr.rel (%p226) target = $region28
        $region27: #{tpu_custom_call.1} parent=11 // pred_region
          %s230 = ssub.s32 128, 128
          %231 = vsyncadd [#allocation11], %s230
          %s233 = sshll.u32 [#allocation10], 4
          %s234 = int_to_ptr.vmem [resolvable:$true] %s233
          %236 = dma.hbm_to_vmem [thread:$0]  %s5, 128, %s234, [#allocation11]
        $region28: #{tpu_custom_call.1} parent=11 // pred_fallthru
          _
      $region12: #{tpu_custom_call.1} parent=5 // pred_fallthru
        _
      %p237 = scmp.lt.s32.totalorder %s22, 6
      // Predicated region
      $region29: #{tpu_custom_call.1} parent=5 // pred_check
        %p238 = pneg %p237
      $region30: #{tpu_custom_call.1} parent=5 // pred_check_branch
        %240 = sbr.rel (%p238) target = $region32
      $region31: #{tpu_custom_call.1} parent=5 // pred_region
        // Predicated region
        $region33: #{tpu_custom_call.1} parent=31 // pred_check
          %p241 = pneg %p56
        $region34: #{tpu_custom_call.1} parent=31 // pred_check_branch
          %243 = sbr.rel (%p241) target = $region36
        $region35: #{tpu_custom_call.1} parent=31 // pred_region
          %p244 = scmp.lt.s32.totalorder %s29, 1
          %s245 = scalar_select %p244, %s29, 1
          %p246 = scmp.lt.s32.totalorder %s30, 2
          %s247 = scalar_select %p246, %s30, 2
          %s248 = smul.addr %s247, 2
          %s249 = smul.addr %s245, 6
          %s250 = sadd.s32 %s248, %s249
          %s251 = smul.addr %s250, 4
          %s252 = scalar_lea.vmem %s1, %s251
        $region36: #{tpu_custom_call.1} parent=31 // pred_fallthru
          _
      $region32: #{tpu_custom_call.1} parent=5 // pred_fallthru
        _
      %p253 = scmp.le.s32.totalorder 1, %s22
      %p254 = scmp.lt.s32.totalorder %s22, 7
      %p255 = pnand %p253, %p254
      %p256 = pneg %p255
      // Predicated region
      $region37: #{tpu_custom_call.1} parent=5 // pred_check
        _
      $region38: #{tpu_custom_call.1} parent=5 // pred_check_branch
        %258 = sbr.rel (%p255) target = $region40
      $region39: #{tpu_custom_call.1} parent=5 // pred_region
        %s259 = ssub.s32 %s22, 1
        // Predicated region
        $region41: #{tpu_custom_call.1} parent=39 // pred_check
          %p260 = pneg %p83
        $region42: #{tpu_custom_call.1} parent=39 // pred_check_branch
          %262 = sbr.rel (%p260) target = $region44
        $region43: #{tpu_custom_call.1} parent=39 // pred_region
          %263 = dma.done [#allocation5], 2880
        $region44: #{tpu_custom_call.1} parent=39 // pred_fallthru
          _
        // Predicated region
        $region45: #{tpu_custom_call.1} parent=39 // pred_check
          %p264 = pneg %p104
        $region46: #{tpu_custom_call.1} parent=39 // pred_check_branch
          %266 = sbr.rel (%p264) target = $region48
        $region47: #{tpu_custom_call.1} parent=39 // pred_region
          %267 = dma.done [#allocation8], 80
        $region48: #{tpu_custom_call.1} parent=39 // pred_fallthru
          _
        // Predicated region
        $region49: #{tpu_custom_call.1} parent=39 // pred_check
          %p268 = pneg %p125
        $region50: #{tpu_custom_call.1} parent=39 // pred_check_branch
          %270 = sbr.rel (%p268) target = $region52
        $region51: #{tpu_custom_call.1} parent=39 // pred_region
          %271 = dma.done [#allocation8], 110592
        $region52: #{tpu_custom_call.1} parent=39 // pred_fallthru
          _
        // Predicated region
        $region53: #{tpu_custom_call.1} parent=39 // pred_check
          %p272 = pneg %p146
        $region54: #{tpu_custom_call.1} parent=39 // pred_check_branch
          %274 = sbr.rel (%p272) target = $region56
        $region55: #{tpu_custom_call.1} parent=39 // pred_region
          %275 = dma.done [#allocation11], 128
        $region56: #{tpu_custom_call.1} parent=39 // pred_fallthru
          _
        %p276 = scmp.lt.s32.totalorder %s31, 1
        %s277 = scalar_select %p276, %s31, 1
        %p278 = scmp.lt.s32.totalorder %s32, 2
        %s279 = scalar_select %p278, %s32, 2
        %s280 = smul.addr %s279, 2
        %s281 = smul.addr %s277, 6
        %s282 = sadd.s32 %s280, %s281
        %s283 = smul.addr %s282, 4
        %s284 = scalar_lea.vmem %s1, %s283
        %p285 = pneg %p62
        %p286 = pneg %p59
        %p287 = pneg %p83
        %p288 = pneg %p80
        %p289 = pneg %p104
        %p290 = pneg %p101
        %p291 = pneg %p125
        %p292 = pneg %p122
        %p293 = pneg %p146
        %p294 = pneg %p143
        %p295 = pneg %p174
        %p296 = pneg %p171
        %s297 = sand.u32 %s161, 1
        %s298 = scalar_lea.sflag [#allocation6], %s297
        %s299 = sand.u32 %s161, 1
        %s300 = smul.addr %s299, 64
        %s301 = scalar_lea.vmem [#allocation12], %s300
        %p302 = scmp.lt.s32.totalorder %s31, 1
        %s303 = scalar_select %p302, %s31, 1
        %p304 = scmp.lt.s32.totalorder %s32, 2
        %s305 = scalar_select %p304, %s32, 2
        %s306 = smul.addr %s305, 2
        %s307 = smul.addr %s303, 6
        %s308 = sadd.s32 %s306, %s307
        %s309 = smul.addr %s308, 4
        %s310 = scalar_lea.vmem %s1, %s309
        %s312 = smul.u32 %s32, 8
        %s313 = sld [smem:[#allocation3 + %s31]]
        %p314 = scmp.ge.s32.totalorder %s312, %s313
        // Predicated region
        $region57: #{tpu_custom_call.1} parent=39 // pred_check
          %p315 = pneg %p314
        $region58: #{tpu_custom_call.1} parent=39 // pred_check_branch
          %317 = sbr.rel (%p315) target = $region60
        $region59: #{tpu_custom_call.1} parent=39 // pred_region
          %318 = vst [vmem:[%s301] sm:$0xff] 0.0
          %319 = vst [vmem:[%s301 + $0x8] sm:$0xff] 0.0
          %320 = vst [vmem:[%s301 + $0x10] sm:$0xff] 0.0
          %321 = vst [vmem:[%s301 + $0x18] sm:$0xff] 0.0
          %322 = vst [vmem:[%s301 + $0x20] sm:$0xff] 0.0
          %323 = vst [vmem:[%s301 + $0x28] sm:$0xff] 0.0
          %324 = vst [vmem:[%s301 + $0x30] sm:$0xff] 0.0
          %325 = vst [vmem:[%s301 + $0x38] sm:$0xff] 0.0
        $region60: #{tpu_custom_call.1} parent=39 // pred_fallthru
          _
        %p326 = scmp.lt.s32.totalorder %s312, %s313
        // Predicated region
        $region61: #{tpu_custom_call.1} parent=39 // pred_check
          %p327 = pneg %p326
        $region62: #{tpu_custom_call.1} parent=39 // pred_check_branch
          %329 = sbr.rel (%p327) target = $region64
        $region63: #{tpu_custom_call.1} parent=39 // pred_region
          %v330 = vld [vmem:[%s310] sm:$0xf]
          %v331 = vld [vmem:[%s310 + $0x4] sm:$0x3]
          %v332 = vld [vmem:[#allocation4] sm:$0xff]
          %v333 = vld [vmem:[#allocation4 + $0x8] sm:$0xff]
          %v334 = vld [vmem:[#allocation4 + $0x10] sm:$0xf]
          %v335 = vld [vmem:[#allocation4 + $0x14] sm:$0xff]
          %v336 = vld [vmem:[#allocation4 + $0x1c] sm:$0xff]
          %v337 = vld [vmem:[#allocation4 + $0x24] sm:$0xf]
          %v338 = vld [vmem:[#allocation4 + $0x28] sm:$0x11]
          %v339 = vld [vmem:[#allocation4 + $0x30] sm:$0x11]
          %v340 = vld [vmem:[#allocation4 + $0x38] sm:$0x1]
          %s341 = scalar_lea.vmem [#allocation4], 60
          %v342 = vld [vmem:[%s341] sm:$0xff]
          %v343 = vld [vmem:[%s341 + $0x8] sm:$0xff]
          %v344 = vld [vmem:[%s341 + $0x10] sm:$0xf]
          %v345 = vld [vmem:[%s341 + $0x14] sm:$0xff]
          %v346 = vld [vmem:[%s341 + $0x1c] sm:$0xff]
          %v347 = vld [vmem:[%s341 + $0x24] sm:$0xf]
          %v348 = vld [vmem:[%s341 + $0x28] sm:$0x11]
          %v349 = vld [vmem:[%s341 + $0x30] sm:$0x11]
          %v350 = vld [vmem:[%s341 + $0x38] sm:$0x1]
          %v353 = vunpack.c.l.b16 %v330
          %v354 = vunpack.c.l.b16 %v331
          %v355 = vpack.c.b16 %v354, %v353
          %v357 = vshrl.u32 %v355, 16
          %v359 = vshll.u32 %v355, 16
          %v361 = vrot.slane %v359, 1
          %v362 = vor.u32 %v357, %v361
          %v372 = vunpack.c.l.b16 %v342
          %v373 = vunpack.c.h.b16 %v342
          %v374 = vunpack.c.l.b16 %v343
          %v375 = vunpack.c.h.b16 %v343
          %v376 = vunpack.c.l.b16 %v344
          %v377 = vunpack.c.l.b16 %v345
          %v378 = vunpack.c.h.b16 %v345
          %v379 = vunpack.c.l.b16 %v346
          %v380 = vunpack.c.h.b16 %v346
          %v381 = vunpack.c.l.b16 %v347
          %v382 = vunpack.c.l.b16 %v348
          %v383 = vunpack.c.h.b16 %v348
          %v384 = vunpack.c.l.b16 %v349
          %v385 = vunpack.c.h.b16 %v349
          %v386 = vunpack.c.l.b16 %v350
          %v387 = vpack.c.b16 %v377, %v372
          %v388 = vpack.c.b16 %v378, %v373
          %v389 = vpack.c.b16 %v379, %v374
          %v390 = vpack.c.b16 %v380, %v375
          %v391 = vpack.c.b16 %v381, %v376
          %v392 = vpack.c.b16 %v382, %v382
          %v393 = vpack.c.b16 %v383, %v383
          %v394 = vpack.c.b16 %v384, %v384
          %v395 = vpack.c.b16 %v385, %v385
          %v396 = vpack.c.b16 %v386, %v386
          %vm402 = vcmask 146432
          %v404 = vsel %vm402, %v362, 0
          %vm406 = vcmask 1040384
          %v408 = vsel %vm406, %v392, 0
          %v411 = vsel %vm406, %v393, 0
          %v414 = vsel %vm406, %v394, 0
          %v417 = vsel %vm406, %v395, 0
          %v420 = vsel %vm406, %v396, 0
          %422 = vmatprep.subr.bf16.mxu0 0
          %423 = vmatpush1.bf16.msra.mxu0 0
          %424 = vmatprep.subr.bf16.mxu0 0
          %425 = vmatpush1.bf16.msra.mxu0 0
          %426 = vmatprep.subr.bf16.mxu0 0
          %427 = vmatpush1.bf16.msra.mxu0 0
          %428 = vmatprep.subr.bf16.mxu0 0
          %429 = vmatpush1.bf16.msra.mxu0 0
          %430 = vmatprep.subr.bf16.mxu0 0
          %431 = vmatpush1.bf16.msra.mxu0 0
          %432 = vmatprep.subr.bf16.mxu0 0
          %433 = vmatpush1.bf16.msra.mxu0 0
          %434 = vmatprep.subr.bf16.mxu0 %v411
          %435 = vmatpush1.bf16.msra.mxu0 %v408
          %436 = vmatprep.subr.bf16.mxu0 %v388
          %437 = vmatpush1.bf16.msra.mxu0 %v387
          %438 = vmatprep.subr.bf16.mxu0 0
          %439 = vmatpush2.bf16.msra.mxu0 0
          %440 = vmatprep.subr.bf16.mxu0 0
          %441 = vmatpush2.bf16.msra.mxu0 0
          %442 = vmatprep.subr.bf16.mxu0 0
          %443 = vmatpush2.bf16.msra.mxu0 0
          %444 = vmatprep.subr.bf16.mxu0 0
          %445 = vmatpush2.bf16.msra.mxu0 0
          %446 = vmatprep.subr.bf16.mxu0 0
          %447 = vmatpush2.bf16.msra.mxu0 0
          %448 = vmatprep.subr.bf16.mxu0 0
          %449 = vmatpush2.bf16.msra.mxu0 0
          %450 = vmatprep.subr.bf16.mxu0 0
          %451 = vmatpush2.bf16.msra.mxu0 0
          %452 = vmatprep.subr.bf16.mxu0 0
          %453 = vmatpush2.bf16.msra.mxu0 0
          %454 = vmatprep.mubr.bf16.mxu0 0
          %455 = vmatmul.mubr.bf16.gmra.mxu0 %v404
          %v456 = vpop.f32.mrf.mxu0
          %v457 = vadd.f32 0.0, %v456
          %v458 = vpop.f32.mrf.mxu0
          %v459 = vadd.f32 0.0, %v458
          %v460 = vpop.f32.mrf.mxu0
          %v461 = vadd.f32 0.0, %v460
          %v462 = vpop.f32.mrf.mxu0
          %v463 = vadd.f32 0.0, %v462
          %464 = vdwg.mxu0
          %465 = vmatprep.subr.bf16.mxu0 0
          %466 = vmatpush1.bf16.msra.mxu0 0
          %467 = vmatprep.subr.bf16.mxu0 0
          %468 = vmatpush1.bf16.msra.mxu0 0
          %469 = vmatprep.subr.bf16.mxu0 0
          %470 = vmatpush1.bf16.msra.mxu0 0
          %471 = vmatprep.subr.bf16.mxu0 0
          %472 = vmatpush1.bf16.msra.mxu0 0
          %473 = vmatprep.subr.bf16.mxu0 0
          %474 = vmatpush1.bf16.msra.mxu0 0
          %475 = vmatprep.subr.bf16.mxu0 0
          %476 = vmatpush1.bf16.msra.mxu0 0
          %477 = vmatprep.subr.bf16.mxu0 %v417
          %478 = vmatpush1.bf16.msra.mxu0 %v414
          %479 = vmatprep.subr.bf16.mxu0 %v390
          %480 = vmatpush1.bf16.msra.mxu0 %v389
          %481 = vmatprep.subr.bf16.mxu0 0
          %482 = vmatpush2.bf16.msra.mxu0 0
          %483 = vmatprep.subr.bf16.mxu0 0
          %484 = vmatpush2.bf16.msra.mxu0 0
          %485 = vmatprep.subr.bf16.mxu0 0
          %486 = vmatpush2.bf16.msra.mxu0 0
          %487 = vmatprep.subr.bf16.mxu0 0
          %488 = vmatpush2.bf16.msra.mxu0 0
          %489 = vmatprep.subr.bf16.mxu0 0
          %490 = vmatpush2.bf16.msra.mxu0 0
          %491 = vmatprep.subr.bf16.mxu0 0
          %492 = vmatpush2.bf16.msra.mxu0 0
          %493 = vmatprep.subr.bf16.mxu0 0
          %494 = vmatpush2.bf16.msra.mxu0 0
          %495 = vmatprep.subr.bf16.mxu0 0
          %496 = vmatpush2.bf16.msra.mxu0 0
          %497 = vmatprep.mubr.bf16.mxu0 0
          %498 = vmatmul.mubr.bf16.gmra.mxu0 %v404
          %v499 = vpop.f32.mrf.mxu0
          %v500 = vadd.f32 0.0, %v499
          %v501 = vpop.f32.mrf.mxu0
          %v502 = vadd.f32 0.0, %v501
          %v503 = vpop.f32.mrf.mxu0
          %v504 = vadd.f32 0.0, %v503
          %v505 = vpop.f32.mrf.mxu0
          %v506 = vadd.f32 0.0, %v505
          %507 = vdwg.mxu0
          %508 = vmatprep.subr.bf16.mxu0 0
          %509 = vmatpush1.bf16.msra.mxu0 0
          %510 = vmatprep.subr.bf16.mxu0 0
          %511 = vmatpush1.bf16.msra.mxu0 0
          %512 = vmatprep.subr.bf16.mxu0 0
          %513 = vmatpush1.bf16.msra.mxu0 0
          %514 = vmatprep.subr.bf16.mxu0 0
          %515 = vmatpush1.bf16.msra.mxu0 0
          %516 = vmatprep.subr.bf16.mxu0 0
          %517 = vmatpush1.bf16.msra.mxu0 0
          %518 = vmatprep.subr.bf16.mxu0 0
          %519 = vmatpush1.bf16.msra.mxu0 0
          %520 = vmatprep.subr.bf16.mxu0 0
          %521 = vmatpush1.bf16.msra.mxu0 %v420
          %522 = vmatprep.subr.bf16.mxu0 0
          %523 = vmatpush1.bf16.msra.mxu0 %v391
          %524 = vmatprep.subr.bf16.mxu0 0
          %525 = vmatpush2.bf16.msra.mxu0 0
          %526 = vmatprep.subr.bf16.mxu0 0
          %527 = vmatpush2.bf16.msra.mxu0 0
          %528 = vmatprep.subr.bf16.mxu0 0
          %529 = vmatpush2.bf16.msra.mxu0 0
          %530 = vmatprep.subr.bf16.mxu0 0
          %531 = vmatpush2.bf16.msra.mxu0 0
          %532 = vmatprep.subr.bf16.mxu0 0
          %533 = vmatpush2.bf16.msra.mxu0 0
          %534 = vmatprep.subr.bf16.mxu0 0
          %535 = vmatpush2.bf16.msra.mxu0 0
          %536 = vmatprep.subr.bf16.mxu0 0
          %537 = vmatpush2.bf16.msra.mxu0 0
          %538 = vmatprep.subr.bf16.mxu0 0
          %539 = vmatpush2.bf16.msra.mxu0 0
          %540 = vmatprep.mubr.bf16.mxu0 0
          %541 = vmatmul.mubr.bf16.gmra.mxu0 %v404
          %v542 = vpop.f32.mrf.mxu0
          %v543 = vadd.f32 0.0, %v542
          %v544 = vpop.f32.mrf.mxu0
          %v545 = vpop.f32.mrf.mxu0
          %v546 = vadd.f32 0.0, %v545
          %v547 = vpop.f32.mrf.mxu0
          %548 = vdwg.mxu0
          %v558 = vunpack.c.l.b16 %v332
          %v559 = vunpack.c.h.b16 %v332
          %v560 = vunpack.c.l.b16 %v333
          %v561 = vunpack.c.h.b16 %v333
          %v562 = vunpack.c.l.b16 %v334
          %v563 = vunpack.c.l.b16 %v335
          %v564 = vunpack.c.h.b16 %v335
          %v565 = vunpack.c.l.b16 %v336
          %v566 = vunpack.c.h.b16 %v336
          %v567 = vunpack.c.l.b16 %v337
          %v568 = vunpack.c.l.b16 %v338
          %v569 = vunpack.c.h.b16 %v338
          %v570 = vunpack.c.l.b16 %v339
          %v571 = vunpack.c.h.b16 %v339
          %v572 = vunpack.c.l.b16 %v340
          %v573 = vpack.c.b16 %v563, %v558
          %v574 = vpack.c.b16 %v564, %v559
          %v575 = vpack.c.b16 %v565, %v560
          %v576 = vpack.c.b16 %v566, %v561
          %v577 = vpack.c.b16 %v567, %v562
          %v578 = vpack.c.b16 %v568, %v568
          %v579 = vpack.c.b16 %v569, %v569
          %v580 = vpack.c.b16 %v570, %v570
          %v581 = vpack.c.b16 %v571, %v571
          %v582 = vpack.c.b16 %v572, %v572
          %v588 = vsel %vm402, %v355, 0
          %v591 = vsel %vm406, %v578, 0
          %v594 = vsel %vm406, %v579, 0
          %v597 = vsel %vm406, %v580, 0
          %v600 = vsel %vm406, %v581, 0
          %v603 = vsel %vm406, %v582, 0
          %605 = vmatprep.subr.bf16.mxu0 0
          %606 = vmatpush1.bf16.msra.mxu0 0
          %607 = vmatprep.subr.bf16.mxu0 0
          %608 = vmatpush1.bf16.msra.mxu0 0
          %609 = vmatprep.subr.bf16.mxu0 0
          %610 = vmatpush1.bf16.msra.mxu0 0
          %611 = vmatprep.subr.bf16.mxu0 0
          %612 = vmatpush1.bf16.msra.mxu0 0
          %613 = vmatprep.subr.bf16.mxu0 0
          %614 = vmatpush1.bf16.msra.mxu0 0
          %615 = vmatprep.subr.bf16.mxu0 0
          %616 = vmatpush1.bf16.msra.mxu0 0
          %617 = vmatprep.subr.bf16.mxu0 %v594
          %618 = vmatpush1.bf16.msra.mxu0 %v591
          %619 = vmatprep.subr.bf16.mxu0 %v574
          %620 = vmatpush1.bf16.msra.mxu0 %v573
          %621 = vmatprep.subr.bf16.mxu0 0
          %622 = vmatpush2.bf16.msra.mxu0 0
          %623 = vmatprep.subr.bf16.mxu0 0
          %624 = vmatpush2.bf16.msra.mxu0 0
          %625 = vmatprep.subr.bf16.mxu0 0
          %626 = vmatpush2.bf16.msra.mxu0 0
          %627 = vmatprep.subr.bf16.mxu0 0
          %628 = vmatpush2.bf16.msra.mxu0 0
          %629 = vmatprep.subr.bf16.mxu0 0
          %630 = vmatpush2.bf16.msra.mxu0 0
          %631 = vmatprep.subr.bf16.mxu0 0
          %632 = vmatpush2.bf16.msra.mxu0 0
          %633 = vmatprep.subr.bf16.mxu0 0
          %634 = vmatpush2.bf16.msra.mxu0 0
          %635 = vmatprep.subr.bf16.mxu0 0
          %636 = vmatpush2.bf16.msra.mxu0 0
          %637 = vmatprep.mubr.bf16.mxu0 0
          %638 = vmatmul.mubr.bf16.gmra.mxu0 %v588
          %v639 = vpop.f32.mrf.mxu0
          %v640 = vadd.f32 %v457, %v639
          %v641 = vpop.f32.mrf.mxu0
          %v642 = vadd.f32 %v459, %v641
          %v643 = vpop.f32.mrf.mxu0
          %v644 = vadd.f32 %v461, %v643
          %v645 = vpop.f32.mrf.mxu0
          %v646 = vadd.f32 %v463, %v645
          %647 = vdwg.mxu0
          %648 = vmatprep.subr.bf16.mxu0 0
          %649 = vmatpush1.bf16.msra.mxu0 0
          %650 = vmatprep.subr.bf16.mxu0 0
          %651 = vmatpush1.bf16.msra.mxu0 0
          %652 = vmatprep.subr.bf16.mxu0 0
          %653 = vmatpush1.bf16.msra.mxu0 0
          %654 = vmatprep.subr.bf16.mxu0 0
          %655 = vmatpush1.bf16.msra.mxu0 0
          %656 = vmatprep.subr.bf16.mxu0 0
          %657 = vmatpush1.bf16.msra.mxu0 0
          %658 = vmatprep.subr.bf16.mxu0 0
          %659 = vmatpush1.bf16.msra.mxu0 0
          %660 = vmatprep.subr.bf16.mxu0 %v600
          %661 = vmatpush1.bf16.msra.mxu0 %v597
          %662 = vmatprep.subr.bf16.mxu0 %v576
          %663 = vmatpush1.bf16.msra.mxu0 %v575
          %664 = vmatprep.subr.bf16.mxu0 0
          %665 = vmatpush2.bf16.msra.mxu0 0
          %666 = vmatprep.subr.bf16.mxu0 0
          %667 = vmatpush2.bf16.msra.mxu0 0
          %668 = vmatprep.subr.bf16.mxu0 0
          %669 = vmatpush2.bf16.msra.mxu0 0
          %670 = vmatprep.subr.bf16.mxu0 0
          %671 = vmatpush2.bf16.msra.mxu0 0
          %672 = vmatprep.subr.bf16.mxu0 0
          %673 = vmatpush2.bf16.msra.mxu0 0
          %674 = vmatprep.subr.bf16.mxu0 0
          %675 = vmatpush2.bf16.msra.mxu0 0
          %676 = vmatprep.subr.bf16.mxu0 0
          %677 = vmatpush2.bf16.msra.mxu0 0
          %678 = vmatprep.subr.bf16.mxu0 0
          %679 = vmatpush2.bf16.msra.mxu0 0
          %680 = vmatprep.mubr.bf16.mxu0 0
          %681 = vmatmul.mubr.bf16.gmra.mxu0 %v588
          %v682 = vpop.f32.mrf.mxu0
          %v683 = vadd.f32 %v500, %v682
          %v684 = vpop.f32.mrf.mxu0
          %v685 = vadd.f32 %v502, %v684
          %v686 = vpop.f32.mrf.mxu0
          %v687 = vadd.f32 %v504, %v686
          %v688 = vpop.f32.mrf.mxu0
          %v689 = vadd.f32 %v506, %v688
          %690 = vdwg.mxu0
          %691 = vmatprep.subr.bf16.mxu0 0
          %692 = vmatpush1.bf16.msra.mxu0 0
          %693 = vmatprep.subr.bf16.mxu0 0
          %694 = vmatpush1.bf16.msra.mxu0 0
          %695 = vmatprep.subr.bf16.mxu0 0
          %696 = vmatpush1.bf16.msra.mxu0 0
          %697 = vmatprep.subr.bf16.mxu0 0
          %698 = vmatpush1.bf16.msra.mxu0 0
          %699 = vmatprep.subr.bf16.mxu0 0
          %700 = vmatpush1.bf16.msra.mxu0 0
          %701 = vmatprep.subr.bf16.mxu0 0
          %702 = vmatpush1.bf16.msra.mxu0 0
          %703 = vmatprep.subr.bf16.mxu0 0
          %704 = vmatpush1.bf16.msra.mxu0 %v603
          %705 = vmatprep.subr.bf16.mxu0 0
          %706 = vmatpush1.bf16.msra.mxu0 %v577
          %707 = vmatprep.subr.bf16.mxu0 0
          %708 = vmatpush2.bf16.msra.mxu0 0
          %709 = vmatprep.subr.bf16.mxu0 0
          %710 = vmatpush2.bf16.msra.mxu0 0
          %711 = vmatprep.subr.bf16.mxu0 0
          %712 = vmatpush2.bf16.msra.mxu0 0
          %713 = vmatprep.subr.bf16.mxu0 0
          %714 = vmatpush2.bf16.msra.mxu0 0
          %715 = vmatprep.subr.bf16.mxu0 0
          %716 = vmatpush2.bf16.msra.mxu0 0
          %717 = vmatprep.subr.bf16.mxu0 0
          %718 = vmatpush2.bf16.msra.mxu0 0
          %719 = vmatprep.subr.bf16.mxu0 0
          %720 = vmatpush2.bf16.msra.mxu0 0
          %721 = vmatprep.subr.bf16.mxu0 0
          %722 = vmatpush2.bf16.msra.mxu0 0
          %723 = vmatprep.mubr.bf16.mxu0 0
          %724 = vmatmul.mubr.bf16.gmra.mxu0 %v588
          %v725 = vpop.f32.mrf.mxu0
          %v726 = vadd.f32 %v543, %v725
          %v727 = vpop.f32.mrf.mxu0
          %v728 = vpop.f32.mrf.mxu0
          %v729 = vadd.f32 %v546, %v728
          %v730 = vpop.f32.mrf.mxu0
          %731 = vdwg.mxu0
          %s732 = scalar_lea.vmem [#allocation4], 120
          %v733 = vld [vmem:[%s732] sm:$0xff]
          %v734 = vld [vmem:[%s732 + $0x8] sm:$0xff]
          %v735 = vld [vmem:[%s732 + $0x10] sm:$0xf]
          %v736 = vld [vmem:[%s732 + $0x14] sm:$0xff]
          %v737 = vld [vmem:[%s732 + $0x1c] sm:$0xff]
          %v738 = vld [vmem:[%s732 + $0x24] sm:$0xf]
          %v739 = vld [vmem:[%s732 + $0x28] sm:$0x11]
          %v740 = vld [vmem:[%s732 + $0x30] sm:$0x11]
          %v741 = vld [vmem:[%s732 + $0x38] sm:$0x1]
          %v742 = vrot.slane %v355, 1
          %v752 = vunpack.c.l.b16 %v733
          %v753 = vunpack.c.h.b16 %v733
          %v754 = vunpack.c.l.b16 %v734
          %v755 = vunpack.c.h.b16 %v734
          %v756 = vunpack.c.l.b16 %v735
          %v757 = vunpack.c.l.b16 %v736
          %v758 = vunpack.c.h.b16 %v736
          %v759 = vunpack.c.l.b16 %v737
          %v760 = vunpack.c.h.b16 %v737
          %v761 = vunpack.c.l.b16 %v738
          %v762 = vunpack.c.l.b16 %v739
          %v763 = vunpack.c.h.b16 %v739
          %v764 = vunpack.c.l.b16 %v740
          %v765 = vunpack.c.h.b16 %v740
          %v766 = vunpack.c.l.b16 %v741
          %v767 = vpack.c.b16 %v757, %v752
          %v768 = vpack.c.b16 %v758, %v753
          %v769 = vpack.c.b16 %v759, %v754
          %v770 = vpack.c.b16 %v760, %v755
          %v771 = vpack.c.b16 %v761, %v756
          %v772 = vpack.c.b16 %v762, %v762
          %v773 = vpack.c.b16 %v763, %v763
          %v774 = vpack.c.b16 %v764, %v764
          %v775 = vpack.c.b16 %v765, %v765
          %v776 = vpack.c.b16 %v766, %v766
          %v783 = vsel %vm402, %v742, 0
          %v786 = vsel %vm406, %v772, 0
          %v789 = vsel %vm406, %v773, 0
          %v792 = vsel %vm406, %v774, 0
          %v795 = vsel %vm406, %v775, 0
          %v798 = vsel %vm406, %v776, 0
          %800 = vmatprep.subr.bf16.mxu0 0
          %801 = vmatpush1.bf16.msra.mxu0 0
          %802 = vmatprep.subr.bf16.mxu0 0
          %803 = vmatpush1.bf16.msra.mxu0 0
          %804 = vmatprep.subr.bf16.mxu0 0
          %805 = vmatpush1.bf16.msra.mxu0 0
          %806 = vmatprep.subr.bf16.mxu0 0
          %807 = vmatpush1.bf16.msra.mxu0 0
          %808 = vmatprep.subr.bf16.mxu0 0
          %809 = vmatpush1.bf16.msra.mxu0 0
          %810 = vmatprep.subr.bf16.mxu0 0
          %811 = vmatpush1.bf16.msra.mxu0 0
          %812 = vmatprep.subr.bf16.mxu0 %v789
          %813 = vmatpush1.bf16.msra.mxu0 %v786
          %814 = vmatprep.subr.bf16.mxu0 %v768
          %815 = vmatpush1.bf16.msra.mxu0 %v767
          %816 = vmatprep.subr.bf16.mxu0 0
          %817 = vmatpush2.bf16.msra.mxu0 0
          %818 = vmatprep.subr.bf16.mxu0 0
          %819 = vmatpush2.bf16.msra.mxu0 0
          %820 = vmatprep.subr.bf16.mxu0 0
          %821 = vmatpush2.bf16.msra.mxu0 0
          %822 = vmatprep.subr.bf16.mxu0 0
          %823 = vmatpush2.bf16.msra.mxu0 0
          %824 = vmatprep.subr.bf16.mxu0 0
          %825 = vmatpush2.bf16.msra.mxu0 0
          %826 = vmatprep.subr.bf16.mxu0 0
          %827 = vmatpush2.bf16.msra.mxu0 0
          %828 = vmatprep.subr.bf16.mxu0 0
          %829 = vmatpush2.bf16.msra.mxu0 0
          %830 = vmatprep.subr.bf16.mxu0 0
          %831 = vmatpush2.bf16.msra.mxu0 0
          %832 = vmatprep.mubr.bf16.mxu0 0
          %833 = vmatmul.mubr.bf16.gmra.mxu0 %v783
          %v834 = vpop.f32.mrf.mxu0
          %v835 = vadd.f32 0.0, %v834
          %v836 = vpop.f32.mrf.mxu0
          %v837 = vadd.f32 0.0, %v836
          %v838 = vpop.f32.mrf.mxu0
          %v839 = vadd.f32 0.0, %v838
          %v840 = vpop.f32.mrf.mxu0
          %v841 = vadd.f32 0.0, %v840
          %842 = vdwg.mxu0
          %843 = vmatprep.subr.bf16.mxu0 0
          %844 = vmatpush1.bf16.msra.mxu0 0
          %845 = vmatprep.subr.bf16.mxu0 0
          %846 = vmatpush1.bf16.msra.mxu0 0
          %847 = vmatprep.subr.bf16.mxu0 0
          %848 = vmatpush1.bf16.msra.mxu0 0
          %849 = vmatprep.subr.bf16.mxu0 0
          %850 = vmatpush1.bf16.msra.mxu0 0
          %851 = vmatprep.subr.bf16.mxu0 0
          %852 = vmatpush1.bf16.msra.mxu0 0
          %853 = vmatprep.subr.bf16.mxu0 0
          %854 = vmatpush1.bf16.msra.mxu0 0
          %855 = vmatprep.subr.bf16.mxu0 %v795
          %856 = vmatpush1.bf16.msra.mxu0 %v792
          %857 = vmatprep.subr.bf16.mxu0 %v770
          %858 = vmatpush1.bf16.msra.mxu0 %v769
          %859 = vmatprep.subr.bf16.mxu0 0
          %860 = vmatpush2.bf16.msra.mxu0 0
          %861 = vmatprep.subr.bf16.mxu0 0
          %862 = vmatpush2.bf16.msra.mxu0 0
          %863 = vmatprep.subr.bf16.mxu0 0
          %864 = vmatpush2.bf16.msra.mxu0 0
          %865 = vmatprep.subr.bf16.mxu0 0
          %866 = vmatpush2.bf16.msra.mxu0 0
          %867 = vmatprep.subr.bf16.mxu0 0
          %868 = vmatpush2.bf16.msra.mxu0 0
          %869 = vmatprep.subr.bf16.mxu0 0
          %870 = vmatpush2.bf16.msra.mxu0 0
          %871 = vmatprep.subr.bf16.mxu0 0
          %872 = vmatpush2.bf16.msra.mxu0 0
          %873 = vmatprep.subr.bf16.mxu0 0
          %874 = vmatpush2.bf16.msra.mxu0 0
          %875 = vmatprep.mubr.bf16.mxu0 0
          %876 = vmatmul.mubr.bf16.gmra.mxu0 %v783
          %v877 = vpop.f32.mrf.mxu0
          %v878 = vadd.f32 0.0, %v877
          %v879 = vpop.f32.mrf.mxu0
          %v880 = vadd.f32 0.0, %v879
          %v881 = vpop.f32.mrf.mxu0
          %v882 = vadd.f32 0.0, %v881
          %v883 = vpop.f32.mrf.mxu0
          %v884 = vadd.f32 0.0, %v883
          %885 = vdwg.mxu0
          %886 = vmatprep.subr.bf16.mxu0 0
          %887 = vmatpush1.bf16.msra.mxu0 0
          %888 = vmatprep.subr.bf16.mxu0 0
          %889 = vmatpush1.bf16.msra.mxu0 0
          %890 = vmatprep.subr.bf16.mxu0 0
          %891 = vmatpush1.bf16.msra.mxu0 0
          %892 = vmatprep.subr.bf16.mxu0 0
          %893 = vmatpush1.bf16.msra.mxu0 0
          %894 = vmatprep.subr.bf16.mxu0 0
          %895 = vmatpush1.bf16.msra.mxu0 0
          %896 = vmatprep.subr.bf16.mxu0 0
          %897 = vmatpush1.bf16.msra.mxu0 0
          %898 = vmatprep.subr.bf16.mxu0 0
          %899 = vmatpush1.bf16.msra.mxu0 %v798
          %900 = vmatprep.subr.bf16.mxu0 0
          %901 = vmatpush1.bf16.msra.mxu0 %v771
          %902 = vmatprep.subr.bf16.mxu0 0
          %903 = vmatpush2.bf16.msra.mxu0 0
          %904 = vmatprep.subr.bf16.mxu0 0
          %905 = vmatpush2.bf16.msra.mxu0 0
          %906 = vmatprep.subr.bf16.mxu0 0
          %907 = vmatpush2.bf16.msra.mxu0 0
          %908 = vmatprep.subr.bf16.mxu0 0
          %909 = vmatpush2.bf16.msra.mxu0 0
          %910 = vmatprep.subr.bf16.mxu0 0
          %911 = vmatpush2.bf16.msra.mxu0 0
          %912 = vmatprep.subr.bf16.mxu0 0
          %913 = vmatpush2.bf16.msra.mxu0 0
          %914 = vmatprep.subr.bf16.mxu0 0
          %915 = vmatpush2.bf16.msra.mxu0 0
          %916 = vmatprep.subr.bf16.mxu0 0
          %917 = vmatpush2.bf16.msra.mxu0 0
          %918 = vmatprep.mubr.bf16.mxu0 0
          %919 = vmatmul.mubr.bf16.gmra.mxu0 %v783
          %v920 = vpop.f32.mrf.mxu0
          %v921 = vadd.f32 0.0, %v920
          %v922 = vpop.f32.mrf.mxu0
          %v923 = vpop.f32.mrf.mxu0
          %v924 = vadd.f32 0.0, %v923
          %v925 = vpop.f32.mrf.mxu0
          %926 = vdwg.mxu0
          %v927 = vadd.f32 %v640, %v835
          %v928 = vadd.f32 %v642, %v837
          %v929 = vadd.f32 %v683, %v878
          %v930 = vadd.f32 %v685, %v880
          %v931 = vadd.f32 %v726, %v921
          %v932 = vadd.f32 %v644, %v839
          %v933 = vadd.f32 %v646, %v841
          %v934 = vadd.f32 %v687, %v882
          %v935 = vadd.f32 %v689, %v884
          %v936 = vadd.f32 %v729, %v924
          %v937 = vld [vmem:[#allocation7] sm:$0x1f]
          %v939 = vlaneseq
          %v940 = vshrl.u32 %v939, 7
          %v941 = vsub.s32 0, %v940
          %v942 = vrot.slane %v937, %v941
          %v943 = vlaneseq
          %v944 = vshrl.u32 %v943, 7
          %v945 = vsub.s32 1, %v944
          %v946 = vrot.slane %v937, %v945
          %v947 = vlaneseq
          %v948 = vshrl.u32 %v947, 7
          %v949 = vsub.s32 2, %v948
          %v950 = vrot.slane %v937, %v949
          %v951 = vlaneseq
          %v952 = vshrl.u32 %v951, 7
          %v953 = vsub.s32 3, %v952
          %v954 = vrot.slane %v937, %v953
          %v955 = vlaneseq
          %v956 = vshrl.u32 %v955, 7
          %v957 = vsub.s32 4, %v956
          %v958 = vrot.slane %v937, %v957
          %v964 = vadd.f32 %v927, %v942
          %v965 = vadd.f32 %v928, %v946
          %v966 = vadd.f32 %v929, %v950
          %v967 = vadd.f32 %v930, %v954
          %v968 = vadd.f32 %v931, %v958
          %v969 = vadd.f32 %v932, %v942
          %v970 = vadd.f32 %v933, %v946
          %v971 = vadd.f32 %v934, %v950
          %v972 = vadd.f32 %v935, %v954
          %v973 = vadd.f32 %v936, %v958
          %v974 = vlaneseq
          %v975 = vshrl.u32 %v974, 7
          %v976 = vadd.s32 %v975, 8
          %s977 = ssub.s32 %s312, 1
          %v978 = vstv %s977
          %v979 = vadd.s32 %v975, %v978
          %v980 = vadd.s32 %v976, %v978
          %vm981 = vcmp.ge.s32.totalorder %v979, 0
          %vm982 = vcmp.ge.s32.totalorder %v980, 0
          %vm983 = vcmp.lt.s32.totalorder %v979, 24
          %vm984 = vcmp.lt.s32.totalorder %v980, 24
          %vm985 = vmand %vm981, %vm983
          %vm986 = vmand %vm982, %vm984
          %v987 = vmax.f32 %v964, 0.0
          %v988 = vmax.f32 %v965, 0.0
          %v989 = vmax.f32 %v966, 0.0
          %v990 = vmax.f32 %v967, 0.0
          %v991 = vmax.f32 %v968, 0.0
          %v992 = vmax.f32 %v969, 0.0
          %v993 = vmax.f32 %v970, 0.0
          %v994 = vmax.f32 %v971, 0.0
          %v995 = vmax.f32 %v972, 0.0
          %v996 = vmax.f32 %v973, 0.0
          %v997 = vsel %vm985, 1, 0
          %v998 = vsel %vm986, 1, 0
          %vm999 = vcmp.eq.s32.totalorder %v997, 1
          %vm1000 = vcmp.eq.s32.totalorder %v998, 1
          %v1001 = vsel %vm999, %v987, 0.0
          %v1002 = vsel %vm999, %v988, 0.0
          %v1003 = vsel %vm999, %v989, 0.0
          %v1004 = vsel %vm999, %v990, 0.0
          %v1005 = vsel %vm999, %v991, 0.0
          %v1006 = vsel %vm1000, %v992, 0.0
          %v1007 = vsel %vm1000, %v993, 0.0
          %v1008 = vsel %vm1000, %v994, 0.0
          %v1009 = vsel %vm1000, %v995, 0.0
          %v1010 = vsel %vm1000, %v996, 0.0
          %v1011 = vpack.c.bf16 %v1006, %v1001
          %v1012 = vpack.c.bf16 %v1007, %v1002
          %v1013 = vpack.c.bf16 %v1008, %v1003
          %v1014 = vpack.c.bf16 %v1009, %v1004
          %v1015 = vpack.c.bf16 %v1010, %v1005
          %v1016 = vld [vmem:[#allocation9] sm:$0xff]
          %v1017 = vld [vmem:[#allocation9 + $0x8] sm:$0xff]
          %v1018 = vld [vmem:[#allocation9 + $0x10] sm:$0xff]
          %v1019 = vld [vmem:[#allocation9 + $0x18] sm:$0xff]
          %v1020 = vld [vmem:[#allocation9 + $0x20] sm:$0xff]
          %v1021 = vld [vmem:[#allocation9 + $0x28] sm:$0xff]
          %v1022 = vld [vmem:[#allocation9 + $0x30] sm:$0xff]
          %v1023 = vld [vmem:[#allocation9 + $0x38] sm:$0xff]
          %v1024 = vld [vmem:[#allocation9 + $0x40] sm:$0xff]
          %v1025 = vld [vmem:[#allocation9 + $0x48] sm:$0xff]
          %v1026 = vld [vmem:[#allocation9 + $0x50] sm:$0xff]
          %v1027 = vld [vmem:[#allocation9 + $0x58] sm:$0xff]
          %v1028 = vld [vmem:[#allocation9 + $0x60] sm:$0xff]
          %v1029 = vld [vmem:[#allocation9 + $0x68] sm:$0xff]
          %v1030 = vld [vmem:[#allocation9 + $0x70] sm:$0xff]
          %v1031 = vld [vmem:[#allocation9 + $0x78] sm:$0xff]
          %v1032 = vld [vmem:[#allocation9 + $0x80] sm:$0xff]
          %v1033 = vld [vmem:[#allocation9 + $0x88] sm:$0xff]
          %v1034 = vld [vmem:[#allocation9 + $0x90] sm:$0xff]
          %v1035 = vld [vmem:[#allocation9 + $0x98] sm:$0xff]
          %v1036 = vld [vmem:[#allocation9 + $0xa0] sm:$0xff]
          %v1037 = vld [vmem:[#allocation9 + $0xa8] sm:$0xff]
          %v1038 = vld [vmem:[#allocation9 + $0xb0] sm:$0xff]
          %v1039 = vld [vmem:[#allocation9 + $0xb8] sm:$0xff]
          %v1040 = vld [vmem:[#allocation9 + $0xc0] sm:$0xff]
          %v1041 = vld [vmem:[#allocation9 + $0xc8] sm:$0xff]
          %v1042 = vld [vmem:[#allocation9 + $0xd0] sm:$0xff]
          %v1043 = vld [vmem:[#allocation9 + $0xd8] sm:$0xff]
          %v1044 = vld [vmem:[#allocation9 + $0xe0] sm:$0xff]
          %v1045 = vld [vmem:[#allocation9 + $0xe8] sm:$0xff]
          %v1046 = vld [vmem:[#allocation9 + $0xf0] sm:$0xff]
          %v1047 = vld [vmem:[#allocation9 + $0xf8] sm:$0xff]
          %v1048 = vld [vmem:[#allocation9 + $0x100] sm:$0xff]
          %v1049 = vld [vmem:[#allocation9 + $0x108] sm:$0xff]
          %v1050 = vld [vmem:[#allocation9 + $0x110] sm:$0xff]
          %v1051 = vld [vmem:[#allocation9 + $0x118] sm:$0xff]
          %v1052 = vld [vmem:[#allocation9 + $0x120] sm:$0xff]
          %v1053 = vld [vmem:[#allocation9 + $0x128] sm:$0xff]
          %v1054 = vld [vmem:[#allocation9 + $0x130] sm:$0xff]
          %v1055 = vld [vmem:[#allocation9 + $0x138] sm:$0xff]
          %v1056 = vld [vmem:[#allocation9 + $0x140] sm:$0xff]
          %v1057 = vld [vmem:[#allocation9 + $0x148] sm:$0xff]
          %v1058 = vld [vmem:[#allocation9 + $0x150] sm:$0xff]
          %v1059 = vld [vmem:[#allocation9 + $0x158] sm:$0xff]
          %v1060 = vld [vmem:[#allocation9 + $0x160] sm:$0xff]
          %v1061 = vld [vmem:[#allocation9 + $0x168] sm:$0xff]
          %v1062 = vld [vmem:[#allocation9 + $0x170] sm:$0xff]
          %v1063 = vld [vmem:[#allocation9 + $0x178] sm:$0xff]
          %v1064 = vld [vmem:[#allocation9 + $0x180] sm:$0xff]
          %v1065 = vld [vmem:[#allocation9 + $0x188] sm:$0xff]
          %v1066 = vld [vmem:[#allocation9 + $0x190] sm:$0xff]
          %v1067 = vld [vmem:[#allocation9 + $0x198] sm:$0xff]
          %v1068 = vld [vmem:[#allocation9 + $0x1a0] sm:$0xff]
          %v1069 = vld [vmem:[#allocation9 + $0x1a8] sm:$0xff]
          %v1070 = vld [vmem:[#allocation9 + $0x1b0] sm:$0xff]
          %v1071 = vld [vmem:[#allocation9 + $0x1b8] sm:$0xff]
          %v1072 = vld [vmem:[#allocation9 + $0x1c0] sm:$0xff]
          %v1073 = vld [vmem:[#allocation9 + $0x1c8] sm:$0xff]
          %v1074 = vld [vmem:[#allocation9 + $0x1d0] sm:$0xff]
          %v1075 = vld [vmem:[#allocation9 + $0x1d8] sm:$0xff]
          %v1076 = vld [vmem:[#allocation9 + $0x1e0] sm:$0xff]
          %v1077 = vld [vmem:[#allocation9 + $0x1e8] sm:$0xff]
          %v1078 = vld [vmem:[#allocation9 + $0x1f0] sm:$0xff]
          %v1079 = vld [vmem:[#allocation9 + $0x1f8] sm:$0xff]
          %v1080 = vld [vmem:[#allocation9 + $0x200] sm:$0xff]
          %v1081 = vld [vmem:[#allocation9 + $0x208] sm:$0xff]
          %v1082 = vld [vmem:[#allocation9 + $0x210] sm:$0xff]
          %v1083 = vld [vmem:[#allocation9 + $0x218] sm:$0xff]
          %v1084 = vld [vmem:[#allocation9 + $0x220] sm:$0xff]
          %v1085 = vld [vmem:[#allocation9 + $0x228] sm:$0xff]
          %v1086 = vld [vmem:[#allocation9 + $0x230] sm:$0xff]
          %v1087 = vld [vmem:[#allocation9 + $0x238] sm:$0xff]
          %v1088 = vld [vmem:[#allocation9 + $0x240] sm:$0xff]
          %v1089 = vld [vmem:[#allocation9 + $0x248] sm:$0xff]
          %v1090 = vld [vmem:[#allocation9 + $0x250] sm:$0xff]
          %v1091 = vld [vmem:[#allocation9 + $0x258] sm:$0xff]
          %v1092 = vld [vmem:[#allocation9 + $0x260] sm:$0xff]
          %v1093 = vld [vmem:[#allocation9 + $0x268] sm:$0xff]
          %v1094 = vld [vmem:[#allocation9 + $0x270] sm:$0xff]
          %v1095 = vld [vmem:[#allocation9 + $0x278] sm:$0xff]
          %v1096 = vld [vmem:[#allocation9 + $0x280] sm:$0xff]
          %v1097 = vld [vmem:[#allocation9 + $0x288] sm:$0xff]
          %v1098 = vld [vmem:[#allocation9 + $0x290] sm:$0xff]
          %v1099 = vld [vmem:[#allocation9 + $0x298] sm:$0xff]
          %v1100 = vld [vmem:[#allocation9 + $0x2a0] sm:$0xff]
          %v1101 = vld [vmem:[#allocation9 + $0x2a8] sm:$0xff]
          %v1102 = vld [vmem:[#allocation9 + $0x2b0] sm:$0xff]
          %v1103 = vld [vmem:[#allocation9 + $0x2b8] sm:$0xff]
          %v1104 = vld [vmem:[#allocation9 + $0x2c0] sm:$0xff]
          %v1105 = vld [vmem:[#allocation9 + $0x2c8] sm:$0xff]
          %v1106 = vld [vmem:[#allocation9 + $0x2d0] sm:$0xff]
          %v1107 = vld [vmem:[#allocation9 + $0x2d8] sm:$0xff]
          %v1108 = vld [vmem:[#allocation9 + $0x2e0] sm:$0xff]
          %v1109 = vld [vmem:[#allocation9 + $0x2e8] sm:$0xff]
          %v1110 = vld [vmem:[#allocation9 + $0x2f0] sm:$0xff]
          %v1111 = vld [vmem:[#allocation9 + $0x2f8] sm:$0xff]
          %v1112 = vld [vmem:[#allocation9 + $0x300] sm:$0xff]
          %v1113 = vld [vmem:[#allocation9 + $0x308] sm:$0xff]
          %v1114 = vld [vmem:[#allocation9 + $0x310] sm:$0xff]
          %v1115 = vld [vmem:[#allocation9 + $0x318] sm:$0xff]
          %v1116 = vld [vmem:[#allocation9 + $0x320] sm:$0xff]
          %v1117 = vld [vmem:[#allocation9 + $0x328] sm:$0xff]
          %v1118 = vld [vmem:[#allocation9 + $0x330] sm:$0xff]
          %v1119 = vld [vmem:[#allocation9 + $0x338] sm:$0xff]
          %v1120 = vld [vmem:[#allocation9 + $0x340] sm:$0xff]
          %v1121 = vld [vmem:[#allocation9 + $0x348] sm:$0xff]
          %v1122 = vld [vmem:[#allocation9 + $0x350] sm:$0xff]
          %v1123 = vld [vmem:[#allocation9 + $0x358] sm:$0xff]
          %v1124 = vld [vmem:[#allocation9 + $0x360] sm:$0xff]
          %v1125 = vld [vmem:[#allocation9 + $0x368] sm:$0xff]
          %v1126 = vld [vmem:[#allocation9 + $0x370] sm:$0xff]
          %v1127 = vld [vmem:[#allocation9 + $0x378] sm:$0xff]
          %v1128 = vld [vmem:[#allocation9 + $0x380] sm:$0xff]
          %v1129 = vld [vmem:[#allocation9 + $0x388] sm:$0xff]
          %v1130 = vld [vmem:[#allocation9 + $0x390] sm:$0xff]
          %v1131 = vld [vmem:[#allocation9 + $0x398] sm:$0xff]
          %v1132 = vld [vmem:[#allocation9 + $0x3a0] sm:$0xff]
          %v1133 = vld [vmem:[#allocation9 + $0x3a8] sm:$0xff]
          %v1134 = vld [vmem:[#allocation9 + $0x3b0] sm:$0xff]
          %v1135 = vld [vmem:[#allocation9 + $0x3b8] sm:$0xff]
          %v1136 = vld [vmem:[#allocation9 + $0x3c0] sm:$0xff]
          %v1137 = vld [vmem:[#allocation9 + $0x3c8] sm:$0xff]
          %v1138 = vld [vmem:[#allocation9 + $0x3d0] sm:$0xff]
          %v1139 = vld [vmem:[#allocation9 + $0x3d8] sm:$0xff]
          %v1140 = vld [vmem:[#allocation9 + $0x3e0] sm:$0xff]
          %v1141 = vld [vmem:[#allocation9 + $0x3e8] sm:$0xff]
          %v1142 = vld [vmem:[#allocation9 + $0x3f0] sm:$0xff]
          %v1143 = vld [vmem:[#allocation9 + $0x3f8] sm:$0xff]
          %v1144 = vld [vmem:[#allocation9 + $0x400] sm:$0xff]
          %v1145 = vld [vmem:[#allocation9 + $0x408] sm:$0xff]
          %v1146 = vld [vmem:[#allocation9 + $0x410] sm:$0xff]
          %v1147 = vld [vmem:[#allocation9 + $0x418] sm:$0xff]
          %v1148 = vld [vmem:[#allocation9 + $0x420] sm:$0xff]
          %v1149 = vld [vmem:[#allocation9 + $0x428] sm:$0xff]
          %v1150 = vld [vmem:[#allocation9 + $0x430] sm:$0xff]
          %v1151 = vld [vmem:[#allocation9 + $0x438] sm:$0xff]
          %v1152 = vld [vmem:[#allocation9 + $0x440] sm:$0xff]
          %v1153 = vld [vmem:[#allocation9 + $0x448] sm:$0xff]
          %v1154 = vld [vmem:[#allocation9 + $0x450] sm:$0xff]
          %v1155 = vld [vmem:[#allocation9 + $0x458] sm:$0xff]
          %v1156 = vld [vmem:[#allocation9 + $0x460] sm:$0xff]
          %v1157 = vld [vmem:[#allocation9 + $0x468] sm:$0xff]
          %v1158 = vld [vmem:[#allocation9 + $0x470] sm:$0xff]
          %v1159 = vld [vmem:[#allocation9 + $0x478] sm:$0xff]
          %v1160 = vld [vmem:[#allocation9 + $0x480] sm:$0xff]
          %v1161 = vld [vmem:[#allocation9 + $0x488] sm:$0xff]
          %v1162 = vld [vmem:[#allocation9 + $0x490] sm:$0xff]
          %v1163 = vld [vmem:[#allocation9 + $0x498] sm:$0xff]
          %v1164 = vld [vmem:[#allocation9 + $0x4a0] sm:$0xff]
          %v1165 = vld [vmem:[#allocation9 + $0x4a8] sm:$0xff]
          %v1166 = vld [vmem:[#allocation9 + $0x4b0] sm:$0xff]
          %v1167 = vld [vmem:[#allocation9 + $0x4b8] sm:$0xff]
          %v1168 = vld [vmem:[#allocation9 + $0x4c0] sm:$0xff]
          %v1169 = vld [vmem:[#allocation9 + $0x4c8] sm:$0xff]
          %v1170 = vld [vmem:[#allocation9 + $0x4d0] sm:$0xff]
          %v1171 = vld [vmem:[#allocation9 + $0x4d8] sm:$0xff]
          %v1172 = vld [vmem:[#allocation9 + $0x4e0] sm:$0xff]
          %v1173 = vld [vmem:[#allocation9 + $0x4e8] sm:$0xff]
          %v1174 = vld [vmem:[#allocation9 + $0x4f0] sm:$0xff]
          %v1175 = vld [vmem:[#allocation9 + $0x4f8] sm:$0xff]
          %v1176 = vld [vmem:[#allocation9 + $0x500] sm:$0xff]
          %v1177 = vld [vmem:[#allocation9 + $0x508] sm:$0xff]
          %v1178 = vld [vmem:[#allocation9 + $0x510] sm:$0xff]
          %v1179 = vld [vmem:[#allocation9 + $0x518] sm:$0xff]
          %v1180 = vld [vmem:[#allocation9 + $0x520] sm:$0xff]
          %v1181 = vld [vmem:[#allocation9 + $0x528] sm:$0xff]
          %v1182 = vld [vmem:[#allocation9 + $0x530] sm:$0xff]
          %v1183 = vld [vmem:[#allocation9 + $0x538] sm:$0xff]
          %v1184 = vld [vmem:[#allocation9 + $0x540] sm:$0xff]
          %v1185 = vld [vmem:[#allocation9 + $0x548] sm:$0xff]
          %v1186 = vld [vmem:[#allocation9 + $0x550] sm:$0xff]
          %v1187 = vld [vmem:[#allocation9 + $0x558] sm:$0xff]
          %v1188 = vld [vmem:[#allocation9 + $0x560] sm:$0xff]
          %v1189 = vld [vmem:[#allocation9 + $0x568] sm:$0xff]
          %v1190 = vld [vmem:[#allocation9 + $0x570] sm:$0xff]
          %v1191 = vld [vmem:[#allocation9 + $0x578] sm:$0xff]
          %v1192 = vld [vmem:[#allocation9 + $0x580] sm:$0xff]
          %v1193 = vld [vmem:[#allocation9 + $0x588] sm:$0xff]
          %v1194 = vld [vmem:[#allocation9 + $0x590] sm:$0xff]
          %v1195 = vld [vmem:[#allocation9 + $0x598] sm:$0xff]
          %v1196 = vld [vmem:[#allocation9 + $0x5a0] sm:$0xff]
          %v1197 = vld [vmem:[#allocation9 + $0x5a8] sm:$0xff]
          %v1198 = vld [vmem:[#allocation9 + $0x5b0] sm:$0xff]
          %v1199 = vld [vmem:[#allocation9 + $0x5b8] sm:$0xff]
          %v1200 = vld [vmem:[#allocation9 + $0x5c0] sm:$0xff]
          %v1201 = vld [vmem:[#allocation9 + $0x5c8] sm:$0xff]
          %v1202 = vld [vmem:[#allocation9 + $0x5d0] sm:$0xff]
          %v1203 = vld [vmem:[#allocation9 + $0x5d8] sm:$0xff]
          %v1204 = vld [vmem:[#allocation9 + $0x5e0] sm:$0xff]
          %v1205 = vld [vmem:[#allocation9 + $0x5e8] sm:$0xff]
          %v1206 = vld [vmem:[#allocation9 + $0x5f0] sm:$0xff]
          %v1207 = vld [vmem:[#allocation9 + $0x5f8] sm:$0xff]
          %v1208 = vld [vmem:[#allocation9 + $0x600] sm:$0xff]
          %v1209 = vld [vmem:[#allocation9 + $0x608] sm:$0xff]
          %v1210 = vld [vmem:[#allocation9 + $0x610] sm:$0xff]
          %v1211 = vld [vmem:[#allocation9 + $0x618] sm:$0xff]
          %v1212 = vld [vmem:[#allocation9 + $0x620] sm:$0xff]
          %v1213 = vld [vmem:[#allocation9 + $0x628] sm:$0xff]
          %v1214 = vld [vmem:[#allocation9 + $0x630] sm:$0xff]
          %v1215 = vld [vmem:[#allocation9 + $0x638] sm:$0xff]
          %v1216 = vld [vmem:[#allocation9 + $0x640] sm:$0xff]
          %v1217 = vld [vmem:[#allocation9 + $0x648] sm:$0xff]
          %v1218 = vld [vmem:[#allocation9 + $0x650] sm:$0xff]
          %v1219 = vld [vmem:[#allocation9 + $0x658] sm:$0xff]
          %v1220 = vld [vmem:[#allocation9 + $0x660] sm:$0xff]
          %v1221 = vld [vmem:[#allocation9 + $0x668] sm:$0xff]
          %v1222 = vld [vmem:[#allocation9 + $0x670] sm:$0xff]
          %v1223 = vld [vmem:[#allocation9 + $0x678] sm:$0xff]
          %v1224 = vld [vmem:[#allocation9 + $0x680] sm:$0xff]
          %v1225 = vld [vmem:[#allocation9 + $0x688] sm:$0xff]
          %v1226 = vld [vmem:[#allocation9 + $0x690] sm:$0xff]
          %v1227 = vld [vmem:[#allocation9 + $0x698] sm:$0xff]
          %v1228 = vld [vmem:[#allocation9 + $0x6a0] sm:$0xff]
          %v1229 = vld [vmem:[#allocation9 + $0x6a8] sm:$0xff]
          %v1230 = vld [vmem:[#allocation9 + $0x6b0] sm:$0xff]
          %v1231 = vld [vmem:[#allocation9 + $0x6b8] sm:$0xff]
          %v1232 = vld [vmem:[#allocation9 + $0x6c0] sm:$0xff]
          %v1233 = vld [vmem:[#allocation9 + $0x6c8] sm:$0xff]
          %v1234 = vld [vmem:[#allocation9 + $0x6d0] sm:$0xff]
          %v1235 = vld [vmem:[#allocation9 + $0x6d8] sm:$0xff]
          %v1236 = vld [vmem:[#allocation9 + $0x6e0] sm:$0xff]
          %v1237 = vld [vmem:[#allocation9 + $0x6e8] sm:$0xff]
          %v1238 = vld [vmem:[#allocation9 + $0x6f0] sm:$0xff]
          %v1239 = vld [vmem:[#allocation9 + $0x6f8] sm:$0xff]
          %v1240 = vld [vmem:[#allocation9 + $0x700] sm:$0xff]
          %v1241 = vld [vmem:[#allocation9 + $0x708] sm:$0xff]
          %v1242 = vld [vmem:[#allocation9 + $0x710] sm:$0xff]
          %v1243 = vld [vmem:[#allocation9 + $0x718] sm:$0xff]
          %v1244 = vld [vmem:[#allocation9 + $0x720] sm:$0xff]
          %v1245 = vld [vmem:[#allocation9 + $0x728] sm:$0xff]
          %v1246 = vld [vmem:[#allocation9 + $0x730] sm:$0xff]
          %v1247 = vld [vmem:[#allocation9 + $0x738] sm:$0xff]
          %v1248 = vld [vmem:[#allocation9 + $0x740] sm:$0xff]
          %v1249 = vld [vmem:[#allocation9 + $0x748] sm:$0xff]
          %v1250 = vld [vmem:[#allocation9 + $0x750] sm:$0xff]
          %v1251 = vld [vmem:[#allocation9 + $0x758] sm:$0xff]
          %v1252 = vld [vmem:[#allocation9 + $0x760] sm:$0xff]
          %v1253 = vld [vmem:[#allocation9 + $0x768] sm:$0xff]
          %v1254 = vld [vmem:[#allocation9 + $0x770] sm:$0xff]
          %v1255 = vld [vmem:[#allocation9 + $0x778] sm:$0xff]
          %v1256 = vld [vmem:[#allocation9 + $0x780] sm:$0xff]
          %v1257 = vld [vmem:[#allocation9 + $0x788] sm:$0xff]
          %v1258 = vld [vmem:[#allocation9 + $0x790] sm:$0xff]
          %v1259 = vld [vmem:[#allocation9 + $0x798] sm:$0xff]
          %v1260 = vld [vmem:[#allocation9 + $0x7a0] sm:$0xff]
          %v1261 = vld [vmem:[#allocation9 + $0x7a8] sm:$0xff]
          %v1262 = vld [vmem:[#allocation9 + $0x7b0] sm:$0xff]
          %v1263 = vld [vmem:[#allocation9 + $0x7b8] sm:$0xff]
          %v1264 = vld [vmem:[#allocation9 + $0x7c0] sm:$0xff]
          %v1265 = vld [vmem:[#allocation9 + $0x7c8] sm:$0xff]
          %v1266 = vld [vmem:[#allocation9 + $0x7d0] sm:$0xff]
          %v1267 = vld [vmem:[#allocation9 + $0x7d8] sm:$0xff]
          %v1268 = vld [vmem:[#allocation9 + $0x7e0] sm:$0xff]
          %v1269 = vld [vmem:[#allocation9 + $0x7e8] sm:$0xff]
          %v1270 = vld [vmem:[#allocation9 + $0x7f0] sm:$0xff]
          %v1271 = vld [vmem:[#allocation9 + $0x7f8] sm:$0xff]
          %v1272 = vld [vmem:[#allocation9 + $0x800] sm:$0xff]
          %v1273 = vld [vmem:[#allocation9 + $0x808] sm:$0xff]
          %v1274 = vld [vmem:[#allocation9 + $0x810] sm:$0xff]
          %v1275 = vld [vmem:[#allocation9 + $0x818] sm:$0xff]
          %v1276 = vld [vmem:[#allocation9 + $0x820] sm:$0xff]
          %v1277 = vld [vmem:[#allocation9 + $0x828] sm:$0xff]
          %v1278 = vld [vmem:[#allocation9 + $0x830] sm:$0xff]
          %v1279 = vld [vmem:[#allocation9 + $0x838] sm:$0xff]
          %v1280 = vld [vmem:[#allocation9 + $0x840] sm:$0xff]
          %v1281 = vld [vmem:[#allocation9 + $0x848] sm:$0xff]
          %v1282 = vld [vmem:[#allocation9 + $0x850] sm:$0xff]
          %v1283 = vld [vmem:[#allocation9 + $0x858] sm:$0xff]
          %v1284 = vld [vmem:[#allocation9 + $0x860] sm:$0xff]
          %v1285 = vld [vmem:[#allocation9 + $0x868] sm:$0xff]
          %v1286 = vld [vmem:[#allocation9 + $0x870] sm:$0xff]
          %v1287 = vld [vmem:[#allocation9 + $0x878] sm:$0xff]
          %v1288 = vld [vmem:[#allocation9 + $0x880] sm:$0xff]
          %v1289 = vld [vmem:[#allocation9 + $0x888] sm:$0xff]
          %v1290 = vld [vmem:[#allocation9 + $0x890] sm:$0xff]
          %v1291 = vld [vmem:[#allocation9 + $0x898] sm:$0xff]
          %v1292 = vld [vmem:[#allocation9 + $0x8a0] sm:$0xff]
          %v1293 = vld [vmem:[#allocation9 + $0x8a8] sm:$0xff]
          %v1294 = vld [vmem:[#allocation9 + $0x8b0] sm:$0xff]
          %v1295 = vld [vmem:[#allocation9 + $0x8b8] sm:$0xff]
          %v1296 = vld [vmem:[#allocation9 + $0x8c0] sm:$0xff]
          %v1297 = vld [vmem:[#allocation9 + $0x8c8] sm:$0xff]
          %v1298 = vld [vmem:[#allocation9 + $0x8d0] sm:$0xff]
          %v1299 = vld [vmem:[#allocation9 + $0x8d8] sm:$0xff]
          %v1300 = vld [vmem:[#allocation9 + $0x8e0] sm:$0xff]
          %v1301 = vld [vmem:[#allocation9 + $0x8e8] sm:$0xff]
          %v1302 = vld [vmem:[#allocation9 + $0x8f0] sm:$0xff]
          %v1303 = vld [vmem:[#allocation9 + $0x8f8] sm:$0xff]
          %s1304 = scalar_lea.vmem [#allocation9], 2304
          %v1305 = vld [vmem:[%s1304] sm:$0xff]
          %v1306 = vld [vmem:[%s1304 + $0x8] sm:$0xff]
          %v1307 = vld [vmem:[%s1304 + $0x10] sm:$0xff]
          %v1308 = vld [vmem:[%s1304 + $0x18] sm:$0xff]
          %v1309 = vld [vmem:[%s1304 + $0x20] sm:$0xff]
          %v1310 = vld [vmem:[%s1304 + $0x28] sm:$0xff]
          %v1311 = vld [vmem:[%s1304 + $0x30] sm:$0xff]
          %v1312 = vld [vmem:[%s1304 + $0x38] sm:$0xff]
          %v1313 = vld [vmem:[%s1304 + $0x40] sm:$0xff]
          %v1314 = vld [vmem:[%s1304 + $0x48] sm:$0xff]
          %v1315 = vld [vmem:[%s1304 + $0x50] sm:$0xff]
          %v1316 = vld [vmem:[%s1304 + $0x58] sm:$0xff]
          %v1317 = vld [vmem:[%s1304 + $0x60] sm:$0xff]
          %v1318 = vld [vmem:[%s1304 + $0x68] sm:$0xff]
          %v1319 = vld [vmem:[%s1304 + $0x70] sm:$0xff]
          %v1320 = vld [vmem:[%s1304 + $0x78] sm:$0xff]
          %v1321 = vld [vmem:[%s1304 + $0x80] sm:$0xff]
          %v1322 = vld [vmem:[%s1304 + $0x88] sm:$0xff]
          %v1323 = vld [vmem:[%s1304 + $0x90] sm:$0xff]
          %v1324 = vld [vmem:[%s1304 + $0x98] sm:$0xff]
          %v1325 = vld [vmem:[%s1304 + $0xa0] sm:$0xff]
          %v1326 = vld [vmem:[%s1304 + $0xa8] sm:$0xff]
          %v1327 = vld [vmem:[%s1304 + $0xb0] sm:$0xff]
          %v1328 = vld [vmem:[%s1304 + $0xb8] sm:$0xff]
          %v1329 = vld [vmem:[%s1304 + $0xc0] sm:$0xff]
          %v1330 = vld [vmem:[%s1304 + $0xc8] sm:$0xff]
          %v1331 = vld [vmem:[%s1304 + $0xd0] sm:$0xff]
          %v1332 = vld [vmem:[%s1304 + $0xd8] sm:$0xff]
          %v1333 = vld [vmem:[%s1304 + $0xe0] sm:$0xff]
          %v1334 = vld [vmem:[%s1304 + $0xe8] sm:$0xff]
          %v1335 = vld [vmem:[%s1304 + $0xf0] sm:$0xff]
          %v1336 = vld [vmem:[%s1304 + $0xf8] sm:$0xff]
          %v1337 = vld [vmem:[%s1304 + $0x100] sm:$0xff]
          %v1338 = vld [vmem:[%s1304 + $0x108] sm:$0xff]
          %v1339 = vld [vmem:[%s1304 + $0x110] sm:$0xff]
          %v1340 = vld [vmem:[%s1304 + $0x118] sm:$0xff]
          %v1341 = vld [vmem:[%s1304 + $0x120] sm:$0xff]
          %v1342 = vld [vmem:[%s1304 + $0x128] sm:$0xff]
          %v1343 = vld [vmem:[%s1304 + $0x130] sm:$0xff]
          %v1344 = vld [vmem:[%s1304 + $0x138] sm:$0xff]
          %v1345 = vld [vmem:[%s1304 + $0x140] sm:$0xff]
          %v1346 = vld [vmem:[%s1304 + $0x148] sm:$0xff]
          %v1347 = vld [vmem:[%s1304 + $0x150] sm:$0xff]
          %v1348 = vld [vmem:[%s1304 + $0x158] sm:$0xff]
          %v1349 = vld [vmem:[%s1304 + $0x160] sm:$0xff]
          %v1350 = vld [vmem:[%s1304 + $0x168] sm:$0xff]
          %v1351 = vld [vmem:[%s1304 + $0x170] sm:$0xff]
          %v1352 = vld [vmem:[%s1304 + $0x178] sm:$0xff]
          %v1353 = vld [vmem:[%s1304 + $0x180] sm:$0xff]
          %v1354 = vld [vmem:[%s1304 + $0x188] sm:$0xff]
          %v1355 = vld [vmem:[%s1304 + $0x190] sm:$0xff]
          %v1356 = vld [vmem:[%s1304 + $0x198] sm:$0xff]
          %v1357 = vld [vmem:[%s1304 + $0x1a0] sm:$0xff]
          %v1358 = vld [vmem:[%s1304 + $0x1a8] sm:$0xff]
          %v1359 = vld [vmem:[%s1304 + $0x1b0] sm:$0xff]
          %v1360 = vld [vmem:[%s1304 + $0x1b8] sm:$0xff]
          %v1361 = vld [vmem:[%s1304 + $0x1c0] sm:$0xff]
          %v1362 = vld [vmem:[%s1304 + $0x1c8] sm:$0xff]
          %v1363 = vld [vmem:[%s1304 + $0x1d0] sm:$0xff]
          %v1364 = vld [vmem:[%s1304 + $0x1d8] sm:$0xff]
          %v1365 = vld [vmem:[%s1304 + $0x1e0] sm:$0xff]
          %v1366 = vld [vmem:[%s1304 + $0x1e8] sm:$0xff]
          %v1367 = vld [vmem:[%s1304 + $0x1f0] sm:$0xff]
          %v1368 = vld [vmem:[%s1304 + $0x1f8] sm:$0xff]
          %v1369 = vld [vmem:[%s1304 + $0x200] sm:$0xff]
          %v1370 = vld [vmem:[%s1304 + $0x208] sm:$0xff]
          %v1371 = vld [vmem:[%s1304 + $0x210] sm:$0xff]
          %v1372 = vld [vmem:[%s1304 + $0x218] sm:$0xff]
          %v1373 = vld [vmem:[%s1304 + $0x220] sm:$0xff]
          %v1374 = vld [vmem:[%s1304 + $0x228] sm:$0xff]
          %v1375 = vld [vmem:[%s1304 + $0x230] sm:$0xff]
          %v1376 = vld [vmem:[%s1304 + $0x238] sm:$0xff]
          %v1377 = vld [vmem:[%s1304 + $0x240] sm:$0xff]
          %v1378 = vld [vmem:[%s1304 + $0x248] sm:$0xff]
          %v1379 = vld [vmem:[%s1304 + $0x250] sm:$0xff]
          %v1380 = vld [vmem:[%s1304 + $0x258] sm:$0xff]
          %v1381 = vld [vmem:[%s1304 + $0x260] sm:$0xff]
          %v1382 = vld [vmem:[%s1304 + $0x268] sm:$0xff]
          %v1383 = vld [vmem:[%s1304 + $0x270] sm:$0xff]
          %v1384 = vld [vmem:[%s1304 + $0x278] sm:$0xff]
          %v1385 = vld [vmem:[%s1304 + $0x280] sm:$0xff]
          %v1386 = vld [vmem:[%s1304 + $0x288] sm:$0xff]
          %v1387 = vld [vmem:[%s1304 + $0x290] sm:$0xff]
          %v1388 = vld [vmem:[%s1304 + $0x298] sm:$0xff]
          %v1389 = vld [vmem:[%s1304 + $0x2a0] sm:$0xff]
          %v1390 = vld [vmem:[%s1304 + $0x2a8] sm:$0xff]
          %v1391 = vld [vmem:[%s1304 + $0x2b0] sm:$0xff]
          %v1392 = vld [vmem:[%s1304 + $0x2b8] sm:$0xff]
          %v1393 = vld [vmem:[%s1304 + $0x2c0] sm:$0xff]
          %v1394 = vld [vmem:[%s1304 + $0x2c8] sm:$0xff]
          %v1395 = vld [vmem:[%s1304 + $0x2d0] sm:$0xff]
          %v1396 = vld [vmem:[%s1304 + $0x2d8] sm:$0xff]
          %v1397 = vld [vmem:[%s1304 + $0x2e0] sm:$0xff]
          %v1398 = vld [vmem:[%s1304 + $0x2e8] sm:$0xff]
          %v1399 = vld [vmem:[%s1304 + $0x2f0] sm:$0xff]
          %v1400 = vld [vmem:[%s1304 + $0x2f8] sm:$0xff]
          %v1401 = vld [vmem:[%s1304 + $0x300] sm:$0xff]
          %v1402 = vld [vmem:[%s1304 + $0x308] sm:$0xff]
          %v1403 = vld [vmem:[%s1304 + $0x310] sm:$0xff]
          %v1404 = vld [vmem:[%s1304 + $0x318] sm:$0xff]
          %v1405 = vld [vmem:[%s1304 + $0x320] sm:$0xff]
          %v1406 = vld [vmem:[%s1304 + $0x328] sm:$0xff]
          %v1407 = vld [vmem:[%s1304 + $0x330] sm:$0xff]
          %v1408 = vld [vmem:[%s1304 + $0x338] sm:$0xff]
          %v1409 = vld [vmem:[%s1304 + $0x340] sm:$0xff]
          %v1410 = vld [vmem:[%s1304 + $0x348] sm:$0xff]
          %v1411 = vld [vmem:[%s1304 + $0x350] sm:$0xff]
          %v1412 = vld [vmem:[%s1304 + $0x358] sm:$0xff]
          %v1413 = vld [vmem:[%s1304 + $0x360] sm:$0xff]
          %v1414 = vld [vmem:[%s1304 + $0x368] sm:$0xff]
          %v1415 = vld [vmem:[%s1304 + $0x370] sm:$0xff]
          %v1416 = vld [vmem:[%s1304 + $0x378] sm:$0xff]
          %v1417 = vld [vmem:[%s1304 + $0x380] sm:$0xff]
          %v1418 = vld [vmem:[%s1304 + $0x388] sm:$0xff]
          %v1419 = vld [vmem:[%s1304 + $0x390] sm:$0xff]
          %v1420 = vld [vmem:[%s1304 + $0x398] sm:$0xff]
          %v1421 = vld [vmem:[%s1304 + $0x3a0] sm:$0xff]
          %v1422 = vld [vmem:[%s1304 + $0x3a8] sm:$0xff]
          %v1423 = vld [vmem:[%s1304 + $0x3b0] sm:$0xff]
          %v1424 = vld [vmem:[%s1304 + $0x3b8] sm:$0xff]
          %v1425 = vld [vmem:[%s1304 + $0x3c0] sm:$0xff]
          %v1426 = vld [vmem:[%s1304 + $0x3c8] sm:$0xff]
          %v1427 = vld [vmem:[%s1304 + $0x3d0] sm:$0xff]
          %v1428 = vld [vmem:[%s1304 + $0x3d8] sm:$0xff]
          %v1429 = vld [vmem:[%s1304 + $0x3e0] sm:$0xff]
          %v1430 = vld [vmem:[%s1304 + $0x3e8] sm:$0xff]
          %v1431 = vld [vmem:[%s1304 + $0x3f0] sm:$0xff]
          %v1432 = vld [vmem:[%s1304 + $0x3f8] sm:$0xff]
          %v1433 = vld [vmem:[%s1304 + $0x400] sm:$0xff]
          %v1434 = vld [vmem:[%s1304 + $0x408] sm:$0xff]
          %v1435 = vld [vmem:[%s1304 + $0x410] sm:$0xff]
          %v1436 = vld [vmem:[%s1304 + $0x418] sm:$0xff]
          %v1437 = vld [vmem:[%s1304 + $0x420] sm:$0xff]
          %v1438 = vld [vmem:[%s1304 + $0x428] sm:$0xff]
          %v1439 = vld [vmem:[%s1304 + $0x430] sm:$0xff]
          %v1440 = vld [vmem:[%s1304 + $0x438] sm:$0xff]
          %v1441 = vld [vmem:[%s1304 + $0x440] sm:$0xff]
          %v1442 = vld [vmem:[%s1304 + $0x448] sm:$0xff]
          %v1443 = vld [vmem:[%s1304 + $0x450] sm:$0xff]
          %v1444 = vld [vmem:[%s1304 + $0x458] sm:$0xff]
          %v1445 = vld [vmem:[%s1304 + $0x460] sm:$0xff]
          %v1446 = vld [vmem:[%s1304 + $0x468] sm:$0xff]
          %v1447 = vld [vmem:[%s1304 + $0x470] sm:$0xff]
          %v1448 = vld [vmem:[%s1304 + $0x478] sm:$0xff]
          %v1449 = vld [vmem:[%s1304 + $0x480] sm:$0xff]
          %v1450 = vld [vmem:[%s1304 + $0x488] sm:$0xff]
          %v1451 = vld [vmem:[%s1304 + $0x490] sm:$0xff]
          %v1452 = vld [vmem:[%s1304 + $0x498] sm:$0xff]
          %v1453 = vld [vmem:[%s1304 + $0x4a0] sm:$0xff]
          %v1454 = vld [vmem:[%s1304 + $0x4a8] sm:$0xff]
          %v1455 = vld [vmem:[%s1304 + $0x4b0] sm:$0xff]
          %v1456 = vld [vmem:[%s1304 + $0x4b8] sm:$0xff]
          %v1457 = vld [vmem:[%s1304 + $0x4c0] sm:$0xff]
          %v1458 = vld [vmem:[%s1304 + $0x4c8] sm:$0xff]
          %v1459 = vld [vmem:[%s1304 + $0x4d0] sm:$0xff]
          %v1460 = vld [vmem:[%s1304 + $0x4d8] sm:$0xff]
          %v1461 = vld [vmem:[%s1304 + $0x4e0] sm:$0xff]
          %v1462 = vld [vmem:[%s1304 + $0x4e8] sm:$0xff]
          %v1463 = vld [vmem:[%s1304 + $0x4f0] sm:$0xff]
          %v1464 = vld [vmem:[%s1304 + $0x4f8] sm:$0xff]
          %v1465 = vld [vmem:[%s1304 + $0x500] sm:$0xff]
          %v1466 = vld [vmem:[%s1304 + $0x508] sm:$0xff]
          %v1467 = vld [vmem:[%s1304 + $0x510] sm:$0xff]
          %v1468 = vld [vmem:[%s1304 + $0x518] sm:$0xff]
          %v1469 = vld [vmem:[%s1304 + $0x520] sm:$0xff]
          %v1470 = vld [vmem:[%s1304 + $0x528] sm:$0xff]
          %v1471 = vld [vmem:[%s1304 + $0x530] sm:$0xff]
          %v1472 = vld [vmem:[%s1304 + $0x538] sm:$0xff]
          %v1473 = vld [vmem:[%s1304 + $0x540] sm:$0xff]
          %v1474 = vld [vmem:[%s1304 + $0x548] sm:$0xff]
          %v1475 = vld [vmem:[%s1304 + $0x550] sm:$0xff]
          %v1476 = vld [vmem:[%s1304 + $0x558] sm:$0xff]
          %v1477 = vld [vmem:[%s1304 + $0x560] sm:$0xff]
          %v1478 = vld [vmem:[%s1304 + $0x568] sm:$0xff]
          %v1479 = vld [vmem:[%s1304 + $0x570] sm:$0xff]
          %v1480 = vld [vmem:[%s1304 + $0x578] sm:$0xff]
          %v1481 = vld [vmem:[%s1304 + $0x580] sm:$0xff]
          %v1482 = vld [vmem:[%s1304 + $0x588] sm:$0xff]
          %v1483 = vld [vmem:[%s1304 + $0x590] sm:$0xff]
          %v1484 = vld [vmem:[%s1304 + $0x598] sm:$0xff]
          %v1485 = vld [vmem:[%s1304 + $0x5a0] sm:$0xff]
          %v1486 = vld [vmem:[%s1304 + $0x5a8] sm:$0xff]
          %v1487 = vld [vmem:[%s1304 + $0x5b0] sm:$0xff]
          %v1488 = vld [vmem:[%s1304 + $0x5b8] sm:$0xff]
          %v1489 = vld [vmem:[%s1304 + $0x5c0] sm:$0xff]
          %v1490 = vld [vmem:[%s1304 + $0x5c8] sm:$0xff]
          %v1491 = vld [vmem:[%s1304 + $0x5d0] sm:$0xff]
          %v1492 = vld [vmem:[%s1304 + $0x5d8] sm:$0xff]
          %v1493 = vld [vmem:[%s1304 + $0x5e0] sm:$0xff]
          %v1494 = vld [vmem:[%s1304 + $0x5e8] sm:$0xff]
          %v1495 = vld [vmem:[%s1304 + $0x5f0] sm:$0xff]
          %v1496 = vld [vmem:[%s1304 + $0x5f8] sm:$0xff]
          %v1497 = vld [vmem:[%s1304 + $0x600] sm:$0xff]
          %v1498 = vld [vmem:[%s1304 + $0x608] sm:$0xff]
          %v1499 = vld [vmem:[%s1304 + $0x610] sm:$0xff]
          %v1500 = vld [vmem:[%s1304 + $0x618] sm:$0xff]
          %v1501 = vld [vmem:[%s1304 + $0x620] sm:$0xff]
          %v1502 = vld [vmem:[%s1304 + $0x628] sm:$0xff]
          %v1503 = vld [vmem:[%s1304 + $0x630] sm:$0xff]
          %v1504 = vld [vmem:[%s1304 + $0x638] sm:$0xff]
          %v1505 = vld [vmem:[%s1304 + $0x640] sm:$0xff]
          %v1506 = vld [vmem:[%s1304 + $0x648] sm:$0xff]
          %v1507 = vld [vmem:[%s1304 + $0x650] sm:$0xff]
          %v1508 = vld [vmem:[%s1304 + $0x658] sm:$0xff]
          %v1509 = vld [vmem:[%s1304 + $0x660] sm:$0xff]
          %v1510 = vld [vmem:[%s1304 + $0x668] sm:$0xff]
          %v1511 = vld [vmem:[%s1304 + $0x670] sm:$0xff]
          %v1512 = vld [vmem:[%s1304 + $0x678] sm:$0xff]
          %v1513 = vld [vmem:[%s1304 + $0x680] sm:$0xff]
          %v1514 = vld [vmem:[%s1304 + $0x688] sm:$0xff]
          %v1515 = vld [vmem:[%s1304 + $0x690] sm:$0xff]
          %v1516 = vld [vmem:[%s1304 + $0x698] sm:$0xff]
          %v1517 = vld [vmem:[%s1304 + $0x6a0] sm:$0xff]
          %v1518 = vld [vmem:[%s1304 + $0x6a8] sm:$0xff]
          %v1519 = vld [vmem:[%s1304 + $0x6b0] sm:$0xff]
          %v1520 = vld [vmem:[%s1304 + $0x6b8] sm:$0xff]
          %v1521 = vld [vmem:[%s1304 + $0x6c0] sm:$0xff]
          %v1522 = vld [vmem:[%s1304 + $0x6c8] sm:$0xff]
          %v1523 = vld [vmem:[%s1304 + $0x6d0] sm:$0xff]
          %v1524 = vld [vmem:[%s1304 + $0x6d8] sm:$0xff]
          %v1525 = vld [vmem:[%s1304 + $0x6e0] sm:$0xff]
          %v1526 = vld [vmem:[%s1304 + $0x6e8] sm:$0xff]
          %v1527 = vld [vmem:[%s1304 + $0x6f0] sm:$0xff]
          %v1528 = vld [vmem:[%s1304 + $0x6f8] sm:$0xff]
          %v1529 = vld [vmem:[%s1304 + $0x700] sm:$0xff]
          %v1530 = vld [vmem:[%s1304 + $0x708] sm:$0xff]
          %v1531 = vld [vmem:[%s1304 + $0x710] sm:$0xff]
          %v1532 = vld [vmem:[%s1304 + $0x718] sm:$0xff]
          %v1533 = vld [vmem:[%s1304 + $0x720] sm:$0xff]
          %v1534 = vld [vmem:[%s1304 + $0x728] sm:$0xff]
          %v1535 = vld [vmem:[%s1304 + $0x730] sm:$0xff]
          %v1536 = vld [vmem:[%s1304 + $0x738] sm:$0xff]
          %v1537 = vld [vmem:[%s1304 + $0x740] sm:$0xff]
          %v1538 = vld [vmem:[%s1304 + $0x748] sm:$0xff]
          %v1539 = vld [vmem:[%s1304 + $0x750] sm:$0xff]
          %v1540 = vld [vmem:[%s1304 + $0x758] sm:$0xff]
          %v1541 = vld [vmem:[%s1304 + $0x760] sm:$0xff]
          %v1542 = vld [vmem:[%s1304 + $0x768] sm:$0xff]
          %v1543 = vld [vmem:[%s1304 + $0x770] sm:$0xff]
          %v1544 = vld [vmem:[%s1304 + $0x778] sm:$0xff]
          %v1545 = vld [vmem:[%s1304 + $0x780] sm:$0xff]
          %v1546 = vld [vmem:[%s1304 + $0x788] sm:$0xff]
          %v1547 = vld [vmem:[%s1304 + $0x790] sm:$0xff]
          %v1548 = vld [vmem:[%s1304 + $0x798] sm:$0xff]
          %v1549 = vld [vmem:[%s1304 + $0x7a0] sm:$0xff]
          %v1550 = vld [vmem:[%s1304 + $0x7a8] sm:$0xff]
          %v1551 = vld [vmem:[%s1304 + $0x7b0] sm:$0xff]
          %v1552 = vld [vmem:[%s1304 + $0x7b8] sm:$0xff]
          %v1553 = vld [vmem:[%s1304 + $0x7c0] sm:$0xff]
          %v1554 = vld [vmem:[%s1304 + $0x7c8] sm:$0xff]
          %v1555 = vld [vmem:[%s1304 + $0x7d0] sm:$0xff]
          %v1556 = vld [vmem:[%s1304 + $0x7d8] sm:$0xff]
          %v1557 = vld [vmem:[%s1304 + $0x7e0] sm:$0xff]
          %v1558 = vld [vmem:[%s1304 + $0x7e8] sm:$0xff]
          %v1559 = vld [vmem:[%s1304 + $0x7f0] sm:$0xff]
          %v1560 = vld [vmem:[%s1304 + $0x7f8] sm:$0xff]
          %v1561 = vld [vmem:[%s1304 + $0x800] sm:$0xff]
          %v1562 = vld [vmem:[%s1304 + $0x808] sm:$0xff]
          %v1563 = vld [vmem:[%s1304 + $0x810] sm:$0xff]
          %v1564 = vld [vmem:[%s1304 + $0x818] sm:$0xff]
          %v1565 = vld [vmem:[%s1304 + $0x820] sm:$0xff]
          %v1566 = vld [vmem:[%s1304 + $0x828] sm:$0xff]
          %v1567 = vld [vmem:[%s1304 + $0x830] sm:$0xff]
          %v1568 = vld [vmem:[%s1304 + $0x838] sm:$0xff]
          %v1569 = vld [vmem:[%s1304 + $0x840] sm:$0xff]
          %v1570 = vld [vmem:[%s1304 + $0x848] sm:$0xff]
          %v1571 = vld [vmem:[%s1304 + $0x850] sm:$0xff]
          %v1572 = vld [vmem:[%s1304 + $0x858] sm:$0xff]
          %v1573 = vld [vmem:[%s1304 + $0x860] sm:$0xff]
          %v1574 = vld [vmem:[%s1304 + $0x868] sm:$0xff]
          %v1575 = vld [vmem:[%s1304 + $0x870] sm:$0xff]
          %v1576 = vld [vmem:[%s1304 + $0x878] sm:$0xff]
          %v1577 = vld [vmem:[%s1304 + $0x880] sm:$0xff]
          %v1578 = vld [vmem:[%s1304 + $0x888] sm:$0xff]
          %v1579 = vld [vmem:[%s1304 + $0x890] sm:$0xff]
          %v1580 = vld [vmem:[%s1304 + $0x898] sm:$0xff]
          %v1581 = vld [vmem:[%s1304 + $0x8a0] sm:$0xff]
          %v1582 = vld [vmem:[%s1304 + $0x8a8] sm:$0xff]
          %v1583 = vld [vmem:[%s1304 + $0x8b0] sm:$0xff]
          %v1584 = vld [vmem:[%s1304 + $0x8b8] sm:$0xff]
          %v1585 = vld [vmem:[%s1304 + $0x8c0] sm:$0xff]
          %v1586 = vld [vmem:[%s1304 + $0x8c8] sm:$0xff]
          %v1587 = vld [vmem:[%s1304 + $0x8d0] sm:$0xff]
          %v1588 = vld [vmem:[%s1304 + $0x8d8] sm:$0xff]
          %v1589 = vld [vmem:[%s1304 + $0x8e0] sm:$0xff]
          %v1590 = vld [vmem:[%s1304 + $0x8e8] sm:$0xff]
          %v1591 = vld [vmem:[%s1304 + $0x8f0] sm:$0xff]
          %v1592 = vld [vmem:[%s1304 + $0x8f8] sm:$0xff]
          %v1594 = vshrl.u32 %v1011, 16
          %v1596 = vshll.u32 %v1011, 16
          %v1598 = vrot.slane %v1596, 1
          %v1599 = vor.u32 %v1594, %v1598
          %v1601 = vshrl.u32 %v1012, 16
          %v1603 = vshll.u32 %v1012, 16
          %v1605 = vrot.slane %v1603, 1
          %v1606 = vor.u32 %v1601, %v1605
          %v1608 = vshrl.u32 %v1013, 16
          %v1610 = vshll.u32 %v1013, 16
          %v1612 = vrot.slane %v1610, 1
          %v1613 = vor.u32 %v1608, %v1612
          %v1615 = vshrl.u32 %v1014, 16
          %v1617 = vshll.u32 %v1014, 16
          %v1619 = vrot.slane %v1617, 1
          %v1620 = vor.u32 %v1615, %v1619
          %v1622 = vshrl.u32 %v1015, 16
          %v1624 = vshll.u32 %v1015, 16
          %v1626 = vrot.slane %v1624, 1
          %v1627 = vor.u32 %v1622, %v1626
          %v1920 = vunpack.c.l.b16 %v1305
          %v1921 = vunpack.c.h.b16 %v1305
          %v1922 = vunpack.c.l.b16 %v1306
          %v1923 = vunpack.c.h.b16 %v1306
          %v1924 = vunpack.c.l.b16 %v1307
          %v1925 = vunpack.c.h.b16 %v1307
          %v1926 = vunpack.c.l.b16 %v1308
          %v1927 = vunpack.c.h.b16 %v1308
          %v1928 = vunpack.c.l.b16 %v1309
          %v1929 = vunpack.c.h.b16 %v1309
          %v1930 = vunpack.c.l.b16 %v1310
          %v1931 = vunpack.c.h.b16 %v1310
          %v1932 = vunpack.c.l.b16 %v1311
          %v1933 = vunpack.c.h.b16 %v1311
          %v1934 = vunpack.c.l.b16 %v1312
          %v1935 = vunpack.c.h.b16 %v1312
          %v1936 = vunpack.c.l.b16 %v1313
          %v1937 = vunpack.c.h.b16 %v1313
          %v1938 = vunpack.c.l.b16 %v1314
          %v1939 = vunpack.c.h.b16 %v1314
          %v1940 = vunpack.c.l.b16 %v1315
          %v1941 = vunpack.c.h.b16 %v1315
          %v1942 = vunpack.c.l.b16 %v1316
          %v1943 = vunpack.c.h.b16 %v1316
          %v1944 = vunpack.c.l.b16 %v1317
          %v1945 = vunpack.c.h.b16 %v1317
          %v1946 = vunpack.c.l.b16 %v1318
          %v1947 = vunpack.c.h.b16 %v1318
          %v1948 = vunpack.c.l.b16 %v1319
          %v1949 = vunpack.c.h.b16 %v1319
          %v1950 = vunpack.c.l.b16 %v1320
          %v1951 = vunpack.c.h.b16 %v1320
          %v1952 = vunpack.c.l.b16 %v1321
          %v1953 = vunpack.c.h.b16 %v1321
          %v1954 = vunpack.c.l.b16 %v1322
          %v1955 = vunpack.c.h.b16 %v1322
          %v1956 = vunpack.c.l.b16 %v1323
          %v1957 = vunpack.c.h.b16 %v1323
          %v1958 = vunpack.c.l.b16 %v1324
          %v1959 = vunpack.c.h.b16 %v1324
          %v1960 = vunpack.c.l.b16 %v1325
          %v1961 = vunpack.c.h.b16 %v1325
          %v1962 = vunpack.c.l.b16 %v1326
          %v1963 = vunpack.c.h.b16 %v1326
          %v1964 = vunpack.c.l.b16 %v1327
          %v1965 = vunpack.c.h.b16 %v1327
          %v1966 = vunpack.c.l.b16 %v1328
          %v1967 = vunpack.c.h.b16 %v1328
          %v1968 = vunpack.c.l.b16 %v1329
          %v1969 = vunpack.c.h.b16 %v1329
          %v1970 = vunpack.c.l.b16 %v1330
          %v1971 = vunpack.c.h.b16 %v1330
          %v1972 = vunpack.c.l.b16 %v1331
          %v1973 = vunpack.c.h.b16 %v1331
          %v1974 = vunpack.c.l.b16 %v1332
          %v1975 = vunpack.c.h.b16 %v1332
          %v1976 = vunpack.c.l.b16 %v1333
          %v1977 = vunpack.c.h.b16 %v1333
          %v1978 = vunpack.c.l.b16 %v1334
          %v1979 = vunpack.c.h.b16 %v1334
          %v1980 = vunpack.c.l.b16 %v1335
          %v1981 = vunpack.c.h.b16 %v1335
          %v1982 = vunpack.c.l.b16 %v1336
          %v1983 = vunpack.c.h.b16 %v1336
          %v1984 = vunpack.c.l.b16 %v1337
          %v1985 = vunpack.c.h.b16 %v1337
          %v1986 = vunpack.c.l.b16 %v1338
          %v1987 = vunpack.c.h.b16 %v1338
          %v1988 = vunpack.c.l.b16 %v1339
          %v1989 = vunpack.c.h.b16 %v1339
          %v1990 = vunpack.c.l.b16 %v1340
          %v1991 = vunpack.c.h.b16 %v1340
          %v1992 = vunpack.c.l.b16 %v1341
          %v1993 = vunpack.c.h.b16 %v1341
          %v1994 = vunpack.c.l.b16 %v1342
          %v1995 = vunpack.c.h.b16 %v1342
          %v1996 = vunpack.c.l.b16 %v1343
          %v1997 = vunpack.c.h.b16 %v1343
          %v1998 = vunpack.c.l.b16 %v1344
          %v1999 = vunpack.c.h.b16 %v1344
          %v2000 = vunpack.c.l.b16 %v1345
          %v2001 = vunpack.c.h.b16 %v1345
          %v2002 = vunpack.c.l.b16 %v1346
          %v2003 = vunpack.c.h.b16 %v1346
          %v2004 = vunpack.c.l.b16 %v1347
          %v2005 = vunpack.c.h.b16 %v1347
          %v2006 = vunpack.c.l.b16 %v1348
          %v2007 = vunpack.c.h.b16 %v1348
          %v2008 = vunpack.c.l.b16 %v1349
          %v2009 = vunpack.c.h.b16 %v1349
          %v2010 = vunpack.c.l.b16 %v1350
          %v2011 = vunpack.c.h.b16 %v1350
          %v2012 = vunpack.c.l.b16 %v1351
          %v2013 = vunpack.c.h.b16 %v1351
          %v2014 = vunpack.c.l.b16 %v1352
          %v2015 = vunpack.c.h.b16 %v1352
          %v2016 = vunpack.c.l.b16 %v1353
          %v2017 = vunpack.c.h.b16 %v1353
          %v2018 = vunpack.c.l.b16 %v1354
          %v2019 = vunpack.c.h.b16 %v1354
          %v2020 = vunpack.c.l.b16 %v1355
          %v2021 = vunpack.c.h.b16 %v1355
          %v2022 = vunpack.c.l.b16 %v1356
          %v2023 = vunpack.c.h.b16 %v1356
          %v2024 = vunpack.c.l.b16 %v1357
          %v2025 = vunpack.c.h.b16 %v1357
          %v2026 = vunpack.c.l.b16 %v1358
          %v2027 = vunpack.c.h.b16 %v1358
          %v2028 = vunpack.c.l.b16 %v1359
          %v2029 = vunpack.c.h.b16 %v1359
          %v2030 = vunpack.c.l.b16 %v1360
          %v2031 = vunpack.c.h.b16 %v1360
          %v2032 = vunpack.c.l.b16 %v1361
          %v2033 = vunpack.c.h.b16 %v1361
          %v2034 = vunpack.c.l.b16 %v1362
          %v2035 = vunpack.c.h.b16 %v1362
          %v2036 = vunpack.c.l.b16 %v1363
          %v2037 = vunpack.c.h.b16 %v1363
          %v2038 = vunpack.c.l.b16 %v1364
          %v2039 = vunpack.c.h.b16 %v1364
          %v2040 = vunpack.c.l.b16 %v1365
          %v2041 = vunpack.c.h.b16 %v1365
          %v2042 = vunpack.c.l.b16 %v1366
          %v2043 = vunpack.c.h.b16 %v1366
          %v2044 = vunpack.c.l.b16 %v1367
          %v2045 = vunpack.c.h.b16 %v1367
          %v2046 = vunpack.c.l.b16 %v1368
          %v2047 = vunpack.c.h.b16 %v1368
          %v2048 = vunpack.c.l.b16 %v1369
          %v2049 = vunpack.c.h.b16 %v1369
          %v2050 = vunpack.c.l.b16 %v1370
          %v2051 = vunpack.c.h.b16 %v1370
          %v2052 = vunpack.c.l.b16 %v1371
          %v2053 = vunpack.c.h.b16 %v1371
          %v2054 = vunpack.c.l.b16 %v1372
          %v2055 = vunpack.c.h.b16 %v1372
          %v2056 = vunpack.c.l.b16 %v1373
          %v2057 = vunpack.c.h.b16 %v1373
          %v2058 = vunpack.c.l.b16 %v1374
          %v2059 = vunpack.c.h.b16 %v1374
          %v2060 = vunpack.c.l.b16 %v1375
          %v2061 = vunpack.c.h.b16 %v1375
          %v2062 = vunpack.c.l.b16 %v1376
          %v2063 = vunpack.c.h.b16 %v1376
          %v2064 = vunpack.c.l.b16 %v1377
          %v2065 = vunpack.c.h.b16 %v1377
          %v2066 = vunpack.c.l.b16 %v1378
          %v2067 = vunpack.c.h.b16 %v1378
          %v2068 = vunpack.c.l.b16 %v1379
          %v2069 = vunpack.c.h.b16 %v1379
          %v2070 = vunpack.c.l.b16 %v1380
          %v2071 = vunpack.c.h.b16 %v1380
          %v2072 = vunpack.c.l.b16 %v1381
          %v2073 = vunpack.c.h.b16 %v1381
          %v2074 = vunpack.c.l.b16 %v1382
          %v2075 = vunpack.c.h.b16 %v1382
          %v2076 = vunpack.c.l.b16 %v1383
          %v2077 = vunpack.c.h.b16 %v1383
          %v2078 = vunpack.c.l.b16 %v1384
          %v2079 = vunpack.c.h.b16 %v1384
          %v2080 = vunpack.c.l.b16 %v1385
          %v2081 = vunpack.c.h.b16 %v1385
          %v2082 = vunpack.c.l.b16 %v1386
          %v2083 = vunpack.c.h.b16 %v1386
          %v2084 = vunpack.c.l.b16 %v1387
          %v2085 = vunpack.c.h.b16 %v1387
          %v2086 = vunpack.c.l.b16 %v1388
          %v2087 = vunpack.c.h.b16 %v1388
          %v2088 = vunpack.c.l.b16 %v1389
          %v2089 = vunpack.c.h.b16 %v1389
          %v2090 = vunpack.c.l.b16 %v1390
          %v2091 = vunpack.c.h.b16 %v1390
          %v2092 = vunpack.c.l.b16 %v1391
          %v2093 = vunpack.c.h.b16 %v1391
          %v2094 = vunpack.c.l.b16 %v1392
          %v2095 = vunpack.c.h.b16 %v1392
          %v2096 = vunpack.c.l.b16 %v1393
          %v2097 = vunpack.c.h.b16 %v1393
          %v2098 = vunpack.c.l.b16 %v1394
          %v2099 = vunpack.c.h.b16 %v1394
          %v2100 = vunpack.c.l.b16 %v1395
          %v2101 = vunpack.c.h.b16 %v1395
          %v2102 = vunpack.c.l.b16 %v1396
          %v2103 = vunpack.c.h.b16 %v1396
          %v2104 = vunpack.c.l.b16 %v1397
          %v2105 = vunpack.c.h.b16 %v1397
          %v2106 = vunpack.c.l.b16 %v1398
          %v2107 = vunpack.c.h.b16 %v1398
          %v2108 = vunpack.c.l.b16 %v1399
          %v2109 = vunpack.c.h.b16 %v1399
          %v2110 = vunpack.c.l.b16 %v1400
          %v2111 = vunpack.c.h.b16 %v1400
          %v2112 = vunpack.c.l.b16 %v1401
          %v2113 = vunpack.c.h.b16 %v1401
          %v2114 = vunpack.c.l.b16 %v1402
          %v2115 = vunpack.c.h.b16 %v1402
          %v2116 = vunpack.c.l.b16 %v1403
          %v2117 = vunpack.c.h.b16 %v1403
          %v2118 = vunpack.c.l.b16 %v1404
          %v2119 = vunpack.c.h.b16 %v1404
          %v2120 = vunpack.c.l.b16 %v1405
          %v2121 = vunpack.c.h.b16 %v1405
          %v2122 = vunpack.c.l.b16 %v1406
          %v2123 = vunpack.c.h.b16 %v1406
          %v2124 = vunpack.c.l.b16 %v1407
          %v2125 = vunpack.c.h.b16 %v1407
          %v2126 = vunpack.c.l.b16 %v1408
          %v2127 = vunpack.c.h.b16 %v1408
          %v2128 = vunpack.c.l.b16 %v1409
          %v2129 = vunpack.c.h.b16 %v1409
          %v2130 = vunpack.c.l.b16 %v1410
          %v2131 = vunpack.c.h.b16 %v1410
          %v2132 = vunpack.c.l.b16 %v1411
          %v2133 = vunpack.c.h.b16 %v1411
          %v2134 = vunpack.c.l.b16 %v1412
          %v2135 = vunpack.c.h.b16 %v1412
          %v2136 = vunpack.c.l.b16 %v1413
          %v2137 = vunpack.c.h.b16 %v1413
          %v2138 = vunpack.c.l.b16 %v1414
          %v2139 = vunpack.c.h.b16 %v1414
          %v2140 = vunpack.c.l.b16 %v1415
          %v2141 = vunpack.c.h.b16 %v1415
          %v2142 = vunpack.c.l.b16 %v1416
          %v2143 = vunpack.c.h.b16 %v1416
          %v2144 = vunpack.c.l.b16 %v1417
          %v2145 = vunpack.c.h.b16 %v1417
          %v2146 = vunpack.c.l.b16 %v1418
          %v2147 = vunpack.c.h.b16 %v1418
          %v2148 = vunpack.c.l.b16 %v1419
          %v2149 = vunpack.c.h.b16 %v1419
          %v2150 = vunpack.c.l.b16 %v1420
          %v2151 = vunpack.c.h.b16 %v1420
          %v2152 = vunpack.c.l.b16 %v1421
          %v2153 = vunpack.c.h.b16 %v1421
          %v2154 = vunpack.c.l.b16 %v1422
          %v2155 = vunpack.c.h.b16 %v1422
          %v2156 = vunpack.c.l.b16 %v1423
          %v2157 = vunpack.c.h.b16 %v1423
          %v2158 = vunpack.c.l.b16 %v1424
          %v2159 = vunpack.c.h.b16 %v1424
          %v2160 = vunpack.c.l.b16 %v1425
          %v2161 = vunpack.c.h.b16 %v1425
          %v2162 = vunpack.c.l.b16 %v1426
          %v2163 = vunpack.c.h.b16 %v1426
          %v2164 = vunpack.c.l.b16 %v1427
          %v2165 = vunpack.c.h.b16 %v1427
          %v2166 = vunpack.c.l.b16 %v1428
          %v2167 = vunpack.c.h.b16 %v1428
          %v2168 = vunpack.c.l.b16 %v1429
          %v2169 = vunpack.c.h.b16 %v1429
          %v2170 = vunpack.c.l.b16 %v1430
          %v2171 = vunpack.c.h.b16 %v1430
          %v2172 = vunpack.c.l.b16 %v1431
          %v2173 = vunpack.c.h.b16 %v1431
          %v2174 = vunpack.c.l.b16 %v1432
          %v2175 = vunpack.c.h.b16 %v1432
          %v2176 = vunpack.c.l.b16 %v1433
          %v2177 = vunpack.c.h.b16 %v1433
          %v2178 = vunpack.c.l.b16 %v1434
          %v2179 = vunpack.c.h.b16 %v1434
          %v2180 = vunpack.c.l.b16 %v1435
          %v2181 = vunpack.c.h.b16 %v1435
          %v2182 = vunpack.c.l.b16 %v1436
          %v2183 = vunpack.c.h.b16 %v1436
          %v2184 = vunpack.c.l.b16 %v1437
          %v2185 = vunpack.c.h.b16 %v1437
          %v2186 = vunpack.c.l.b16 %v1438
          %v2187 = vunpack.c.h.b16 %v1438
          %v2188 = vunpack.c.l.b16 %v1439
          %v2189 = vunpack.c.h.b16 %v1439
          %v2190 = vunpack.c.l.b16 %v1440
          %v2191 = vunpack.c.h.b16 %v1440
          %v2192 = vunpack.c.l.b16 %v1441
          %v2193 = vunpack.c.h.b16 %v1441
          %v2194 = vunpack.c.l.b16 %v1442
          %v2195 = vunpack.c.h.b16 %v1442
          %v2196 = vunpack.c.l.b16 %v1443
          %v2197 = vunpack.c.h.b16 %v1443
          %v2198 = vunpack.c.l.b16 %v1444
          %v2199 = vunpack.c.h.b16 %v1444
          %v2200 = vunpack.c.l.b16 %v1445
          %v2201 = vunpack.c.h.b16 %v1445
          %v2202 = vunpack.c.l.b16 %v1446
          %v2203 = vunpack.c.h.b16 %v1446
          %v2204 = vunpack.c.l.b16 %v1447
          %v2205 = vunpack.c.h.b16 %v1447
          %v2206 = vunpack.c.l.b16 %v1448
          %v2207 = vunpack.c.h.b16 %v1448
          %v2208 = vunpack.c.l.b16 %v1449
          %v2209 = vunpack.c.h.b16 %v1449
          %v2210 = vunpack.c.l.b16 %v1450
          %v2211 = vunpack.c.h.b16 %v1450
          %v2212 = vunpack.c.l.b16 %v1451
          %v2213 = vunpack.c.h.b16 %v1451
          %v2214 = vunpack.c.l.b16 %v1452
          %v2215 = vunpack.c.h.b16 %v1452
          %v2216 = vunpack.c.l.b16 %v1453
          %v2217 = vunpack.c.h.b16 %v1453
          %v2218 = vunpack.c.l.b16 %v1454
          %v2219 = vunpack.c.h.b16 %v1454
          %v2220 = vunpack.c.l.b16 %v1455
          %v2221 = vunpack.c.h.b16 %v1455
          %v2222 = vunpack.c.l.b16 %v1456
          %v2223 = vunpack.c.h.b16 %v1456
          %v2224 = vunpack.c.l.b16 %v1457
          %v2225 = vunpack.c.h.b16 %v1457
          %v2226 = vunpack.c.l.b16 %v1458
          %v2227 = vunpack.c.h.b16 %v1458
          %v2228 = vunpack.c.l.b16 %v1459
          %v2229 = vunpack.c.h.b16 %v1459
          %v2230 = vunpack.c.l.b16 %v1460
          %v2231 = vunpack.c.h.b16 %v1460
          %v2232 = vunpack.c.l.b16 %v1461
          %v2233 = vunpack.c.h.b16 %v1461
          %v2234 = vunpack.c.l.b16 %v1462
          %v2235 = vunpack.c.h.b16 %v1462
          %v2236 = vunpack.c.l.b16 %v1463
          %v2237 = vunpack.c.h.b16 %v1463
          %v2238 = vunpack.c.l.b16 %v1464
          %v2239 = vunpack.c.h.b16 %v1464
          %v2240 = vunpack.c.l.b16 %v1465
          %v2241 = vunpack.c.h.b16 %v1465
          %v2242 = vunpack.c.l.b16 %v1466
          %v2243 = vunpack.c.h.b16 %v1466
          %v2244 = vunpack.c.l.b16 %v1467
          %v2245 = vunpack.c.h.b16 %v1467
          %v2246 = vunpack.c.l.b16 %v1468
          %v2247 = vunpack.c.h.b16 %v1468
          %v2248 = vunpack.c.l.b16 %v1469
          %v2249 = vunpack.c.h.b16 %v1469
          %v2250 = vunpack.c.l.b16 %v1470
          %v2251 = vunpack.c.h.b16 %v1470
          %v2252 = vunpack.c.l.b16 %v1471
          %v2253 = vunpack.c.h.b16 %v1471
          %v2254 = vunpack.c.l.b16 %v1472
          %v2255 = vunpack.c.h.b16 %v1472
          %v2256 = vunpack.c.l.b16 %v1473
          %v2257 = vunpack.c.h.b16 %v1473
          %v2258 = vunpack.c.l.b16 %v1474
          %v2259 = vunpack.c.h.b16 %v1474
          %v2260 = vunpack.c.l.b16 %v1475
          %v2261 = vunpack.c.h.b16 %v1475
          %v2262 = vunpack.c.l.b16 %v1476
          %v2263 = vunpack.c.h.b16 %v1476
          %v2264 = vunpack.c.l.b16 %v1477
          %v2265 = vunpack.c.h.b16 %v1477
          %v2266 = vunpack.c.l.b16 %v1478
          %v2267 = vunpack.c.h.b16 %v1478
          %v2268 = vunpack.c.l.b16 %v1479
          %v2269 = vunpack.c.h.b16 %v1479
          %v2270 = vunpack.c.l.b16 %v1480
          %v2271 = vunpack.c.h.b16 %v1480
          %v2272 = vunpack.c.l.b16 %v1481
          %v2273 = vunpack.c.h.b16 %v1481
          %v2274 = vunpack.c.l.b16 %v1482
          %v2275 = vunpack.c.h.b16 %v1482
          %v2276 = vunpack.c.l.b16 %v1483
          %v2277 = vunpack.c.h.b16 %v1483
          %v2278 = vunpack.c.l.b16 %v1484
          %v2279 = vunpack.c.h.b16 %v1484
          %v2280 = vunpack.c.l.b16 %v1485
          %v2281 = vunpack.c.h.b16 %v1485
          %v2282 = vunpack.c.l.b16 %v1486
          %v2283 = vunpack.c.h.b16 %v1486
          %v2284 = vunpack.c.l.b16 %v1487
          %v2285 = vunpack.c.h.b16 %v1487
          %v2286 = vunpack.c.l.b16 %v1488
          %v2287 = vunpack.c.h.b16 %v1488
          %v2288 = vunpack.c.l.b16 %v1489
          %v2289 = vunpack.c.h.b16 %v1489
          %v2290 = vunpack.c.l.b16 %v1490
          %v2291 = vunpack.c.h.b16 %v1490
          %v2292 = vunpack.c.l.b16 %v1491
          %v2293 = vunpack.c.h.b16 %v1491
          %v2294 = vunpack.c.l.b16 %v1492
          %v2295 = vunpack.c.h.b16 %v1492
          %v2296 = vunpack.c.l.b16 %v1493
          %v2297 = vunpack.c.h.b16 %v1493
          %v2298 = vunpack.c.l.b16 %v1494
          %v2299 = vunpack.c.h.b16 %v1494
          %v2300 = vunpack.c.l.b16 %v1495
          %v2301 = vunpack.c.h.b16 %v1495
          %v2302 = vunpack.c.l.b16 %v1496
          %v2303 = vunpack.c.h.b16 %v1496
          %v2304 = vunpack.c.l.b16 %v1497
          %v2305 = vunpack.c.h.b16 %v1497
          %v2306 = vunpack.c.l.b16 %v1498
          %v2307 = vunpack.c.h.b16 %v1498
          %v2308 = vunpack.c.l.b16 %v1499
          %v2309 = vunpack.c.h.b16 %v1499
          %v2310 = vunpack.c.l.b16 %v1500
          %v2311 = vunpack.c.h.b16 %v1500
          %v2312 = vunpack.c.l.b16 %v1501
          %v2313 = vunpack.c.h.b16 %v1501
          %v2314 = vunpack.c.l.b16 %v1502
          %v2315 = vunpack.c.h.b16 %v1502
          %v2316 = vunpack.c.l.b16 %v1503
          %v2317 = vunpack.c.h.b16 %v1503
          %v2318 = vunpack.c.l.b16 %v1504
          %v2319 = vunpack.c.h.b16 %v1504
          %v2320 = vunpack.c.l.b16 %v1505
          %v2321 = vunpack.c.h.b16 %v1505
          %v2322 = vunpack.c.l.b16 %v1506
          %v2323 = vunpack.c.h.b16 %v1506
          %v2324 = vunpack.c.l.b16 %v1507
          %v2325 = vunpack.c.h.b16 %v1507
          %v2326 = vunpack.c.l.b16 %v1508
          %v2327 = vunpack.c.h.b16 %v1508
          %v2328 = vunpack.c.l.b16 %v1509
          %v2329 = vunpack.c.h.b16 %v1509
          %v2330 = vunpack.c.l.b16 %v1510
          %v2331 = vunpack.c.h.b16 %v1510
          %v2332 = vunpack.c.l.b16 %v1511
          %v2333 = vunpack.c.h.b16 %v1511
          %v2334 = vunpack.c.l.b16 %v1512
          %v2335 = vunpack.c.h.b16 %v1512
          %v2336 = vunpack.c.l.b16 %v1513
          %v2337 = vunpack.c.h.b16 %v1513
          %v2338 = vunpack.c.l.b16 %v1514
          %v2339 = vunpack.c.h.b16 %v1514
          %v2340 = vunpack.c.l.b16 %v1515
          %v2341 = vunpack.c.h.b16 %v1515
          %v2342 = vunpack.c.l.b16 %v1516
          %v2343 = vunpack.c.h.b16 %v1516
          %v2344 = vunpack.c.l.b16 %v1517
          %v2345 = vunpack.c.h.b16 %v1517
          %v2346 = vunpack.c.l.b16 %v1518
          %v2347 = vunpack.c.h.b16 %v1518
          %v2348 = vunpack.c.l.b16 %v1519
          %v2349 = vunpack.c.h.b16 %v1519
          %v2350 = vunpack.c.l.b16 %v1520
          %v2351 = vunpack.c.h.b16 %v1520
          %v2352 = vunpack.c.l.b16 %v1521
          %v2353 = vunpack.c.h.b16 %v1521
          %v2354 = vunpack.c.l.b16 %v1522
          %v2355 = vunpack.c.h.b16 %v1522
          %v2356 = vunpack.c.l.b16 %v1523
          %v2357 = vunpack.c.h.b16 %v1523
          %v2358 = vunpack.c.l.b16 %v1524
          %v2359 = vunpack.c.h.b16 %v1524
          %v2360 = vunpack.c.l.b16 %v1525
          %v2361 = vunpack.c.h.b16 %v1525
          %v2362 = vunpack.c.l.b16 %v1526
          %v2363 = vunpack.c.h.b16 %v1526
          %v2364 = vunpack.c.l.b16 %v1527
          %v2365 = vunpack.c.h.b16 %v1527
          %v2366 = vunpack.c.l.b16 %v1528
          %v2367 = vunpack.c.h.b16 %v1528
          %v2368 = vunpack.c.l.b16 %v1529
          %v2369 = vunpack.c.h.b16 %v1529
          %v2370 = vunpack.c.l.b16 %v1530
          %v2371 = vunpack.c.h.b16 %v1530
          %v2372 = vunpack.c.l.b16 %v1531
          %v2373 = vunpack.c.h.b16 %v1531
          %v2374 = vunpack.c.l.b16 %v1532
          %v2375 = vunpack.c.h.b16 %v1532
          %v2376 = vunpack.c.l.b16 %v1533
          %v2377 = vunpack.c.h.b16 %v1533
          %v2378 = vunpack.c.l.b16 %v1534
          %v2379 = vunpack.c.h.b16 %v1534
          %v2380 = vunpack.c.l.b16 %v1535
          %v2381 = vunpack.c.h.b16 %v1535
          %v2382 = vunpack.c.l.b16 %v1536
          %v2383 = vunpack.c.h.b16 %v1536
          %v2384 = vunpack.c.l.b16 %v1537
          %v2385 = vunpack.c.h.b16 %v1537
          %v2386 = vunpack.c.l.b16 %v1538
          %v2387 = vunpack.c.h.b16 %v1538
          %v2388 = vunpack.c.l.b16 %v1539
          %v2389 = vunpack.c.h.b16 %v1539
          %v2390 = vunpack.c.l.b16 %v1540
          %v2391 = vunpack.c.h.b16 %v1540
          %v2392 = vunpack.c.l.b16 %v1541
          %v2393 = vunpack.c.h.b16 %v1541
          %v2394 = vunpack.c.l.b16 %v1542
          %v2395 = vunpack.c.h.b16 %v1542
          %v2396 = vunpack.c.l.b16 %v1543
          %v2397 = vunpack.c.h.b16 %v1543
          %v2398 = vunpack.c.l.b16 %v1544
          %v2399 = vunpack.c.h.b16 %v1544
          %v2400 = vunpack.c.l.b16 %v1545
          %v2401 = vunpack.c.h.b16 %v1545
          %v2402 = vunpack.c.l.b16 %v1546
          %v2403 = vunpack.c.h.b16 %v1546
          %v2404 = vunpack.c.l.b16 %v1547
          %v2405 = vunpack.c.h.b16 %v1547
          %v2406 = vunpack.c.l.b16 %v1548
          %v2407 = vunpack.c.h.b16 %v1548
          %v2408 = vunpack.c.l.b16 %v1549
          %v2409 = vunpack.c.h.b16 %v1549
          %v2410 = vunpack.c.l.b16 %v1550
          %v2411 = vunpack.c.h.b16 %v1550
          %v2412 = vunpack.c.l.b16 %v1551
          %v2413 = vunpack.c.h.b16 %v1551
          %v2414 = vunpack.c.l.b16 %v1552
          %v2415 = vunpack.c.h.b16 %v1552
          %v2416 = vunpack.c.l.b16 %v1553
          %v2417 = vunpack.c.h.b16 %v1553
          %v2418 = vunpack.c.l.b16 %v1554
          %v2419 = vunpack.c.h.b16 %v1554
          %v2420 = vunpack.c.l.b16 %v1555
          %v2421 = vunpack.c.h.b16 %v1555
          %v2422 = vunpack.c.l.b16 %v1556
          %v2423 = vunpack.c.h.b16 %v1556
          %v2424 = vunpack.c.l.b16 %v1557
          %v2425 = vunpack.c.h.b16 %v1557
          %v2426 = vunpack.c.l.b16 %v1558
          %v2427 = vunpack.c.h.b16 %v1558
          %v2428 = vunpack.c.l.b16 %v1559
          %v2429 = vunpack.c.h.b16 %v1559
          %v2430 = vunpack.c.l.b16 %v1560
          %v2431 = vunpack.c.h.b16 %v1560
          %v2432 = vunpack.c.l.b16 %v1561
          %v2433 = vunpack.c.h.b16 %v1561
          %v2434 = vunpack.c.l.b16 %v1562
          %v2435 = vunpack.c.h.b16 %v1562
          %v2436 = vunpack.c.l.b16 %v1563
          %v2437 = vunpack.c.h.b16 %v1563
          %v2438 = vunpack.c.l.b16 %v1564
          %v2439 = vunpack.c.h.b16 %v1564
          %v2440 = vunpack.c.l.b16 %v1565
          %v2441 = vunpack.c.h.b16 %v1565
          %v2442 = vunpack.c.l.b16 %v1566
          %v2443 = vunpack.c.h.b16 %v1566
          %v2444 = vunpack.c.l.b16 %v1567
          %v2445 = vunpack.c.h.b16 %v1567
          %v2446 = vunpack.c.l.b16 %v1568
          %v2447 = vunpack.c.h.b16 %v1568
          %v2448 = vunpack.c.l.b16 %v1569
          %v2449 = vunpack.c.h.b16 %v1569
          %v2450 = vunpack.c.l.b16 %v1570
          %v2451 = vunpack.c.h.b16 %v1570
          %v2452 = vunpack.c.l.b16 %v1571
          %v2453 = vunpack.c.h.b16 %v1571
          %v2454 = vunpack.c.l.b16 %v1572
          %v2455 = vunpack.c.h.b16 %v1572
          %v2456 = vunpack.c.l.b16 %v1573
          %v2457 = vunpack.c.h.b16 %v1573
          %v2458 = vunpack.c.l.b16 %v1574
          %v2459 = vunpack.c.h.b16 %v1574
          %v2460 = vunpack.c.l.b16 %v1575
          %v2461 = vunpack.c.h.b16 %v1575
          %v2462 = vunpack.c.l.b16 %v1576
          %v2463 = vunpack.c.h.b16 %v1576
          %v2464 = vunpack.c.l.b16 %v1577
          %v2465 = vunpack.c.h.b16 %v1577
          %v2466 = vunpack.c.l.b16 %v1578
          %v2467 = vunpack.c.h.b16 %v1578
          %v2468 = vunpack.c.l.b16 %v1579
          %v2469 = vunpack.c.h.b16 %v1579
          %v2470 = vunpack.c.l.b16 %v1580
          %v2471 = vunpack.c.h.b16 %v1580
          %v2472 = vunpack.c.l.b16 %v1581
          %v2473 = vunpack.c.h.b16 %v1581
          %v2474 = vunpack.c.l.b16 %v1582
          %v2475 = vunpack.c.h.b16 %v1582
          %v2476 = vunpack.c.l.b16 %v1583
          %v2477 = vunpack.c.h.b16 %v1583
          %v2478 = vunpack.c.l.b16 %v1584
          %v2479 = vunpack.c.h.b16 %v1584
          %v2480 = vunpack.c.l.b16 %v1585
          %v2481 = vunpack.c.h.b16 %v1585
          %v2482 = vunpack.c.l.b16 %v1586
          %v2483 = vunpack.c.h.b16 %v1586
          %v2484 = vunpack.c.l.b16 %v1587
          %v2485 = vunpack.c.h.b16 %v1587
          %v2486 = vunpack.c.l.b16 %v1588
          %v2487 = vunpack.c.h.b16 %v1588
          %v2488 = vunpack.c.l.b16 %v1589
          %v2489 = vunpack.c.h.b16 %v1589
          %v2490 = vunpack.c.l.b16 %v1590
          %v2491 = vunpack.c.h.b16 %v1590
          %v2492 = vunpack.c.l.b16 %v1591
          %v2493 = vunpack.c.h.b16 %v1591
          %v2494 = vunpack.c.l.b16 %v1592
          %v2495 = vunpack.c.h.b16 %v1592
          %v2496 = vpack.c.b16 %v1928, %v1920
          %v2497 = vpack.c.b16 %v1929, %v1921
          %v2498 = vpack.c.b16 %v1930, %v1922
          %v2499 = vpack.c.b16 %v1931, %v1923
          %v2500 = vpack.c.b16 %v1932, %v1924
          %v2501 = vpack.c.b16 %v1933, %v1925
          %v2502 = vpack.c.b16 %v1934, %v1926
          %v2503 = vpack.c.b16 %v1935, %v1927
          %v2504 = vpack.c.b16 %v1944, %v1936
          %v2505 = vpack.c.b16 %v1945, %v1937
          %v2506 = vpack.c.b16 %v1946, %v1938
          %v2507 = vpack.c.b16 %v1947, %v1939
          %v2508 = vpack.c.b16 %v1948, %v1940
          %v2509 = vpack.c.b16 %v1949, %v1941
          %v2510 = vpack.c.b16 %v1950, %v1942
          %v2511 = vpack.c.b16 %v1951, %v1943
          %v2512 = vpack.c.b16 %v1960, %v1952
          %v2513 = vpack.c.b16 %v1961, %v1953
          %v2514 = vpack.c.b16 %v1962, %v1954
          %v2515 = vpack.c.b16 %v1963, %v1955
          %v2516 = vpack.c.b16 %v1964, %v1956
          %v2517 = vpack.c.b16 %v1965, %v1957
          %v2518 = vpack.c.b16 %v1966, %v1958
          %v2519 = vpack.c.b16 %v1967, %v1959
          %v2520 = vpack.c.b16 %v1976, %v1968
          %v2521 = vpack.c.b16 %v1977, %v1969
          %v2522 = vpack.c.b16 %v1978, %v1970
          %v2523 = vpack.c.b16 %v1979, %v1971
          %v2524 = vpack.c.b16 %v1980, %v1972
          %v2525 = vpack.c.b16 %v1981, %v1973
          %v2526 = vpack.c.b16 %v1982, %v1974
          %v2527 = vpack.c.b16 %v1983, %v1975
          %v2528 = vpack.c.b16 %v1992, %v1984
          %v2529 = vpack.c.b16 %v1993, %v1985
          %v2530 = vpack.c.b16 %v1994, %v1986
          %v2531 = vpack.c.b16 %v1995, %v1987
          %v2532 = vpack.c.b16 %v1996, %v1988
          %v2533 = vpack.c.b16 %v1997, %v1989
          %v2534 = vpack.c.b16 %v1998, %v1990
          %v2535 = vpack.c.b16 %v1999, %v1991
          %v2536 = vpack.c.b16 %v2008, %v2000
          %v2537 = vpack.c.b16 %v2009, %v2001
          %v2538 = vpack.c.b16 %v2010, %v2002
          %v2539 = vpack.c.b16 %v2011, %v2003
          %v2540 = vpack.c.b16 %v2012, %v2004
          %v2541 = vpack.c.b16 %v2013, %v2005
          %v2542 = vpack.c.b16 %v2014, %v2006
          %v2543 = vpack.c.b16 %v2015, %v2007
          %v2544 = vpack.c.b16 %v2024, %v2016
          %v2545 = vpack.c.b16 %v2025, %v2017
          %v2546 = vpack.c.b16 %v2026, %v2018
          %v2547 = vpack.c.b16 %v2027, %v2019
          %v2548 = vpack.c.b16 %v2028, %v2020
          %v2549 = vpack.c.b16 %v2029, %v2021
          %v2550 = vpack.c.b16 %v2030, %v2022
          %v2551 = vpack.c.b16 %v2031, %v2023
          %v2552 = vpack.c.b16 %v2040, %v2032
          %v2553 = vpack.c.b16 %v2041, %v2033
          %v2554 = vpack.c.b16 %v2042, %v2034
          %v2555 = vpack.c.b16 %v2043, %v2035
          %v2556 = vpack.c.b16 %v2044, %v2036
          %v2557 = vpack.c.b16 %v2045, %v2037
          %v2558 = vpack.c.b16 %v2046, %v2038
          %v2559 = vpack.c.b16 %v2047, %v2039
          %v2560 = vpack.c.b16 %v2056, %v2048
          %v2561 = vpack.c.b16 %v2057, %v2049
          %v2562 = vpack.c.b16 %v2058, %v2050
          %v2563 = vpack.c.b16 %v2059, %v2051
          %v2564 = vpack.c.b16 %v2060, %v2052
          %v2565 = vpack.c.b16 %v2061, %v2053
          %v2566 = vpack.c.b16 %v2062, %v2054
          %v2567 = vpack.c.b16 %v2063, %v2055
          %v2568 = vpack.c.b16 %v2072, %v2064
          %v2569 = vpack.c.b16 %v2073, %v2065
          %v2570 = vpack.c.b16 %v2074, %v2066
          %v2571 = vpack.c.b16 %v2075, %v2067
          %v2572 = vpack.c.b16 %v2076, %v2068
          %v2573 = vpack.c.b16 %v2077, %v2069
          %v2574 = vpack.c.b16 %v2078, %v2070
          %v2575 = vpack.c.b16 %v2079, %v2071
          %v2576 = vpack.c.b16 %v2088, %v2080
          %v2577 = vpack.c.b16 %v2089, %v2081
          %v2578 = vpack.c.b16 %v2090, %v2082
          %v2579 = vpack.c.b16 %v2091, %v2083
          %v2580 = vpack.c.b16 %v2092, %v2084
          %v2581 = vpack.c.b16 %v2093, %v2085
          %v2582 = vpack.c.b16 %v2094, %v2086
          %v2583 = vpack.c.b16 %v2095, %v2087
          %v2584 = vpack.c.b16 %v2104, %v2096
          %v2585 = vpack.c.b16 %v2105, %v2097
          %v2586 = vpack.c.b16 %v2106, %v2098
          %v2587 = vpack.c.b16 %v2107, %v2099
          %v2588 = vpack.c.b16 %v2108, %v2100
          %v2589 = vpack.c.b16 %v2109, %v2101
          %v2590 = vpack.c.b16 %v2110, %v2102
          %v2591 = vpack.c.b16 %v2111, %v2103
          %v2592 = vpack.c.b16 %v2120, %v2112
          %v2593 = vpack.c.b16 %v2121, %v2113
          %v2594 = vpack.c.b16 %v2122, %v2114
          %v2595 = vpack.c.b16 %v2123, %v2115
          %v2596 = vpack.c.b16 %v2124, %v2116
          %v2597 = vpack.c.b16 %v2125, %v2117
          %v2598 = vpack.c.b16 %v2126, %v2118
          %v2599 = vpack.c.b16 %v2127, %v2119
          %v2600 = vpack.c.b16 %v2136, %v2128
          %v2601 = vpack.c.b16 %v2137, %v2129
          %v2602 = vpack.c.b16 %v2138, %v2130
          %v2603 = vpack.c.b16 %v2139, %v2131
          %v2604 = vpack.c.b16 %v2140, %v2132
          %v2605 = vpack.c.b16 %v2141, %v2133
          %v2606 = vpack.c.b16 %v2142, %v2134
          %v2607 = vpack.c.b16 %v2143, %v2135
          %v2608 = vpack.c.b16 %v2152, %v2144
          %v2609 = vpack.c.b16 %v2153, %v2145
          %v2610 = vpack.c.b16 %v2154, %v2146
          %v2611 = vpack.c.b16 %v2155, %v2147
          %v2612 = vpack.c.b16 %v2156, %v2148
          %v2613 = vpack.c.b16 %v2157, %v2149
          %v2614 = vpack.c.b16 %v2158, %v2150
          %v2615 = vpack.c.b16 %v2159, %v2151
          %v2616 = vpack.c.b16 %v2168, %v2160
          %v2617 = vpack.c.b16 %v2169, %v2161
          %v2618 = vpack.c.b16 %v2170, %v2162
          %v2619 = vpack.c.b16 %v2171, %v2163
          %v2620 = vpack.c.b16 %v2172, %v2164
          %v2621 = vpack.c.b16 %v2173, %v2165
          %v2622 = vpack.c.b16 %v2174, %v2166
          %v2623 = vpack.c.b16 %v2175, %v2167
          %v2624 = vpack.c.b16 %v2184, %v2176
          %v2625 = vpack.c.b16 %v2185, %v2177
          %v2626 = vpack.c.b16 %v2186, %v2178
          %v2627 = vpack.c.b16 %v2187, %v2179
          %v2628 = vpack.c.b16 %v2188, %v2180
          %v2629 = vpack.c.b16 %v2189, %v2181
          %v2630 = vpack.c.b16 %v2190, %v2182
          %v2631 = vpack.c.b16 %v2191, %v2183
          %v2632 = vpack.c.b16 %v2200, %v2192
          %v2633 = vpack.c.b16 %v2201, %v2193
          %v2634 = vpack.c.b16 %v2202, %v2194
          %v2635 = vpack.c.b16 %v2203, %v2195
          %v2636 = vpack.c.b16 %v2204, %v2196
          %v2637 = vpack.c.b16 %v2205, %v2197
          %v2638 = vpack.c.b16 %v2206, %v2198
          %v2639 = vpack.c.b16 %v2207, %v2199
          %v2640 = vpack.c.b16 %v2216, %v2208
          %v2641 = vpack.c.b16 %v2217, %v2209
          %v2642 = vpack.c.b16 %v2218, %v2210
          %v2643 = vpack.c.b16 %v2219, %v2211
          %v2644 = vpack.c.b16 %v2220, %v2212
          %v2645 = vpack.c.b16 %v2221, %v2213
          %v2646 = vpack.c.b16 %v2222, %v2214
          %v2647 = vpack.c.b16 %v2223, %v2215
          %v2648 = vpack.c.b16 %v2232, %v2224
          %v2649 = vpack.c.b16 %v2233, %v2225
          %v2650 = vpack.c.b16 %v2234, %v2226
          %v2651 = vpack.c.b16 %v2235, %v2227
          %v2652 = vpack.c.b16 %v2236, %v2228
          %v2653 = vpack.c.b16 %v2237, %v2229
          %v2654 = vpack.c.b16 %v2238, %v2230
          %v2655 = vpack.c.b16 %v2239, %v2231
          %v2656 = vpack.c.b16 %v2248, %v2240
          %v2657 = vpack.c.b16 %v2249, %v2241
          %v2658 = vpack.c.b16 %v2250, %v2242
          %v2659 = vpack.c.b16 %v2251, %v2243
          %v2660 = vpack.c.b16 %v2252, %v2244
          %v2661 = vpack.c.b16 %v2253, %v2245
          %v2662 = vpack.c.b16 %v2254, %v2246
          %v2663 = vpack.c.b16 %v2255, %v2247
          %v2664 = vpack.c.b16 %v2264, %v2256
          %v2665 = vpack.c.b16 %v2265, %v2257
          %v2666 = vpack.c.b16 %v2266, %v2258
          %v2667 = vpack.c.b16 %v2267, %v2259
          %v2668 = vpack.c.b16 %v2268, %v2260
          %v2669 = vpack.c.b16 %v2269, %v2261
          %v2670 = vpack.c.b16 %v2270, %v2262
          %v2671 = vpack.c.b16 %v2271, %v2263
          %v2672 = vpack.c.b16 %v2280, %v2272
          %v2673 = vpack.c.b16 %v2281, %v2273
          %v2674 = vpack.c.b16 %v2282, %v2274
          %v2675 = vpack.c.b16 %v2283, %v2275
          %v2676 = vpack.c.b16 %v2284, %v2276
          %v2677 = vpack.c.b16 %v2285, %v2277
          %v2678 = vpack.c.b16 %v2286, %v2278
          %v2679 = vpack.c.b16 %v2287, %v2279
          %v2680 = vpack.c.b16 %v2296, %v2288
          %v2681 = vpack.c.b16 %v2297, %v2289
          %v2682 = vpack.c.b16 %v2298, %v2290
          %v2683 = vpack.c.b16 %v2299, %v2291
          %v2684 = vpack.c.b16 %v2300, %v2292
          %v2685 = vpack.c.b16 %v2301, %v2293
          %v2686 = vpack.c.b16 %v2302, %v2294
          %v2687 = vpack.c.b16 %v2303, %v2295
          %v2688 = vpack.c.b16 %v2312, %v2304
          %v2689 = vpack.c.b16 %v2313, %v2305
          %v2690 = vpack.c.b16 %v2314, %v2306
          %v2691 = vpack.c.b16 %v2315, %v2307
          %v2692 = vpack.c.b16 %v2316, %v2308
          %v2693 = vpack.c.b16 %v2317, %v2309
          %v2694 = vpack.c.b16 %v2318, %v2310
          %v2695 = vpack.c.b16 %v2319, %v2311
          %v2696 = vpack.c.b16 %v2328, %v2320
          %v2697 = vpack.c.b16 %v2329, %v2321
          %v2698 = vpack.c.b16 %v2330, %v2322
          %v2699 = vpack.c.b16 %v2331, %v2323
          %v2700 = vpack.c.b16 %v2332, %v2324
          %v2701 = vpack.c.b16 %v2333, %v2325
          %v2702 = vpack.c.b16 %v2334, %v2326
          %v2703 = vpack.c.b16 %v2335, %v2327
          %v2704 = vpack.c.b16 %v2344, %v2336
          %v2705 = vpack.c.b16 %v2345, %v2337
          %v2706 = vpack.c.b16 %v2346, %v2338
          %v2707 = vpack.c.b16 %v2347, %v2339
          %v2708 = vpack.c.b16 %v2348, %v2340
          %v2709 = vpack.c.b16 %v2349, %v2341
          %v2710 = vpack.c.b16 %v2350, %v2342
          %v2711 = vpack.c.b16 %v2351, %v2343
          %v2712 = vpack.c.b16 %v2360, %v2352
          %v2713 = vpack.c.b16 %v2361, %v2353
          %v2714 = vpack.c.b16 %v2362, %v2354
          %v2715 = vpack.c.b16 %v2363, %v2355
          %v2716 = vpack.c.b16 %v2364, %v2356
          %v2717 = vpack.c.b16 %v2365, %v2357
          %v2718 = vpack.c.b16 %v2366, %v2358
          %v2719 = vpack.c.b16 %v2367, %v2359
          %v2720 = vpack.c.b16 %v2376, %v2368
          %v2721 = vpack.c.b16 %v2377, %v2369
          %v2722 = vpack.c.b16 %v2378, %v2370
          %v2723 = vpack.c.b16 %v2379, %v2371
          %v2724 = vpack.c.b16 %v2380, %v2372
          %v2725 = vpack.c.b16 %v2381, %v2373
          %v2726 = vpack.c.b16 %v2382, %v2374
          %v2727 = vpack.c.b16 %v2383, %v2375
          %v2728 = vpack.c.b16 %v2392, %v2384
          %v2729 = vpack.c.b16 %v2393, %v2385
          %v2730 = vpack.c.b16 %v2394, %v2386
          %v2731 = vpack.c.b16 %v2395, %v2387
          %v2732 = vpack.c.b16 %v2396, %v2388
          %v2733 = vpack.c.b16 %v2397, %v2389
          %v2734 = vpack.c.b16 %v2398, %v2390
          %v2735 = vpack.c.b16 %v2399, %v2391
          %v2736 = vpack.c.b16 %v2408, %v2400
          %v2737 = vpack.c.b16 %v2409, %v2401
          %v2738 = vpack.c.b16 %v2410, %v2402
          %v2739 = vpack.c.b16 %v2411, %v2403
          %v2740 = vpack.c.b16 %v2412, %v2404
          %v2741 = vpack.c.b16 %v2413, %v2405
          %v2742 = vpack.c.b16 %v2414, %v2406
          %v2743 = vpack.c.b16 %v2415, %v2407
          %v2744 = vpack.c.b16 %v2424, %v2416
          %v2745 = vpack.c.b16 %v2425, %v2417
          %v2746 = vpack.c.b16 %v2426, %v2418
          %v2747 = vpack.c.b16 %v2427, %v2419
          %v2748 = vpack.c.b16 %v2428, %v2420
          %v2749 = vpack.c.b16 %v2429, %v2421
          %v2750 = vpack.c.b16 %v2430, %v2422
          %v2751 = vpack.c.b16 %v2431, %v2423
          %v2752 = vpack.c.b16 %v2440, %v2432
          %v2753 = vpack.c.b16 %v2441, %v2433
          %v2754 = vpack.c.b16 %v2442, %v2434
          %v2755 = vpack.c.b16 %v2443, %v2435
          %v2756 = vpack.c.b16 %v2444, %v2436
          %v2757 = vpack.c.b16 %v2445, %v2437
          %v2758 = vpack.c.b16 %v2446, %v2438
          %v2759 = vpack.c.b16 %v2447, %v2439
          %v2760 = vpack.c.b16 %v2456, %v2448
          %v2761 = vpack.c.b16 %v2457, %v2449
          %v2762 = vpack.c.b16 %v2458, %v2450
          %v2763 = vpack.c.b16 %v2459, %v2451
          %v2764 = vpack.c.b16 %v2460, %v2452
          %v2765 = vpack.c.b16 %v2461, %v2453
          %v2766 = vpack.c.b16 %v2462, %v2454
          %v2767 = vpack.c.b16 %v2463, %v2455
          %v2768 = vpack.c.b16 %v2472, %v2464
          %v2769 = vpack.c.b16 %v2473, %v2465
          %v2770 = vpack.c.b16 %v2474, %v2466
          %v2771 = vpack.c.b16 %v2475, %v2467
          %v2772 = vpack.c.b16 %v2476, %v2468
          %v2773 = vpack.c.b16 %v2477, %v2469
          %v2774 = vpack.c.b16 %v2478, %v2470
          %v2775 = vpack.c.b16 %v2479, %v2471
          %v2776 = vpack.c.b16 %v2488, %v2480
          %v2777 = vpack.c.b16 %v2489, %v2481
          %v2778 = vpack.c.b16 %v2490, %v2482
          %v2779 = vpack.c.b16 %v2491, %v2483
          %v2780 = vpack.c.b16 %v2492, %v2484
          %v2781 = vpack.c.b16 %v2493, %v2485
          %v2782 = vpack.c.b16 %v2494, %v2486
          %v2783 = vpack.c.b16 %v2495, %v2487
          %vm3072 = vcmask 523264
          %v3074 = vsel %vm3072, %v1627, 0
          %3076 = vmatprep.subr.bf16.mxu0 %v2553
          %3077 = vmatpush1.bf16.msra.mxu0 %v2552
          %3078 = vmatprep.subr.bf16.mxu0 %v2545
          %3079 = vmatpush1.bf16.msra.mxu0 %v2544
          %3080 = vmatprep.subr.bf16.mxu0 %v2537
          %3081 = vmatpush1.bf16.msra.mxu0 %v2536
          %3082 = vmatprep.subr.bf16.mxu0 %v2529
          %3083 = vmatpush1.bf16.msra.mxu0 %v2528
          %3084 = vmatprep.subr.bf16.mxu0 %v2521
          %3085 = vmatpush1.bf16.msra.mxu0 %v2520
          %3086 = vmatprep.subr.bf16.mxu0 %v2513
          %3087 = vmatpush1.bf16.msra.mxu0 %v2512
          %3088 = vmatprep.subr.bf16.mxu0 %v2505
          %3089 = vmatpush1.bf16.msra.mxu0 %v2504
          %3090 = vmatprep.subr.bf16.mxu0 %v2497
          %3091 = vmatpush1.bf16.msra.mxu0 %v2496
          %3092 = vmatprep.subr.bf16.mxu0 %v2617
          %3093 = vmatpush2.bf16.msra.mxu0 %v2616
          %3094 = vmatprep.subr.bf16.mxu0 %v2609
          %3095 = vmatpush2.bf16.msra.mxu0 %v2608
          %3096 = vmatprep.subr.bf16.mxu0 %v2601
          %3097 = vmatpush2.bf16.msra.mxu0 %v2600
          %3098 = vmatprep.subr.bf16.mxu0 %v2593
          %3099 = vmatpush2.bf16.msra.mxu0 %v2592
          %3100 = vmatprep.subr.bf16.mxu0 %v2585
          %3101 = vmatpush2.bf16.msra.mxu0 %v2584
          %3102 = vmatprep.subr.bf16.mxu0 %v2577
          %3103 = vmatpush2.bf16.msra.mxu0 %v2576
          %3104 = vmatprep.subr.bf16.mxu0 %v2569
          %3105 = vmatpush2.bf16.msra.mxu0 %v2568
          %3106 = vmatprep.subr.bf16.mxu0 %v2561
          %3107 = vmatpush2.bf16.msra.mxu0 %v2560
          %3108 = vmatprep.mubr.bf16.mxu0 %v1606
          %3109 = vmatmul.mubr.bf16.gmra.mxu0 %v1599
          %v3110 = vpop.f32.mrf.mxu0
          %v3111 = vadd.f32 0.0, %v3110
          %v3112 = vpop.f32.mrf.mxu0
          %v3113 = vadd.f32 0.0, %v3112
          %v3114 = vpop.f32.mrf.mxu0
          %v3115 = vpop.f32.mrf.mxu0
          %3116 = vdwg.mxu0
          %3117 = vmatprep.subr.bf16.mxu0 %v2681
          %3118 = vmatpush1.bf16.msra.mxu0 %v2680
          %3119 = vmatprep.subr.bf16.mxu0 %v2673
          %3120 = vmatpush1.bf16.msra.mxu0 %v2672
          %3121 = vmatprep.subr.bf16.mxu0 %v2665
          %3122 = vmatpush1.bf16.msra.mxu0 %v2664
          %3123 = vmatprep.subr.bf16.mxu0 %v2657
          %3124 = vmatpush1.bf16.msra.mxu0 %v2656
          %3125 = vmatprep.subr.bf16.mxu0 %v2649
          %3126 = vmatpush1.bf16.msra.mxu0 %v2648
          %3127 = vmatprep.subr.bf16.mxu0 %v2641
          %3128 = vmatpush1.bf16.msra.mxu0 %v2640
          %3129 = vmatprep.subr.bf16.mxu0 %v2633
          %3130 = vmatpush1.bf16.msra.mxu0 %v2632
          %3131 = vmatprep.subr.bf16.mxu0 %v2625
          %3132 = vmatpush1.bf16.msra.mxu0 %v2624
          %3133 = vmatprep.subr.bf16.mxu0 %v2745
          %3134 = vmatpush2.bf16.msra.mxu0 %v2744
          %3135 = vmatprep.subr.bf16.mxu0 %v2737
          %3136 = vmatpush2.bf16.msra.mxu0 %v2736
          %3137 = vmatprep.subr.bf16.mxu0 %v2729
          %3138 = vmatpush2.bf16.msra.mxu0 %v2728
          %3139 = vmatprep.subr.bf16.mxu0 %v2721
          %3140 = vmatpush2.bf16.msra.mxu0 %v2720
          %3141 = vmatprep.subr.bf16.mxu0 %v2713
          %3142 = vmatpush2.bf16.msra.mxu0 %v2712
          %3143 = vmatprep.subr.bf16.mxu0 %v2705
          %3144 = vmatpush2.bf16.msra.mxu0 %v2704
          %3145 = vmatprep.subr.bf16.mxu0 %v2697
          %3146 = vmatpush2.bf16.msra.mxu0 %v2696
          %3147 = vmatprep.subr.bf16.mxu0 %v2689
          %3148 = vmatpush2.bf16.msra.mxu0 %v2688
          %3149 = vmatprep.mubr.bf16.mxu0 %v1620
          %3150 = vmatmul.mubr.bf16.gmra.mxu0 %v1613
          %v3151 = vpop.f32.mrf.mxu0
          %v3152 = vadd.f32 %v3111, %v3151
          %v3153 = vpop.f32.mrf.mxu0
          %v3154 = vadd.f32 %v3113, %v3153
          %v3155 = vpop.f32.mrf.mxu0
          %v3156 = vpop.f32.mrf.mxu0
          %3157 = vdwg.mxu0
          %3158 = vmatprep.subr.bf16.mxu0 0
          %3159 = vmatpush1.bf16.msra.mxu0 0
          %3160 = vmatprep.subr.bf16.mxu0 0
          %3161 = vmatpush1.bf16.msra.mxu0 0
          %3162 = vmatprep.subr.bf16.mxu0 0
          %3163 = vmatpush1.bf16.msra.mxu0 0
          %3164 = vmatprep.subr.bf16.mxu0 0
          %3165 = vmatpush1.bf16.msra.mxu0 0
          %3166 = vmatprep.subr.bf16.mxu0 %v2777
          %3167 = vmatpush1.bf16.msra.mxu0 %v2776
          %3168 = vmatprep.subr.bf16.mxu0 %v2769
          %3169 = vmatpush1.bf16.msra.mxu0 %v2768
          %3170 = vmatprep.subr.bf16.mxu0 %v2761
          %3171 = vmatpush1.bf16.msra.mxu0 %v2760
          %3172 = vmatprep.subr.bf16.mxu0 %v2753
          %3173 = vmatpush1.bf16.msra.mxu0 %v2752
          %3174 = vmatprep.subr.bf16.mxu0 0
          %3175 = vmatpush2.bf16.msra.mxu0 0
          %3176 = vmatprep.subr.bf16.mxu0 0
          %3177 = vmatpush2.bf16.msra.mxu0 0
          %3178 = vmatprep.subr.bf16.mxu0 0
          %3179 = vmatpush2.bf16.msra.mxu0 0
          %3180 = vmatprep.subr.bf16.mxu0 0
          %3181 = vmatpush2.bf16.msra.mxu0 0
          %3182 = vmatprep.subr.bf16.mxu0 0
          %3183 = vmatpush2.bf16.msra.mxu0 0
          %3184 = vmatprep.subr.bf16.mxu0 0
          %3185 = vmatpush2.bf16.msra.mxu0 0
          %3186 = vmatprep.subr.bf16.mxu0 0
          %3187 = vmatpush2.bf16.msra.mxu0 0
          %3188 = vmatprep.subr.bf16.mxu0 0
          %3189 = vmatpush2.bf16.msra.mxu0 0
          %3190 = vmatprep.mubr.bf16.mxu0 0
          %3191 = vmatmul.mubr.bf16.gmra.mxu0 %v3074
          %v3192 = vpop.f32.mrf.mxu0
          %v3193 = vadd.f32 %v3152, %v3192
          %v3194 = vpop.f32.mrf.mxu0
          %v3195 = vadd.f32 %v3154, %v3194
          %v3196 = vpop.f32.mrf.mxu0
          %v3197 = vpop.f32.mrf.mxu0
          %3198 = vdwg.mxu0
          %3199 = vmatprep.subr.bf16.mxu0 %v2555
          %3200 = vmatpush1.bf16.msra.mxu0 %v2554
          %3201 = vmatprep.subr.bf16.mxu0 %v2547
          %3202 = vmatpush1.bf16.msra.mxu0 %v2546
          %3203 = vmatprep.subr.bf16.mxu0 %v2539
          %3204 = vmatpush1.bf16.msra.mxu0 %v2538
          %3205 = vmatprep.subr.bf16.mxu0 %v2531
          %3206 = vmatpush1.bf16.msra.mxu0 %v2530
          %3207 = vmatprep.subr.bf16.mxu0 %v2523
          %3208 = vmatpush1.bf16.msra.mxu0 %v2522
          %3209 = vmatprep.subr.bf16.mxu0 %v2515
          %3210 = vmatpush1.bf16.msra.mxu0 %v2514
          %3211 = vmatprep.subr.bf16.mxu0 %v2507
          %3212 = vmatpush1.bf16.msra.mxu0 %v2506
          %3213 = vmatprep.subr.bf16.mxu0 %v2499
          %3214 = vmatpush1.bf16.msra.mxu0 %v2498
          %3215 = vmatprep.subr.bf16.mxu0 %v2619
          %3216 = vmatpush2.bf16.msra.mxu0 %v2618
          %3217 = vmatprep.subr.bf16.mxu0 %v2611
          %3218 = vmatpush2.bf16.msra.mxu0 %v2610
          %3219 = vmatprep.subr.bf16.mxu0 %v2603
          %3220 = vmatpush2.bf16.msra.mxu0 %v2602
          %3221 = vmatprep.subr.bf16.mxu0 %v2595
          %3222 = vmatpush2.bf16.msra.mxu0 %v2594
          %3223 = vmatprep.subr.bf16.mxu0 %v2587
          %3224 = vmatpush2.bf16.msra.mxu0 %v2586
          %3225 = vmatprep.subr.bf16.mxu0 %v2579
          %3226 = vmatpush2.bf16.msra.mxu0 %v2578
          %3227 = vmatprep.subr.bf16.mxu0 %v2571
          %3228 = vmatpush2.bf16.msra.mxu0 %v2570
          %3229 = vmatprep.subr.bf16.mxu0 %v2563
          %3230 = vmatpush2.bf16.msra.mxu0 %v2562
          %3231 = vmatprep.mubr.bf16.mxu0 %v1606
          %3232 = vmatmul.mubr.bf16.gmra.mxu0 %v1599
          %v3233 = vpop.f32.mrf.mxu0
          %v3234 = vadd.f32 0.0, %v3233
          %v3235 = vpop.f32.mrf.mxu0
          %v3236 = vadd.f32 0.0, %v3235
          %v3237 = vpop.f32.mrf.mxu0
          %v3238 = vpop.f32.mrf.mxu0
          %3239 = vdwg.mxu0
          %3240 = vmatprep.subr.bf16.mxu0 %v2683
          %3241 = vmatpush1.bf16.msra.mxu0 %v2682
          %3242 = vmatprep.subr.bf16.mxu0 %v2675
          %3243 = vmatpush1.bf16.msra.mxu0 %v2674
          %3244 = vmatprep.subr.bf16.mxu0 %v2667
          %3245 = vmatpush1.bf16.msra.mxu0 %v2666
          %3246 = vmatprep.subr.bf16.mxu0 %v2659
          %3247 = vmatpush1.bf16.msra.mxu0 %v2658
          %3248 = vmatprep.subr.bf16.mxu0 %v2651
          %3249 = vmatpush1.bf16.msra.mxu0 %v2650
          %3250 = vmatprep.subr.bf16.mxu0 %v2643
          %3251 = vmatpush1.bf16.msra.mxu0 %v2642
          %3252 = vmatprep.subr.bf16.mxu0 %v2635
          %3253 = vmatpush1.bf16.msra.mxu0 %v2634
          %3254 = vmatprep.subr.bf16.mxu0 %v2627
          %3255 = vmatpush1.bf16.msra.mxu0 %v2626
          %3256 = vmatprep.subr.bf16.mxu0 %v2747
          %3257 = vmatpush2.bf16.msra.mxu0 %v2746
          %3258 = vmatprep.subr.bf16.mxu0 %v2739
          %3259 = vmatpush2.bf16.msra.mxu0 %v2738
          %3260 = vmatprep.subr.bf16.mxu0 %v2731
          %3261 = vmatpush2.bf16.msra.mxu0 %v2730
          %3262 = vmatprep.subr.bf16.mxu0 %v2723
          %3263 = vmatpush2.bf16.msra.mxu0 %v2722
          %3264 = vmatprep.subr.bf16.mxu0 %v2715
          %3265 = vmatpush2.bf16.msra.mxu0 %v2714
          %3266 = vmatprep.subr.bf16.mxu0 %v2707
          %3267 = vmatpush2.bf16.msra.mxu0 %v2706
          %3268 = vmatprep.subr.bf16.mxu0 %v2699
          %3269 = vmatpush2.bf16.msra.mxu0 %v2698
          %3270 = vmatprep.subr.bf16.mxu0 %v2691
          %3271 = vmatpush2.bf16.msra.mxu0 %v2690
          %3272 = vmatprep.mubr.bf16.mxu0 %v1620
          %3273 = vmatmul.mubr.bf16.gmra.mxu0 %v1613
          %v3274 = vpop.f32.mrf.mxu0
          %v3275 = vadd.f32 %v3234, %v3274
          %v3276 = vpop.f32.mrf.mxu0
          %v3277 = vadd.f32 %v3236, %v3276
          %v3278 = vpop.f32.mrf.mxu0
          %v3279 = vpop.f32.mrf.mxu0
          %3280 = vdwg.mxu0
          %3281 = vmatprep.subr.bf16.mxu0 0
          %3282 = vmatpush1.bf16.msra.mxu0 0
          %3283 = vmatprep.subr.bf16.mxu0 0
          %3284 = vmatpush1.bf16.msra.mxu0 0
          %3285 = vmatprep.subr.bf16.mxu0 0
          %3286 = vmatpush1.bf16.msra.mxu0 0
          %3287 = vmatprep.subr.bf16.mxu0 0
          %3288 = vmatpush1.bf16.msra.mxu0 0
          %3289 = vmatprep.subr.bf16.mxu0 %v2779
          %3290 = vmatpush1.bf16.msra.mxu0 %v2778
          %3291 = vmatprep.subr.bf16.mxu0 %v2771
          %3292 = vmatpush1.bf16.msra.mxu0 %v2770
          %3293 = vmatprep.subr.bf16.mxu0 %v2763
          %3294 = vmatpush1.bf16.msra.mxu0 %v2762
          %3295 = vmatprep.subr.bf16.mxu0 %v2755
          %3296 = vmatpush1.bf16.msra.mxu0 %v2754
          %3297 = vmatprep.subr.bf16.mxu0 0
          %3298 = vmatpush2.bf16.msra.mxu0 0
          %3299 = vmatprep.subr.bf16.mxu0 0
          %3300 = vmatpush2.bf16.msra.mxu0 0
          %3301 = vmatprep.subr.bf16.mxu0 0
          %3302 = vmatpush2.bf16.msra.mxu0 0
          %3303 = vmatprep.subr.bf16.mxu0 0
          %3304 = vmatpush2.bf16.msra.mxu0 0
          %3305 = vmatprep.subr.bf16.mxu0 0
          %3306 = vmatpush2.bf16.msra.mxu0 0
          %3307 = vmatprep.subr.bf16.mxu0 0
          %3308 = vmatpush2.bf16.msra.mxu0 0
          %3309 = vmatprep.subr.bf16.mxu0 0
          %3310 = vmatpush2.bf16.msra.mxu0 0
          %3311 = vmatprep.subr.bf16.mxu0 0
          %3312 = vmatpush2.bf16.msra.mxu0 0
          %3313 = vmatprep.mubr.bf16.mxu0 0
          %3314 = vmatmul.mubr.bf16.gmra.mxu0 %v3074
          %v3315 = vpop.f32.mrf.mxu0
          %v3316 = vadd.f32 %v3275, %v3315
          %v3317 = vpop.f32.mrf.mxu0
          %v3318 = vadd.f32 %v3277, %v3317
          %v3319 = vpop.f32.mrf.mxu0
          %v3320 = vpop.f32.mrf.mxu0
          %3321 = vdwg.mxu0
          %3322 = vmatprep.subr.bf16.mxu0 %v2557
          %3323 = vmatpush1.bf16.msra.mxu0 %v2556
          %3324 = vmatprep.subr.bf16.mxu0 %v2549
          %3325 = vmatpush1.bf16.msra.mxu0 %v2548
          %3326 = vmatprep.subr.bf16.mxu0 %v2541
          %3327 = vmatpush1.bf16.msra.mxu0 %v2540
          %3328 = vmatprep.subr.bf16.mxu0 %v2533
          %3329 = vmatpush1.bf16.msra.mxu0 %v2532
          %3330 = vmatprep.subr.bf16.mxu0 %v2525
          %3331 = vmatpush1.bf16.msra.mxu0 %v2524
          %3332 = vmatprep.subr.bf16.mxu0 %v2517
          %3333 = vmatpush1.bf16.msra.mxu0 %v2516
          %3334 = vmatprep.subr.bf16.mxu0 %v2509
          %3335 = vmatpush1.bf16.msra.mxu0 %v2508
          %3336 = vmatprep.subr.bf16.mxu0 %v2501
          %3337 = vmatpush1.bf16.msra.mxu0 %v2500
          %3338 = vmatprep.subr.bf16.mxu0 %v2621
          %3339 = vmatpush2.bf16.msra.mxu0 %v2620
          %3340 = vmatprep.subr.bf16.mxu0 %v2613
          %3341 = vmatpush2.bf16.msra.mxu0 %v2612
          %3342 = vmatprep.subr.bf16.mxu0 %v2605
          %3343 = vmatpush2.bf16.msra.mxu0 %v2604
          %3344 = vmatprep.subr.bf16.mxu0 %v2597
          %3345 = vmatpush2.bf16.msra.mxu0 %v2596
          %3346 = vmatprep.subr.bf16.mxu0 %v2589
          %3347 = vmatpush2.bf16.msra.mxu0 %v2588
          %3348 = vmatprep.subr.bf16.mxu0 %v2581
          %3349 = vmatpush2.bf16.msra.mxu0 %v2580
          %3350 = vmatprep.subr.bf16.mxu0 %v2573
          %3351 = vmatpush2.bf16.msra.mxu0 %v2572
          %3352 = vmatprep.subr.bf16.mxu0 %v2565
          %3353 = vmatpush2.bf16.msra.mxu0 %v2564
          %3354 = vmatprep.mubr.bf16.mxu0 %v1606
          %3355 = vmatmul.mubr.bf16.gmra.mxu0 %v1599
          %v3356 = vpop.f32.mrf.mxu0
          %v3357 = vadd.f32 0.0, %v3356
          %v3358 = vpop.f32.mrf.mxu0
          %v3359 = vadd.f32 0.0, %v3358
          %v3360 = vpop.f32.mrf.mxu0
          %v3361 = vpop.f32.mrf.mxu0
          %3362 = vdwg.mxu0
          %3363 = vmatprep.subr.bf16.mxu0 %v2685
          %3364 = vmatpush1.bf16.msra.mxu0 %v2684
          %3365 = vmatprep.subr.bf16.mxu0 %v2677
          %3366 = vmatpush1.bf16.msra.mxu0 %v2676
          %3367 = vmatprep.subr.bf16.mxu0 %v2669
          %3368 = vmatpush1.bf16.msra.mxu0 %v2668
          %3369 = vmatprep.subr.bf16.mxu0 %v2661
          %3370 = vmatpush1.bf16.msra.mxu0 %v2660
          %3371 = vmatprep.subr.bf16.mxu0 %v2653
          %3372 = vmatpush1.bf16.msra.mxu0 %v2652
          %3373 = vmatprep.subr.bf16.mxu0 %v2645
          %3374 = vmatpush1.bf16.msra.mxu0 %v2644
          %3375 = vmatprep.subr.bf16.mxu0 %v2637
          %3376 = vmatpush1.bf16.msra.mxu0 %v2636
          %3377 = vmatprep.subr.bf16.mxu0 %v2629
          %3378 = vmatpush1.bf16.msra.mxu0 %v2628
          %3379 = vmatprep.subr.bf16.mxu0 %v2749
          %3380 = vmatpush2.bf16.msra.mxu0 %v2748
          %3381 = vmatprep.subr.bf16.mxu0 %v2741
          %3382 = vmatpush2.bf16.msra.mxu0 %v2740
          %3383 = vmatprep.subr.bf16.mxu0 %v2733
          %3384 = vmatpush2.bf16.msra.mxu0 %v2732
          %3385 = vmatprep.subr.bf16.mxu0 %v2725
          %3386 = vmatpush2.bf16.msra.mxu0 %v2724
          %3387 = vmatprep.subr.bf16.mxu0 %v2717
          %3388 = vmatpush2.bf16.msra.mxu0 %v2716
          %3389 = vmatprep.subr.bf16.mxu0 %v2709
          %3390 = vmatpush2.bf16.msra.mxu0 %v2708
          %3391 = vmatprep.subr.bf16.mxu0 %v2701
          %3392 = vmatpush2.bf16.msra.mxu0 %v2700
          %3393 = vmatprep.subr.bf16.mxu0 %v2693
          %3394 = vmatpush2.bf16.msra.mxu0 %v2692
          %3395 = vmatprep.mubr.bf16.mxu0 %v1620
          %3396 = vmatmul.mubr.bf16.gmra.mxu0 %v1613
          %v3397 = vpop.f32.mrf.mxu0
          %v3398 = vadd.f32 %v3357, %v3397
          %v3399 = vpop.f32.mrf.mxu0
          %v3400 = vadd.f32 %v3359, %v3399
          %v3401 = vpop.f32.mrf.mxu0
          %v3402 = vpop.f32.mrf.mxu0
          %3403 = vdwg.mxu0
          %3404 = vmatprep.subr.bf16.mxu0 0
          %3405 = vmatpush1.bf16.msra.mxu0 0
          %3406 = vmatprep.subr.bf16.mxu0 0
          %3407 = vmatpush1.bf16.msra.mxu0 0
          %3408 = vmatprep.subr.bf16.mxu0 0
          %3409 = vmatpush1.bf16.msra.mxu0 0
          %3410 = vmatprep.subr.bf16.mxu0 0
          %3411 = vmatpush1.bf16.msra.mxu0 0
          %3412 = vmatprep.subr.bf16.mxu0 %v2781
          %3413 = vmatpush1.bf16.msra.mxu0 %v2780
          %3414 = vmatprep.subr.bf16.mxu0 %v2773
          %3415 = vmatpush1.bf16.msra.mxu0 %v2772
          %3416 = vmatprep.subr.bf16.mxu0 %v2765
          %3417 = vmatpush1.bf16.msra.mxu0 %v2764
          %3418 = vmatprep.subr.bf16.mxu0 %v2757
          %3419 = vmatpush1.bf16.msra.mxu0 %v2756
          %3420 = vmatprep.subr.bf16.mxu0 0
          %3421 = vmatpush2.bf16.msra.mxu0 0
          %3422 = vmatprep.subr.bf16.mxu0 0
          %3423 = vmatpush2.bf16.msra.mxu0 0
          %3424 = vmatprep.subr.bf16.mxu0 0
          %3425 = vmatpush2.bf16.msra.mxu0 0
          %3426 = vmatprep.subr.bf16.mxu0 0
          %3427 = vmatpush2.bf16.msra.mxu0 0
          %3428 = vmatprep.subr.bf16.mxu0 0
          %3429 = vmatpush2.bf16.msra.mxu0 0
          %3430 = vmatprep.subr.bf16.mxu0 0
          %3431 = vmatpush2.bf16.msra.mxu0 0
          %3432 = vmatprep.subr.bf16.mxu0 0
          %3433 = vmatpush2.bf16.msra.mxu0 0
          %3434 = vmatprep.subr.bf16.mxu0 0
          %3435 = vmatpush2.bf16.msra.mxu0 0
          %3436 = vmatprep.mubr.bf16.mxu0 0
          %3437 = vmatmul.mubr.bf16.gmra.mxu0 %v3074
          %v3438 = vpop.f32.mrf.mxu0
          %v3439 = vadd.f32 %v3398, %v3438
          %v3440 = vpop.f32.mrf.mxu0
          %v3441 = vadd.f32 %v3400, %v3440
          %v3442 = vpop.f32.mrf.mxu0
          %v3443 = vpop.f32.mrf.mxu0
          %3444 = vdwg.mxu0
          %3445 = vmatprep.subr.bf16.mxu0 %v2559
          %3446 = vmatpush1.bf16.msra.mxu0 %v2558
          %3447 = vmatprep.subr.bf16.mxu0 %v2551
          %3448 = vmatpush1.bf16.msra.mxu0 %v2550
          %3449 = vmatprep.subr.bf16.mxu0 %v2543
          %3450 = vmatpush1.bf16.msra.mxu0 %v2542
          %3451 = vmatprep.subr.bf16.mxu0 %v2535
          %3452 = vmatpush1.bf16.msra.mxu0 %v2534
          %3453 = vmatprep.subr.bf16.mxu0 %v2527
          %3454 = vmatpush1.bf16.msra.mxu0 %v2526
          %3455 = vmatprep.subr.bf16.mxu0 %v2519
          %3456 = vmatpush1.bf16.msra.mxu0 %v2518
          %3457 = vmatprep.subr.bf16.mxu0 %v2511
          %3458 = vmatpush1.bf16.msra.mxu0 %v2510
          %3459 = vmatprep.subr.bf16.mxu0 %v2503
          %3460 = vmatpush1.bf16.msra.mxu0 %v2502
          %3461 = vmatprep.subr.bf16.mxu0 %v2623
          %3462 = vmatpush2.bf16.msra.mxu0 %v2622
          %3463 = vmatprep.subr.bf16.mxu0 %v2615
          %3464 = vmatpush2.bf16.msra.mxu0 %v2614
          %3465 = vmatprep.subr.bf16.mxu0 %v2607
          %3466 = vmatpush2.bf16.msra.mxu0 %v2606
          %3467 = vmatprep.subr.bf16.mxu0 %v2599
          %3468 = vmatpush2.bf16.msra.mxu0 %v2598
          %3469 = vmatprep.subr.bf16.mxu0 %v2591
          %3470 = vmatpush2.bf16.msra.mxu0 %v2590
          %3471 = vmatprep.subr.bf16.mxu0 %v2583
          %3472 = vmatpush2.bf16.msra.mxu0 %v2582
          %3473 = vmatprep.subr.bf16.mxu0 %v2575
          %3474 = vmatpush2.bf16.msra.mxu0 %v2574
          %3475 = vmatprep.subr.bf16.mxu0 %v2567
          %3476 = vmatpush2.bf16.msra.mxu0 %v2566
          %3477 = vmatprep.mubr.bf16.mxu0 %v1606
          %3478 = vmatmul.mubr.bf16.gmra.mxu0 %v1599
          %v3479 = vpop.f32.mrf.mxu0
          %v3480 = vadd.f32 0.0, %v3479
          %v3481 = vpop.f32.mrf.mxu0
          %v3482 = vadd.f32 0.0, %v3481
          %v3483 = vpop.f32.mrf.mxu0
          %v3484 = vpop.f32.mrf.mxu0
          %3485 = vdwg.mxu0
          %3486 = vmatprep.subr.bf16.mxu0 %v2687
          %3487 = vmatpush1.bf16.msra.mxu0 %v2686
          %3488 = vmatprep.subr.bf16.mxu0 %v2679
          %3489 = vmatpush1.bf16.msra.mxu0 %v2678
          %3490 = vmatprep.subr.bf16.mxu0 %v2671
          %3491 = vmatpush1.bf16.msra.mxu0 %v2670
          %3492 = vmatprep.subr.bf16.mxu0 %v2663
          %3493 = vmatpush1.bf16.msra.mxu0 %v2662
          %3494 = vmatprep.subr.bf16.mxu0 %v2655
          %3495 = vmatpush1.bf16.msra.mxu0 %v2654
          %3496 = vmatprep.subr.bf16.mxu0 %v2647
          %3497 = vmatpush1.bf16.msra.mxu0 %v2646
          %3498 = vmatprep.subr.bf16.mxu0 %v2639
          %3499 = vmatpush1.bf16.msra.mxu0 %v2638
          %3500 = vmatprep.subr.bf16.mxu0 %v2631
          %3501 = vmatpush1.bf16.msra.mxu0 %v2630
          %3502 = vmatprep.subr.bf16.mxu0 %v2751
          %3503 = vmatpush2.bf16.msra.mxu0 %v2750
          %3504 = vmatprep.subr.bf16.mxu0 %v2743
          %3505 = vmatpush2.bf16.msra.mxu0 %v2742
          %3506 = vmatprep.subr.bf16.mxu0 %v2735
          %3507 = vmatpush2.bf16.msra.mxu0 %v2734
          %3508 = vmatprep.subr.bf16.mxu0 %v2727
          %3509 = vmatpush2.bf16.msra.mxu0 %v2726
          %3510 = vmatprep.subr.bf16.mxu0 %v2719
          %3511 = vmatpush2.bf16.msra.mxu0 %v2718
          %3512 = vmatprep.subr.bf16.mxu0 %v2711
          %3513 = vmatpush2.bf16.msra.mxu0 %v2710
          %3514 = vmatprep.subr.bf16.mxu0 %v2703
          %3515 = vmatpush2.bf16.msra.mxu0 %v2702
          %3516 = vmatprep.subr.bf16.mxu0 %v2695
          %3517 = vmatpush2.bf16.msra.mxu0 %v2694
          %3518 = vmatprep.mubr.bf16.mxu0 %v1620
          %3519 = vmatmul.mubr.bf16.gmra.mxu0 %v1613
          %v3520 = vpop.f32.mrf.mxu0
          %v3521 = vadd.f32 %v3480, %v3520
          %v3522 = vpop.f32.mrf.mxu0
          %v3523 = vadd.f32 %v3482, %v3522
          %v3524 = vpop.f32.mrf.mxu0
          %v3525 = vpop.f32.mrf.mxu0
          %3526 = vdwg.mxu0
          %3527 = vmatprep.subr.bf16.mxu0 0
          %3528 = vmatpush1.bf16.msra.mxu0 0
          %3529 = vmatprep.subr.bf16.mxu0 0
          %3530 = vmatpush1.bf16.msra.mxu0 0
          %3531 = vmatprep.subr.bf16.mxu0 0
          %3532 = vmatpush1.bf16.msra.mxu0 0
          %3533 = vmatprep.subr.bf16.mxu0 0
          %3534 = vmatpush1.bf16.msra.mxu0 0
          %3535 = vmatprep.subr.bf16.mxu0 %v2783
          %3536 = vmatpush1.bf16.msra.mxu0 %v2782
          %3537 = vmatprep.subr.bf16.mxu0 %v2775
          %3538 = vmatpush1.bf16.msra.mxu0 %v2774
          %3539 = vmatprep.subr.bf16.mxu0 %v2767
          %3540 = vmatpush1.bf16.msra.mxu0 %v2766
          %3541 = vmatprep.subr.bf16.mxu0 %v2759
          %3542 = vmatpush1.bf16.msra.mxu0 %v2758
          %3543 = vmatprep.subr.bf16.mxu0 0
          %3544 = vmatpush2.bf16.msra.mxu0 0
          %3545 = vmatprep.subr.bf16.mxu0 0
          %3546 = vmatpush2.bf16.msra.mxu0 0
          %3547 = vmatprep.subr.bf16.mxu0 0
          %3548 = vmatpush2.bf16.msra.mxu0 0
          %3549 = vmatprep.subr.bf16.mxu0 0
          %3550 = vmatpush2.bf16.msra.mxu0 0
          %3551 = vmatprep.subr.bf16.mxu0 0
          %3552 = vmatpush2.bf16.msra.mxu0 0
          %3553 = vmatprep.subr.bf16.mxu0 0
          %3554 = vmatpush2.bf16.msra.mxu0 0
          %3555 = vmatprep.subr.bf16.mxu0 0
          %3556 = vmatpush2.bf16.msra.mxu0 0
          %3557 = vmatprep.subr.bf16.mxu0 0
          %3558 = vmatpush2.bf16.msra.mxu0 0
          %3559 = vmatprep.mubr.bf16.mxu0 0
          %3560 = vmatmul.mubr.bf16.gmra.mxu0 %v3074
          %v3561 = vpop.f32.mrf.mxu0
          %v3562 = vadd.f32 %v3521, %v3561
          %v3563 = vpop.f32.mrf.mxu0
          %v3564 = vadd.f32 %v3523, %v3563
          %v3565 = vpop.f32.mrf.mxu0
          %v3566 = vpop.f32.mrf.mxu0
          %3567 = vdwg.mxu0
          %v3856 = vunpack.c.l.b16 %v1016
          %v3857 = vunpack.c.h.b16 %v1016
          %v3858 = vunpack.c.l.b16 %v1017
          %v3859 = vunpack.c.h.b16 %v1017
          %v3860 = vunpack.c.l.b16 %v1018
          %v3861 = vunpack.c.h.b16 %v1018
          %v3862 = vunpack.c.l.b16 %v1019
          %v3863 = vunpack.c.h.b16 %v1019
          %v3864 = vunpack.c.l.b16 %v1020
          %v3865 = vunpack.c.h.b16 %v1020
          %v3866 = vunpack.c.l.b16 %v1021
          %v3867 = vunpack.c.h.b16 %v1021
          %v3868 = vunpack.c.l.b16 %v1022
          %v3869 = vunpack.c.h.b16 %v1022
          %v3870 = vunpack.c.l.b16 %v1023
          %v3871 = vunpack.c.h.b16 %v1023
          %v3872 = vunpack.c.l.b16 %v1024
          %v3873 = vunpack.c.h.b16 %v1024
          %v3874 = vunpack.c.l.b16 %v1025
          %v3875 = vunpack.c.h.b16 %v1025
          %v3876 = vunpack.c.l.b16 %v1026
          %v3877 = vunpack.c.h.b16 %v1026
          %v3878 = vunpack.c.l.b16 %v1027
          %v3879 = vunpack.c.h.b16 %v1027
          %v3880 = vunpack.c.l.b16 %v1028
          %v3881 = vunpack.c.h.b16 %v1028
          %v3882 = vunpack.c.l.b16 %v1029
          %v3883 = vunpack.c.h.b16 %v1029
          %v3884 = vunpack.c.l.b16 %v1030
          %v3885 = vunpack.c.h.b16 %v1030
          %v3886 = vunpack.c.l.b16 %v1031
          %v3887 = vunpack.c.h.b16 %v1031
          %v3888 = vunpack.c.l.b16 %v1032
          %v3889 = vunpack.c.h.b16 %v1032
          %v3890 = vunpack.c.l.b16 %v1033
          %v3891 = vunpack.c.h.b16 %v1033
          %v3892 = vunpack.c.l.b16 %v1034
          %v3893 = vunpack.c.h.b16 %v1034
          %v3894 = vunpack.c.l.b16 %v1035
          %v3895 = vunpack.c.h.b16 %v1035
          %v3896 = vunpack.c.l.b16 %v1036
          %v3897 = vunpack.c.h.b16 %v1036
          %v3898 = vunpack.c.l.b16 %v1037
          %v3899 = vunpack.c.h.b16 %v1037
          %v3900 = vunpack.c.l.b16 %v1038
          %v3901 = vunpack.c.h.b16 %v1038
          %v3902 = vunpack.c.l.b16 %v1039
          %v3903 = vunpack.c.h.b16 %v1039
          %v3904 = vunpack.c.l.b16 %v1040
          %v3905 = vunpack.c.h.b16 %v1040
          %v3906 = vunpack.c.l.b16 %v1041
          %v3907 = vunpack.c.h.b16 %v1041
          %v3908 = vunpack.c.l.b16 %v1042
          %v3909 = vunpack.c.h.b16 %v1042
          %v3910 = vunpack.c.l.b16 %v1043
          %v3911 = vunpack.c.h.b16 %v1043
          %v3912 = vunpack.c.l.b16 %v1044
          %v3913 = vunpack.c.h.b16 %v1044
          %v3914 = vunpack.c.l.b16 %v1045
          %v3915 = vunpack.c.h.b16 %v1045
          %v3916 = vunpack.c.l.b16 %v1046
          %v3917 = vunpack.c.h.b16 %v1046
          %v3918 = vunpack.c.l.b16 %v1047
          %v3919 = vunpack.c.h.b16 %v1047
          %v3920 = vunpack.c.l.b16 %v1048
          %v3921 = vunpack.c.h.b16 %v1048
          %v3922 = vunpack.c.l.b16 %v1049
          %v3923 = vunpack.c.h.b16 %v1049
          %v3924 = vunpack.c.l.b16 %v1050
          %v3925 = vunpack.c.h.b16 %v1050
          %v3926 = vunpack.c.l.b16 %v1051
          %v3927 = vunpack.c.h.b16 %v1051
          %v3928 = vunpack.c.l.b16 %v1052
          %v3929 = vunpack.c.h.b16 %v1052
          %v3930 = vunpack.c.l.b16 %v1053
          %v3931 = vunpack.c.h.b16 %v1053
          %v3932 = vunpack.c.l.b16 %v1054
          %v3933 = vunpack.c.h.b16 %v1054
          %v3934 = vunpack.c.l.b16 %v1055
          %v3935 = vunpack.c.h.b16 %v1055
          %v3936 = vunpack.c.l.b16 %v1056
          %v3937 = vunpack.c.h.b16 %v1056
          %v3938 = vunpack.c.l.b16 %v1057
          %v3939 = vunpack.c.h.b16 %v1057
          %v3940 = vunpack.c.l.b16 %v1058
          %v3941 = vunpack.c.h.b16 %v1058
          %v3942 = vunpack.c.l.b16 %v1059
          %v3943 = vunpack.c.h.b16 %v1059
          %v3944 = vunpack.c.l.b16 %v1060
          %v3945 = vunpack.c.h.b16 %v1060
          %v3946 = vunpack.c.l.b16 %v1061
          %v3947 = vunpack.c.h.b16 %v1061
          %v3948 = vunpack.c.l.b16 %v1062
          %v3949 = vunpack.c.h.b16 %v1062
          %v3950 = vunpack.c.l.b16 %v1063
          %v3951 = vunpack.c.h.b16 %v1063
          %v3952 = vunpack.c.l.b16 %v1064
          %v3953 = vunpack.c.h.b16 %v1064
          %v3954 = vunpack.c.l.b16 %v1065
          %v3955 = vunpack.c.h.b16 %v1065
          %v3956 = vunpack.c.l.b16 %v1066
          %v3957 = vunpack.c.h.b16 %v1066
          %v3958 = vunpack.c.l.b16 %v1067
          %v3959 = vunpack.c.h.b16 %v1067
          %v3960 = vunpack.c.l.b16 %v1068
          %v3961 = vunpack.c.h.b16 %v1068
          %v3962 = vunpack.c.l.b16 %v1069
          %v3963 = vunpack.c.h.b16 %v1069
          %v3964 = vunpack.c.l.b16 %v1070
          %v3965 = vunpack.c.h.b16 %v1070
          %v3966 = vunpack.c.l.b16 %v1071
          %v3967 = vunpack.c.h.b16 %v1071
          %v3968 = vunpack.c.l.b16 %v1072
          %v3969 = vunpack.c.h.b16 %v1072
          %v3970 = vunpack.c.l.b16 %v1073
          %v3971 = vunpack.c.h.b16 %v1073
          %v3972 = vunpack.c.l.b16 %v1074
          %v3973 = vunpack.c.h.b16 %v1074
          %v3974 = vunpack.c.l.b16 %v1075
          %v3975 = vunpack.c.h.b16 %v1075
          %v3976 = vunpack.c.l.b16 %v1076
          %v3977 = vunpack.c.h.b16 %v1076
          %v3978 = vunpack.c.l.b16 %v1077
          %v3979 = vunpack.c.h.b16 %v1077
          %v3980 = vunpack.c.l.b16 %v1078
          %v3981 = vunpack.c.h.b16 %v1078
          %v3982 = vunpack.c.l.b16 %v1079
          %v3983 = vunpack.c.h.b16 %v1079
          %v3984 = vunpack.c.l.b16 %v1080
          %v3985 = vunpack.c.h.b16 %v1080
          %v3986 = vunpack.c.l.b16 %v1081
          %v3987 = vunpack.c.h.b16 %v1081
          %v3988 = vunpack.c.l.b16 %v1082
          %v3989 = vunpack.c.h.b16 %v1082
          %v3990 = vunpack.c.l.b16 %v1083
          %v3991 = vunpack.c.h.b16 %v1083
          %v3992 = vunpack.c.l.b16 %v1084
          %v3993 = vunpack.c.h.b16 %v1084
          %v3994 = vunpack.c.l.b16 %v1085
          %v3995 = vunpack.c.h.b16 %v1085
          %v3996 = vunpack.c.l.b16 %v1086
          %v3997 = vunpack.c.h.b16 %v1086
          %v3998 = vunpack.c.l.b16 %v1087
          %v3999 = vunpack.c.h.b16 %v1087
          %v4000 = vunpack.c.l.b16 %v1088
          %v4001 = vunpack.c.h.b16 %v1088
          %v4002 = vunpack.c.l.b16 %v1089
          %v4003 = vunpack.c.h.b16 %v1089
          %v4004 = vunpack.c.l.b16 %v1090
          %v4005 = vunpack.c.h.b16 %v1090
          %v4006 = vunpack.c.l.b16 %v1091
          %v4007 = vunpack.c.h.b16 %v1091
          %v4008 = vunpack.c.l.b16 %v1092
          %v4009 = vunpack.c.h.b16 %v1092
          %v4010 = vunpack.c.l.b16 %v1093
          %v4011 = vunpack.c.h.b16 %v1093
          %v4012 = vunpack.c.l.b16 %v1094
          %v4013 = vunpack.c.h.b16 %v1094
          %v4014 = vunpack.c.l.b16 %v1095
          %v4015 = vunpack.c.h.b16 %v1095
          %v4016 = vunpack.c.l.b16 %v1096
          %v4017 = vunpack.c.h.b16 %v1096
          %v4018 = vunpack.c.l.b16 %v1097
          %v4019 = vunpack.c.h.b16 %v1097
          %v4020 = vunpack.c.l.b16 %v1098
          %v4021 = vunpack.c.h.b16 %v1098
          %v4022 = vunpack.c.l.b16 %v1099
          %v4023 = vunpack.c.h.b16 %v1099
          %v4024 = vunpack.c.l.b16 %v1100
          %v4025 = vunpack.c.h.b16 %v1100
          %v4026 = vunpack.c.l.b16 %v1101
          %v4027 = vunpack.c.h.b16 %v1101
          %v4028 = vunpack.c.l.b16 %v1102
          %v4029 = vunpack.c.h.b16 %v1102
          %v4030 = vunpack.c.l.b16 %v1103
          %v4031 = vunpack.c.h.b16 %v1103
          %v4032 = vunpack.c.l.b16 %v1104
          %v4033 = vunpack.c.h.b16 %v1104
          %v4034 = vunpack.c.l.b16 %v1105
          %v4035 = vunpack.c.h.b16 %v1105
          %v4036 = vunpack.c.l.b16 %v1106
          %v4037 = vunpack.c.h.b16 %v1106
          %v4038 = vunpack.c.l.b16 %v1107
          %v4039 = vunpack.c.h.b16 %v1107
          %v4040 = vunpack.c.l.b16 %v1108
          %v4041 = vunpack.c.h.b16 %v1108
          %v4042 = vunpack.c.l.b16 %v1109
          %v4043 = vunpack.c.h.b16 %v1109
          %v4044 = vunpack.c.l.b16 %v1110
          %v4045 = vunpack.c.h.b16 %v1110
          %v4046 = vunpack.c.l.b16 %v1111
          %v4047 = vunpack.c.h.b16 %v1111
          %v4048 = vunpack.c.l.b16 %v1112
          %v4049 = vunpack.c.h.b16 %v1112
          %v4050 = vunpack.c.l.b16 %v1113
          %v4051 = vunpack.c.h.b16 %v1113
          %v4052 = vunpack.c.l.b16 %v1114
          %v4053 = vunpack.c.h.b16 %v1114
          %v4054 = vunpack.c.l.b16 %v1115
          %v4055 = vunpack.c.h.b16 %v1115
          %v4056 = vunpack.c.l.b16 %v1116
          %v4057 = vunpack.c.h.b16 %v1116
          %v4058 = vunpack.c.l.b16 %v1117
          %v4059 = vunpack.c.h.b16 %v1117
          %v4060 = vunpack.c.l.b16 %v1118
          %v4061 = vunpack.c.h.b16 %v1118
          %v4062 = vunpack.c.l.b16 %v1119
          %v4063 = vunpack.c.h.b16 %v1119
          %v4064 = vunpack.c.l.b16 %v1120
          %v4065 = vunpack.c.h.b16 %v1120
          %v4066 = vunpack.c.l.b16 %v1121
          %v4067 = vunpack.c.h.b16 %v1121
          %v4068 = vunpack.c.l.b16 %v1122
          %v4069 = vunpack.c.h.b16 %v1122
          %v4070 = vunpack.c.l.b16 %v1123
          %v4071 = vunpack.c.h.b16 %v1123
          %v4072 = vunpack.c.l.b16 %v1124
          %v4073 = vunpack.c.h.b16 %v1124
          %v4074 = vunpack.c.l.b16 %v1125
          %v4075 = vunpack.c.h.b16 %v1125
          %v4076 = vunpack.c.l.b16 %v1126
          %v4077 = vunpack.c.h.b16 %v1126
          %v4078 = vunpack.c.l.b16 %v1127
          %v4079 = vunpack.c.h.b16 %v1127
          %v4080 = vunpack.c.l.b16 %v1128
          %v4081 = vunpack.c.h.b16 %v1128
          %v4082 = vunpack.c.l.b16 %v1129
          %v4083 = vunpack.c.h.b16 %v1129
          %v4084 = vunpack.c.l.b16 %v1130
          %v4085 = vunpack.c.h.b16 %v1130
          %v4086 = vunpack.c.l.b16 %v1131
          %v4087 = vunpack.c.h.b16 %v1131
          %v4088 = vunpack.c.l.b16 %v1132
          %v4089 = vunpack.c.h.b16 %v1132
          %v4090 = vunpack.c.l.b16 %v1133
          %v4091 = vunpack.c.h.b16 %v1133
          %v4092 = vunpack.c.l.b16 %v1134
          %v4093 = vunpack.c.h.b16 %v1134
          %v4094 = vunpack.c.l.b16 %v1135
          %v4095 = vunpack.c.h.b16 %v1135
          %v4096 = vunpack.c.l.b16 %v1136
          %v4097 = vunpack.c.h.b16 %v1136
          %v4098 = vunpack.c.l.b16 %v1137
          %v4099 = vunpack.c.h.b16 %v1137
          %v4100 = vunpack.c.l.b16 %v1138
          %v4101 = vunpack.c.h.b16 %v1138
          %v4102 = vunpack.c.l.b16 %v1139
          %v4103 = vunpack.c.h.b16 %v1139
          %v4104 = vunpack.c.l.b16 %v1140
          %v4105 = vunpack.c.h.b16 %v1140
          %v4106 = vunpack.c.l.b16 %v1141
          %v4107 = vunpack.c.h.b16 %v1141
          %v4108 = vunpack.c.l.b16 %v1142
          %v4109 = vunpack.c.h.b16 %v1142
          %v4110 = vunpack.c.l.b16 %v1143
          %v4111 = vunpack.c.h.b16 %v1143
          %v4112 = vunpack.c.l.b16 %v1144
          %v4113 = vunpack.c.h.b16 %v1144
          %v4114 = vunpack.c.l.b16 %v1145
          %v4115 = vunpack.c.h.b16 %v1145
          %v4116 = vunpack.c.l.b16 %v1146
          %v4117 = vunpack.c.h.b16 %v1146
          %v4118 = vunpack.c.l.b16 %v1147
          %v4119 = vunpack.c.h.b16 %v1147
          %v4120 = vunpack.c.l.b16 %v1148
          %v4121 = vunpack.c.h.b16 %v1148
          %v4122 = vunpack.c.l.b16 %v1149
          %v4123 = vunpack.c.h.b16 %v1149
          %v4124 = vunpack.c.l.b16 %v1150
          %v4125 = vunpack.c.h.b16 %v1150
          %v4126 = vunpack.c.l.b16 %v1151
          %v4127 = vunpack.c.h.b16 %v1151
          %v4128 = vunpack.c.l.b16 %v1152
          %v4129 = vunpack.c.h.b16 %v1152
          %v4130 = vunpack.c.l.b16 %v1153
          %v4131 = vunpack.c.h.b16 %v1153
          %v4132 = vunpack.c.l.b16 %v1154
          %v4133 = vunpack.c.h.b16 %v1154
          %v4134 = vunpack.c.l.b16 %v1155
          %v4135 = vunpack.c.h.b16 %v1155
          %v4136 = vunpack.c.l.b16 %v1156
          %v4137 = vunpack.c.h.b16 %v1156
          %v4138 = vunpack.c.l.b16 %v1157
          %v4139 = vunpack.c.h.b16 %v1157
          %v4140 = vunpack.c.l.b16 %v1158
          %v4141 = vunpack.c.h.b16 %v1158
          %v4142 = vunpack.c.l.b16 %v1159
          %v4143 = vunpack.c.h.b16 %v1159
          %v4144 = vunpack.c.l.b16 %v1160
          %v4145 = vunpack.c.h.b16 %v1160
          %v4146 = vunpack.c.l.b16 %v1161
          %v4147 = vunpack.c.h.b16 %v1161
          %v4148 = vunpack.c.l.b16 %v1162
          %v4149 = vunpack.c.h.b16 %v1162
          %v4150 = vunpack.c.l.b16 %v1163
          %v4151 = vunpack.c.h.b16 %v1163
          %v4152 = vunpack.c.l.b16 %v1164
          %v4153 = vunpack.c.h.b16 %v1164
          %v4154 = vunpack.c.l.b16 %v1165
          %v4155 = vunpack.c.h.b16 %v1165
          %v4156 = vunpack.c.l.b16 %v1166
          %v4157 = vunpack.c.h.b16 %v1166
          %v4158 = vunpack.c.l.b16 %v1167
          %v4159 = vunpack.c.h.b16 %v1167
          %v4160 = vunpack.c.l.b16 %v1168
          %v4161 = vunpack.c.h.b16 %v1168
          %v4162 = vunpack.c.l.b16 %v1169
          %v4163 = vunpack.c.h.b16 %v1169
          %v4164 = vunpack.c.l.b16 %v1170
          %v4165 = vunpack.c.h.b16 %v1170
          %v4166 = vunpack.c.l.b16 %v1171
          %v4167 = vunpack.c.h.b16 %v1171
          %v4168 = vunpack.c.l.b16 %v1172
          %v4169 = vunpack.c.h.b16 %v1172
          %v4170 = vunpack.c.l.b16 %v1173
          %v4171 = vunpack.c.h.b16 %v1173
          %v4172 = vunpack.c.l.b16 %v1174
          %v4173 = vunpack.c.h.b16 %v1174
          %v4174 = vunpack.c.l.b16 %v1175
          %v4175 = vunpack.c.h.b16 %v1175
          %v4176 = vunpack.c.l.b16 %v1176
          %v4177 = vunpack.c.h.b16 %v1176
          %v4178 = vunpack.c.l.b16 %v1177
          %v4179 = vunpack.c.h.b16 %v1177
          %v4180 = vunpack.c.l.b16 %v1178
          %v4181 = vunpack.c.h.b16 %v1178
          %v4182 = vunpack.c.l.b16 %v1179
          %v4183 = vunpack.c.h.b16 %v1179
          %v4184 = vunpack.c.l.b16 %v1180
          %v4185 = vunpack.c.h.b16 %v1180
          %v4186 = vunpack.c.l.b16 %v1181
          %v4187 = vunpack.c.h.b16 %v1181
          %v4188 = vunpack.c.l.b16 %v1182
          %v4189 = vunpack.c.h.b16 %v1182
          %v4190 = vunpack.c.l.b16 %v1183
          %v4191 = vunpack.c.h.b16 %v1183
          %v4192 = vunpack.c.l.b16 %v1184
          %v4193 = vunpack.c.h.b16 %v1184
          %v4194 = vunpack.c.l.b16 %v1185
          %v4195 = vunpack.c.h.b16 %v1185
          %v4196 = vunpack.c.l.b16 %v1186
          %v4197 = vunpack.c.h.b16 %v1186
          %v4198 = vunpack.c.l.b16 %v1187
          %v4199 = vunpack.c.h.b16 %v1187
          %v4200 = vunpack.c.l.b16 %v1188
          %v4201 = vunpack.c.h.b16 %v1188
          %v4202 = vunpack.c.l.b16 %v1189
          %v4203 = vunpack.c.h.b16 %v1189
          %v4204 = vunpack.c.l.b16 %v1190
          %v4205 = vunpack.c.h.b16 %v1190
          %v4206 = vunpack.c.l.b16 %v1191
          %v4207 = vunpack.c.h.b16 %v1191
          %v4208 = vunpack.c.l.b16 %v1192
          %v4209 = vunpack.c.h.b16 %v1192
          %v4210 = vunpack.c.l.b16 %v1193
          %v4211 = vunpack.c.h.b16 %v1193
          %v4212 = vunpack.c.l.b16 %v1194
          %v4213 = vunpack.c.h.b16 %v1194
          %v4214 = vunpack.c.l.b16 %v1195
          %v4215 = vunpack.c.h.b16 %v1195
          %v4216 = vunpack.c.l.b16 %v1196
          %v4217 = vunpack.c.h.b16 %v1196
          %v4218 = vunpack.c.l.b16 %v1197
          %v4219 = vunpack.c.h.b16 %v1197
          %v4220 = vunpack.c.l.b16 %v1198
          %v4221 = vunpack.c.h.b16 %v1198
          %v4222 = vunpack.c.l.b16 %v1199
          %v4223 = vunpack.c.h.b16 %v1199
          %v4224 = vunpack.c.l.b16 %v1200
          %v4225 = vunpack.c.h.b16 %v1200
          %v4226 = vunpack.c.l.b16 %v1201
          %v4227 = vunpack.c.h.b16 %v1201
          %v4228 = vunpack.c.l.b16 %v1202
          %v4229 = vunpack.c.h.b16 %v1202
          %v4230 = vunpack.c.l.b16 %v1203
          %v4231 = vunpack.c.h.b16 %v1203
          %v4232 = vunpack.c.l.b16 %v1204
          %v4233 = vunpack.c.h.b16 %v1204
          %v4234 = vunpack.c.l.b16 %v1205
          %v4235 = vunpack.c.h.b16 %v1205
          %v4236 = vunpack.c.l.b16 %v1206
          %v4237 = vunpack.c.h.b16 %v1206
          %v4238 = vunpack.c.l.b16 %v1207
          %v4239 = vunpack.c.h.b16 %v1207
          %v4240 = vunpack.c.l.b16 %v1208
          %v4241 = vunpack.c.h.b16 %v1208
          %v4242 = vunpack.c.l.b16 %v1209
          %v4243 = vunpack.c.h.b16 %v1209
          %v4244 = vunpack.c.l.b16 %v1210
          %v4245 = vunpack.c.h.b16 %v1210
          %v4246 = vunpack.c.l.b16 %v1211
          %v4247 = vunpack.c.h.b16 %v1211
          %v4248 = vunpack.c.l.b16 %v1212
          %v4249 = vunpack.c.h.b16 %v1212
          %v4250 = vunpack.c.l.b16 %v1213
          %v4251 = vunpack.c.h.b16 %v1213
          %v4252 = vunpack.c.l.b16 %v1214
          %v4253 = vunpack.c.h.b16 %v1214
          %v4254 = vunpack.c.l.b16 %v1215
          %v4255 = vunpack.c.h.b16 %v1215
          %v4256 = vunpack.c.l.b16 %v1216
          %v4257 = vunpack.c.h.b16 %v1216
          %v4258 = vunpack.c.l.b16 %v1217
          %v4259 = vunpack.c.h.b16 %v1217
          %v4260 = vunpack.c.l.b16 %v1218
          %v4261 = vunpack.c.h.b16 %v1218
          %v4262 = vunpack.c.l.b16 %v1219
          %v4263 = vunpack.c.h.b16 %v1219
          %v4264 = vunpack.c.l.b16 %v1220
          %v4265 = vunpack.c.h.b16 %v1220
          %v4266 = vunpack.c.l.b16 %v1221
          %v4267 = vunpack.c.h.b16 %v1221
          %v4268 = vunpack.c.l.b16 %v1222
          %v4269 = vunpack.c.h.b16 %v1222
          %v4270 = vunpack.c.l.b16 %v1223
          %v4271 = vunpack.c.h.b16 %v1223
          %v4272 = vunpack.c.l.b16 %v1224
          %v4273 = vunpack.c.h.b16 %v1224
          %v4274 = vunpack.c.l.b16 %v1225
          %v4275 = vunpack.c.h.b16 %v1225
          %v4276 = vunpack.c.l.b16 %v1226
          %v4277 = vunpack.c.h.b16 %v1226
          %v4278 = vunpack.c.l.b16 %v1227
          %v4279 = vunpack.c.h.b16 %v1227
          %v4280 = vunpack.c.l.b16 %v1228
          %v4281 = vunpack.c.h.b16 %v1228
          %v4282 = vunpack.c.l.b16 %v1229
          %v4283 = vunpack.c.h.b16 %v1229
          %v4284 = vunpack.c.l.b16 %v1230
          %v4285 = vunpack.c.h.b16 %v1230
          %v4286 = vunpack.c.l.b16 %v1231
          %v4287 = vunpack.c.h.b16 %v1231
          %v4288 = vunpack.c.l.b16 %v1232
          %v4289 = vunpack.c.h.b16 %v1232
          %v4290 = vunpack.c.l.b16 %v1233
          %v4291 = vunpack.c.h.b16 %v1233
          %v4292 = vunpack.c.l.b16 %v1234
          %v4293 = vunpack.c.h.b16 %v1234
          %v4294 = vunpack.c.l.b16 %v1235
          %v4295 = vunpack.c.h.b16 %v1235
          %v4296 = vunpack.c.l.b16 %v1236
          %v4297 = vunpack.c.h.b16 %v1236
          %v4298 = vunpack.c.l.b16 %v1237
          %v4299 = vunpack.c.h.b16 %v1237
          %v4300 = vunpack.c.l.b16 %v1238
          %v4301 = vunpack.c.h.b16 %v1238
          %v4302 = vunpack.c.l.b16 %v1239
          %v4303 = vunpack.c.h.b16 %v1239
          %v4304 = vunpack.c.l.b16 %v1240
          %v4305 = vunpack.c.h.b16 %v1240
          %v4306 = vunpack.c.l.b16 %v1241
          %v4307 = vunpack.c.h.b16 %v1241
          %v4308 = vunpack.c.l.b16 %v1242
          %v4309 = vunpack.c.h.b16 %v1242
          %v4310 = vunpack.c.l.b16 %v1243
          %v4311 = vunpack.c.h.b16 %v1243
          %v4312 = vunpack.c.l.b16 %v1244
          %v4313 = vunpack.c.h.b16 %v1244
          %v4314 = vunpack.c.l.b16 %v1245
          %v4315 = vunpack.c.h.b16 %v1245
          %v4316 = vunpack.c.l.b16 %v1246
          %v4317 = vunpack.c.h.b16 %v1246
          %v4318 = vunpack.c.l.b16 %v1247
          %v4319 = vunpack.c.h.b16 %v1247
          %v4320 = vunpack.c.l.b16 %v1248
          %v4321 = vunpack.c.h.b16 %v1248
          %v4322 = vunpack.c.l.b16 %v1249
          %v4323 = vunpack.c.h.b16 %v1249
          %v4324 = vunpack.c.l.b16 %v1250
          %v4325 = vunpack.c.h.b16 %v1250
          %v4326 = vunpack.c.l.b16 %v1251
          %v4327 = vunpack.c.h.b16 %v1251
          %v4328 = vunpack.c.l.b16 %v1252
          %v4329 = vunpack.c.h.b16 %v1252
          %v4330 = vunpack.c.l.b16 %v1253
          %v4331 = vunpack.c.h.b16 %v1253
          %v4332 = vunpack.c.l.b16 %v1254
          %v4333 = vunpack.c.h.b16 %v1254
          %v4334 = vunpack.c.l.b16 %v1255
          %v4335 = vunpack.c.h.b16 %v1255
          %v4336 = vunpack.c.l.b16 %v1256
          %v4337 = vunpack.c.h.b16 %v1256
          %v4338 = vunpack.c.l.b16 %v1257
          %v4339 = vunpack.c.h.b16 %v1257
          %v4340 = vunpack.c.l.b16 %v1258
          %v4341 = vunpack.c.h.b16 %v1258
          %v4342 = vunpack.c.l.b16 %v1259
          %v4343 = vunpack.c.h.b16 %v1259
          %v4344 = vunpack.c.l.b16 %v1260
          %v4345 = vunpack.c.h.b16 %v1260
          %v4346 = vunpack.c.l.b16 %v1261
          %v4347 = vunpack.c.h.b16 %v1261
          %v4348 = vunpack.c.l.b16 %v1262
          %v4349 = vunpack.c.h.b16 %v1262
          %v4350 = vunpack.c.l.b16 %v1263
          %v4351 = vunpack.c.h.b16 %v1263
          %v4352 = vunpack.c.l.b16 %v1264
          %v4353 = vunpack.c.h.b16 %v1264
          %v4354 = vunpack.c.l.b16 %v1265
          %v4355 = vunpack.c.h.b16 %v1265
          %v4356 = vunpack.c.l.b16 %v1266
          %v4357 = vunpack.c.h.b16 %v1266
          %v4358 = vunpack.c.l.b16 %v1267
          %v4359 = vunpack.c.h.b16 %v1267
          %v4360 = vunpack.c.l.b16 %v1268
          %v4361 = vunpack.c.h.b16 %v1268
          %v4362 = vunpack.c.l.b16 %v1269
          %v4363 = vunpack.c.h.b16 %v1269
          %v4364 = vunpack.c.l.b16 %v1270
          %v4365 = vunpack.c.h.b16 %v1270
          %v4366 = vunpack.c.l.b16 %v1271
          %v4367 = vunpack.c.h.b16 %v1271
          %v4368 = vunpack.c.l.b16 %v1272
          %v4369 = vunpack.c.h.b16 %v1272
          %v4370 = vunpack.c.l.b16 %v1273
          %v4371 = vunpack.c.h.b16 %v1273
          %v4372 = vunpack.c.l.b16 %v1274
          %v4373 = vunpack.c.h.b16 %v1274
          %v4374 = vunpack.c.l.b16 %v1275
          %v4375 = vunpack.c.h.b16 %v1275
          %v4376 = vunpack.c.l.b16 %v1276
          %v4377 = vunpack.c.h.b16 %v1276
          %v4378 = vunpack.c.l.b16 %v1277
          %v4379 = vunpack.c.h.b16 %v1277
          %v4380 = vunpack.c.l.b16 %v1278
          %v4381 = vunpack.c.h.b16 %v1278
          %v4382 = vunpack.c.l.b16 %v1279
          %v4383 = vunpack.c.h.b16 %v1279
          %v4384 = vunpack.c.l.b16 %v1280
          %v4385 = vunpack.c.h.b16 %v1280
          %v4386 = vunpack.c.l.b16 %v1281
          %v4387 = vunpack.c.h.b16 %v1281
          %v4388 = vunpack.c.l.b16 %v1282
          %v4389 = vunpack.c.h.b16 %v1282
          %v4390 = vunpack.c.l.b16 %v1283
          %v4391 = vunpack.c.h.b16 %v1283
          %v4392 = vunpack.c.l.b16 %v1284
          %v4393 = vunpack.c.h.b16 %v1284
          %v4394 = vunpack.c.l.b16 %v1285
          %v4395 = vunpack.c.h.b16 %v1285
          %v4396 = vunpack.c.l.b16 %v1286
          %v4397 = vunpack.c.h.b16 %v1286
          %v4398 = vunpack.c.l.b16 %v1287
          %v4399 = vunpack.c.h.b16 %v1287
          %v4400 = vunpack.c.l.b16 %v1288
          %v4401 = vunpack.c.h.b16 %v1288
          %v4402 = vunpack.c.l.b16 %v1289
          %v4403 = vunpack.c.h.b16 %v1289
          %v4404 = vunpack.c.l.b16 %v1290
          %v4405 = vunpack.c.h.b16 %v1290
          %v4406 = vunpack.c.l.b16 %v1291
          %v4407 = vunpack.c.h.b16 %v1291
          %v4408 = vunpack.c.l.b16 %v1292
          %v4409 = vunpack.c.h.b16 %v1292
          %v4410 = vunpack.c.l.b16 %v1293
          %v4411 = vunpack.c.h.b16 %v1293
          %v4412 = vunpack.c.l.b16 %v1294
          %v4413 = vunpack.c.h.b16 %v1294
          %v4414 = vunpack.c.l.b16 %v1295
          %v4415 = vunpack.c.h.b16 %v1295
          %v4416 = vunpack.c.l.b16 %v1296
          %v4417 = vunpack.c.h.b16 %v1296
          %v4418 = vunpack.c.l.b16 %v1297
          %v4419 = vunpack.c.h.b16 %v1297
          %v4420 = vunpack.c.l.b16 %v1298
          %v4421 = vunpack.c.h.b16 %v1298
          %v4422 = vunpack.c.l.b16 %v1299
          %v4423 = vunpack.c.h.b16 %v1299
          %v4424 = vunpack.c.l.b16 %v1300
          %v4425 = vunpack.c.h.b16 %v1300
          %v4426 = vunpack.c.l.b16 %v1301
          %v4427 = vunpack.c.h.b16 %v1301
          %v4428 = vunpack.c.l.b16 %v1302
          %v4429 = vunpack.c.h.b16 %v1302
          %v4430 = vunpack.c.l.b16 %v1303
          %v4431 = vunpack.c.h.b16 %v1303
          %v4432 = vpack.c.b16 %v3864, %v3856
          %v4433 = vpack.c.b16 %v3865, %v3857
          %v4434 = vpack.c.b16 %v3866, %v3858
          %v4435 = vpack.c.b16 %v3867, %v3859
          %v4436 = vpack.c.b16 %v3868, %v3860
          %v4437 = vpack.c.b16 %v3869, %v3861
          %v4438 = vpack.c.b16 %v3870, %v3862
          %v4439 = vpack.c.b16 %v3871, %v3863
          %v4440 = vpack.c.b16 %v3880, %v3872
          %v4441 = vpack.c.b16 %v3881, %v3873
          %v4442 = vpack.c.b16 %v3882, %v3874
          %v4443 = vpack.c.b16 %v3883, %v3875
          %v4444 = vpack.c.b16 %v3884, %v3876
          %v4445 = vpack.c.b16 %v3885, %v3877
          %v4446 = vpack.c.b16 %v3886, %v3878
          %v4447 = vpack.c.b16 %v3887, %v3879
          %v4448 = vpack.c.b16 %v3896, %v3888
          %v4449 = vpack.c.b16 %v3897, %v3889
          %v4450 = vpack.c.b16 %v3898, %v3890
          %v4451 = vpack.c.b16 %v3899, %v3891
          %v4452 = vpack.c.b16 %v3900, %v3892
          %v4453 = vpack.c.b16 %v3901, %v3893
          %v4454 = vpack.c.b16 %v3902, %v3894
          %v4455 = vpack.c.b16 %v3903, %v3895
          %v4456 = vpack.c.b16 %v3912, %v3904
          %v4457 = vpack.c.b16 %v3913, %v3905
          %v4458 = vpack.c.b16 %v3914, %v3906
          %v4459 = vpack.c.b16 %v3915, %v3907
          %v4460 = vpack.c.b16 %v3916, %v3908
          %v4461 = vpack.c.b16 %v3917, %v3909
          %v4462 = vpack.c.b16 %v3918, %v3910
          %v4463 = vpack.c.b16 %v3919, %v3911
          %v4464 = vpack.c.b16 %v3928, %v3920
          %v4465 = vpack.c.b16 %v3929, %v3921
          %v4466 = vpack.c.b16 %v3930, %v3922
          %v4467 = vpack.c.b16 %v3931, %v3923
          %v4468 = vpack.c.b16 %v3932, %v3924
          %v4469 = vpack.c.b16 %v3933, %v3925
          %v4470 = vpack.c.b16 %v3934, %v3926
          %v4471 = vpack.c.b16 %v3935, %v3927
          %v4472 = vpack.c.b16 %v3944, %v3936
          %v4473 = vpack.c.b16 %v3945, %v3937
          %v4474 = vpack.c.b16 %v3946, %v3938
          %v4475 = vpack.c.b16 %v3947, %v3939
          %v4476 = vpack.c.b16 %v3948, %v3940
          %v4477 = vpack.c.b16 %v3949, %v3941
          %v4478 = vpack.c.b16 %v3950, %v3942
          %v4479 = vpack.c.b16 %v3951, %v3943
          %v4480 = vpack.c.b16 %v3960, %v3952
          %v4481 = vpack.c.b16 %v3961, %v3953
          %v4482 = vpack.c.b16 %v3962, %v3954
          %v4483 = vpack.c.b16 %v3963, %v3955
          %v4484 = vpack.c.b16 %v3964, %v3956
          %v4485 = vpack.c.b16 %v3965, %v3957
          %v4486 = vpack.c.b16 %v3966, %v3958
          %v4487 = vpack.c.b16 %v3967, %v3959
          %v4488 = vpack.c.b16 %v3976, %v3968
          %v4489 = vpack.c.b16 %v3977, %v3969
          %v4490 = vpack.c.b16 %v3978, %v3970
          %v4491 = vpack.c.b16 %v3979, %v3971
          %v4492 = vpack.c.b16 %v3980, %v3972
          %v4493 = vpack.c.b16 %v3981, %v3973
          %v4494 = vpack.c.b16 %v3982, %v3974
          %v4495 = vpack.c.b16 %v3983, %v3975
          %v4496 = vpack.c.b16 %v3992, %v3984
          %v4497 = vpack.c.b16 %v3993, %v3985
          %v4498 = vpack.c.b16 %v3994, %v3986
          %v4499 = vpack.c.b16 %v3995, %v3987
          %v4500 = vpack.c.b16 %v3996, %v3988
          %v4501 = vpack.c.b16 %v3997, %v3989
          %v4502 = vpack.c.b16 %v3998, %v3990
          %v4503 = vpack.c.b16 %v3999, %v3991
          %v4504 = vpack.c.b16 %v4008, %v4000
          %v4505 = vpack.c.b16 %v4009, %v4001
          %v4506 = vpack.c.b16 %v4010, %v4002
          %v4507 = vpack.c.b16 %v4011, %v4003
          %v4508 = vpack.c.b16 %v4012, %v4004
          %v4509 = vpack.c.b16 %v4013, %v4005
          %v4510 = vpack.c.b16 %v4014, %v4006
          %v4511 = vpack.c.b16 %v4015, %v4007
          %v4512 = vpack.c.b16 %v4024, %v4016
          %v4513 = vpack.c.b16 %v4025, %v4017
          %v4514 = vpack.c.b16 %v4026, %v4018
          %v4515 = vpack.c.b16 %v4027, %v4019
          %v4516 = vpack.c.b16 %v4028, %v4020
          %v4517 = vpack.c.b16 %v4029, %v4021
          %v4518 = vpack.c.b16 %v4030, %v4022
          %v4519 = vpack.c.b16 %v4031, %v4023
          %v4520 = vpack.c.b16 %v4040, %v4032
          %v4521 = vpack.c.b16 %v4041, %v4033
          %v4522 = vpack.c.b16 %v4042, %v4034
          %v4523 = vpack.c.b16 %v4043, %v4035
          %v4524 = vpack.c.b16 %v4044, %v4036
          %v4525 = vpack.c.b16 %v4045, %v4037
          %v4526 = vpack.c.b16 %v4046, %v4038
          %v4527 = vpack.c.b16 %v4047, %v4039
          %v4528 = vpack.c.b16 %v4056, %v4048
          %v4529 = vpack.c.b16 %v4057, %v4049
          %v4530 = vpack.c.b16 %v4058, %v4050
          %v4531 = vpack.c.b16 %v4059, %v4051
          %v4532 = vpack.c.b16 %v4060, %v4052
          %v4533 = vpack.c.b16 %v4061, %v4053
          %v4534 = vpack.c.b16 %v4062, %v4054
          %v4535 = vpack.c.b16 %v4063, %v4055
          %v4536 = vpack.c.b16 %v4072, %v4064
          %v4537 = vpack.c.b16 %v4073, %v4065
          %v4538 = vpack.c.b16 %v4074, %v4066
          %v4539 = vpack.c.b16 %v4075, %v4067
          %v4540 = vpack.c.b16 %v4076, %v4068
          %v4541 = vpack.c.b16 %v4077, %v4069
          %v4542 = vpack.c.b16 %v4078, %v4070
          %v4543 = vpack.c.b16 %v4079, %v4071
          %v4544 = vpack.c.b16 %v4088, %v4080
          %v4545 = vpack.c.b16 %v4089, %v4081
          %v4546 = vpack.c.b16 %v4090, %v4082
          %v4547 = vpack.c.b16 %v4091, %v4083
          %v4548 = vpack.c.b16 %v4092, %v4084
          %v4549 = vpack.c.b16 %v4093, %v4085
          %v4550 = vpack.c.b16 %v4094, %v4086
          %v4551 = vpack.c.b16 %v4095, %v4087
          %v4552 = vpack.c.b16 %v4104, %v4096
          %v4553 = vpack.c.b16 %v4105, %v4097
          %v4554 = vpack.c.b16 %v4106, %v4098
          %v4555 = vpack.c.b16 %v4107, %v4099
          %v4556 = vpack.c.b16 %v4108, %v4100
          %v4557 = vpack.c.b16 %v4109, %v4101
          %v4558 = vpack.c.b16 %v4110, %v4102
          %v4559 = vpack.c.b16 %v4111, %v4103
          %v4560 = vpack.c.b16 %v4120, %v4112
          %v4561 = vpack.c.b16 %v4121, %v4113
          %v4562 = vpack.c.b16 %v4122, %v4114
          %v4563 = vpack.c.b16 %v4123, %v4115
          %v4564 = vpack.c.b16 %v4124, %v4116
          %v4565 = vpack.c.b16 %v4125, %v4117
          %v4566 = vpack.c.b16 %v4126, %v4118
          %v4567 = vpack.c.b16 %v4127, %v4119
          %v4568 = vpack.c.b16 %v4136, %v4128
          %v4569 = vpack.c.b16 %v4137, %v4129
          %v4570 = vpack.c.b16 %v4138, %v4130
          %v4571 = vpack.c.b16 %v4139, %v4131
          %v4572 = vpack.c.b16 %v4140, %v4132
          %v4573 = vpack.c.b16 %v4141, %v4133
          %v4574 = vpack.c.b16 %v4142, %v4134
          %v4575 = vpack.c.b16 %v4143, %v4135
          %v4576 = vpack.c.b16 %v4152, %v4144
          %v4577 = vpack.c.b16 %v4153, %v4145
          %v4578 = vpack.c.b16 %v4154, %v4146
          %v4579 = vpack.c.b16 %v4155, %v4147
          %v4580 = vpack.c.b16 %v4156, %v4148
          %v4581 = vpack.c.b16 %v4157, %v4149
          %v4582 = vpack.c.b16 %v4158, %v4150
          %v4583 = vpack.c.b16 %v4159, %v4151
          %v4584 = vpack.c.b16 %v4168, %v4160
          %v4585 = vpack.c.b16 %v4169, %v4161
          %v4586 = vpack.c.b16 %v4170, %v4162
          %v4587 = vpack.c.b16 %v4171, %v4163
          %v4588 = vpack.c.b16 %v4172, %v4164
          %v4589 = vpack.c.b16 %v4173, %v4165
          %v4590 = vpack.c.b16 %v4174, %v4166
          %v4591 = vpack.c.b16 %v4175, %v4167
          %v4592 = vpack.c.b16 %v4184, %v4176
          %v4593 = vpack.c.b16 %v4185, %v4177
          %v4594 = vpack.c.b16 %v4186, %v4178
          %v4595 = vpack.c.b16 %v4187, %v4179
          %v4596 = vpack.c.b16 %v4188, %v4180
          %v4597 = vpack.c.b16 %v4189, %v4181
          %v4598 = vpack.c.b16 %v4190, %v4182
          %v4599 = vpack.c.b16 %v4191, %v4183
          %v4600 = vpack.c.b16 %v4200, %v4192
          %v4601 = vpack.c.b16 %v4201, %v4193
          %v4602 = vpack.c.b16 %v4202, %v4194
          %v4603 = vpack.c.b16 %v4203, %v4195
          %v4604 = vpack.c.b16 %v4204, %v4196
          %v4605 = vpack.c.b16 %v4205, %v4197
          %v4606 = vpack.c.b16 %v4206, %v4198
          %v4607 = vpack.c.b16 %v4207, %v4199
          %v4608 = vpack.c.b16 %v4216, %v4208
          %v4609 = vpack.c.b16 %v4217, %v4209
          %v4610 = vpack.c.b16 %v4218, %v4210
          %v4611 = vpack.c.b16 %v4219, %v4211
          %v4612 = vpack.c.b16 %v4220, %v4212
          %v4613 = vpack.c.b16 %v4221, %v4213
          %v4614 = vpack.c.b16 %v4222, %v4214
          %v4615 = vpack.c.b16 %v4223, %v4215
          %v4616 = vpack.c.b16 %v4232, %v4224
          %v4617 = vpack.c.b16 %v4233, %v4225
          %v4618 = vpack.c.b16 %v4234, %v4226
          %v4619 = vpack.c.b16 %v4235, %v4227
          %v4620 = vpack.c.b16 %v4236, %v4228
          %v4621 = vpack.c.b16 %v4237, %v4229
          %v4622 = vpack.c.b16 %v4238, %v4230
          %v4623 = vpack.c.b16 %v4239, %v4231
          %v4624 = vpack.c.b16 %v4248, %v4240
          %v4625 = vpack.c.b16 %v4249, %v4241
          %v4626 = vpack.c.b16 %v4250, %v4242
          %v4627 = vpack.c.b16 %v4251, %v4243
          %v4628 = vpack.c.b16 %v4252, %v4244
          %v4629 = vpack.c.b16 %v4253, %v4245
          %v4630 = vpack.c.b16 %v4254, %v4246
          %v4631 = vpack.c.b16 %v4255, %v4247
          %v4632 = vpack.c.b16 %v4264, %v4256
          %v4633 = vpack.c.b16 %v4265, %v4257
          %v4634 = vpack.c.b16 %v4266, %v4258
          %v4635 = vpack.c.b16 %v4267, %v4259
          %v4636 = vpack.c.b16 %v4268, %v4260
          %v4637 = vpack.c.b16 %v4269, %v4261
          %v4638 = vpack.c.b16 %v4270, %v4262
          %v4639 = vpack.c.b16 %v4271, %v4263
          %v4640 = vpack.c.b16 %v4280, %v4272
          %v4641 = vpack.c.b16 %v4281, %v4273
          %v4642 = vpack.c.b16 %v4282, %v4274
          %v4643 = vpack.c.b16 %v4283, %v4275
          %v4644 = vpack.c.b16 %v4284, %v4276
          %v4645 = vpack.c.b16 %v4285, %v4277
          %v4646 = vpack.c.b16 %v4286, %v4278
          %v4647 = vpack.c.b16 %v4287, %v4279
          %v4648 = vpack.c.b16 %v4296, %v4288
          %v4649 = vpack.c.b16 %v4297, %v4289
          %v4650 = vpack.c.b16 %v4298, %v4290
          %v4651 = vpack.c.b16 %v4299, %v4291
          %v4652 = vpack.c.b16 %v4300, %v4292
          %v4653 = vpack.c.b16 %v4301, %v4293
          %v4654 = vpack.c.b16 %v4302, %v4294
          %v4655 = vpack.c.b16 %v4303, %v4295
          %v4656 = vpack.c.b16 %v4312, %v4304
          %v4657 = vpack.c.b16 %v4313, %v4305
          %v4658 = vpack.c.b16 %v4314, %v4306
          %v4659 = vpack.c.b16 %v4315, %v4307
          %v4660 = vpack.c.b16 %v4316, %v4308
          %v4661 = vpack.c.b16 %v4317, %v4309
          %v4662 = vpack.c.b16 %v4318, %v4310
          %v4663 = vpack.c.b16 %v4319, %v4311
          %v4664 = vpack.c.b16 %v4328, %v4320
          %v4665 = vpack.c.b16 %v4329, %v4321
          %v4666 = vpack.c.b16 %v4330, %v4322
          %v4667 = vpack.c.b16 %v4331, %v4323
          %v4668 = vpack.c.b16 %v4332, %v4324
          %v4669 = vpack.c.b16 %v4333, %v4325
          %v4670 = vpack.c.b16 %v4334, %v4326
          %v4671 = vpack.c.b16 %v4335, %v4327
          %v4672 = vpack.c.b16 %v4344, %v4336
          %v4673 = vpack.c.b16 %v4345, %v4337
          %v4674 = vpack.c.b16 %v4346, %v4338
          %v4675 = vpack.c.b16 %v4347, %v4339
          %v4676 = vpack.c.b16 %v4348, %v4340
          %v4677 = vpack.c.b16 %v4349, %v4341
          %v4678 = vpack.c.b16 %v4350, %v4342
          %v4679 = vpack.c.b16 %v4351, %v4343
          %v4680 = vpack.c.b16 %v4360, %v4352
          %v4681 = vpack.c.b16 %v4361, %v4353
          %v4682 = vpack.c.b16 %v4362, %v4354
          %v4683 = vpack.c.b16 %v4363, %v4355
          %v4684 = vpack.c.b16 %v4364, %v4356
          %v4685 = vpack.c.b16 %v4365, %v4357
          %v4686 = vpack.c.b16 %v4366, %v4358
          %v4687 = vpack.c.b16 %v4367, %v4359
          %v4688 = vpack.c.b16 %v4376, %v4368
          %v4689 = vpack.c.b16 %v4377, %v4369
          %v4690 = vpack.c.b16 %v4378, %v4370
          %v4691 = vpack.c.b16 %v4379, %v4371
          %v4692 = vpack.c.b16 %v4380, %v4372
          %v4693 = vpack.c.b16 %v4381, %v4373
          %v4694 = vpack.c.b16 %v4382, %v4374
          %v4695 = vpack.c.b16 %v4383, %v4375
          %v4696 = vpack.c.b16 %v4392, %v4384
          %v4697 = vpack.c.b16 %v4393, %v4385
          %v4698 = vpack.c.b16 %v4394, %v4386
          %v4699 = vpack.c.b16 %v4395, %v4387
          %v4700 = vpack.c.b16 %v4396, %v4388
          %v4701 = vpack.c.b16 %v4397, %v4389
          %v4702 = vpack.c.b16 %v4398, %v4390
          %v4703 = vpack.c.b16 %v4399, %v4391
          %v4704 = vpack.c.b16 %v4408, %v4400
          %v4705 = vpack.c.b16 %v4409, %v4401
          %v4706 = vpack.c.b16 %v4410, %v4402
          %v4707 = vpack.c.b16 %v4411, %v4403
          %v4708 = vpack.c.b16 %v4412, %v4404
          %v4709 = vpack.c.b16 %v4413, %v4405
          %v4710 = vpack.c.b16 %v4414, %v4406
          %v4711 = vpack.c.b16 %v4415, %v4407
          %v4712 = vpack.c.b16 %v4424, %v4416
          %v4713 = vpack.c.b16 %v4425, %v4417
          %v4714 = vpack.c.b16 %v4426, %v4418
          %v4715 = vpack.c.b16 %v4427, %v4419
          %v4716 = vpack.c.b16 %v4428, %v4420
          %v4717 = vpack.c.b16 %v4429, %v4421
          %v4718 = vpack.c.b16 %v4430, %v4422
          %v4719 = vpack.c.b16 %v4431, %v4423
          %v5008 = vsel %vm3072, %v1015, 0
          %5010 = vmatprep.subr.bf16.mxu0 %v4489
          %5011 = vmatpush1.bf16.msra.mxu0 %v4488
          %5012 = vmatprep.subr.bf16.mxu0 %v4481
          %5013 = vmatpush1.bf16.msra.mxu0 %v4480
          %5014 = vmatprep.subr.bf16.mxu0 %v4473
          %5015 = vmatpush1.bf16.msra.mxu0 %v4472
          %5016 = vmatprep.subr.bf16.mxu0 %v4465
          %5017 = vmatpush1.bf16.msra.mxu0 %v4464
          %5018 = vmatprep.subr.bf16.mxu0 %v4457
          %5019 = vmatpush1.bf16.msra.mxu0 %v4456
          %5020 = vmatprep.subr.bf16.mxu0 %v4449
          %5021 = vmatpush1.bf16.msra.mxu0 %v4448
          %5022 = vmatprep.subr.bf16.mxu0 %v4441
          %5023 = vmatpush1.bf16.msra.mxu0 %v4440
          %5024 = vmatprep.subr.bf16.mxu0 %v4433
          %5025 = vmatpush1.bf16.msra.mxu0 %v4432
          %5026 = vmatprep.subr.bf16.mxu0 %v4553
          %5027 = vmatpush2.bf16.msra.mxu0 %v4552
          %5028 = vmatprep.subr.bf16.mxu0 %v4545
          %5029 = vmatpush2.bf16.msra.mxu0 %v4544
          %5030 = vmatprep.subr.bf16.mxu0 %v4537
          %5031 = vmatpush2.bf16.msra.mxu0 %v4536
          %5032 = vmatprep.subr.bf16.mxu0 %v4529
          %5033 = vmatpush2.bf16.msra.mxu0 %v4528
          %5034 = vmatprep.subr.bf16.mxu0 %v4521
          %5035 = vmatpush2.bf16.msra.mxu0 %v4520
          %5036 = vmatprep.subr.bf16.mxu0 %v4513
          %5037 = vmatpush2.bf16.msra.mxu0 %v4512
          %5038 = vmatprep.subr.bf16.mxu0 %v4505
          %5039 = vmatpush2.bf16.msra.mxu0 %v4504
          %5040 = vmatprep.subr.bf16.mxu0 %v4497
          %5041 = vmatpush2.bf16.msra.mxu0 %v4496
          %5042 = vmatprep.mubr.bf16.mxu0 %v1012
          %5043 = vmatmul.mubr.bf16.gmra.mxu0 %v1011
          %v5044 = vpop.f32.mrf.mxu0
          %v5045 = vadd.f32 %v3193, %v5044
          %v5046 = vpop.f32.mrf.mxu0
          %v5047 = vadd.f32 %v3195, %v5046
          %v5048 = vpop.f32.mrf.mxu0
          %v5049 = vpop.f32.mrf.mxu0
          %5050 = vdwg.mxu0
          %5051 = vmatprep.subr.bf16.mxu0 %v4617
          %5052 = vmatpush1.bf16.msra.mxu0 %v4616
          %5053 = vmatprep.subr.bf16.mxu0 %v4609
          %5054 = vmatpush1.bf16.msra.mxu0 %v4608
          %5055 = vmatprep.subr.bf16.mxu0 %v4601
          %5056 = vmatpush1.bf16.msra.mxu0 %v4600
          %5057 = vmatprep.subr.bf16.mxu0 %v4593
          %5058 = vmatpush1.bf16.msra.mxu0 %v4592
          %5059 = vmatprep.subr.bf16.mxu0 %v4585
          %5060 = vmatpush1.bf16.msra.mxu0 %v4584
          %5061 = vmatprep.subr.bf16.mxu0 %v4577
          %5062 = vmatpush1.bf16.msra.mxu0 %v4576
          %5063 = vmatprep.subr.bf16.mxu0 %v4569
          %5064 = vmatpush1.bf16.msra.mxu0 %v4568
          %5065 = vmatprep.subr.bf16.mxu0 %v4561
          %5066 = vmatpush1.bf16.msra.mxu0 %v4560
          %5067 = vmatprep.subr.bf16.mxu0 %v4681
          %5068 = vmatpush2.bf16.msra.mxu0 %v4680
          %5069 = vmatprep.subr.bf16.mxu0 %v4673
          %5070 = vmatpush2.bf16.msra.mxu0 %v4672
          %5071 = vmatprep.subr.bf16.mxu0 %v4665
          %5072 = vmatpush2.bf16.msra.mxu0 %v4664
          %5073 = vmatprep.subr.bf16.mxu0 %v4657
          %5074 = vmatpush2.bf16.msra.mxu0 %v4656
          %5075 = vmatprep.subr.bf16.mxu0 %v4649
          %5076 = vmatpush2.bf16.msra.mxu0 %v4648
          %5077 = vmatprep.subr.bf16.mxu0 %v4641
          %5078 = vmatpush2.bf16.msra.mxu0 %v4640
          %5079 = vmatprep.subr.bf16.mxu0 %v4633
          %5080 = vmatpush2.bf16.msra.mxu0 %v4632
          %5081 = vmatprep.subr.bf16.mxu0 %v4625
          %5082 = vmatpush2.bf16.msra.mxu0 %v4624
          %5083 = vmatprep.mubr.bf16.mxu0 %v1014
          %5084 = vmatmul.mubr.bf16.gmra.mxu0 %v1013
          %v5085 = vpop.f32.mrf.mxu0
          %v5086 = vadd.f32 %v5045, %v5085
          %v5087 = vpop.f32.mrf.mxu0
          %v5088 = vadd.f32 %v5047, %v5087
          %v5089 = vpop.f32.mrf.mxu0
          %v5090 = vpop.f32.mrf.mxu0
          %5091 = vdwg.mxu0
          %5092 = vmatprep.subr.bf16.mxu0 0
          %5093 = vmatpush1.bf16.msra.mxu0 0
          %5094 = vmatprep.subr.bf16.mxu0 0
          %5095 = vmatpush1.bf16.msra.mxu0 0
          %5096 = vmatprep.subr.bf16.mxu0 0
          %5097 = vmatpush1.bf16.msra.mxu0 0
          %5098 = vmatprep.subr.bf16.mxu0 0
          %5099 = vmatpush1.bf16.msra.mxu0 0
          %5100 = vmatprep.subr.bf16.mxu0 %v4713
          %5101 = vmatpush1.bf16.msra.mxu0 %v4712
          %5102 = vmatprep.subr.bf16.mxu0 %v4705
          %5103 = vmatpush1.bf16.msra.mxu0 %v4704
          %5104 = vmatprep.subr.bf16.mxu0 %v4697
          %5105 = vmatpush1.bf16.msra.mxu0 %v4696
          %5106 = vmatprep.subr.bf16.mxu0 %v4689
          %5107 = vmatpush1.bf16.msra.mxu0 %v4688
          %5108 = vmatprep.subr.bf16.mxu0 0
          %5109 = vmatpush2.bf16.msra.mxu0 0
          %5110 = vmatprep.subr.bf16.mxu0 0
          %5111 = vmatpush2.bf16.msra.mxu0 0
          %5112 = vmatprep.subr.bf16.mxu0 0
          %5113 = vmatpush2.bf16.msra.mxu0 0
          %5114 = vmatprep.subr.bf16.mxu0 0
          %5115 = vmatpush2.bf16.msra.mxu0 0
          %5116 = vmatprep.subr.bf16.mxu0 0
          %5117 = vmatpush2.bf16.msra.mxu0 0
          %5118 = vmatprep.subr.bf16.mxu0 0
          %5119 = vmatpush2.bf16.msra.mxu0 0
          %5120 = vmatprep.subr.bf16.mxu0 0
          %5121 = vmatpush2.bf16.msra.mxu0 0
          %5122 = vmatprep.subr.bf16.mxu0 0
          %5123 = vmatpush2.bf16.msra.mxu0 0
          %5124 = vmatprep.mubr.bf16.mxu0 0
          %5125 = vmatmul.mubr.bf16.gmra.mxu0 %v5008
          %v5126 = vpop.f32.mrf.mxu0
          %v5127 = vadd.f32 %v5086, %v5126
          %v5128 = vpop.f32.mrf.mxu0
          %v5129 = vadd.f32 %v5088, %v5128
          %v5130 = vpop.f32.mrf.mxu0
          %v5131 = vpop.f32.mrf.mxu0
          %5132 = vdwg.mxu0
          %5133 = vmatprep.subr.bf16.mxu0 %v4491
          %5134 = vmatpush1.bf16.msra.mxu0 %v4490
          %5135 = vmatprep.subr.bf16.mxu0 %v4483
          %5136 = vmatpush1.bf16.msra.mxu0 %v4482
          %5137 = vmatprep.subr.bf16.mxu0 %v4475
          %5138 = vmatpush1.bf16.msra.mxu0 %v4474
          %5139 = vmatprep.subr.bf16.mxu0 %v4467
          %5140 = vmatpush1.bf16.msra.mxu0 %v4466
          %5141 = vmatprep.subr.bf16.mxu0 %v4459
          %5142 = vmatpush1.bf16.msra.mxu0 %v4458
          %5143 = vmatprep.subr.bf16.mxu0 %v4451
          %5144 = vmatpush1.bf16.msra.mxu0 %v4450
          %5145 = vmatprep.subr.bf16.mxu0 %v4443
          %5146 = vmatpush1.bf16.msra.mxu0 %v4442
          %5147 = vmatprep.subr.bf16.mxu0 %v4435
          %5148 = vmatpush1.bf16.msra.mxu0 %v4434
          %5149 = vmatprep.subr.bf16.mxu0 %v4555
          %5150 = vmatpush2.bf16.msra.mxu0 %v4554
          %5151 = vmatprep.subr.bf16.mxu0 %v4547
          %5152 = vmatpush2.bf16.msra.mxu0 %v4546
          %5153 = vmatprep.subr.bf16.mxu0 %v4539
          %5154 = vmatpush2.bf16.msra.mxu0 %v4538
          %5155 = vmatprep.subr.bf16.mxu0 %v4531
          %5156 = vmatpush2.bf16.msra.mxu0 %v4530
          %5157 = vmatprep.subr.bf16.mxu0 %v4523
          %5158 = vmatpush2.bf16.msra.mxu0 %v4522
          %5159 = vmatprep.subr.bf16.mxu0 %v4515
          %5160 = vmatpush2.bf16.msra.mxu0 %v4514
          %5161 = vmatprep.subr.bf16.mxu0 %v4507
          %5162 = vmatpush2.bf16.msra.mxu0 %v4506
          %5163 = vmatprep.subr.bf16.mxu0 %v4499
          %5164 = vmatpush2.bf16.msra.mxu0 %v4498
          %5165 = vmatprep.mubr.bf16.mxu0 %v1012
          %5166 = vmatmul.mubr.bf16.gmra.mxu0 %v1011
          %v5167 = vpop.f32.mrf.mxu0
          %v5168 = vadd.f32 %v3316, %v5167
          %v5169 = vpop.f32.mrf.mxu0
          %v5170 = vadd.f32 %v3318, %v5169
          %v5171 = vpop.f32.mrf.mxu0
          %v5172 = vpop.f32.mrf.mxu0
          %5173 = vdwg.mxu0
          %5174 = vmatprep.subr.bf16.mxu0 %v4619
          %5175 = vmatpush1.bf16.msra.mxu0 %v4618
          %5176 = vmatprep.subr.bf16.mxu0 %v4611
          %5177 = vmatpush1.bf16.msra.mxu0 %v4610
          %5178 = vmatprep.subr.bf16.mxu0 %v4603
          %5179 = vmatpush1.bf16.msra.mxu0 %v4602
          %5180 = vmatprep.subr.bf16.mxu0 %v4595
          %5181 = vmatpush1.bf16.msra.mxu0 %v4594
          %5182 = vmatprep.subr.bf16.mxu0 %v4587
          %5183 = vmatpush1.bf16.msra.mxu0 %v4586
          %5184 = vmatprep.subr.bf16.mxu0 %v4579
          %5185 = vmatpush1.bf16.msra.mxu0 %v4578
          %5186 = vmatprep.subr.bf16.mxu0 %v4571
          %5187 = vmatpush1.bf16.msra.mxu0 %v4570
          %5188 = vmatprep.subr.bf16.mxu0 %v4563
          %5189 = vmatpush1.bf16.msra.mxu0 %v4562
          %5190 = vmatprep.subr.bf16.mxu0 %v4683
          %5191 = vmatpush2.bf16.msra.mxu0 %v4682
          %5192 = vmatprep.subr.bf16.mxu0 %v4675
          %5193 = vmatpush2.bf16.msra.mxu0 %v4674
          %5194 = vmatprep.subr.bf16.mxu0 %v4667
          %5195 = vmatpush2.bf16.msra.mxu0 %v4666
          %5196 = vmatprep.subr.bf16.mxu0 %v4659
          %5197 = vmatpush2.bf16.msra.mxu0 %v4658
          %5198 = vmatprep.subr.bf16.mxu0 %v4651
          %5199 = vmatpush2.bf16.msra.mxu0 %v4650
          %5200 = vmatprep.subr.bf16.mxu0 %v4643
          %5201 = vmatpush2.bf16.msra.mxu0 %v4642
          %5202 = vmatprep.subr.bf16.mxu0 %v4635
          %5203 = vmatpush2.bf16.msra.mxu0 %v4634
          %5204 = vmatprep.subr.bf16.mxu0 %v4627
          %5205 = vmatpush2.bf16.msra.mxu0 %v4626
          %5206 = vmatprep.mubr.bf16.mxu0 %v1014
          %5207 = vmatmul.mubr.bf16.gmra.mxu0 %v1013
          %v5208 = vpop.f32.mrf.mxu0
          %v5209 = vadd.f32 %v5168, %v5208
          %v5210 = vpop.f32.mrf.mxu0
          %v5211 = vadd.f32 %v5170, %v5210
          %v5212 = vpop.f32.mrf.mxu0
          %v5213 = vpop.f32.mrf.mxu0
          %5214 = vdwg.mxu0
          %5215 = vmatprep.subr.bf16.mxu0 0
          %5216 = vmatpush1.bf16.msra.mxu0 0
          %5217 = vmatprep.subr.bf16.mxu0 0
          %5218 = vmatpush1.bf16.msra.mxu0 0
          %5219 = vmatprep.subr.bf16.mxu0 0
          %5220 = vmatpush1.bf16.msra.mxu0 0
          %5221 = vmatprep.subr.bf16.mxu0 0
          %5222 = vmatpush1.bf16.msra.mxu0 0
          %5223 = vmatprep.subr.bf16.mxu0 %v4715
          %5224 = vmatpush1.bf16.msra.mxu0 %v4714
          %5225 = vmatprep.subr.bf16.mxu0 %v4707
          %5226 = vmatpush1.bf16.msra.mxu0 %v4706
          %5227 = vmatprep.subr.bf16.mxu0 %v4699
          %5228 = vmatpush1.bf16.msra.mxu0 %v4698
          %5229 = vmatprep.subr.bf16.mxu0 %v4691
          %5230 = vmatpush1.bf16.msra.mxu0 %v4690
          %5231 = vmatprep.subr.bf16.mxu0 0
          %5232 = vmatpush2.bf16.msra.mxu0 0
          %5233 = vmatprep.subr.bf16.mxu0 0
          %5234 = vmatpush2.bf16.msra.mxu0 0
          %5235 = vmatprep.subr.bf16.mxu0 0
          %5236 = vmatpush2.bf16.msra.mxu0 0
          %5237 = vmatprep.subr.bf16.mxu0 0
          %5238 = vmatpush2.bf16.msra.mxu0 0
          %5239 = vmatprep.subr.bf16.mxu0 0
          %5240 = vmatpush2.bf16.msra.mxu0 0
          %5241 = vmatprep.subr.bf16.mxu0 0
          %5242 = vmatpush2.bf16.msra.mxu0 0
          %5243 = vmatprep.subr.bf16.mxu0 0
          %5244 = vmatpush2.bf16.msra.mxu0 0
          %5245 = vmatprep.subr.bf16.mxu0 0
          %5246 = vmatpush2.bf16.msra.mxu0 0
          %5247 = vmatprep.mubr.bf16.mxu0 0
          %5248 = vmatmul.mubr.bf16.gmra.mxu0 %v5008
          %v5249 = vpop.f32.mrf.mxu0
          %v5250 = vadd.f32 %v5209, %v5249
          %v5251 = vpop.f32.mrf.mxu0
          %v5252 = vadd.f32 %v5211, %v5251
          %v5253 = vpop.f32.mrf.mxu0
          %v5254 = vpop.f32.mrf.mxu0
          %5255 = vdwg.mxu0
          %5256 = vmatprep.subr.bf16.mxu0 %v4493
          %5257 = vmatpush1.bf16.msra.mxu0 %v4492
          %5258 = vmatprep.subr.bf16.mxu0 %v4485
          %5259 = vmatpush1.bf16.msra.mxu0 %v4484
          %5260 = vmatprep.subr.bf16.mxu0 %v4477
          %5261 = vmatpush1.bf16.msra.mxu0 %v4476
          %5262 = vmatprep.subr.bf16.mxu0 %v4469
          %5263 = vmatpush1.bf16.msra.mxu0 %v4468
          %5264 = vmatprep.subr.bf16.mxu0 %v4461
          %5265 = vmatpush1.bf16.msra.mxu0 %v4460
          %5266 = vmatprep.subr.bf16.mxu0 %v4453
          %5267 = vmatpush1.bf16.msra.mxu0 %v4452
          %5268 = vmatprep.subr.bf16.mxu0 %v4445
          %5269 = vmatpush1.bf16.msra.mxu0 %v4444
          %5270 = vmatprep.subr.bf16.mxu0 %v4437
          %5271 = vmatpush1.bf16.msra.mxu0 %v4436
          %5272 = vmatprep.subr.bf16.mxu0 %v4557
          %5273 = vmatpush2.bf16.msra.mxu0 %v4556
          %5274 = vmatprep.subr.bf16.mxu0 %v4549
          %5275 = vmatpush2.bf16.msra.mxu0 %v4548
          %5276 = vmatprep.subr.bf16.mxu0 %v4541
          %5277 = vmatpush2.bf16.msra.mxu0 %v4540
          %5278 = vmatprep.subr.bf16.mxu0 %v4533
          %5279 = vmatpush2.bf16.msra.mxu0 %v4532
          %5280 = vmatprep.subr.bf16.mxu0 %v4525
          %5281 = vmatpush2.bf16.msra.mxu0 %v4524
          %5282 = vmatprep.subr.bf16.mxu0 %v4517
          %5283 = vmatpush2.bf16.msra.mxu0 %v4516
          %5284 = vmatprep.subr.bf16.mxu0 %v4509
          %5285 = vmatpush2.bf16.msra.mxu0 %v4508
          %5286 = vmatprep.subr.bf16.mxu0 %v4501
          %5287 = vmatpush2.bf16.msra.mxu0 %v4500
          %5288 = vmatprep.mubr.bf16.mxu0 %v1012
          %5289 = vmatmul.mubr.bf16.gmra.mxu0 %v1011
          %v5290 = vpop.f32.mrf.mxu0
          %v5291 = vadd.f32 %v3439, %v5290
          %v5292 = vpop.f32.mrf.mxu0
          %v5293 = vadd.f32 %v3441, %v5292
          %v5294 = vpop.f32.mrf.mxu0
          %v5295 = vpop.f32.mrf.mxu0
          %5296 = vdwg.mxu0
          %5297 = vmatprep.subr.bf16.mxu0 %v4621
          %5298 = vmatpush1.bf16.msra.mxu0 %v4620
          %5299 = vmatprep.subr.bf16.mxu0 %v4613
          %5300 = vmatpush1.bf16.msra.mxu0 %v4612
          %5301 = vmatprep.subr.bf16.mxu0 %v4605
          %5302 = vmatpush1.bf16.msra.mxu0 %v4604
          %5303 = vmatprep.subr.bf16.mxu0 %v4597
          %5304 = vmatpush1.bf16.msra.mxu0 %v4596
          %5305 = vmatprep.subr.bf16.mxu0 %v4589
          %5306 = vmatpush1.bf16.msra.mxu0 %v4588
          %5307 = vmatprep.subr.bf16.mxu0 %v4581
          %5308 = vmatpush1.bf16.msra.mxu0 %v4580
          %5309 = vmatprep.subr.bf16.mxu0 %v4573
          %5310 = vmatpush1.bf16.msra.mxu0 %v4572
          %5311 = vmatprep.subr.bf16.mxu0 %v4565
          %5312 = vmatpush1.bf16.msra.mxu0 %v4564
          %5313 = vmatprep.subr.bf16.mxu0 %v4685
          %5314 = vmatpush2.bf16.msra.mxu0 %v4684
          %5315 = vmatprep.subr.bf16.mxu0 %v4677
          %5316 = vmatpush2.bf16.msra.mxu0 %v4676
          %5317 = vmatprep.subr.bf16.mxu0 %v4669
          %5318 = vmatpush2.bf16.msra.mxu0 %v4668
          %5319 = vmatprep.subr.bf16.mxu0 %v4661
          %5320 = vmatpush2.bf16.msra.mxu0 %v4660
          %5321 = vmatprep.subr.bf16.mxu0 %v4653
          %5322 = vmatpush2.bf16.msra.mxu0 %v4652
          %5323 = vmatprep.subr.bf16.mxu0 %v4645
          %5324 = vmatpush2.bf16.msra.mxu0 %v4644
          %5325 = vmatprep.subr.bf16.mxu0 %v4637
          %5326 = vmatpush2.bf16.msra.mxu0 %v4636
          %5327 = vmatprep.subr.bf16.mxu0 %v4629
          %5328 = vmatpush2.bf16.msra.mxu0 %v4628
          %5329 = vmatprep.mubr.bf16.mxu0 %v1014
          %5330 = vmatmul.mubr.bf16.gmra.mxu0 %v1013
          %v5331 = vpop.f32.mrf.mxu0
          %v5332 = vadd.f32 %v5291, %v5331
          %v5333 = vpop.f32.mrf.mxu0
          %v5334 = vadd.f32 %v5293, %v5333
          %v5335 = vpop.f32.mrf.mxu0
          %v5336 = vpop.f32.mrf.mxu0
          %5337 = vdwg.mxu0
          %5338 = vmatprep.subr.bf16.mxu0 0
          %5339 = vmatpush1.bf16.msra.mxu0 0
          %5340 = vmatprep.subr.bf16.mxu0 0
          %5341 = vmatpush1.bf16.msra.mxu0 0
          %5342 = vmatprep.subr.bf16.mxu0 0
          %5343 = vmatpush1.bf16.msra.mxu0 0
          %5344 = vmatprep.subr.bf16.mxu0 0
          %5345 = vmatpush1.bf16.msra.mxu0 0
          %5346 = vmatprep.subr.bf16.mxu0 %v4717
          %5347 = vmatpush1.bf16.msra.mxu0 %v4716
          %5348 = vmatprep.subr.bf16.mxu0 %v4709
          %5349 = vmatpush1.bf16.msra.mxu0 %v4708
          %5350 = vmatprep.subr.bf16.mxu0 %v4701
          %5351 = vmatpush1.bf16.msra.mxu0 %v4700
          %5352 = vmatprep.subr.bf16.mxu0 %v4693
          %5353 = vmatpush1.bf16.msra.mxu0 %v4692
          %5354 = vmatprep.subr.bf16.mxu0 0
          %5355 = vmatpush2.bf16.msra.mxu0 0
          %5356 = vmatprep.subr.bf16.mxu0 0
          %5357 = vmatpush2.bf16.msra.mxu0 0
          %5358 = vmatprep.subr.bf16.mxu0 0
          %5359 = vmatpush2.bf16.msra.mxu0 0
          %5360 = vmatprep.subr.bf16.mxu0 0
          %5361 = vmatpush2.bf16.msra.mxu0 0
          %5362 = vmatprep.subr.bf16.mxu0 0
          %5363 = vmatpush2.bf16.msra.mxu0 0
          %5364 = vmatprep.subr.bf16.mxu0 0
          %5365 = vmatpush2.bf16.msra.mxu0 0
          %5366 = vmatprep.subr.bf16.mxu0 0
          %5367 = vmatpush2.bf16.msra.mxu0 0
          %5368 = vmatprep.subr.bf16.mxu0 0
          %5369 = vmatpush2.bf16.msra.mxu0 0
          %5370 = vmatprep.mubr.bf16.mxu0 0
          %5371 = vmatmul.mubr.bf16.gmra.mxu0 %v5008
          %v5372 = vpop.f32.mrf.mxu0
          %v5373 = vadd.f32 %v5332, %v5372
          %v5374 = vpop.f32.mrf.mxu0
          %v5375 = vadd.f32 %v5334, %v5374
          %v5376 = vpop.f32.mrf.mxu0
          %v5377 = vpop.f32.mrf.mxu0
          %5378 = vdwg.mxu0
          %5379 = vmatprep.subr.bf16.mxu0 %v4495
          %5380 = vmatpush1.bf16.msra.mxu0 %v4494
          %5381 = vmatprep.subr.bf16.mxu0 %v4487
          %5382 = vmatpush1.bf16.msra.mxu0 %v4486
          %5383 = vmatprep.subr.bf16.mxu0 %v4479
          %5384 = vmatpush1.bf16.msra.mxu0 %v4478
          %5385 = vmatprep.subr.bf16.mxu0 %v4471
          %5386 = vmatpush1.bf16.msra.mxu0 %v4470
          %5387 = vmatprep.subr.bf16.mxu0 %v4463
          %5388 = vmatpush1.bf16.msra.mxu0 %v4462
          %5389 = vmatprep.subr.bf16.mxu0 %v4455
          %5390 = vmatpush1.bf16.msra.mxu0 %v4454
          %5391 = vmatprep.subr.bf16.mxu0 %v4447
          %5392 = vmatpush1.bf16.msra.mxu0 %v4446
          %5393 = vmatprep.subr.bf16.mxu0 %v4439
          %5394 = vmatpush1.bf16.msra.mxu0 %v4438
          %5395 = vmatprep.subr.bf16.mxu0 %v4559
          %5396 = vmatpush2.bf16.msra.mxu0 %v4558
          %5397 = vmatprep.subr.bf16.mxu0 %v4551
          %5398 = vmatpush2.bf16.msra.mxu0 %v4550
          %5399 = vmatprep.subr.bf16.mxu0 %v4543
          %5400 = vmatpush2.bf16.msra.mxu0 %v4542
          %5401 = vmatprep.subr.bf16.mxu0 %v4535
          %5402 = vmatpush2.bf16.msra.mxu0 %v4534
          %5403 = vmatprep.subr.bf16.mxu0 %v4527
          %5404 = vmatpush2.bf16.msra.mxu0 %v4526
          %5405 = vmatprep.subr.bf16.mxu0 %v4519
          %5406 = vmatpush2.bf16.msra.mxu0 %v4518
          %5407 = vmatprep.subr.bf16.mxu0 %v4511
          %5408 = vmatpush2.bf16.msra.mxu0 %v4510
          %5409 = vmatprep.subr.bf16.mxu0 %v4503
          %5410 = vmatpush2.bf16.msra.mxu0 %v4502
          %5411 = vmatprep.mubr.bf16.mxu0 %v1012
          %5412 = vmatmul.mubr.bf16.gmra.mxu0 %v1011
          %v5413 = vpop.f32.mrf.mxu0
          %v5414 = vadd.f32 %v3562, %v5413
          %v5415 = vpop.f32.mrf.mxu0
          %v5416 = vadd.f32 %v3564, %v5415
          %v5417 = vpop.f32.mrf.mxu0
          %v5418 = vpop.f32.mrf.mxu0
          %5419 = vdwg.mxu0
          %5420 = vmatprep.subr.bf16.mxu0 %v4623
          %5421 = vmatpush1.bf16.msra.mxu0 %v4622
          %5422 = vmatprep.subr.bf16.mxu0 %v4615
          %5423 = vmatpush1.bf16.msra.mxu0 %v4614
          %5424 = vmatprep.subr.bf16.mxu0 %v4607
          %5425 = vmatpush1.bf16.msra.mxu0 %v4606
          %5426 = vmatprep.subr.bf16.mxu0 %v4599
          %5427 = vmatpush1.bf16.msra.mxu0 %v4598
          %5428 = vmatprep.subr.bf16.mxu0 %v4591
          %5429 = vmatpush1.bf16.msra.mxu0 %v4590
          %5430 = vmatprep.subr.bf16.mxu0 %v4583
          %5431 = vmatpush1.bf16.msra.mxu0 %v4582
          %5432 = vmatprep.subr.bf16.mxu0 %v4575
          %5433 = vmatpush1.bf16.msra.mxu0 %v4574
          %5434 = vmatprep.subr.bf16.mxu0 %v4567
          %5435 = vmatpush1.bf16.msra.mxu0 %v4566
          %5436 = vmatprep.subr.bf16.mxu0 %v4687
          %5437 = vmatpush2.bf16.msra.mxu0 %v4686
          %5438 = vmatprep.subr.bf16.mxu0 %v4679
          %5439 = vmatpush2.bf16.msra.mxu0 %v4678
          %5440 = vmatprep.subr.bf16.mxu0 %v4671
          %5441 = vmatpush2.bf16.msra.mxu0 %v4670
          %5442 = vmatprep.subr.bf16.mxu0 %v4663
          %5443 = vmatpush2.bf16.msra.mxu0 %v4662
          %5444 = vmatprep.subr.bf16.mxu0 %v4655
          %5445 = vmatpush2.bf16.msra.mxu0 %v4654
          %5446 = vmatprep.subr.bf16.mxu0 %v4647
          %5447 = vmatpush2.bf16.msra.mxu0 %v4646
          %5448 = vmatprep.subr.bf16.mxu0 %v4639
          %5449 = vmatpush2.bf16.msra.mxu0 %v4638
          %5450 = vmatprep.subr.bf16.mxu0 %v4631
          %5451 = vmatpush2.bf16.msra.mxu0 %v4630
          %5452 = vmatprep.mubr.bf16.mxu0 %v1014
          %5453 = vmatmul.mubr.bf16.gmra.mxu0 %v1013
          %v5454 = vpop.f32.mrf.mxu0
          %v5455 = vadd.f32 %v5414, %v5454
          %v5456 = vpop.f32.mrf.mxu0
          %v5457 = vadd.f32 %v5416, %v5456
          %v5458 = vpop.f32.mrf.mxu0
          %v5459 = vpop.f32.mrf.mxu0
          %5460 = vdwg.mxu0
          %5461 = vmatprep.subr.bf16.mxu0 0
          %5462 = vmatpush1.bf16.msra.mxu0 0
          %5463 = vmatprep.subr.bf16.mxu0 0
          %5464 = vmatpush1.bf16.msra.mxu0 0
          %5465 = vmatprep.subr.bf16.mxu0 0
          %5466 = vmatpush1.bf16.msra.mxu0 0
          %5467 = vmatprep.subr.bf16.mxu0 0
          %5468 = vmatpush1.bf16.msra.mxu0 0
          %5469 = vmatprep.subr.bf16.mxu0 %v4719
          %5470 = vmatpush1.bf16.msra.mxu0 %v4718
          %5471 = vmatprep.subr.bf16.mxu0 %v4711
          %5472 = vmatpush1.bf16.msra.mxu0 %v4710
          %5473 = vmatprep.subr.bf16.mxu0 %v4703
          %5474 = vmatpush1.bf16.msra.mxu0 %v4702
          %5475 = vmatprep.subr.bf16.mxu0 %v4695
          %5476 = vmatpush1.bf16.msra.mxu0 %v4694
          %5477 = vmatprep.subr.bf16.mxu0 0
          %5478 = vmatpush2.bf16.msra.mxu0 0
          %5479 = vmatprep.subr.bf16.mxu0 0
          %5480 = vmatpush2.bf16.msra.mxu0 0
          %5481 = vmatprep.subr.bf16.mxu0 0
          %5482 = vmatpush2.bf16.msra.mxu0 0
          %5483 = vmatprep.subr.bf16.mxu0 0
          %5484 = vmatpush2.bf16.msra.mxu0 0
          %5485 = vmatprep.subr.bf16.mxu0 0
          %5486 = vmatpush2.bf16.msra.mxu0 0
          %5487 = vmatprep.subr.bf16.mxu0 0
          %5488 = vmatpush2.bf16.msra.mxu0 0
          %5489 = vmatprep.subr.bf16.mxu0 0
          %5490 = vmatpush2.bf16.msra.mxu0 0
          %5491 = vmatprep.subr.bf16.mxu0 0
          %5492 = vmatpush2.bf16.msra.mxu0 0
          %5493 = vmatprep.mubr.bf16.mxu0 0
          %5494 = vmatmul.mubr.bf16.gmra.mxu0 %v5008
          %v5495 = vpop.f32.mrf.mxu0
          %v5496 = vadd.f32 %v5455, %v5495
          %v5497 = vpop.f32.mrf.mxu0
          %v5498 = vadd.f32 %v5457, %v5497
          %v5499 = vpop.f32.mrf.mxu0
          %v5500 = vpop.f32.mrf.mxu0
          %5501 = vdwg.mxu0
          %s5502 = scalar_lea.vmem [#allocation9], 4608
          %v5503 = vld [vmem:[%s5502] sm:$0xff]
          %v5504 = vld [vmem:[%s5502 + $0x8] sm:$0xff]
          %v5505 = vld [vmem:[%s5502 + $0x10] sm:$0xff]
          %v5506 = vld [vmem:[%s5502 + $0x18] sm:$0xff]
          %v5507 = vld [vmem:[%s5502 + $0x20] sm:$0xff]
          %v5508 = vld [vmem:[%s5502 + $0x28] sm:$0xff]
          %v5509 = vld [vmem:[%s5502 + $0x30] sm:$0xff]
          %v5510 = vld [vmem:[%s5502 + $0x38] sm:$0xff]
          %v5511 = vld [vmem:[%s5502 + $0x40] sm:$0xff]
          %v5512 = vld [vmem:[%s5502 + $0x48] sm:$0xff]
          %v5513 = vld [vmem:[%s5502 + $0x50] sm:$0xff]
          %v5514 = vld [vmem:[%s5502 + $0x58] sm:$0xff]
          %v5515 = vld [vmem:[%s5502 + $0x60] sm:$0xff]
          %v5516 = vld [vmem:[%s5502 + $0x68] sm:$0xff]
          %v5517 = vld [vmem:[%s5502 + $0x70] sm:$0xff]
          %v5518 = vld [vmem:[%s5502 + $0x78] sm:$0xff]
          %v5519 = vld [vmem:[%s5502 + $0x80] sm:$0xff]
          %v5520 = vld [vmem:[%s5502 + $0x88] sm:$0xff]
          %v5521 = vld [vmem:[%s5502 + $0x90] sm:$0xff]
          %v5522 = vld [vmem:[%s5502 + $0x98] sm:$0xff]
          %v5523 = vld [vmem:[%s5502 + $0xa0] sm:$0xff]
          %v5524 = vld [vmem:[%s5502 + $0xa8] sm:$0xff]
          %v5525 = vld [vmem:[%s5502 + $0xb0] sm:$0xff]
          %v5526 = vld [vmem:[%s5502 + $0xb8] sm:$0xff]
          %v5527 = vld [vmem:[%s5502 + $0xc0] sm:$0xff]
          %v5528 = vld [vmem:[%s5502 + $0xc8] sm:$0xff]
          %v5529 = vld [vmem:[%s5502 + $0xd0] sm:$0xff]
          %v5530 = vld [vmem:[%s5502 + $0xd8] sm:$0xff]
          %v5531 = vld [vmem:[%s5502 + $0xe0] sm:$0xff]
          %v5532 = vld [vmem:[%s5502 + $0xe8] sm:$0xff]
          %v5533 = vld [vmem:[%s5502 + $0xf0] sm:$0xff]
          %v5534 = vld [vmem:[%s5502 + $0xf8] sm:$0xff]
          %v5535 = vld [vmem:[%s5502 + $0x100] sm:$0xff]
          %v5536 = vld [vmem:[%s5502 + $0x108] sm:$0xff]
          %v5537 = vld [vmem:[%s5502 + $0x110] sm:$0xff]
          %v5538 = vld [vmem:[%s5502 + $0x118] sm:$0xff]
          %v5539 = vld [vmem:[%s5502 + $0x120] sm:$0xff]
          %v5540 = vld [vmem:[%s5502 + $0x128] sm:$0xff]
          %v5541 = vld [vmem:[%s5502 + $0x130] sm:$0xff]
          %v5542 = vld [vmem:[%s5502 + $0x138] sm:$0xff]
          %v5543 = vld [vmem:[%s5502 + $0x140] sm:$0xff]
          %v5544 = vld [vmem:[%s5502 + $0x148] sm:$0xff]
          %v5545 = vld [vmem:[%s5502 + $0x150] sm:$0xff]
          %v5546 = vld [vmem:[%s5502 + $0x158] sm:$0xff]
          %v5547 = vld [vmem:[%s5502 + $0x160] sm:$0xff]
          %v5548 = vld [vmem:[%s5502 + $0x168] sm:$0xff]
          %v5549 = vld [vmem:[%s5502 + $0x170] sm:$0xff]
          %v5550 = vld [vmem:[%s5502 + $0x178] sm:$0xff]
          %v5551 = vld [vmem:[%s5502 + $0x180] sm:$0xff]
          %v5552 = vld [vmem:[%s5502 + $0x188] sm:$0xff]
          %v5553 = vld [vmem:[%s5502 + $0x190] sm:$0xff]
          %v5554 = vld [vmem:[%s5502 + $0x198] sm:$0xff]
          %v5555 = vld [vmem:[%s5502 + $0x1a0] sm:$0xff]
          %v5556 = vld [vmem:[%s5502 + $0x1a8] sm:$0xff]
          %v5557 = vld [vmem:[%s5502 + $0x1b0] sm:$0xff]
          %v5558 = vld [vmem:[%s5502 + $0x1b8] sm:$0xff]
          %v5559 = vld [vmem:[%s5502 + $0x1c0] sm:$0xff]
          %v5560 = vld [vmem:[%s5502 + $0x1c8] sm:$0xff]
          %v5561 = vld [vmem:[%s5502 + $0x1d0] sm:$0xff]
          %v5562 = vld [vmem:[%s5502 + $0x1d8] sm:$0xff]
          %v5563 = vld [vmem:[%s5502 + $0x1e0] sm:$0xff]
          %v5564 = vld [vmem:[%s5502 + $0x1e8] sm:$0xff]
          %v5565 = vld [vmem:[%s5502 + $0x1f0] sm:$0xff]
          %v5566 = vld [vmem:[%s5502 + $0x1f8] sm:$0xff]
          %v5567 = vld [vmem:[%s5502 + $0x200] sm:$0xff]
          %v5568 = vld [vmem:[%s5502 + $0x208] sm:$0xff]
          %v5569 = vld [vmem:[%s5502 + $0x210] sm:$0xff]
          %v5570 = vld [vmem:[%s5502 + $0x218] sm:$0xff]
          %v5571 = vld [vmem:[%s5502 + $0x220] sm:$0xff]
          %v5572 = vld [vmem:[%s5502 + $0x228] sm:$0xff]
          %v5573 = vld [vmem:[%s5502 + $0x230] sm:$0xff]
          %v5574 = vld [vmem:[%s5502 + $0x238] sm:$0xff]
          %v5575 = vld [vmem:[%s5502 + $0x240] sm:$0xff]
          %v5576 = vld [vmem:[%s5502 + $0x248] sm:$0xff]
          %v5577 = vld [vmem:[%s5502 + $0x250] sm:$0xff]
          %v5578 = vld [vmem:[%s5502 + $0x258] sm:$0xff]
          %v5579 = vld [vmem:[%s5502 + $0x260] sm:$0xff]
          %v5580 = vld [vmem:[%s5502 + $0x268] sm:$0xff]
          %v5581 = vld [vmem:[%s5502 + $0x270] sm:$0xff]
          %v5582 = vld [vmem:[%s5502 + $0x278] sm:$0xff]
          %v5583 = vld [vmem:[%s5502 + $0x280] sm:$0xff]
          %v5584 = vld [vmem:[%s5502 + $0x288] sm:$0xff]
          %v5585 = vld [vmem:[%s5502 + $0x290] sm:$0xff]
          %v5586 = vld [vmem:[%s5502 + $0x298] sm:$0xff]
          %v5587 = vld [vmem:[%s5502 + $0x2a0] sm:$0xff]
          %v5588 = vld [vmem:[%s5502 + $0x2a8] sm:$0xff]
          %v5589 = vld [vmem:[%s5502 + $0x2b0] sm:$0xff]
          %v5590 = vld [vmem:[%s5502 + $0x2b8] sm:$0xff]
          %v5591 = vld [vmem:[%s5502 + $0x2c0] sm:$0xff]
          %v5592 = vld [vmem:[%s5502 + $0x2c8] sm:$0xff]
          %v5593 = vld [vmem:[%s5502 + $0x2d0] sm:$0xff]
          %v5594 = vld [vmem:[%s5502 + $0x2d8] sm:$0xff]
          %v5595 = vld [vmem:[%s5502 + $0x2e0] sm:$0xff]
          %v5596 = vld [vmem:[%s5502 + $0x2e8] sm:$0xff]
          %v5597 = vld [vmem:[%s5502 + $0x2f0] sm:$0xff]
          %v5598 = vld [vmem:[%s5502 + $0x2f8] sm:$0xff]
          %v5599 = vld [vmem:[%s5502 + $0x300] sm:$0xff]
          %v5600 = vld [vmem:[%s5502 + $0x308] sm:$0xff]
          %v5601 = vld [vmem:[%s5502 + $0x310] sm:$0xff]
          %v5602 = vld [vmem:[%s5502 + $0x318] sm:$0xff]
          %v5603 = vld [vmem:[%s5502 + $0x320] sm:$0xff]
          %v5604 = vld [vmem:[%s5502 + $0x328] sm:$0xff]
          %v5605 = vld [vmem:[%s5502 + $0x330] sm:$0xff]
          %v5606 = vld [vmem:[%s5502 + $0x338] sm:$0xff]
          %v5607 = vld [vmem:[%s5502 + $0x340] sm:$0xff]
          %v5608 = vld [vmem:[%s5502 + $0x348] sm:$0xff]
          %v5609 = vld [vmem:[%s5502 + $0x350] sm:$0xff]
          %v5610 = vld [vmem:[%s5502 + $0x358] sm:$0xff]
          %v5611 = vld [vmem:[%s5502 + $0x360] sm:$0xff]
          %v5612 = vld [vmem:[%s5502 + $0x368] sm:$0xff]
          %v5613 = vld [vmem:[%s5502 + $0x370] sm:$0xff]
          %v5614 = vld [vmem:[%s5502 + $0x378] sm:$0xff]
          %v5615 = vld [vmem:[%s5502 + $0x380] sm:$0xff]
          %v5616 = vld [vmem:[%s5502 + $0x388] sm:$0xff]
          %v5617 = vld [vmem:[%s5502 + $0x390] sm:$0xff]
          %v5618 = vld [vmem:[%s5502 + $0x398] sm:$0xff]
          %v5619 = vld [vmem:[%s5502 + $0x3a0] sm:$0xff]
          %v5620 = vld [vmem:[%s5502 + $0x3a8] sm:$0xff]
          %v5621 = vld [vmem:[%s5502 + $0x3b0] sm:$0xff]
          %v5622 = vld [vmem:[%s5502 + $0x3b8] sm:$0xff]
          %v5623 = vld [vmem:[%s5502 + $0x3c0] sm:$0xff]
          %v5624 = vld [vmem:[%s5502 + $0x3c8] sm:$0xff]
          %v5625 = vld [vmem:[%s5502 + $0x3d0] sm:$0xff]
          %v5626 = vld [vmem:[%s5502 + $0x3d8] sm:$0xff]
          %v5627 = vld [vmem:[%s5502 + $0x3e0] sm:$0xff]
          %v5628 = vld [vmem:[%s5502 + $0x3e8] sm:$0xff]
          %v5629 = vld [vmem:[%s5502 + $0x3f0] sm:$0xff]
          %v5630 = vld [vmem:[%s5502 + $0x3f8] sm:$0xff]
          %v5631 = vld [vmem:[%s5502 + $0x400] sm:$0xff]
          %v5632 = vld [vmem:[%s5502 + $0x408] sm:$0xff]
          %v5633 = vld [vmem:[%s5502 + $0x410] sm:$0xff]
          %v5634 = vld [vmem:[%s5502 + $0x418] sm:$0xff]
          %v5635 = vld [vmem:[%s5502 + $0x420] sm:$0xff]
          %v5636 = vld [vmem:[%s5502 + $0x428] sm:$0xff]
          %v5637 = vld [vmem:[%s5502 + $0x430] sm:$0xff]
          %v5638 = vld [vmem:[%s5502 + $0x438] sm:$0xff]
          %v5639 = vld [vmem:[%s5502 + $0x440] sm:$0xff]
          %v5640 = vld [vmem:[%s5502 + $0x448] sm:$0xff]
          %v5641 = vld [vmem:[%s5502 + $0x450] sm:$0xff]
          %v5642 = vld [vmem:[%s5502 + $0x458] sm:$0xff]
          %v5643 = vld [vmem:[%s5502 + $0x460] sm:$0xff]
          %v5644 = vld [vmem:[%s5502 + $0x468] sm:$0xff]
          %v5645 = vld [vmem:[%s5502 + $0x470] sm:$0xff]
          %v5646 = vld [vmem:[%s5502 + $0x478] sm:$0xff]
          %v5647 = vld [vmem:[%s5502 + $0x480] sm:$0xff]
          %v5648 = vld [vmem:[%s5502 + $0x488] sm:$0xff]
          %v5649 = vld [vmem:[%s5502 + $0x490] sm:$0xff]
          %v5650 = vld [vmem:[%s5502 + $0x498] sm:$0xff]
          %v5651 = vld [vmem:[%s5502 + $0x4a0] sm:$0xff]
          %v5652 = vld [vmem:[%s5502 + $0x4a8] sm:$0xff]
          %v5653 = vld [vmem:[%s5502 + $0x4b0] sm:$0xff]
          %v5654 = vld [vmem:[%s5502 + $0x4b8] sm:$0xff]
          %v5655 = vld [vmem:[%s5502 + $0x4c0] sm:$0xff]
          %v5656 = vld [vmem:[%s5502 + $0x4c8] sm:$0xff]
          %v5657 = vld [vmem:[%s5502 + $0x4d0] sm:$0xff]
          %v5658 = vld [vmem:[%s5502 + $0x4d8] sm:$0xff]
          %v5659 = vld [vmem:[%s5502 + $0x4e0] sm:$0xff]
          %v5660 = vld [vmem:[%s5502 + $0x4e8] sm:$0xff]
          %v5661 = vld [vmem:[%s5502 + $0x4f0] sm:$0xff]
          %v5662 = vld [vmem:[%s5502 + $0x4f8] sm:$0xff]
          %v5663 = vld [vmem:[%s5502 + $0x500] sm:$0xff]
          %v5664 = vld [vmem:[%s5502 + $0x508] sm:$0xff]
          %v5665 = vld [vmem:[%s5502 + $0x510] sm:$0xff]
          %v5666 = vld [vmem:[%s5502 + $0x518] sm:$0xff]
          %v5667 = vld [vmem:[%s5502 + $0x520] sm:$0xff]
          %v5668 = vld [vmem:[%s5502 + $0x528] sm:$0xff]
          %v5669 = vld [vmem:[%s5502 + $0x530] sm:$0xff]
          %v5670 = vld [vmem:[%s5502 + $0x538] sm:$0xff]
          %v5671 = vld [vmem:[%s5502 + $0x540] sm:$0xff]
          %v5672 = vld [vmem:[%s5502 + $0x548] sm:$0xff]
          %v5673 = vld [vmem:[%s5502 + $0x550] sm:$0xff]
          %v5674 = vld [vmem:[%s5502 + $0x558] sm:$0xff]
          %v5675 = vld [vmem:[%s5502 + $0x560] sm:$0xff]
          %v5676 = vld [vmem:[%s5502 + $0x568] sm:$0xff]
          %v5677 = vld [vmem:[%s5502 + $0x570] sm:$0xff]
          %v5678 = vld [vmem:[%s5502 + $0x578] sm:$0xff]
          %v5679 = vld [vmem:[%s5502 + $0x580] sm:$0xff]
          %v5680 = vld [vmem:[%s5502 + $0x588] sm:$0xff]
          %v5681 = vld [vmem:[%s5502 + $0x590] sm:$0xff]
          %v5682 = vld [vmem:[%s5502 + $0x598] sm:$0xff]
          %v5683 = vld [vmem:[%s5502 + $0x5a0] sm:$0xff]
          %v5684 = vld [vmem:[%s5502 + $0x5a8] sm:$0xff]
          %v5685 = vld [vmem:[%s5502 + $0x5b0] sm:$0xff]
          %v5686 = vld [vmem:[%s5502 + $0x5b8] sm:$0xff]
          %v5687 = vld [vmem:[%s5502 + $0x5c0] sm:$0xff]
          %v5688 = vld [vmem:[%s5502 + $0x5c8] sm:$0xff]
          %v5689 = vld [vmem:[%s5502 + $0x5d0] sm:$0xff]
          %v5690 = vld [vmem:[%s5502 + $0x5d8] sm:$0xff]
          %v5691 = vld [vmem:[%s5502 + $0x5e0] sm:$0xff]
          %v5692 = vld [vmem:[%s5502 + $0x5e8] sm:$0xff]
          %v5693 = vld [vmem:[%s5502 + $0x5f0] sm:$0xff]
          %v5694 = vld [vmem:[%s5502 + $0x5f8] sm:$0xff]
          %v5695 = vld [vmem:[%s5502 + $0x600] sm:$0xff]
          %v5696 = vld [vmem:[%s5502 + $0x608] sm:$0xff]
          %v5697 = vld [vmem:[%s5502 + $0x610] sm:$0xff]
          %v5698 = vld [vmem:[%s5502 + $0x618] sm:$0xff]
          %v5699 = vld [vmem:[%s5502 + $0x620] sm:$0xff]
          %v5700 = vld [vmem:[%s5502 + $0x628] sm:$0xff]
          %v5701 = vld [vmem:[%s5502 + $0x630] sm:$0xff]
          %v5702 = vld [vmem:[%s5502 + $0x638] sm:$0xff]
          %v5703 = vld [vmem:[%s5502 + $0x640] sm:$0xff]
          %v5704 = vld [vmem:[%s5502 + $0x648] sm:$0xff]
          %v5705 = vld [vmem:[%s5502 + $0x650] sm:$0xff]
          %v5706 = vld [vmem:[%s5502 + $0x658] sm:$0xff]
          %v5707 = vld [vmem:[%s5502 + $0x660] sm:$0xff]
          %v5708 = vld [vmem:[%s5502 + $0x668] sm:$0xff]
          %v5709 = vld [vmem:[%s5502 + $0x670] sm:$0xff]
          %v5710 = vld [vmem:[%s5502 + $0x678] sm:$0xff]
          %v5711 = vld [vmem:[%s5502 + $0x680] sm:$0xff]
          %v5712 = vld [vmem:[%s5502 + $0x688] sm:$0xff]
          %v5713 = vld [vmem:[%s5502 + $0x690] sm:$0xff]
          %v5714 = vld [vmem:[%s5502 + $0x698] sm:$0xff]
          %v5715 = vld [vmem:[%s5502 + $0x6a0] sm:$0xff]
          %v5716 = vld [vmem:[%s5502 + $0x6a8] sm:$0xff]
          %v5717 = vld [vmem:[%s5502 + $0x6b0] sm:$0xff]
          %v5718 = vld [vmem:[%s5502 + $0x6b8] sm:$0xff]
          %v5719 = vld [vmem:[%s5502 + $0x6c0] sm:$0xff]
          %v5720 = vld [vmem:[%s5502 + $0x6c8] sm:$0xff]
          %v5721 = vld [vmem:[%s5502 + $0x6d0] sm:$0xff]
          %v5722 = vld [vmem:[%s5502 + $0x6d8] sm:$0xff]
          %v5723 = vld [vmem:[%s5502 + $0x6e0] sm:$0xff]
          %v5724 = vld [vmem:[%s5502 + $0x6e8] sm:$0xff]
          %v5725 = vld [vmem:[%s5502 + $0x6f0] sm:$0xff]
          %v5726 = vld [vmem:[%s5502 + $0x6f8] sm:$0xff]
          %v5727 = vld [vmem:[%s5502 + $0x700] sm:$0xff]
          %v5728 = vld [vmem:[%s5502 + $0x708] sm:$0xff]
          %v5729 = vld [vmem:[%s5502 + $0x710] sm:$0xff]
          %v5730 = vld [vmem:[%s5502 + $0x718] sm:$0xff]
          %v5731 = vld [vmem:[%s5502 + $0x720] sm:$0xff]
          %v5732 = vld [vmem:[%s5502 + $0x728] sm:$0xff]
          %v5733 = vld [vmem:[%s5502 + $0x730] sm:$0xff]
          %v5734 = vld [vmem:[%s5502 + $0x738] sm:$0xff]
          %v5735 = vld [vmem:[%s5502 + $0x740] sm:$0xff]
          %v5736 = vld [vmem:[%s5502 + $0x748] sm:$0xff]
          %v5737 = vld [vmem:[%s5502 + $0x750] sm:$0xff]
          %v5738 = vld [vmem:[%s5502 + $0x758] sm:$0xff]
          %v5739 = vld [vmem:[%s5502 + $0x760] sm:$0xff]
          %v5740 = vld [vmem:[%s5502 + $0x768] sm:$0xff]
          %v5741 = vld [vmem:[%s5502 + $0x770] sm:$0xff]
          %v5742 = vld [vmem:[%s5502 + $0x778] sm:$0xff]
          %v5743 = vld [vmem:[%s5502 + $0x780] sm:$0xff]
          %v5744 = vld [vmem:[%s5502 + $0x788] sm:$0xff]
          %v5745 = vld [vmem:[%s5502 + $0x790] sm:$0xff]
          %v5746 = vld [vmem:[%s5502 + $0x798] sm:$0xff]
          %v5747 = vld [vmem:[%s5502 + $0x7a0] sm:$0xff]
          %v5748 = vld [vmem:[%s5502 + $0x7a8] sm:$0xff]
          %v5749 = vld [vmem:[%s5502 + $0x7b0] sm:$0xff]
          %v5750 = vld [vmem:[%s5502 + $0x7b8] sm:$0xff]
          %v5751 = vld [vmem:[%s5502 + $0x7c0] sm:$0xff]
          %v5752 = vld [vmem:[%s5502 + $0x7c8] sm:$0xff]
          %v5753 = vld [vmem:[%s5502 + $0x7d0] sm:$0xff]
          %v5754 = vld [vmem:[%s5502 + $0x7d8] sm:$0xff]
          %v5755 = vld [vmem:[%s5502 + $0x7e0] sm:$0xff]
          %v5756 = vld [vmem:[%s5502 + $0x7e8] sm:$0xff]
          %v5757 = vld [vmem:[%s5502 + $0x7f0] sm:$0xff]
          %v5758 = vld [vmem:[%s5502 + $0x7f8] sm:$0xff]
          %v5759 = vld [vmem:[%s5502 + $0x800] sm:$0xff]
          %v5760 = vld [vmem:[%s5502 + $0x808] sm:$0xff]
          %v5761 = vld [vmem:[%s5502 + $0x810] sm:$0xff]
          %v5762 = vld [vmem:[%s5502 + $0x818] sm:$0xff]
          %v5763 = vld [vmem:[%s5502 + $0x820] sm:$0xff]
          %v5764 = vld [vmem:[%s5502 + $0x828] sm:$0xff]
          %v5765 = vld [vmem:[%s5502 + $0x830] sm:$0xff]
          %v5766 = vld [vmem:[%s5502 + $0x838] sm:$0xff]
          %v5767 = vld [vmem:[%s5502 + $0x840] sm:$0xff]
          %v5768 = vld [vmem:[%s5502 + $0x848] sm:$0xff]
          %v5769 = vld [vmem:[%s5502 + $0x850] sm:$0xff]
          %v5770 = vld [vmem:[%s5502 + $0x858] sm:$0xff]
          %v5771 = vld [vmem:[%s5502 + $0x860] sm:$0xff]
          %v5772 = vld [vmem:[%s5502 + $0x868] sm:$0xff]
          %v5773 = vld [vmem:[%s5502 + $0x870] sm:$0xff]
          %v5774 = vld [vmem:[%s5502 + $0x878] sm:$0xff]
          %v5775 = vld [vmem:[%s5502 + $0x880] sm:$0xff]
          %v5776 = vld [vmem:[%s5502 + $0x888] sm:$0xff]
          %v5777 = vld [vmem:[%s5502 + $0x890] sm:$0xff]
          %v5778 = vld [vmem:[%s5502 + $0x898] sm:$0xff]
          %v5779 = vld [vmem:[%s5502 + $0x8a0] sm:$0xff]
          %v5780 = vld [vmem:[%s5502 + $0x8a8] sm:$0xff]
          %v5781 = vld [vmem:[%s5502 + $0x8b0] sm:$0xff]
          %v5782 = vld [vmem:[%s5502 + $0x8b8] sm:$0xff]
          %v5783 = vld [vmem:[%s5502 + $0x8c0] sm:$0xff]
          %v5784 = vld [vmem:[%s5502 + $0x8c8] sm:$0xff]
          %v5785 = vld [vmem:[%s5502 + $0x8d0] sm:$0xff]
          %v5786 = vld [vmem:[%s5502 + $0x8d8] sm:$0xff]
          %v5787 = vld [vmem:[%s5502 + $0x8e0] sm:$0xff]
          %v5788 = vld [vmem:[%s5502 + $0x8e8] sm:$0xff]
          %v5789 = vld [vmem:[%s5502 + $0x8f0] sm:$0xff]
          %v5790 = vld [vmem:[%s5502 + $0x8f8] sm:$0xff]
          %v5796 = vrot.slane %v1011, 1
          %v5797 = vrot.slane %v1012, 1
          %v5798 = vrot.slane %v1013, 1
          %v5799 = vrot.slane %v1014, 1
          %v5800 = vrot.slane %v1015, 1
          %v6093 = vunpack.c.l.b16 %v5503
          %v6094 = vunpack.c.h.b16 %v5503
          %v6095 = vunpack.c.l.b16 %v5504
          %v6096 = vunpack.c.h.b16 %v5504
          %v6097 = vunpack.c.l.b16 %v5505
          %v6098 = vunpack.c.h.b16 %v5505
          %v6099 = vunpack.c.l.b16 %v5506
          %v6100 = vunpack.c.h.b16 %v5506
          %v6101 = vunpack.c.l.b16 %v5507
          %v6102 = vunpack.c.h.b16 %v5507
          %v6103 = vunpack.c.l.b16 %v5508
          %v6104 = vunpack.c.h.b16 %v5508
          %v6105 = vunpack.c.l.b16 %v5509
          %v6106 = vunpack.c.h.b16 %v5509
          %v6107 = vunpack.c.l.b16 %v5510
          %v6108 = vunpack.c.h.b16 %v5510
          %v6109 = vunpack.c.l.b16 %v5511
          %v6110 = vunpack.c.h.b16 %v5511
          %v6111 = vunpack.c.l.b16 %v5512
          %v6112 = vunpack.c.h.b16 %v5512
          %v6113 = vunpack.c.l.b16 %v5513
          %v6114 = vunpack.c.h.b16 %v5513
          %v6115 = vunpack.c.l.b16 %v5514
          %v6116 = vunpack.c.h.b16 %v5514
          %v6117 = vunpack.c.l.b16 %v5515
          %v6118 = vunpack.c.h.b16 %v5515
          %v6119 = vunpack.c.l.b16 %v5516
          %v6120 = vunpack.c.h.b16 %v5516
          %v6121 = vunpack.c.l.b16 %v5517
          %v6122 = vunpack.c.h.b16 %v5517
          %v6123 = vunpack.c.l.b16 %v5518
          %v6124 = vunpack.c.h.b16 %v5518
          %v6125 = vunpack.c.l.b16 %v5519
          %v6126 = vunpack.c.h.b16 %v5519
          %v6127 = vunpack.c.l.b16 %v5520
          %v6128 = vunpack.c.h.b16 %v5520
          %v6129 = vunpack.c.l.b16 %v5521
          %v6130 = vunpack.c.h.b16 %v5521
          %v6131 = vunpack.c.l.b16 %v5522
          %v6132 = vunpack.c.h.b16 %v5522
          %v6133 = vunpack.c.l.b16 %v5523
          %v6134 = vunpack.c.h.b16 %v5523
          %v6135 = vunpack.c.l.b16 %v5524
          %v6136 = vunpack.c.h.b16 %v5524
          %v6137 = vunpack.c.l.b16 %v5525
          %v6138 = vunpack.c.h.b16 %v5525
          %v6139 = vunpack.c.l.b16 %v5526
          %v6140 = vunpack.c.h.b16 %v5526
          %v6141 = vunpack.c.l.b16 %v5527
          %v6142 = vunpack.c.h.b16 %v5527
          %v6143 = vunpack.c.l.b16 %v5528
          %v6144 = vunpack.c.h.b16 %v5528
          %v6145 = vunpack.c.l.b16 %v5529
          %v6146 = vunpack.c.h.b16 %v5529
          %v6147 = vunpack.c.l.b16 %v5530
          %v6148 = vunpack.c.h.b16 %v5530
          %v6149 = vunpack.c.l.b16 %v5531
          %v6150 = vunpack.c.h.b16 %v5531
          %v6151 = vunpack.c.l.b16 %v5532
          %v6152 = vunpack.c.h.b16 %v5532
          %v6153 = vunpack.c.l.b16 %v5533
          %v6154 = vunpack.c.h.b16 %v5533
          %v6155 = vunpack.c.l.b16 %v5534
          %v6156 = vunpack.c.h.b16 %v5534
          %v6157 = vunpack.c.l.b16 %v5535
          %v6158 = vunpack.c.h.b16 %v5535
          %v6159 = vunpack.c.l.b16 %v5536
          %v6160 = vunpack.c.h.b16 %v5536
          %v6161 = vunpack.c.l.b16 %v5537
          %v6162 = vunpack.c.h.b16 %v5537
          %v6163 = vunpack.c.l.b16 %v5538
          %v6164 = vunpack.c.h.b16 %v5538
          %v6165 = vunpack.c.l.b16 %v5539
          %v6166 = vunpack.c.h.b16 %v5539
          %v6167 = vunpack.c.l.b16 %v5540
          %v6168 = vunpack.c.h.b16 %v5540
          %v6169 = vunpack.c.l.b16 %v5541
          %v6170 = vunpack.c.h.b16 %v5541
          %v6171 = vunpack.c.l.b16 %v5542
          %v6172 = vunpack.c.h.b16 %v5542
          %v6173 = vunpack.c.l.b16 %v5543
          %v6174 = vunpack.c.h.b16 %v5543
          %v6175 = vunpack.c.l.b16 %v5544
          %v6176 = vunpack.c.h.b16 %v5544
          %v6177 = vunpack.c.l.b16 %v5545
          %v6178 = vunpack.c.h.b16 %v5545
          %v6179 = vunpack.c.l.b16 %v5546
          %v6180 = vunpack.c.h.b16 %v5546
          %v6181 = vunpack.c.l.b16 %v5547
          %v6182 = vunpack.c.h.b16 %v5547
          %v6183 = vunpack.c.l.b16 %v5548
          %v6184 = vunpack.c.h.b16 %v5548
          %v6185 = vunpack.c.l.b16 %v5549
          %v6186 = vunpack.c.h.b16 %v5549
          %v6187 = vunpack.c.l.b16 %v5550
          %v6188 = vunpack.c.h.b16 %v5550
          %v6189 = vunpack.c.l.b16 %v5551
          %v6190 = vunpack.c.h.b16 %v5551
          %v6191 = vunpack.c.l.b16 %v5552
          %v6192 = vunpack.c.h.b16 %v5552
          %v6193 = vunpack.c.l.b16 %v5553
          %v6194 = vunpack.c.h.b16 %v5553
          %v6195 = vunpack.c.l.b16 %v5554
          %v6196 = vunpack.c.h.b16 %v5554
          %v6197 = vunpack.c.l.b16 %v5555
          %v6198 = vunpack.c.h.b16 %v5555
          %v6199 = vunpack.c.l.b16 %v5556
          %v6200 = vunpack.c.h.b16 %v5556
          %v6201 = vunpack.c.l.b16 %v5557
          %v6202 = vunpack.c.h.b16 %v5557
          %v6203 = vunpack.c.l.b16 %v5558
          %v6204 = vunpack.c.h.b16 %v5558
          %v6205 = vunpack.c.l.b16 %v5559
          %v6206 = vunpack.c.h.b16 %v5559
          %v6207 = vunpack.c.l.b16 %v5560
          %v6208 = vunpack.c.h.b16 %v5560
          %v6209 = vunpack.c.l.b16 %v5561
          %v6210 = vunpack.c.h.b16 %v5561
          %v6211 = vunpack.c.l.b16 %v5562
          %v6212 = vunpack.c.h.b16 %v5562
          %v6213 = vunpack.c.l.b16 %v5563
          %v6214 = vunpack.c.h.b16 %v5563
          %v6215 = vunpack.c.l.b16 %v5564
          %v6216 = vunpack.c.h.b16 %v5564
          %v6217 = vunpack.c.l.b16 %v5565
          %v6218 = vunpack.c.h.b16 %v5565
          %v6219 = vunpack.c.l.b16 %v5566
          %v6220 = vunpack.c.h.b16 %v5566
          %v6221 = vunpack.c.l.b16 %v5567
          %v6222 = vunpack.c.h.b16 %v5567
          %v6223 = vunpack.c.l.b16 %v5568
          %v6224 = vunpack.c.h.b16 %v5568
          %v6225 = vunpack.c.l.b16 %v5569
          %v6226 = vunpack.c.h.b16 %v5569
          %v6227 = vunpack.c.l.b16 %v5570
          %v6228 = vunpack.c.h.b16 %v5570
          %v6229 = vunpack.c.l.b16 %v5571
          %v6230 = vunpack.c.h.b16 %v5571
          %v6231 = vunpack.c.l.b16 %v5572
          %v6232 = vunpack.c.h.b16 %v5572
          %v6233 = vunpack.c.l.b16 %v5573
          %v6234 = vunpack.c.h.b16 %v5573
          %v6235 = vunpack.c.l.b16 %v5574
          %v6236 = vunpack.c.h.b16 %v5574
          %v6237 = vunpack.c.l.b16 %v5575
          %v6238 = vunpack.c.h.b16 %v5575
          %v6239 = vunpack.c.l.b16 %v5576
          %v6240 = vunpack.c.h.b16 %v5576
          %v6241 = vunpack.c.l.b16 %v5577
          %v6242 = vunpack.c.h.b16 %v5577
          %v6243 = vunpack.c.l.b16 %v5578
          %v6244 = vunpack.c.h.b16 %v5578
          %v6245 = vunpack.c.l.b16 %v5579
          %v6246 = vunpack.c.h.b16 %v5579
          %v6247 = vunpack.c.l.b16 %v5580
          %v6248 = vunpack.c.h.b16 %v5580
          %v6249 = vunpack.c.l.b16 %v5581
          %v6250 = vunpack.c.h.b16 %v5581
          %v6251 = vunpack.c.l.b16 %v5582
          %v6252 = vunpack.c.h.b16 %v5582
          %v6253 = vunpack.c.l.b16 %v5583
          %v6254 = vunpack.c.h.b16 %v5583
          %v6255 = vunpack.c.l.b16 %v5584
          %v6256 = vunpack.c.h.b16 %v5584
          %v6257 = vunpack.c.l.b16 %v5585
          %v6258 = vunpack.c.h.b16 %v5585
          %v6259 = vunpack.c.l.b16 %v5586
          %v6260 = vunpack.c.h.b16 %v5586
          %v6261 = vunpack.c.l.b16 %v5587
          %v6262 = vunpack.c.h.b16 %v5587
          %v6263 = vunpack.c.l.b16 %v5588
          %v6264 = vunpack.c.h.b16 %v5588
          %v6265 = vunpack.c.l.b16 %v5589
          %v6266 = vunpack.c.h.b16 %v5589
          %v6267 = vunpack.c.l.b16 %v5590
          %v6268 = vunpack.c.h.b16 %v5590
          %v6269 = vunpack.c.l.b16 %v5591
          %v6270 = vunpack.c.h.b16 %v5591
          %v6271 = vunpack.c.l.b16 %v5592
          %v6272 = vunpack.c.h.b16 %v5592
          %v6273 = vunpack.c.l.b16 %v5593
          %v6274 = vunpack.c.h.b16 %v5593
          %v6275 = vunpack.c.l.b16 %v5594
          %v6276 = vunpack.c.h.b16 %v5594
          %v6277 = vunpack.c.l.b16 %v5595
          %v6278 = vunpack.c.h.b16 %v5595
          %v6279 = vunpack.c.l.b16 %v5596
          %v6280 = vunpack.c.h.b16 %v5596
          %v6281 = vunpack.c.l.b16 %v5597
          %v6282 = vunpack.c.h.b16 %v5597
          %v6283 = vunpack.c.l.b16 %v5598
          %v6284 = vunpack.c.h.b16 %v5598
          %v6285 = vunpack.c.l.b16 %v5599
          %v6286 = vunpack.c.h.b16 %v5599
          %v6287 = vunpack.c.l.b16 %v5600
          %v6288 = vunpack.c.h.b16 %v5600
          %v6289 = vunpack.c.l.b16 %v5601
          %v6290 = vunpack.c.h.b16 %v5601
          %v6291 = vunpack.c.l.b16 %v5602
          %v6292 = vunpack.c.h.b16 %v5602
          %v6293 = vunpack.c.l.b16 %v5603
          %v6294 = vunpack.c.h.b16 %v5603
          %v6295 = vunpack.c.l.b16 %v5604
          %v6296 = vunpack.c.h.b16 %v5604
          %v6297 = vunpack.c.l.b16 %v5605
          %v6298 = vunpack.c.h.b16 %v5605
          %v6299 = vunpack.c.l.b16 %v5606
          %v6300 = vunpack.c.h.b16 %v5606
          %v6301 = vunpack.c.l.b16 %v5607
          %v6302 = vunpack.c.h.b16 %v5607
          %v6303 = vunpack.c.l.b16 %v5608
          %v6304 = vunpack.c.h.b16 %v5608
          %v6305 = vunpack.c.l.b16 %v5609
          %v6306 = vunpack.c.h.b16 %v5609
          %v6307 = vunpack.c.l.b16 %v5610
          %v6308 = vunpack.c.h.b16 %v5610
          %v6309 = vunpack.c.l.b16 %v5611
          %v6310 = vunpack.c.h.b16 %v5611
          %v6311 = vunpack.c.l.b16 %v5612
          %v6312 = vunpack.c.h.b16 %v5612
          %v6313 = vunpack.c.l.b16 %v5613
          %v6314 = vunpack.c.h.b16 %v5613
          %v6315 = vunpack.c.l.b16 %v5614
          %v6316 = vunpack.c.h.b16 %v5614
          %v6317 = vunpack.c.l.b16 %v5615
          %v6318 = vunpack.c.h.b16 %v5615
          %v6319 = vunpack.c.l.b16 %v5616
          %v6320 = vunpack.c.h.b16 %v5616
          %v6321 = vunpack.c.l.b16 %v5617
          %v6322 = vunpack.c.h.b16 %v5617
          %v6323 = vunpack.c.l.b16 %v5618
          %v6324 = vunpack.c.h.b16 %v5618
          %v6325 = vunpack.c.l.b16 %v5619
          %v6326 = vunpack.c.h.b16 %v5619
          %v6327 = vunpack.c.l.b16 %v5620
          %v6328 = vunpack.c.h.b16 %v5620
          %v6329 = vunpack.c.l.b16 %v5621
          %v6330 = vunpack.c.h.b16 %v5621
          %v6331 = vunpack.c.l.b16 %v5622
          %v6332 = vunpack.c.h.b16 %v5622
          %v6333 = vunpack.c.l.b16 %v5623
          %v6334 = vunpack.c.h.b16 %v5623
          %v6335 = vunpack.c.l.b16 %v5624
          %v6336 = vunpack.c.h.b16 %v5624
          %v6337 = vunpack.c.l.b16 %v5625
          %v6338 = vunpack.c.h.b16 %v5625
          %v6339 = vunpack.c.l.b16 %v5626
          %v6340 = vunpack.c.h.b16 %v5626
          %v6341 = vunpack.c.l.b16 %v5627
          %v6342 = vunpack.c.h.b16 %v5627
          %v6343 = vunpack.c.l.b16 %v5628
          %v6344 = vunpack.c.h.b16 %v5628
          %v6345 = vunpack.c.l.b16 %v5629
          %v6346 = vunpack.c.h.b16 %v5629
          %v6347 = vunpack.c.l.b16 %v5630
          %v6348 = vunpack.c.h.b16 %v5630
          %v6349 = vunpack.c.l.b16 %v5631
          %v6350 = vunpack.c.h.b16 %v5631
          %v6351 = vunpack.c.l.b16 %v5632
          %v6352 = vunpack.c.h.b16 %v5632
          %v6353 = vunpack.c.l.b16 %v5633
          %v6354 = vunpack.c.h.b16 %v5633
          %v6355 = vunpack.c.l.b16 %v5634
          %v6356 = vunpack.c.h.b16 %v5634
          %v6357 = vunpack.c.l.b16 %v5635
          %v6358 = vunpack.c.h.b16 %v5635
          %v6359 = vunpack.c.l.b16 %v5636
          %v6360 = vunpack.c.h.b16 %v5636
          %v6361 = vunpack.c.l.b16 %v5637
          %v6362 = vunpack.c.h.b16 %v5637
          %v6363 = vunpack.c.l.b16 %v5638
          %v6364 = vunpack.c.h.b16 %v5638
          %v6365 = vunpack.c.l.b16 %v5639
          %v6366 = vunpack.c.h.b16 %v5639
          %v6367 = vunpack.c.l.b16 %v5640
          %v6368 = vunpack.c.h.b16 %v5640
          %v6369 = vunpack.c.l.b16 %v5641
          %v6370 = vunpack.c.h.b16 %v5641
          %v6371 = vunpack.c.l.b16 %v5642
          %v6372 = vunpack.c.h.b16 %v5642
          %v6373 = vunpack.c.l.b16 %v5643
          %v6374 = vunpack.c.h.b16 %v5643
          %v6375 = vunpack.c.l.b16 %v5644
          %v6376 = vunpack.c.h.b16 %v5644
          %v6377 = vunpack.c.l.b16 %v5645
          %v6378 = vunpack.c.h.b16 %v5645
          %v6379 = vunpack.c.l.b16 %v5646
          %v6380 = vunpack.c.h.b16 %v5646
          %v6381 = vunpack.c.l.b16 %v5647
          %v6382 = vunpack.c.h.b16 %v5647
          %v6383 = vunpack.c.l.b16 %v5648
          %v6384 = vunpack.c.h.b16 %v5648
          %v6385 = vunpack.c.l.b16 %v5649
          %v6386 = vunpack.c.h.b16 %v5649
          %v6387 = vunpack.c.l.b16 %v5650
          %v6388 = vunpack.c.h.b16 %v5650
          %v6389 = vunpack.c.l.b16 %v5651
          %v6390 = vunpack.c.h.b16 %v5651
          %v6391 = vunpack.c.l.b16 %v5652
          %v6392 = vunpack.c.h.b16 %v5652
          %v6393 = vunpack.c.l.b16 %v5653
          %v6394 = vunpack.c.h.b16 %v5653
          %v6395 = vunpack.c.l.b16 %v5654
          %v6396 = vunpack.c.h.b16 %v5654
          %v6397 = vunpack.c.l.b16 %v5655
          %v6398 = vunpack.c.h.b16 %v5655
          %v6399 = vunpack.c.l.b16 %v5656
          %v6400 = vunpack.c.h.b16 %v5656
          %v6401 = vunpack.c.l.b16 %v5657
          %v6402 = vunpack.c.h.b16 %v5657
          %v6403 = vunpack.c.l.b16 %v5658
          %v6404 = vunpack.c.h.b16 %v5658
          %v6405 = vunpack.c.l.b16 %v5659
          %v6406 = vunpack.c.h.b16 %v5659
          %v6407 = vunpack.c.l.b16 %v5660
          %v6408 = vunpack.c.h.b16 %v5660
          %v6409 = vunpack.c.l.b16 %v5661
          %v6410 = vunpack.c.h.b16 %v5661
          %v6411 = vunpack.c.l.b16 %v5662
          %v6412 = vunpack.c.h.b16 %v5662
          %v6413 = vunpack.c.l.b16 %v5663
          %v6414 = vunpack.c.h.b16 %v5663
          %v6415 = vunpack.c.l.b16 %v5664
          %v6416 = vunpack.c.h.b16 %v5664
          %v6417 = vunpack.c.l.b16 %v5665
          %v6418 = vunpack.c.h.b16 %v5665
          %v6419 = vunpack.c.l.b16 %v5666
          %v6420 = vunpack.c.h.b16 %v5666
          %v6421 = vunpack.c.l.b16 %v5667
          %v6422 = vunpack.c.h.b16 %v5667
          %v6423 = vunpack.c.l.b16 %v5668
          %v6424 = vunpack.c.h.b16 %v5668
          %v6425 = vunpack.c.l.b16 %v5669
          %v6426 = vunpack.c.h.b16 %v5669
          %v6427 = vunpack.c.l.b16 %v5670
          %v6428 = vunpack.c.h.b16 %v5670
          %v6429 = vunpack.c.l.b16 %v5671
          %v6430 = vunpack.c.h.b16 %v5671
          %v6431 = vunpack.c.l.b16 %v5672
          %v6432 = vunpack.c.h.b16 %v5672
          %v6433 = vunpack.c.l.b16 %v5673
          %v6434 = vunpack.c.h.b16 %v5673
          %v6435 = vunpack.c.l.b16 %v5674
          %v6436 = vunpack.c.h.b16 %v5674
          %v6437 = vunpack.c.l.b16 %v5675
          %v6438 = vunpack.c.h.b16 %v5675
          %v6439 = vunpack.c.l.b16 %v5676
          %v6440 = vunpack.c.h.b16 %v5676
          %v6441 = vunpack.c.l.b16 %v5677
          %v6442 = vunpack.c.h.b16 %v5677
          %v6443 = vunpack.c.l.b16 %v5678
          %v6444 = vunpack.c.h.b16 %v5678
          %v6445 = vunpack.c.l.b16 %v5679
          %v6446 = vunpack.c.h.b16 %v5679
          %v6447 = vunpack.c.l.b16 %v5680
          %v6448 = vunpack.c.h.b16 %v5680
          %v6449 = vunpack.c.l.b16 %v5681
          %v6450 = vunpack.c.h.b16 %v5681
          %v6451 = vunpack.c.l.b16 %v5682
          %v6452 = vunpack.c.h.b16 %v5682
          %v6453 = vunpack.c.l.b16 %v5683
          %v6454 = vunpack.c.h.b16 %v5683
          %v6455 = vunpack.c.l.b16 %v5684
          %v6456 = vunpack.c.h.b16 %v5684
          %v6457 = vunpack.c.l.b16 %v5685
          %v6458 = vunpack.c.h.b16 %v5685
          %v6459 = vunpack.c.l.b16 %v5686
          %v6460 = vunpack.c.h.b16 %v5686
          %v6461 = vunpack.c.l.b16 %v5687
          %v6462 = vunpack.c.h.b16 %v5687
          %v6463 = vunpack.c.l.b16 %v5688
          %v6464 = vunpack.c.h.b16 %v5688
          %v6465 = vunpack.c.l.b16 %v5689
          %v6466 = vunpack.c.h.b16 %v5689
          %v6467 = vunpack.c.l.b16 %v5690
          %v6468 = vunpack.c.h.b16 %v5690
          %v6469 = vunpack.c.l.b16 %v5691
          %v6470 = vunpack.c.h.b16 %v5691
          %v6471 = vunpack.c.l.b16 %v5692
          %v6472 = vunpack.c.h.b16 %v5692
          %v6473 = vunpack.c.l.b16 %v5693
          %v6474 = vunpack.c.h.b16 %v5693
          %v6475 = vunpack.c.l.b16 %v5694
          %v6476 = vunpack.c.h.b16 %v5694
          %v6477 = vunpack.c.l.b16 %v5695
          %v6478 = vunpack.c.h.b16 %v5695
          %v6479 = vunpack.c.l.b16 %v5696
          %v6480 = vunpack.c.h.b16 %v5696
          %v6481 = vunpack.c.l.b16 %v5697
          %v6482 = vunpack.c.h.b16 %v5697
          %v6483 = vunpack.c.l.b16 %v5698
          %v6484 = vunpack.c.h.b16 %v5698
          %v6485 = vunpack.c.l.b16 %v5699
          %v6486 = vunpack.c.h.b16 %v5699
          %v6487 = vunpack.c.l.b16 %v5700
          %v6488 = vunpack.c.h.b16 %v5700
          %v6489 = vunpack.c.l.b16 %v5701
          %v6490 = vunpack.c.h.b16 %v5701
          %v6491 = vunpack.c.l.b16 %v5702
          %v6492 = vunpack.c.h.b16 %v5702
          %v6493 = vunpack.c.l.b16 %v5703
          %v6494 = vunpack.c.h.b16 %v5703
          %v6495 = vunpack.c.l.b16 %v5704
          %v6496 = vunpack.c.h.b16 %v5704
          %v6497 = vunpack.c.l.b16 %v5705
          %v6498 = vunpack.c.h.b16 %v5705
          %v6499 = vunpack.c.l.b16 %v5706
          %v6500 = vunpack.c.h.b16 %v5706
          %v6501 = vunpack.c.l.b16 %v5707
          %v6502 = vunpack.c.h.b16 %v5707
          %v6503 = vunpack.c.l.b16 %v5708
          %v6504 = vunpack.c.h.b16 %v5708
          %v6505 = vunpack.c.l.b16 %v5709
          %v6506 = vunpack.c.h.b16 %v5709
          %v6507 = vunpack.c.l.b16 %v5710
          %v6508 = vunpack.c.h.b16 %v5710
          %v6509 = vunpack.c.l.b16 %v5711
          %v6510 = vunpack.c.h.b16 %v5711
          %v6511 = vunpack.c.l.b16 %v5712
          %v6512 = vunpack.c.h.b16 %v5712
          %v6513 = vunpack.c.l.b16 %v5713
          %v6514 = vunpack.c.h.b16 %v5713
          %v6515 = vunpack.c.l.b16 %v5714
          %v6516 = vunpack.c.h.b16 %v5714
          %v6517 = vunpack.c.l.b16 %v5715
          %v6518 = vunpack.c.h.b16 %v5715
          %v6519 = vunpack.c.l.b16 %v5716
          %v6520 = vunpack.c.h.b16 %v5716
          %v6521 = vunpack.c.l.b16 %v5717
          %v6522 = vunpack.c.h.b16 %v5717
          %v6523 = vunpack.c.l.b16 %v5718
          %v6524 = vunpack.c.h.b16 %v5718
          %v6525 = vunpack.c.l.b16 %v5719
          %v6526 = vunpack.c.h.b16 %v5719
          %v6527 = vunpack.c.l.b16 %v5720
          %v6528 = vunpack.c.h.b16 %v5720
          %v6529 = vunpack.c.l.b16 %v5721
          %v6530 = vunpack.c.h.b16 %v5721
          %v6531 = vunpack.c.l.b16 %v5722
          %v6532 = vunpack.c.h.b16 %v5722
          %v6533 = vunpack.c.l.b16 %v5723
          %v6534 = vunpack.c.h.b16 %v5723
          %v6535 = vunpack.c.l.b16 %v5724
          %v6536 = vunpack.c.h.b16 %v5724
          %v6537 = vunpack.c.l.b16 %v5725
          %v6538 = vunpack.c.h.b16 %v5725
          %v6539 = vunpack.c.l.b16 %v5726
          %v6540 = vunpack.c.h.b16 %v5726
          %v6541 = vunpack.c.l.b16 %v5727
          %v6542 = vunpack.c.h.b16 %v5727
          %v6543 = vunpack.c.l.b16 %v5728
          %v6544 = vunpack.c.h.b16 %v5728
          %v6545 = vunpack.c.l.b16 %v5729
          %v6546 = vunpack.c.h.b16 %v5729
          %v6547 = vunpack.c.l.b16 %v5730
          %v6548 = vunpack.c.h.b16 %v5730
          %v6549 = vunpack.c.l.b16 %v5731
          %v6550 = vunpack.c.h.b16 %v5731
          %v6551 = vunpack.c.l.b16 %v5732
          %v6552 = vunpack.c.h.b16 %v5732
          %v6553 = vunpack.c.l.b16 %v5733
          %v6554 = vunpack.c.h.b16 %v5733
          %v6555 = vunpack.c.l.b16 %v5734
          %v6556 = vunpack.c.h.b16 %v5734
          %v6557 = vunpack.c.l.b16 %v5735
          %v6558 = vunpack.c.h.b16 %v5735
          %v6559 = vunpack.c.l.b16 %v5736
          %v6560 = vunpack.c.h.b16 %v5736
          %v6561 = vunpack.c.l.b16 %v5737
          %v6562 = vunpack.c.h.b16 %v5737
          %v6563 = vunpack.c.l.b16 %v5738
          %v6564 = vunpack.c.h.b16 %v5738
          %v6565 = vunpack.c.l.b16 %v5739
          %v6566 = vunpack.c.h.b16 %v5739
          %v6567 = vunpack.c.l.b16 %v5740
          %v6568 = vunpack.c.h.b16 %v5740
          %v6569 = vunpack.c.l.b16 %v5741
          %v6570 = vunpack.c.h.b16 %v5741
          %v6571 = vunpack.c.l.b16 %v5742
          %v6572 = vunpack.c.h.b16 %v5742
          %v6573 = vunpack.c.l.b16 %v5743
          %v6574 = vunpack.c.h.b16 %v5743
          %v6575 = vunpack.c.l.b16 %v5744
          %v6576 = vunpack.c.h.b16 %v5744
          %v6577 = vunpack.c.l.b16 %v5745
          %v6578 = vunpack.c.h.b16 %v5745
          %v6579 = vunpack.c.l.b16 %v5746
          %v6580 = vunpack.c.h.b16 %v5746
          %v6581 = vunpack.c.l.b16 %v5747
          %v6582 = vunpack.c.h.b16 %v5747
          %v6583 = vunpack.c.l.b16 %v5748
          %v6584 = vunpack.c.h.b16 %v5748
          %v6585 = vunpack.c.l.b16 %v5749
          %v6586 = vunpack.c.h.b16 %v5749
          %v6587 = vunpack.c.l.b16 %v5750
          %v6588 = vunpack.c.h.b16 %v5750
          %v6589 = vunpack.c.l.b16 %v5751
          %v6590 = vunpack.c.h.b16 %v5751
          %v6591 = vunpack.c.l.b16 %v5752
          %v6592 = vunpack.c.h.b16 %v5752
          %v6593 = vunpack.c.l.b16 %v5753
          %v6594 = vunpack.c.h.b16 %v5753
          %v6595 = vunpack.c.l.b16 %v5754
          %v6596 = vunpack.c.h.b16 %v5754
          %v6597 = vunpack.c.l.b16 %v5755
          %v6598 = vunpack.c.h.b16 %v5755
          %v6599 = vunpack.c.l.b16 %v5756
          %v6600 = vunpack.c.h.b16 %v5756
          %v6601 = vunpack.c.l.b16 %v5757
          %v6602 = vunpack.c.h.b16 %v5757
          %v6603 = vunpack.c.l.b16 %v5758
          %v6604 = vunpack.c.h.b16 %v5758
          %v6605 = vunpack.c.l.b16 %v5759
          %v6606 = vunpack.c.h.b16 %v5759
          %v6607 = vunpack.c.l.b16 %v5760
          %v6608 = vunpack.c.h.b16 %v5760
          %v6609 = vunpack.c.l.b16 %v5761
          %v6610 = vunpack.c.h.b16 %v5761
          %v6611 = vunpack.c.l.b16 %v5762
          %v6612 = vunpack.c.h.b16 %v5762
          %v6613 = vunpack.c.l.b16 %v5763
          %v6614 = vunpack.c.h.b16 %v5763
          %v6615 = vunpack.c.l.b16 %v5764
          %v6616 = vunpack.c.h.b16 %v5764
          %v6617 = vunpack.c.l.b16 %v5765
          %v6618 = vunpack.c.h.b16 %v5765
          %v6619 = vunpack.c.l.b16 %v5766
          %v6620 = vunpack.c.h.b16 %v5766
          %v6621 = vunpack.c.l.b16 %v5767
          %v6622 = vunpack.c.h.b16 %v5767
          %v6623 = vunpack.c.l.b16 %v5768
          %v6624 = vunpack.c.h.b16 %v5768
          %v6625 = vunpack.c.l.b16 %v5769
          %v6626 = vunpack.c.h.b16 %v5769
          %v6627 = vunpack.c.l.b16 %v5770
          %v6628 = vunpack.c.h.b16 %v5770
          %v6629 = vunpack.c.l.b16 %v5771
          %v6630 = vunpack.c.h.b16 %v5771
          %v6631 = vunpack.c.l.b16 %v5772
          %v6632 = vunpack.c.h.b16 %v5772
          %v6633 = vunpack.c.l.b16 %v5773
          %v6634 = vunpack.c.h.b16 %v5773
          %v6635 = vunpack.c.l.b16 %v5774
          %v6636 = vunpack.c.h.b16 %v5774
          %v6637 = vunpack.c.l.b16 %v5775
          %v6638 = vunpack.c.h.b16 %v5775
          %v6639 = vunpack.c.l.b16 %v5776
          %v6640 = vunpack.c.h.b16 %v5776
          %v6641 = vunpack.c.l.b16 %v5777
          %v6642 = vunpack.c.h.b16 %v5777
          %v6643 = vunpack.c.l.b16 %v5778
          %v6644 = vunpack.c.h.b16 %v5778
          %v6645 = vunpack.c.l.b16 %v5779
          %v6646 = vunpack.c.h.b16 %v5779
          %v6647 = vunpack.c.l.b16 %v5780
          %v6648 = vunpack.c.h.b16 %v5780
          %v6649 = vunpack.c.l.b16 %v5781
          %v6650 = vunpack.c.h.b16 %v5781
          %v6651 = vunpack.c.l.b16 %v5782
          %v6652 = vunpack.c.h.b16 %v5782
          %v6653 = vunpack.c.l.b16 %v5783
          %v6654 = vunpack.c.h.b16 %v5783
          %v6655 = vunpack.c.l.b16 %v5784
          %v6656 = vunpack.c.h.b16 %v5784
          %v6657 = vunpack.c.l.b16 %v5785
          %v6658 = vunpack.c.h.b16 %v5785
          %v6659 = vunpack.c.l.b16 %v5786
          %v6660 = vunpack.c.h.b16 %v5786
          %v6661 = vunpack.c.l.b16 %v5787
          %v6662 = vunpack.c.h.b16 %v5787
          %v6663 = vunpack.c.l.b16 %v5788
          %v6664 = vunpack.c.h.b16 %v5788
          %v6665 = vunpack.c.l.b16 %v5789
          %v6666 = vunpack.c.h.b16 %v5789
          %v6667 = vunpack.c.l.b16 %v5790
          %v6668 = vunpack.c.h.b16 %v5790
          %v6669 = vpack.c.b16 %v6101, %v6093
          %v6670 = vpack.c.b16 %v6102, %v6094
          %v6671 = vpack.c.b16 %v6103, %v6095
          %v6672 = vpack.c.b16 %v6104, %v6096
          %v6673 = vpack.c.b16 %v6105, %v6097
          %v6674 = vpack.c.b16 %v6106, %v6098
          %v6675 = vpack.c.b16 %v6107, %v6099
          %v6676 = vpack.c.b16 %v6108, %v6100
          %v6677 = vpack.c.b16 %v6117, %v6109
          %v6678 = vpack.c.b16 %v6118, %v6110
          %v6679 = vpack.c.b16 %v6119, %v6111
          %v6680 = vpack.c.b16 %v6120, %v6112
          %v6681 = vpack.c.b16 %v6121, %v6113
          %v6682 = vpack.c.b16 %v6122, %v6114
          %v6683 = vpack.c.b16 %v6123, %v6115
          %v6684 = vpack.c.b16 %v6124, %v6116
          %v6685 = vpack.c.b16 %v6133, %v6125
          %v6686 = vpack.c.b16 %v6134, %v6126
          %v6687 = vpack.c.b16 %v6135, %v6127
          %v6688 = vpack.c.b16 %v6136, %v6128
          %v6689 = vpack.c.b16 %v6137, %v6129
          %v6690 = vpack.c.b16 %v6138, %v6130
          %v6691 = vpack.c.b16 %v6139, %v6131
          %v6692 = vpack.c.b16 %v6140, %v6132
          %v6693 = vpack.c.b16 %v6149, %v6141
          %v6694 = vpack.c.b16 %v6150, %v6142
          %v6695 = vpack.c.b16 %v6151, %v6143
          %v6696 = vpack.c.b16 %v6152, %v6144
          %v6697 = vpack.c.b16 %v6153, %v6145
          %v6698 = vpack.c.b16 %v6154, %v6146
          %v6699 = vpack.c.b16 %v6155, %v6147
          %v6700 = vpack.c.b16 %v6156, %v6148
          %v6701 = vpack.c.b16 %v6165, %v6157
          %v6702 = vpack.c.b16 %v6166, %v6158
          %v6703 = vpack.c.b16 %v6167, %v6159
          %v6704 = vpack.c.b16 %v6168, %v6160
          %v6705 = vpack.c.b16 %v6169, %v6161
          %v6706 = vpack.c.b16 %v6170, %v6162
          %v6707 = vpack.c.b16 %v6171, %v6163
          %v6708 = vpack.c.b16 %v6172, %v6164
          %v6709 = vpack.c.b16 %v6181, %v6173
          %v6710 = vpack.c.b16 %v6182, %v6174
          %v6711 = vpack.c.b16 %v6183, %v6175
          %v6712 = vpack.c.b16 %v6184, %v6176
          %v6713 = vpack.c.b16 %v6185, %v6177
          %v6714 = vpack.c.b16 %v6186, %v6178
          %v6715 = vpack.c.b16 %v6187, %v6179
          %v6716 = vpack.c.b16 %v6188, %v6180
          %v6717 = vpack.c.b16 %v6197, %v6189
          %v6718 = vpack.c.b16 %v6198, %v6190
          %v6719 = vpack.c.b16 %v6199, %v6191
          %v6720 = vpack.c.b16 %v6200, %v6192
          %v6721 = vpack.c.b16 %v6201, %v6193
          %v6722 = vpack.c.b16 %v6202, %v6194
          %v6723 = vpack.c.b16 %v6203, %v6195
          %v6724 = vpack.c.b16 %v6204, %v6196
          %v6725 = vpack.c.b16 %v6213, %v6205
          %v6726 = vpack.c.b16 %v6214, %v6206
          %v6727 = vpack.c.b16 %v6215, %v6207
          %v6728 = vpack.c.b16 %v6216, %v6208
          %v6729 = vpack.c.b16 %v6217, %v6209
          %v6730 = vpack.c.b16 %v6218, %v6210
          %v6731 = vpack.c.b16 %v6219, %v6211
          %v6732 = vpack.c.b16 %v6220, %v6212
          %v6733 = vpack.c.b16 %v6229, %v6221
          %v6734 = vpack.c.b16 %v6230, %v6222
          %v6735 = vpack.c.b16 %v6231, %v6223
          %v6736 = vpack.c.b16 %v6232, %v6224
          %v6737 = vpack.c.b16 %v6233, %v6225
          %v6738 = vpack.c.b16 %v6234, %v6226
          %v6739 = vpack.c.b16 %v6235, %v6227
          %v6740 = vpack.c.b16 %v6236, %v6228
          %v6741 = vpack.c.b16 %v6245, %v6237
          %v6742 = vpack.c.b16 %v6246, %v6238
          %v6743 = vpack.c.b16 %v6247, %v6239
          %v6744 = vpack.c.b16 %v6248, %v6240
          %v6745 = vpack.c.b16 %v6249, %v6241
          %v6746 = vpack.c.b16 %v6250, %v6242
          %v6747 = vpack.c.b16 %v6251, %v6243
          %v6748 = vpack.c.b16 %v6252, %v6244
          %v6749 = vpack.c.b16 %v6261, %v6253
          %v6750 = vpack.c.b16 %v6262, %v6254
          %v6751 = vpack.c.b16 %v6263, %v6255
          %v6752 = vpack.c.b16 %v6264, %v6256
          %v6753 = vpack.c.b16 %v6265, %v6257
          %v6754 = vpack.c.b16 %v6266, %v6258
          %v6755 = vpack.c.b16 %v6267, %v6259
          %v6756 = vpack.c.b16 %v6268, %v6260
          %v6757 = vpack.c.b16 %v6277, %v6269
          %v6758 = vpack.c.b16 %v6278, %v6270
          %v6759 = vpack.c.b16 %v6279, %v6271
          %v6760 = vpack.c.b16 %v6280, %v6272
          %v6761 = vpack.c.b16 %v6281, %v6273
          %v6762 = vpack.c.b16 %v6282, %v6274
          %v6763 = vpack.c.b16 %v6283, %v6275
          %v6764 = vpack.c.b16 %v6284, %v6276
          %v6765 = vpack.c.b16 %v6293, %v6285
          %v6766 = vpack.c.b16 %v6294, %v6286
          %v6767 = vpack.c.b16 %v6295, %v6287
          %v6768 = vpack.c.b16 %v6296, %v6288
          %v6769 = vpack.c.b16 %v6297, %v6289
          %v6770 = vpack.c.b16 %v6298, %v6290
          %v6771 = vpack.c.b16 %v6299, %v6291
          %v6772 = vpack.c.b16 %v6300, %v6292
          %v6773 = vpack.c.b16 %v6309, %v6301
          %v6774 = vpack.c.b16 %v6310, %v6302
          %v6775 = vpack.c.b16 %v6311, %v6303
          %v6776 = vpack.c.b16 %v6312, %v6304
          %v6777 = vpack.c.b16 %v6313, %v6305
          %v6778 = vpack.c.b16 %v6314, %v6306
          %v6779 = vpack.c.b16 %v6315, %v6307
          %v6780 = vpack.c.b16 %v6316, %v6308
          %v6781 = vpack.c.b16 %v6325, %v6317
          %v6782 = vpack.c.b16 %v6326, %v6318
          %v6783 = vpack.c.b16 %v6327, %v6319
          %v6784 = vpack.c.b16 %v6328, %v6320
          %v6785 = vpack.c.b16 %v6329, %v6321
          %v6786 = vpack.c.b16 %v6330, %v6322
          %v6787 = vpack.c.b16 %v6331, %v6323
          %v6788 = vpack.c.b16 %v6332, %v6324
          %v6789 = vpack.c.b16 %v6341, %v6333
          %v6790 = vpack.c.b16 %v6342, %v6334
          %v6791 = vpack.c.b16 %v6343, %v6335
          %v6792 = vpack.c.b16 %v6344, %v6336
          %v6793 = vpack.c.b16 %v6345, %v6337
          %v6794 = vpack.c.b16 %v6346, %v6338
          %v6795 = vpack.c.b16 %v6347, %v6339
          %v6796 = vpack.c.b16 %v6348, %v6340
          %v6797 = vpack.c.b16 %v6357, %v6349
          %v6798 = vpack.c.b16 %v6358, %v6350
          %v6799 = vpack.c.b16 %v6359, %v6351
          %v6800 = vpack.c.b16 %v6360, %v6352
          %v6801 = vpack.c.b16 %v6361, %v6353
          %v6802 = vpack.c.b16 %v6362, %v6354
          %v6803 = vpack.c.b16 %v6363, %v6355
          %v6804 = vpack.c.b16 %v6364, %v6356
          %v6805 = vpack.c.b16 %v6373, %v6365
          %v6806 = vpack.c.b16 %v6374, %v6366
          %v6807 = vpack.c.b16 %v6375, %v6367
          %v6808 = vpack.c.b16 %v6376, %v6368
          %v6809 = vpack.c.b16 %v6377, %v6369
          %v6810 = vpack.c.b16 %v6378, %v6370
          %v6811 = vpack.c.b16 %v6379, %v6371
          %v6812 = vpack.c.b16 %v6380, %v6372
          %v6813 = vpack.c.b16 %v6389, %v6381
          %v6814 = vpack.c.b16 %v6390, %v6382
          %v6815 = vpack.c.b16 %v6391, %v6383
          %v6816 = vpack.c.b16 %v6392, %v6384
          %v6817 = vpack.c.b16 %v6393, %v6385
          %v6818 = vpack.c.b16 %v6394, %v6386
          %v6819 = vpack.c.b16 %v6395, %v6387
          %v6820 = vpack.c.b16 %v6396, %v6388
          %v6821 = vpack.c.b16 %v6405, %v6397
          %v6822 = vpack.c.b16 %v6406, %v6398
          %v6823 = vpack.c.b16 %v6407, %v6399
          %v6824 = vpack.c.b16 %v6408, %v6400
          %v6825 = vpack.c.b16 %v6409, %v6401
          %v6826 = vpack.c.b16 %v6410, %v6402
          %v6827 = vpack.c.b16 %v6411, %v6403
          %v6828 = vpack.c.b16 %v6412, %v6404
          %v6829 = vpack.c.b16 %v6421, %v6413
          %v6830 = vpack.c.b16 %v6422, %v6414
          %v6831 = vpack.c.b16 %v6423, %v6415
          %v6832 = vpack.c.b16 %v6424, %v6416
          %v6833 = vpack.c.b16 %v6425, %v6417
          %v6834 = vpack.c.b16 %v6426, %v6418
          %v6835 = vpack.c.b16 %v6427, %v6419
          %v6836 = vpack.c.b16 %v6428, %v6420
          %v6837 = vpack.c.b16 %v6437, %v6429
          %v6838 = vpack.c.b16 %v6438, %v6430
          %v6839 = vpack.c.b16 %v6439, %v6431
          %v6840 = vpack.c.b16 %v6440, %v6432
          %v6841 = vpack.c.b16 %v6441, %v6433
          %v6842 = vpack.c.b16 %v6442, %v6434
          %v6843 = vpack.c.b16 %v6443, %v6435
          %v6844 = vpack.c.b16 %v6444, %v6436
          %v6845 = vpack.c.b16 %v6453, %v6445
          %v6846 = vpack.c.b16 %v6454, %v6446
          %v6847 = vpack.c.b16 %v6455, %v6447
          %v6848 = vpack.c.b16 %v6456, %v6448
          %v6849 = vpack.c.b16 %v6457, %v6449
          %v6850 = vpack.c.b16 %v6458, %v6450
          %v6851 = vpack.c.b16 %v6459, %v6451
          %v6852 = vpack.c.b16 %v6460, %v6452
          %v6853 = vpack.c.b16 %v6469, %v6461
          %v6854 = vpack.c.b16 %v6470, %v6462
          %v6855 = vpack.c.b16 %v6471, %v6463
          %v6856 = vpack.c.b16 %v6472, %v6464
          %v6857 = vpack.c.b16 %v6473, %v6465
          %v6858 = vpack.c.b16 %v6474, %v6466
          %v6859 = vpack.c.b16 %v6475, %v6467
          %v6860 = vpack.c.b16 %v6476, %v6468
          %v6861 = vpack.c.b16 %v6485, %v6477
          %v6862 = vpack.c.b16 %v6486, %v6478
          %v6863 = vpack.c.b16 %v6487, %v6479
          %v6864 = vpack.c.b16 %v6488, %v6480
          %v6865 = vpack.c.b16 %v6489, %v6481
          %v6866 = vpack.c.b16 %v6490, %v6482
          %v6867 = vpack.c.b16 %v6491, %v6483
          %v6868 = vpack.c.b16 %v6492, %v6484
          %v6869 = vpack.c.b16 %v6501, %v6493
          %v6870 = vpack.c.b16 %v6502, %v6494
          %v6871 = vpack.c.b16 %v6503, %v6495
          %v6872 = vpack.c.b16 %v6504, %v6496
          %v6873 = vpack.c.b16 %v6505, %v6497
          %v6874 = vpack.c.b16 %v6506, %v6498
          %v6875 = vpack.c.b16 %v6507, %v6499
          %v6876 = vpack.c.b16 %v6508, %v6500
          %v6877 = vpack.c.b16 %v6517, %v6509
          %v6878 = vpack.c.b16 %v6518, %v6510
          %v6879 = vpack.c.b16 %v6519, %v6511
          %v6880 = vpack.c.b16 %v6520, %v6512
          %v6881 = vpack.c.b16 %v6521, %v6513
          %v6882 = vpack.c.b16 %v6522, %v6514
          %v6883 = vpack.c.b16 %v6523, %v6515
          %v6884 = vpack.c.b16 %v6524, %v6516
          %v6885 = vpack.c.b16 %v6533, %v6525
          %v6886 = vpack.c.b16 %v6534, %v6526
          %v6887 = vpack.c.b16 %v6535, %v6527
          %v6888 = vpack.c.b16 %v6536, %v6528
          %v6889 = vpack.c.b16 %v6537, %v6529
          %v6890 = vpack.c.b16 %v6538, %v6530
          %v6891 = vpack.c.b16 %v6539, %v6531
          %v6892 = vpack.c.b16 %v6540, %v6532
          %v6893 = vpack.c.b16 %v6549, %v6541
          %v6894 = vpack.c.b16 %v6550, %v6542
          %v6895 = vpack.c.b16 %v6551, %v6543
          %v6896 = vpack.c.b16 %v6552, %v6544
          %v6897 = vpack.c.b16 %v6553, %v6545
          %v6898 = vpack.c.b16 %v6554, %v6546
          %v6899 = vpack.c.b16 %v6555, %v6547
          %v6900 = vpack.c.b16 %v6556, %v6548
          %v6901 = vpack.c.b16 %v6565, %v6557
          %v6902 = vpack.c.b16 %v6566, %v6558
          %v6903 = vpack.c.b16 %v6567, %v6559
          %v6904 = vpack.c.b16 %v6568, %v6560
          %v6905 = vpack.c.b16 %v6569, %v6561
          %v6906 = vpack.c.b16 %v6570, %v6562
          %v6907 = vpack.c.b16 %v6571, %v6563
          %v6908 = vpack.c.b16 %v6572, %v6564
          %v6909 = vpack.c.b16 %v6581, %v6573
          %v6910 = vpack.c.b16 %v6582, %v6574
          %v6911 = vpack.c.b16 %v6583, %v6575
          %v6912 = vpack.c.b16 %v6584, %v6576
          %v6913 = vpack.c.b16 %v6585, %v6577
          %v6914 = vpack.c.b16 %v6586, %v6578
          %v6915 = vpack.c.b16 %v6587, %v6579
          %v6916 = vpack.c.b16 %v6588, %v6580
          %v6917 = vpack.c.b16 %v6597, %v6589
          %v6918 = vpack.c.b16 %v6598, %v6590
          %v6919 = vpack.c.b16 %v6599, %v6591
          %v6920 = vpack.c.b16 %v6600, %v6592
          %v6921 = vpack.c.b16 %v6601, %v6593
          %v6922 = vpack.c.b16 %v6602, %v6594
          %v6923 = vpack.c.b16 %v6603, %v6595
          %v6924 = vpack.c.b16 %v6604, %v6596
          %v6925 = vpack.c.b16 %v6613, %v6605
          %v6926 = vpack.c.b16 %v6614, %v6606
          %v6927 = vpack.c.b16 %v6615, %v6607
          %v6928 = vpack.c.b16 %v6616, %v6608
          %v6929 = vpack.c.b16 %v6617, %v6609
          %v6930 = vpack.c.b16 %v6618, %v6610
          %v6931 = vpack.c.b16 %v6619, %v6611
          %v6932 = vpack.c.b16 %v6620, %v6612
          %v6933 = vpack.c.b16 %v6629, %v6621
          %v6934 = vpack.c.b16 %v6630, %v6622
          %v6935 = vpack.c.b16 %v6631, %v6623
          %v6936 = vpack.c.b16 %v6632, %v6624
          %v6937 = vpack.c.b16 %v6633, %v6625
          %v6938 = vpack.c.b16 %v6634, %v6626
          %v6939 = vpack.c.b16 %v6635, %v6627
          %v6940 = vpack.c.b16 %v6636, %v6628
          %v6941 = vpack.c.b16 %v6645, %v6637
          %v6942 = vpack.c.b16 %v6646, %v6638
          %v6943 = vpack.c.b16 %v6647, %v6639
          %v6944 = vpack.c.b16 %v6648, %v6640
          %v6945 = vpack.c.b16 %v6649, %v6641
          %v6946 = vpack.c.b16 %v6650, %v6642
          %v6947 = vpack.c.b16 %v6651, %v6643
          %v6948 = vpack.c.b16 %v6652, %v6644
          %v6949 = vpack.c.b16 %v6661, %v6653
          %v6950 = vpack.c.b16 %v6662, %v6654
          %v6951 = vpack.c.b16 %v6663, %v6655
          %v6952 = vpack.c.b16 %v6664, %v6656
          %v6953 = vpack.c.b16 %v6665, %v6657
          %v6954 = vpack.c.b16 %v6666, %v6658
          %v6955 = vpack.c.b16 %v6667, %v6659
          %v6956 = vpack.c.b16 %v6668, %v6660
          %v7246 = vsel %vm3072, %v5800, 0
          %7248 = vmatprep.subr.bf16.mxu0 %v6726
          %7249 = vmatpush1.bf16.msra.mxu0 %v6725
          %7250 = vmatprep.subr.bf16.mxu0 %v6718
          %7251 = vmatpush1.bf16.msra.mxu0 %v6717
          %7252 = vmatprep.subr.bf16.mxu0 %v6710
          %7253 = vmatpush1.bf16.msra.mxu0 %v6709
          %7254 = vmatprep.subr.bf16.mxu0 %v6702
          %7255 = vmatpush1.bf16.msra.mxu0 %v6701
          %7256 = vmatprep.subr.bf16.mxu0 %v6694
          %7257 = vmatpush1.bf16.msra.mxu0 %v6693
          %7258 = vmatprep.subr.bf16.mxu0 %v6686
          %7259 = vmatpush1.bf16.msra.mxu0 %v6685
          %7260 = vmatprep.subr.bf16.mxu0 %v6678
          %7261 = vmatpush1.bf16.msra.mxu0 %v6677
          %7262 = vmatprep.subr.bf16.mxu0 %v6670
          %7263 = vmatpush1.bf16.msra.mxu0 %v6669
          %7264 = vmatprep.subr.bf16.mxu0 %v6790
          %7265 = vmatpush2.bf16.msra.mxu0 %v6789
          %7266 = vmatprep.subr.bf16.mxu0 %v6782
          %7267 = vmatpush2.bf16.msra.mxu0 %v6781
          %7268 = vmatprep.subr.bf16.mxu0 %v6774
          %7269 = vmatpush2.bf16.msra.mxu0 %v6773
          %7270 = vmatprep.subr.bf16.mxu0 %v6766
          %7271 = vmatpush2.bf16.msra.mxu0 %v6765
          %7272 = vmatprep.subr.bf16.mxu0 %v6758
          %7273 = vmatpush2.bf16.msra.mxu0 %v6757
          %7274 = vmatprep.subr.bf16.mxu0 %v6750
          %7275 = vmatpush2.bf16.msra.mxu0 %v6749
          %7276 = vmatprep.subr.bf16.mxu0 %v6742
          %7277 = vmatpush2.bf16.msra.mxu0 %v6741
          %7278 = vmatprep.subr.bf16.mxu0 %v6734
          %7279 = vmatpush2.bf16.msra.mxu0 %v6733
          %7280 = vmatprep.mubr.bf16.mxu0 %v5797
          %7281 = vmatmul.mubr.bf16.gmra.mxu0 %v5796
          %v7282 = vpop.f32.mrf.mxu0
          %v7283 = vadd.f32 0.0, %v7282
          %v7284 = vpop.f32.mrf.mxu0
          %v7285 = vadd.f32 0.0, %v7284
          %v7286 = vpop.f32.mrf.mxu0
          %v7287 = vpop.f32.mrf.mxu0
          %7288 = vdwg.mxu0
          %7289 = vmatprep.subr.bf16.mxu0 %v6854
          %7290 = vmatpush1.bf16.msra.mxu0 %v6853
          %7291 = vmatprep.subr.bf16.mxu0 %v6846
          %7292 = vmatpush1.bf16.msra.mxu0 %v6845
          %7293 = vmatprep.subr.bf16.mxu0 %v6838
          %7294 = vmatpush1.bf16.msra.mxu0 %v6837
          %7295 = vmatprep.subr.bf16.mxu0 %v6830
          %7296 = vmatpush1.bf16.msra.mxu0 %v6829
          %7297 = vmatprep.subr.bf16.mxu0 %v6822
          %7298 = vmatpush1.bf16.msra.mxu0 %v6821
          %7299 = vmatprep.subr.bf16.mxu0 %v6814
          %7300 = vmatpush1.bf16.msra.mxu0 %v6813
          %7301 = vmatprep.subr.bf16.mxu0 %v6806
          %7302 = vmatpush1.bf16.msra.mxu0 %v6805
          %7303 = vmatprep.subr.bf16.mxu0 %v6798
          %7304 = vmatpush1.bf16.msra.mxu0 %v6797
          %7305 = vmatprep.subr.bf16.mxu0 %v6918
          %7306 = vmatpush2.bf16.msra.mxu0 %v6917
          %7307 = vmatprep.subr.bf16.mxu0 %v6910
          %7308 = vmatpush2.bf16.msra.mxu0 %v6909
          %7309 = vmatprep.subr.bf16.mxu0 %v6902
          %7310 = vmatpush2.bf16.msra.mxu0 %v6901
          %7311 = vmatprep.subr.bf16.mxu0 %v6894
          %7312 = vmatpush2.bf16.msra.mxu0 %v6893
          %7313 = vmatprep.subr.bf16.mxu0 %v6886
          %7314 = vmatpush2.bf16.msra.mxu0 %v6885
          %7315 = vmatprep.subr.bf16.mxu0 %v6878
          %7316 = vmatpush2.bf16.msra.mxu0 %v6877
          %7317 = vmatprep.subr.bf16.mxu0 %v6870
          %7318 = vmatpush2.bf16.msra.mxu0 %v6869
          %7319 = vmatprep.subr.bf16.mxu0 %v6862
          %7320 = vmatpush2.bf16.msra.mxu0 %v6861
          %7321 = vmatprep.mubr.bf16.mxu0 %v5799
          %7322 = vmatmul.mubr.bf16.gmra.mxu0 %v5798
          %v7323 = vpop.f32.mrf.mxu0
          %v7324 = vadd.f32 %v7283, %v7323
          %v7325 = vpop.f32.mrf.mxu0
          %v7326 = vadd.f32 %v7285, %v7325
          %v7327 = vpop.f32.mrf.mxu0
          %v7328 = vpop.f32.mrf.mxu0
          %7329 = vdwg.mxu0
          %7330 = vmatprep.subr.bf16.mxu0 0
          %7331 = vmatpush1.bf16.msra.mxu0 0
          %7332 = vmatprep.subr.bf16.mxu0 0
          %7333 = vmatpush1.bf16.msra.mxu0 0
          %7334 = vmatprep.subr.bf16.mxu0 0
          %7335 = vmatpush1.bf16.msra.mxu0 0
          %7336 = vmatprep.subr.bf16.mxu0 0
          %7337 = vmatpush1.bf16.msra.mxu0 0
          %7338 = vmatprep.subr.bf16.mxu0 %v6950
          %7339 = vmatpush1.bf16.msra.mxu0 %v6949
          %7340 = vmatprep.subr.bf16.mxu0 %v6942
          %7341 = vmatpush1.bf16.msra.mxu0 %v6941
          %7342 = vmatprep.subr.bf16.mxu0 %v6934
          %7343 = vmatpush1.bf16.msra.mxu0 %v6933
          %7344 = vmatprep.subr.bf16.mxu0 %v6926
          %7345 = vmatpush1.bf16.msra.mxu0 %v6925
          %7346 = vmatprep.subr.bf16.mxu0 0
          %7347 = vmatpush2.bf16.msra.mxu0 0
          %7348 = vmatprep.subr.bf16.mxu0 0
          %7349 = vmatpush2.bf16.msra.mxu0 0
          %7350 = vmatprep.subr.bf16.mxu0 0
          %7351 = vmatpush2.bf16.msra.mxu0 0
          %7352 = vmatprep.subr.bf16.mxu0 0
          %7353 = vmatpush2.bf16.msra.mxu0 0
          %7354 = vmatprep.subr.bf16.mxu0 0
          %7355 = vmatpush2.bf16.msra.mxu0 0
          %7356 = vmatprep.subr.bf16.mxu0 0
          %7357 = vmatpush2.bf16.msra.mxu0 0
          %7358 = vmatprep.subr.bf16.mxu0 0
          %7359 = vmatpush2.bf16.msra.mxu0 0
          %7360 = vmatprep.subr.bf16.mxu0 0
          %7361 = vmatpush2.bf16.msra.mxu0 0
          %7362 = vmatprep.mubr.bf16.mxu0 0
          %7363 = vmatmul.mubr.bf16.gmra.mxu0 %v7246
          %v7364 = vpop.f32.mrf.mxu0
          %v7365 = vadd.f32 %v7324, %v7364
          %v7366 = vpop.f32.mrf.mxu0
          %v7367 = vadd.f32 %v7326, %v7366
          %v7368 = vpop.f32.mrf.mxu0
          %v7369 = vpop.f32.mrf.mxu0
          %7370 = vdwg.mxu0
          %7371 = vmatprep.subr.bf16.mxu0 %v6728
          %7372 = vmatpush1.bf16.msra.mxu0 %v6727
          %7373 = vmatprep.subr.bf16.mxu0 %v6720
          %7374 = vmatpush1.bf16.msra.mxu0 %v6719
          %7375 = vmatprep.subr.bf16.mxu0 %v6712
          %7376 = vmatpush1.bf16.msra.mxu0 %v6711
          %7377 = vmatprep.subr.bf16.mxu0 %v6704
          %7378 = vmatpush1.bf16.msra.mxu0 %v6703
          %7379 = vmatprep.subr.bf16.mxu0 %v6696
          %7380 = vmatpush1.bf16.msra.mxu0 %v6695
          %7381 = vmatprep.subr.bf16.mxu0 %v6688
          %7382 = vmatpush1.bf16.msra.mxu0 %v6687
          %7383 = vmatprep.subr.bf16.mxu0 %v6680
          %7384 = vmatpush1.bf16.msra.mxu0 %v6679
          %7385 = vmatprep.subr.bf16.mxu0 %v6672
          %7386 = vmatpush1.bf16.msra.mxu0 %v6671
          %7387 = vmatprep.subr.bf16.mxu0 %v6792
          %7388 = vmatpush2.bf16.msra.mxu0 %v6791
          %7389 = vmatprep.subr.bf16.mxu0 %v6784
          %7390 = vmatpush2.bf16.msra.mxu0 %v6783
          %7391 = vmatprep.subr.bf16.mxu0 %v6776
          %7392 = vmatpush2.bf16.msra.mxu0 %v6775
          %7393 = vmatprep.subr.bf16.mxu0 %v6768
          %7394 = vmatpush2.bf16.msra.mxu0 %v6767
          %7395 = vmatprep.subr.bf16.mxu0 %v6760
          %7396 = vmatpush2.bf16.msra.mxu0 %v6759
          %7397 = vmatprep.subr.bf16.mxu0 %v6752
          %7398 = vmatpush2.bf16.msra.mxu0 %v6751
          %7399 = vmatprep.subr.bf16.mxu0 %v6744
          %7400 = vmatpush2.bf16.msra.mxu0 %v6743
          %7401 = vmatprep.subr.bf16.mxu0 %v6736
          %7402 = vmatpush2.bf16.msra.mxu0 %v6735
          %7403 = vmatprep.mubr.bf16.mxu0 %v5797
          %7404 = vmatmul.mubr.bf16.gmra.mxu0 %v5796
          %v7405 = vpop.f32.mrf.mxu0
          %v7406 = vadd.f32 0.0, %v7405
          %v7407 = vpop.f32.mrf.mxu0
          %v7408 = vadd.f32 0.0, %v7407
          %v7409 = vpop.f32.mrf.mxu0
          %v7410 = vpop.f32.mrf.mxu0
          %7411 = vdwg.mxu0
          %7412 = vmatprep.subr.bf16.mxu0 %v6856
          %7413 = vmatpush1.bf16.msra.mxu0 %v6855
          %7414 = vmatprep.subr.bf16.mxu0 %v6848
          %7415 = vmatpush1.bf16.msra.mxu0 %v6847
          %7416 = vmatprep.subr.bf16.mxu0 %v6840
          %7417 = vmatpush1.bf16.msra.mxu0 %v6839
          %7418 = vmatprep.subr.bf16.mxu0 %v6832
          %7419 = vmatpush1.bf16.msra.mxu0 %v6831
          %7420 = vmatprep.subr.bf16.mxu0 %v6824
          %7421 = vmatpush1.bf16.msra.mxu0 %v6823
          %7422 = vmatprep.subr.bf16.mxu0 %v6816
          %7423 = vmatpush1.bf16.msra.mxu0 %v6815
          %7424 = vmatprep.subr.bf16.mxu0 %v6808
          %7425 = vmatpush1.bf16.msra.mxu0 %v6807
          %7426 = vmatprep.subr.bf16.mxu0 %v6800
          %7427 = vmatpush1.bf16.msra.mxu0 %v6799
          %7428 = vmatprep.subr.bf16.mxu0 %v6920
          %7429 = vmatpush2.bf16.msra.mxu0 %v6919
          %7430 = vmatprep.subr.bf16.mxu0 %v6912
          %7431 = vmatpush2.bf16.msra.mxu0 %v6911
          %7432 = vmatprep.subr.bf16.mxu0 %v6904
          %7433 = vmatpush2.bf16.msra.mxu0 %v6903
          %7434 = vmatprep.subr.bf16.mxu0 %v6896
          %7435 = vmatpush2.bf16.msra.mxu0 %v6895
          %7436 = vmatprep.subr.bf16.mxu0 %v6888
          %7437 = vmatpush2.bf16.msra.mxu0 %v6887
          %7438 = vmatprep.subr.bf16.mxu0 %v6880
          %7439 = vmatpush2.bf16.msra.mxu0 %v6879
          %7440 = vmatprep.subr.bf16.mxu0 %v6872
          %7441 = vmatpush2.bf16.msra.mxu0 %v6871
          %7442 = vmatprep.subr.bf16.mxu0 %v6864
          %7443 = vmatpush2.bf16.msra.mxu0 %v6863
          %7444 = vmatprep.mubr.bf16.mxu0 %v5799
          %7445 = vmatmul.mubr.bf16.gmra.mxu0 %v5798
          %v7446 = vpop.f32.mrf.mxu0
          %v7447 = vadd.f32 %v7406, %v7446
          %v7448 = vpop.f32.mrf.mxu0
          %v7449 = vadd.f32 %v7408, %v7448
          %v7450 = vpop.f32.mrf.mxu0
          %v7451 = vpop.f32.mrf.mxu0
          %7452 = vdwg.mxu0
          %7453 = vmatprep.subr.bf16.mxu0 0
          %7454 = vmatpush1.bf16.msra.mxu0 0
          %7455 = vmatprep.subr.bf16.mxu0 0
          %7456 = vmatpush1.bf16.msra.mxu0 0
          %7457 = vmatprep.subr.bf16.mxu0 0
          %7458 = vmatpush1.bf16.msra.mxu0 0
          %7459 = vmatprep.subr.bf16.mxu0 0
          %7460 = vmatpush1.bf16.msra.mxu0 0
          %7461 = vmatprep.subr.bf16.mxu0 %v6952
          %7462 = vmatpush1.bf16.msra.mxu0 %v6951
          %7463 = vmatprep.subr.bf16.mxu0 %v6944
          %7464 = vmatpush1.bf16.msra.mxu0 %v6943
          %7465 = vmatprep.subr.bf16.mxu0 %v6936
          %7466 = vmatpush1.bf16.msra.mxu0 %v6935
          %7467 = vmatprep.subr.bf16.mxu0 %v6928
          %7468 = vmatpush1.bf16.msra.mxu0 %v6927
          %7469 = vmatprep.subr.bf16.mxu0 0
          %7470 = vmatpush2.bf16.msra.mxu0 0
          %7471 = vmatprep.subr.bf16.mxu0 0
          %7472 = vmatpush2.bf16.msra.mxu0 0
          %7473 = vmatprep.subr.bf16.mxu0 0
          %7474 = vmatpush2.bf16.msra.mxu0 0
          %7475 = vmatprep.subr.bf16.mxu0 0
          %7476 = vmatpush2.bf16.msra.mxu0 0
          %7477 = vmatprep.subr.bf16.mxu0 0
          %7478 = vmatpush2.bf16.msra.mxu0 0
          %7479 = vmatprep.subr.bf16.mxu0 0
          %7480 = vmatpush2.bf16.msra.mxu0 0
          %7481 = vmatprep.subr.bf16.mxu0 0
          %7482 = vmatpush2.bf16.msra.mxu0 0
          %7483 = vmatprep.subr.bf16.mxu0 0
          %7484 = vmatpush2.bf16.msra.mxu0 0
          %7485 = vmatprep.mubr.bf16.mxu0 0
          %7486 = vmatmul.mubr.bf16.gmra.mxu0 %v7246
          %v7487 = vpop.f32.mrf.mxu0
          %v7488 = vadd.f32 %v7447, %v7487
          %v7489 = vpop.f32.mrf.mxu0
          %v7490 = vadd.f32 %v7449, %v7489
          %v7491 = vpop.f32.mrf.mxu0
          %v7492 = vpop.f32.mrf.mxu0
          %7493 = vdwg.mxu0
          %7494 = vmatprep.subr.bf16.mxu0 %v6730
          %7495 = vmatpush1.bf16.msra.mxu0 %v6729
          %7496 = vmatprep.subr.bf16.mxu0 %v6722
          %7497 = vmatpush1.bf16.msra.mxu0 %v6721
          %7498 = vmatprep.subr.bf16.mxu0 %v6714
          %7499 = vmatpush1.bf16.msra.mxu0 %v6713
          %7500 = vmatprep.subr.bf16.mxu0 %v6706
          %7501 = vmatpush1.bf16.msra.mxu0 %v6705
          %7502 = vmatprep.subr.bf16.mxu0 %v6698
          %7503 = vmatpush1.bf16.msra.mxu0 %v6697
          %7504 = vmatprep.subr.bf16.mxu0 %v6690
          %7505 = vmatpush1.bf16.msra.mxu0 %v6689
          %7506 = vmatprep.subr.bf16.mxu0 %v6682
          %7507 = vmatpush1.bf16.msra.mxu0 %v6681
          %7508 = vmatprep.subr.bf16.mxu0 %v6674
          %7509 = vmatpush1.bf16.msra.mxu0 %v6673
          %7510 = vmatprep.subr.bf16.mxu0 %v6794
          %7511 = vmatpush2.bf16.msra.mxu0 %v6793
          %7512 = vmatprep.subr.bf16.mxu0 %v6786
          %7513 = vmatpush2.bf16.msra.mxu0 %v6785
          %7514 = vmatprep.subr.bf16.mxu0 %v6778
          %7515 = vmatpush2.bf16.msra.mxu0 %v6777
          %7516 = vmatprep.subr.bf16.mxu0 %v6770
          %7517 = vmatpush2.bf16.msra.mxu0 %v6769
          %7518 = vmatprep.subr.bf16.mxu0 %v6762
          %7519 = vmatpush2.bf16.msra.mxu0 %v6761
          %7520 = vmatprep.subr.bf16.mxu0 %v6754
          %7521 = vmatpush2.bf16.msra.mxu0 %v6753
          %7522 = vmatprep.subr.bf16.mxu0 %v6746
          %7523 = vmatpush2.bf16.msra.mxu0 %v6745
          %7524 = vmatprep.subr.bf16.mxu0 %v6738
          %7525 = vmatpush2.bf16.msra.mxu0 %v6737
          %7526 = vmatprep.mubr.bf16.mxu0 %v5797
          %7527 = vmatmul.mubr.bf16.gmra.mxu0 %v5796
          %v7528 = vpop.f32.mrf.mxu0
          %v7529 = vadd.f32 0.0, %v7528
          %v7530 = vpop.f32.mrf.mxu0
          %v7531 = vadd.f32 0.0, %v7530
          %v7532 = vpop.f32.mrf.mxu0
          %v7533 = vpop.f32.mrf.mxu0
          %7534 = vdwg.mxu0
          %7535 = vmatprep.subr.bf16.mxu0 %v6858
          %7536 = vmatpush1.bf16.msra.mxu0 %v6857
          %7537 = vmatprep.subr.bf16.mxu0 %v6850
          %7538 = vmatpush1.bf16.msra.mxu0 %v6849
          %7539 = vmatprep.subr.bf16.mxu0 %v6842
          %7540 = vmatpush1.bf16.msra.mxu0 %v6841
          %7541 = vmatprep.subr.bf16.mxu0 %v6834
          %7542 = vmatpush1.bf16.msra.mxu0 %v6833
          %7543 = vmatprep.subr.bf16.mxu0 %v6826
          %7544 = vmatpush1.bf16.msra.mxu0 %v6825
          %7545 = vmatprep.subr.bf16.mxu0 %v6818
          %7546 = vmatpush1.bf16.msra.mxu0 %v6817
          %7547 = vmatprep.subr.bf16.mxu0 %v6810
          %7548 = vmatpush1.bf16.msra.mxu0 %v6809
          %7549 = vmatprep.subr.bf16.mxu0 %v6802
          %7550 = vmatpush1.bf16.msra.mxu0 %v6801
          %7551 = vmatprep.subr.bf16.mxu0 %v6922
          %7552 = vmatpush2.bf16.msra.mxu0 %v6921
          %7553 = vmatprep.subr.bf16.mxu0 %v6914
          %7554 = vmatpush2.bf16.msra.mxu0 %v6913
          %7555 = vmatprep.subr.bf16.mxu0 %v6906
          %7556 = vmatpush2.bf16.msra.mxu0 %v6905
          %7557 = vmatprep.subr.bf16.mxu0 %v6898
          %7558 = vmatpush2.bf16.msra.mxu0 %v6897
          %7559 = vmatprep.subr.bf16.mxu0 %v6890
          %7560 = vmatpush2.bf16.msra.mxu0 %v6889
          %7561 = vmatprep.subr.bf16.mxu0 %v6882
          %7562 = vmatpush2.bf16.msra.mxu0 %v6881
          %7563 = vmatprep.subr.bf16.mxu0 %v6874
          %7564 = vmatpush2.bf16.msra.mxu0 %v6873
          %7565 = vmatprep.subr.bf16.mxu0 %v6866
          %7566 = vmatpush2.bf16.msra.mxu0 %v6865
          %7567 = vmatprep.mubr.bf16.mxu0 %v5799
          %7568 = vmatmul.mubr.bf16.gmra.mxu0 %v5798
          %v7569 = vpop.f32.mrf.mxu0
          %v7570 = vadd.f32 %v7529, %v7569
          %v7571 = vpop.f32.mrf.mxu0
          %v7572 = vadd.f32 %v7531, %v7571
          %v7573 = vpop.f32.mrf.mxu0
          %v7574 = vpop.f32.mrf.mxu0
          %7575 = vdwg.mxu0
          %7576 = vmatprep.subr.bf16.mxu0 0
          %7577 = vmatpush1.bf16.msra.mxu0 0
          %7578 = vmatprep.subr.bf16.mxu0 0
          %7579 = vmatpush1.bf16.msra.mxu0 0
          %7580 = vmatprep.subr.bf16.mxu0 0
          %7581 = vmatpush1.bf16.msra.mxu0 0
          %7582 = vmatprep.subr.bf16.mxu0 0
          %7583 = vmatpush1.bf16.msra.mxu0 0
          %7584 = vmatprep.subr.bf16.mxu0 %v6954
          %7585 = vmatpush1.bf16.msra.mxu0 %v6953
          %7586 = vmatprep.subr.bf16.mxu0 %v6946
          %7587 = vmatpush1.bf16.msra.mxu0 %v6945
          %7588 = vmatprep.subr.bf16.mxu0 %v6938
          %7589 = vmatpush1.bf16.msra.mxu0 %v6937
          %7590 = vmatprep.subr.bf16.mxu0 %v6930
          %7591 = vmatpush1.bf16.msra.mxu0 %v6929
          %7592 = vmatprep.subr.bf16.mxu0 0
          %7593 = vmatpush2.bf16.msra.mxu0 0
          %7594 = vmatprep.subr.bf16.mxu0 0
          %7595 = vmatpush2.bf16.msra.mxu0 0
          %7596 = vmatprep.subr.bf16.mxu0 0
          %7597 = vmatpush2.bf16.msra.mxu0 0
          %7598 = vmatprep.subr.bf16.mxu0 0
          %7599 = vmatpush2.bf16.msra.mxu0 0
          %7600 = vmatprep.subr.bf16.mxu0 0
          %7601 = vmatpush2.bf16.msra.mxu0 0
          %7602 = vmatprep.subr.bf16.mxu0 0
          %7603 = vmatpush2.bf16.msra.mxu0 0
          %7604 = vmatprep.subr.bf16.mxu0 0
          %7605 = vmatpush2.bf16.msra.mxu0 0
          %7606 = vmatprep.subr.bf16.mxu0 0
          %7607 = vmatpush2.bf16.msra.mxu0 0
          %7608 = vmatprep.mubr.bf16.mxu0 0
          %7609 = vmatmul.mubr.bf16.gmra.mxu0 %v7246
          %v7610 = vpop.f32.mrf.mxu0
          %v7611 = vadd.f32 %v7570, %v7610
          %v7612 = vpop.f32.mrf.mxu0
          %v7613 = vadd.f32 %v7572, %v7612
          %v7614 = vpop.f32.mrf.mxu0
          %v7615 = vpop.f32.mrf.mxu0
          %7616 = vdwg.mxu0
          %7617 = vmatprep.subr.bf16.mxu0 %v6732
          %7618 = vmatpush1.bf16.msra.mxu0 %v6731
          %7619 = vmatprep.subr.bf16.mxu0 %v6724
          %7620 = vmatpush1.bf16.msra.mxu0 %v6723
          %7621 = vmatprep.subr.bf16.mxu0 %v6716
          %7622 = vmatpush1.bf16.msra.mxu0 %v6715
          %7623 = vmatprep.subr.bf16.mxu0 %v6708
          %7624 = vmatpush1.bf16.msra.mxu0 %v6707
          %7625 = vmatprep.subr.bf16.mxu0 %v6700
          %7626 = vmatpush1.bf16.msra.mxu0 %v6699
          %7627 = vmatprep.subr.bf16.mxu0 %v6692
          %7628 = vmatpush1.bf16.msra.mxu0 %v6691
          %7629 = vmatprep.subr.bf16.mxu0 %v6684
          %7630 = vmatpush1.bf16.msra.mxu0 %v6683
          %7631 = vmatprep.subr.bf16.mxu0 %v6676
          %7632 = vmatpush1.bf16.msra.mxu0 %v6675
          %7633 = vmatprep.subr.bf16.mxu0 %v6796
          %7634 = vmatpush2.bf16.msra.mxu0 %v6795
          %7635 = vmatprep.subr.bf16.mxu0 %v6788
          %7636 = vmatpush2.bf16.msra.mxu0 %v6787
          %7637 = vmatprep.subr.bf16.mxu0 %v6780
          %7638 = vmatpush2.bf16.msra.mxu0 %v6779
          %7639 = vmatprep.subr.bf16.mxu0 %v6772
          %7640 = vmatpush2.bf16.msra.mxu0 %v6771
          %7641 = vmatprep.subr.bf16.mxu0 %v6764
          %7642 = vmatpush2.bf16.msra.mxu0 %v6763
          %7643 = vmatprep.subr.bf16.mxu0 %v6756
          %7644 = vmatpush2.bf16.msra.mxu0 %v6755
          %7645 = vmatprep.subr.bf16.mxu0 %v6748
          %7646 = vmatpush2.bf16.msra.mxu0 %v6747
          %7647 = vmatprep.subr.bf16.mxu0 %v6740
          %7648 = vmatpush2.bf16.msra.mxu0 %v6739
          %7649 = vmatprep.mubr.bf16.mxu0 %v5797
          %7650 = vmatmul.mubr.bf16.gmra.mxu0 %v5796
          %v7651 = vpop.f32.mrf.mxu0
          %v7652 = vadd.f32 0.0, %v7651
          %v7653 = vpop.f32.mrf.mxu0
          %v7654 = vadd.f32 0.0, %v7653
          %v7655 = vpop.f32.mrf.mxu0
          %v7656 = vpop.f32.mrf.mxu0
          %7657 = vdwg.mxu0
          %7658 = vmatprep.subr.bf16.mxu0 %v6860
          %7659 = vmatpush1.bf16.msra.mxu0 %v6859
          %7660 = vmatprep.subr.bf16.mxu0 %v6852
          %7661 = vmatpush1.bf16.msra.mxu0 %v6851
          %7662 = vmatprep.subr.bf16.mxu0 %v6844
          %7663 = vmatpush1.bf16.msra.mxu0 %v6843
          %7664 = vmatprep.subr.bf16.mxu0 %v6836
          %7665 = vmatpush1.bf16.msra.mxu0 %v6835
          %7666 = vmatprep.subr.bf16.mxu0 %v6828
          %7667 = vmatpush1.bf16.msra.mxu0 %v6827
          %7668 = vmatprep.subr.bf16.mxu0 %v6820
          %7669 = vmatpush1.bf16.msra.mxu0 %v6819
          %7670 = vmatprep.subr.bf16.mxu0 %v6812
          %7671 = vmatpush1.bf16.msra.mxu0 %v6811
          %7672 = vmatprep.subr.bf16.mxu0 %v6804
          %7673 = vmatpush1.bf16.msra.mxu0 %v6803
          %7674 = vmatprep.subr.bf16.mxu0 %v6924
          %7675 = vmatpush2.bf16.msra.mxu0 %v6923
          %7676 = vmatprep.subr.bf16.mxu0 %v6916
          %7677 = vmatpush2.bf16.msra.mxu0 %v6915
          %7678 = vmatprep.subr.bf16.mxu0 %v6908
          %7679 = vmatpush2.bf16.msra.mxu0 %v6907
          %7680 = vmatprep.subr.bf16.mxu0 %v6900
          %7681 = vmatpush2.bf16.msra.mxu0 %v6899
          %7682 = vmatprep.subr.bf16.mxu0 %v6892
          %7683 = vmatpush2.bf16.msra.mxu0 %v6891
          %7684 = vmatprep.subr.bf16.mxu0 %v6884
          %7685 = vmatpush2.bf16.msra.mxu0 %v6883
          %7686 = vmatprep.subr.bf16.mxu0 %v6876
          %7687 = vmatpush2.bf16.msra.mxu0 %v6875
          %7688 = vmatprep.subr.bf16.mxu0 %v6868
          %7689 = vmatpush2.bf16.msra.mxu0 %v6867
          %7690 = vmatprep.mubr.bf16.mxu0 %v5799
          %7691 = vmatmul.mubr.bf16.gmra.mxu0 %v5798
          %v7692 = vpop.f32.mrf.mxu0
          %v7693 = vadd.f32 %v7652, %v7692
          %v7694 = vpop.f32.mrf.mxu0
          %v7695 = vadd.f32 %v7654, %v7694
          %v7696 = vpop.f32.mrf.mxu0
          %v7697 = vpop.f32.mrf.mxu0
          %7698 = vdwg.mxu0
          %7699 = vmatprep.subr.bf16.mxu0 0
          %7700 = vmatpush1.bf16.msra.mxu0 0
          %7701 = vmatprep.subr.bf16.mxu0 0
          %7702 = vmatpush1.bf16.msra.mxu0 0
          %7703 = vmatprep.subr.bf16.mxu0 0
          %7704 = vmatpush1.bf16.msra.mxu0 0
          %7705 = vmatprep.subr.bf16.mxu0 0
          %7706 = vmatpush1.bf16.msra.mxu0 0
          %7707 = vmatprep.subr.bf16.mxu0 %v6956
          %7708 = vmatpush1.bf16.msra.mxu0 %v6955
          %7709 = vmatprep.subr.bf16.mxu0 %v6948
          %7710 = vmatpush1.bf16.msra.mxu0 %v6947
          %7711 = vmatprep.subr.bf16.mxu0 %v6940
          %7712 = vmatpush1.bf16.msra.mxu0 %v6939
          %7713 = vmatprep.subr.bf16.mxu0 %v6932
          %7714 = vmatpush1.bf16.msra.mxu0 %v6931
          %7715 = vmatprep.subr.bf16.mxu0 0
          %7716 = vmatpush2.bf16.msra.mxu0 0
          %7717 = vmatprep.subr.bf16.mxu0 0
          %7718 = vmatpush2.bf16.msra.mxu0 0
          %7719 = vmatprep.subr.bf16.mxu0 0
          %7720 = vmatpush2.bf16.msra.mxu0 0
          %7721 = vmatprep.subr.bf16.mxu0 0
          %7722 = vmatpush2.bf16.msra.mxu0 0
          %7723 = vmatprep.subr.bf16.mxu0 0
          %7724 = vmatpush2.bf16.msra.mxu0 0
          %7725 = vmatprep.subr.bf16.mxu0 0
          %7726 = vmatpush2.bf16.msra.mxu0 0
          %7727 = vmatprep.subr.bf16.mxu0 0
          %7728 = vmatpush2.bf16.msra.mxu0 0
          %7729 = vmatprep.subr.bf16.mxu0 0
          %7730 = vmatpush2.bf16.msra.mxu0 0
          %7731 = vmatprep.mubr.bf16.mxu0 0
          %7732 = vmatmul.mubr.bf16.gmra.mxu0 %v7246
          %v7733 = vpop.f32.mrf.mxu0
          %v7734 = vadd.f32 %v7693, %v7733
          %v7735 = vpop.f32.mrf.mxu0
          %v7736 = vadd.f32 %v7695, %v7735
          %v7737 = vpop.f32.mrf.mxu0
          %v7738 = vpop.f32.mrf.mxu0
          %7739 = vdwg.mxu0
          %v7740 = vadd.f32 %v5127, %v7365
          %v7741 = vadd.f32 %v5129, %v7367
          %v7742 = vadd.f32 %v5250, %v7488
          %v7743 = vadd.f32 %v5252, %v7490
          %v7744 = vadd.f32 %v5373, %v7611
          %v7745 = vadd.f32 %v5375, %v7613
          %v7746 = vadd.f32 %v5496, %v7734
          %v7747 = vadd.f32 %v5498, %v7736
          %v7748 = vld [vmem:[#allocation10] sm:$0xff]
          %v7750 = vlaneseq
          %v7751 = vshrl.u32 %v7750, 7
          %v7752 = vsub.s32 0, %v7751
          %v7753 = vrot.slane %v7748, %v7752
          %v7754 = vlaneseq
          %v7755 = vshrl.u32 %v7754, 7
          %v7756 = vsub.s32 1, %v7755
          %v7757 = vrot.slane %v7748, %v7756
          %v7758 = vlaneseq
          %v7759 = vshrl.u32 %v7758, 7
          %v7760 = vsub.s32 2, %v7759
          %v7761 = vrot.slane %v7748, %v7760
          %v7762 = vlaneseq
          %v7763 = vshrl.u32 %v7762, 7
          %v7764 = vsub.s32 3, %v7763
          %v7765 = vrot.slane %v7748, %v7764
          %v7766 = vlaneseq
          %v7767 = vshrl.u32 %v7766, 7
          %v7768 = vsub.s32 4, %v7767
          %v7769 = vrot.slane %v7748, %v7768
          %v7770 = vlaneseq
          %v7771 = vshrl.u32 %v7770, 7
          %v7772 = vsub.s32 5, %v7771
          %v7773 = vrot.slane %v7748, %v7772
          %v7774 = vlaneseq
          %v7775 = vshrl.u32 %v7774, 7
          %v7776 = vsub.s32 6, %v7775
          %v7777 = vrot.slane %v7748, %v7776
          %v7778 = vlaneseq
          %v7779 = vshrl.u32 %v7778, 7
          %v7780 = vsub.s32 7, %v7779
          %v7781 = vrot.slane %v7748, %v7780
          %v7790 = vadd.f32 %v7740, %v7753
          %v7791 = vadd.f32 %v7741, %v7757
          %v7792 = vadd.f32 %v7742, %v7761
          %v7793 = vadd.f32 %v7743, %v7765
          %v7794 = vadd.f32 %v7744, %v7769
          %v7795 = vadd.f32 %v7745, %v7773
          %v7796 = vadd.f32 %v7746, %v7777
          %v7797 = vadd.f32 %v7747, %v7781
          %v7798 = vmax.f32 %v7790, 0.0
          %v7799 = vmax.f32 %v7791, 0.0
          %v7800 = vmax.f32 %v7792, 0.0
          %v7801 = vmax.f32 %v7793, 0.0
          %v7802 = vmax.f32 %v7794, 0.0
          %v7803 = vmax.f32 %v7795, 0.0
          %v7804 = vmax.f32 %v7796, 0.0
          %v7805 = vmax.f32 %v7797, 0.0
          %v7806 = vstv %s312
          %v7807 = vadd.s32 %v975, %v7806
          %v7808 = vstv %s313
          %vm7809 = vcmp.lt.s32.totalorder %v7807, %v7808
          %v7810 = vsel %vm7809, 1, 0
          %v7811 = vcvt.s32.f32 %v7810
          %v7812 = vmul.f32 %v7798, %v7811
          %v7813 = vmul.f32 %v7799, %v7811
          %v7814 = vmul.f32 %v7800, %v7811
          %v7815 = vmul.f32 %v7801, %v7811
          %v7816 = vmul.f32 %v7802, %v7811
          %v7817 = vmul.f32 %v7803, %v7811
          %v7818 = vmul.f32 %v7804, %v7811
          %v7819 = vmul.f32 %v7805, %v7811
          %7820 = vst [vmem:[%s301] sm:$0xff] %v7812
          %7821 = vst [vmem:[%s301 + $0x8] sm:$0xff] %v7813
          %7822 = vst [vmem:[%s301 + $0x10] sm:$0xff] %v7814
          %7823 = vst [vmem:[%s301 + $0x18] sm:$0xff] %v7815
          %7824 = vst [vmem:[%s301 + $0x20] sm:$0xff] %v7816
          %7825 = vst [vmem:[%s301 + $0x28] sm:$0xff] %v7817
          %7826 = vst [vmem:[%s301 + $0x30] sm:$0xff] %v7818
          %7827 = vst [vmem:[%s301 + $0x38] sm:$0xff] %v7819
        $region64: #{tpu_custom_call.1} parent=39 // pred_fallthru
          _
        %s7828 = sand.u32 %s161, 1
        %s7829 = scalar_lea.sflag [#allocation6], %s7828
        %s7830 = sand.u32 %s161, 1
        %s7831 = smul.addr %s7830, 64
        %s7832 = scalar_lea.vmem [#allocation12], %s7831
        // Predicated region
        $region65: #{tpu_custom_call.1} parent=39 // pred_check
          %p7833 = pneg %p171
        $region66: #{tpu_custom_call.1} parent=39 // pred_check_branch
          %7835 = sbr.rel (%p7833) target = $region68
        $region67: #{tpu_custom_call.1} parent=39 // pred_region
          %s7837 = ssub.s32 1024, 1024
          %7838 = vsyncadd %s7829, %s7837
          %s7839 = smul.addr %s32, 8
          %s7840 = smul.addr %s31, 24
          %s7841 = sadd.s32 %s7839, %s7840
          %s7842 = smul.addr %s7841, 128
          %s7843 = scalar_lea.hbm %s6, %s7842
          %s7845 = sshll.u32 %s7832, 4
          %s7846 = int_to_ptr.vmem [resolvable:$true] %s7845
          %7848 = dma.vmem_to_hbm [thread:$0]  %s7846, 1024, %s7843, %s7829
        $region68: #{tpu_custom_call.1} parent=39 // pred_fallthru
          _
      $region40: #{tpu_custom_call.1} parent=5 // pred_fallthru
        _
      %p7849 = scmp.le.s32.totalorder 2, %s22
      // Predicated region
      $region69: #{tpu_custom_call.1} parent=5 // pred_check
        %p7850 = pneg %p7849
      $region70: #{tpu_custom_call.1} parent=5 // pred_check_branch
        %7852 = sbr.rel (%p7850) target = $region72
      $region71: #{tpu_custom_call.1} parent=5 // pred_region
        %s7853 = ssub.s32 %s22, 2
        // Predicated region
        $region73: #{tpu_custom_call.1} parent=71 // pred_check
          %p7854 = pneg %p177
        $region74: #{tpu_custom_call.1} parent=71 // pred_check_branch
          %7856 = sbr.rel (%p7854) target = $region76
        $region75: #{tpu_custom_call.1} parent=71 // pred_region
          %s7857 = sand.u32 %s162, 1
          %s7858 = scalar_lea.sflag [#allocation6], %s7857
          %s7859 = sand.u32 %s162, 1
          %s7860 = smul.addr %s7859, 64
          %s7861 = scalar_lea.vmem [#allocation12], %s7860
          %7862 = dma.done %s7858, 1024
        $region76: #{tpu_custom_call.1} parent=71 // pred_fallthru
          _
      $region72: #{tpu_custom_call.1} parent=5 // pred_fallthru
        _
    $region6: #{tpu_custom_call.1} parent=1 // loop_footer
      %s26 = sadd.s32 1, %s22
    $region7: #{tpu_custom_call.1} parent=1 // loop_footer_branch
      %21 = sbr.rel target = $region3
    $region8: #{tpu_custom_call.1} parent=1 // loop_exit
      _
    %7863 = vsyncpa [#allocation5], 1
    %s7864 = scalar_lea.sflag [#allocation5], 1
    %7865 = vsyncpa %s7864, 1
    %7866 = vsyncpa [#allocation8], 1
    %7867 = vsyncpa [#allocation11], 1
    %7868 = vsyncpa [#allocation6], 1
    %s7869 = scalar_lea.sflag [#allocation6], 1
    %7870 = vsyncpa %s7869, 1

</llo_original>
